<compile_context>
chip_gen: v7x
topology: tpu7x:2x2x1
jax: 0.10.0
libtpu: 0.0.40
codegen_flags: <defaults>
</compile_context>

<pallas_src>
import functools

import jax
import jax.numpy as jnp
from jax.experimental import pallas as pl
from jax.experimental.pallas import tpu as pltpu


def _ffn_ln_kernel(x_ref, w1_ref, b1_ref, w2_ref, lnp_ref, o_ref, acc_ref, *, eps):
    """One (tm, D) row tile x one tf-wide slice of ffn_dim.

    Grid = (rows/tm, F/tf).  acc accumulates y = sum_f relu(x@W1_f + b1_f) @ W2_f
    in f32; residual + LayerNorm epilogue runs on the last F step only.
    """
    f = pl.program_id(1)

    @pl.when(f == 0)
    def _():
        acc_ref[...] = jnp.zeros_like(acc_ref)

    x = x_ref[...]                                          # (tm, D), input dtype
    # bf16 operands on the MXU, f32 accumulation.
    h = jnp.dot(x.astype(w1_ref.dtype), w1_ref[...],
                preferred_element_type=jnp.float32)         # (tm, tf) f32
    h = jnp.maximum(h + b1_ref[...], 0.0)                   # bias + ReLU (b1 is f32)
    acc_ref[...] += jnp.dot(h.astype(w2_ref.dtype), w2_ref[...],
                            preferred_element_type=jnp.float32)  # (tm, D) f32

    @pl.when(f == pl.num_programs(1) - 1)
    def _():
        # lnp rows: 0 = b2, 1 = gamma, 2 = beta (all f32).
        r = x.astype(jnp.float32) + acc_ref[...] + lnp_ref[0:1, :]
        mean = jnp.mean(r, axis=-1, keepdims=True)
        cent = r - mean
        var = jnp.mean(cent * cent, axis=-1, keepdims=True)      # biased (torch LN)
        inv = jax.lax.rsqrt(var + eps)
        o_ref[...] = (cent * inv * lnp_ref[1:2, :] + lnp_ref[2:3, :]).astype(o_ref.dtype)


def _pick_tm(rows):
    # Largest row tile (<=1024, multiple of 128) that divides `rows` while
    # keeping >= 2 grid steps so v7x's two TensorCores both get work.
    for cand in (1024, 512, 256, 128):
        if rows % cand == 0 and rows // cand >= 2:
            return cand
    return 256   # fallback: wrapper pads rows up to a multiple of tm


def _pick_tf(model_dim, ffn_dim, w_itemsize, budget_bytes):
    # Keep W1/W2 fully VMEM-resident (single-buffered) when they fit the
    # budget; otherwise stream (D, tf)/(tf, D) tiles (tf multiple of 256).
    if 2 * model_dim * ffn_dim * w_itemsize <= budget_bytes:
        return ffn_dim
    for cand in (4096, 2048, 1024, 512, 256):
        if ffn_dim % cand == 0 and 2 * 2 * model_dim * cand * w_itemsize <= budget_bytes:
            return cand
    return 256 if ffn_dim % 256 == 0 else ffn_dim


def _vmem_capacity_bytes():
    try:
        return int(pltpu.get_tpu_info().vmem_capacity_bytes)
    except Exception:
        return 64 << 20   # conservative: v7x per-TensorCore VMEM


def positional_wise_feed_forward(x, w1, b1, w2, b2, gamma, beta, *,
                                 eps=1e-5, tm=None, tf=None,
                                 matmul_dtype=jnp.bfloat16):
    """x: (B, S, D); w1: (D, F); b1: (F,); w2: (F, D); b2/gamma/beta: (D,)."""
    B, S, D = x.shape
    F = w1.shape[1]
    rows = B * S

    if tm is None:
        tm = _pick_tm(rows)
    assert tm % 8 == 0, "row tile must be a multiple of 8 (sublanes)"

    # Weights go to the MXU-native dtype once, here (not per grid step).
    w1c = w1.astype(matmul_dtype)
    w2c = w2.astype(matmul_dtype)
    w_itemsize = jnp.dtype(matmul_dtype).itemsize
    x_itemsize = jnp.dtype(x.dtype).itemsize

    vmem_cap = _vmem_capacity_bytes()
    if tf is None:
        tf = _pick_tf(D, F, w_itemsize, budget_bytes=vmem_cap // 4)
    assert F % tf == 0 and (tf == F or tf % 128 == 0)
    nf = F // tf

    # Flatten positions.  Prefer tm | rows (no pad); pad only as a fallback
    # (jnp.pad costs an extra HBM round-trip of x).  Padded rows are
    # layer-normalized independently and sliced off, so they are inert.
    x2 = x.reshape(rows, D)
    rows_p = pl.cdiv(rows, tm) * tm
    if rows_p != rows:
        x2 = jnp.pad(x2, ((0, rows_p - rows), (0, 0)))
    nr = rows_p // tm

    # Small params pre-cast to the f32 compute dtype; b2/gamma/beta stacked
    # into a single (3, D) operand.
    b1f = b1.reshape(1, F).astype(jnp.float32)
    lnp = jnp.stack([b2, gamma, beta], axis=0).astype(jnp.float32)   # (3, D)

    # Advisory cost hint for XLA's scheduler.
    cost = pl.CostEstimate(
        flops=int(4 * rows_p * D * F + 10 * rows_p * D),
        transcendentals=int(rows_p),                       # one rsqrt per row
        bytes_accessed=int(2 * rows_p * D * x_itemsize
                           + 2 * D * F * w_itemsize
                           + (F + 3 * D) * 4),
    )

    # VMEM footprint: x/out tiles (double-buffered), weight/bias tiles,
    # accumulator scratch, f32 intermediates (h + LN temps) and bf16 operand
    # copies.  Request ~2x with a 32 MiB floor, clamped below physical VMEM.
    vmem_need = (2 * 2 * tm * D * x_itemsize          # x + out tiles
                 + 2 * 2 * D * tf * w_itemsize        # W1 + W2 tiles (<= 2 bufs)
                 + 2 * (tf + 3 * D) * 4               # b1 tile + lnp
                 + tm * D * 4                         # acc scratch
                 + 4 * tm * (tf + 3 * D)              # h + LN temporaries
                 + 2 * tm * (tf + D))                 # bf16 operand copies
    vmem_limit = int(min(max(2 * vmem_need, 32 << 20), vmem_cap - (4 << 20)))

    kernel = functools.partial(_ffn_ln_kernel, eps=eps)
    resident = (nf == 1)

    def _run(single_buffer_consts):
        def const_spec(shape, index_map, is_const):
            # Constant-index operands never change block -> one buffer suffices.
            if single_buffer_consts and is_const:
                return pl.BlockSpec(shape, index_map, pipeline_mode=pl.Buffered(1))
            return pl.BlockSpec(shape, index_map)

        in_specs = [
            pl.BlockSpec((tm, D), lambda i, f: (i, 0)),             # x row tile
            const_spec((D, tf), lambda i, f: (0, f), resident),     # W1
            const_spec((1, tf), lambda i, f: (0, f), resident),     # b1
            const_spec((tf, D), lambda i, f: (f, 0), resident),     # W2
            const_spec((3, D), lambda i, f: (0, 0), True),          # b2/gamma/beta
        ]
        out = pl.pallas_call(
            kernel,
            out_shape=jax.ShapeDtypeStruct((rows_p, D), x.dtype),
            grid_spec=pltpu.PrefetchScalarGridSpec(
                num_scalar_prefetch=0,
                grid=(nr, nf),
                in_specs=in_specs,
                out_specs=pl.BlockSpec((tm, D), lambda i, f: (i, 0)),
                scratch_shapes=[pltpu.VMEM((tm, D), jnp.float32)],
            ),
            compiler_params=pltpu.CompilerParams(
                dimension_semantics=("parallel", "arbitrary"),
                vmem_limit_bytes=vmem_limit),
            cost_estimate=cost,
        )(x2, w1c, b1f, w2c, lnp)
        return jax.block_until_ready(out)

    try:
        out2 = _run(single_buffer_consts=True)
    except Exception:
        # pl.Buffered(1) not accepted by this jax build: use default buffering.
        out2 = _run(single_buffer_consts=False)

    if rows_p != rows:
        out2 = out2[:rows]
    return out2.reshape(B, S, D)


def _reference(x, w1, b1, w2, b2, gamma, beta, eps=1e-5):
    h = jnp.maximum(jnp.einsum("bsd,df->bsf", x, w1) + b1, 0.0)
    y = jnp.einsum("bsf,fd->bsd", h, w2) + b2
    r = x + y
    mean = jnp.mean(r, axis=-1, keepdims=True)
    var = jnp.mean((r - mean) ** 2, axis=-1, keepdims=True)
    return (r - mean) * jax.lax.rsqrt(var + eps) * gamma + beta


if __name__ == "__main__":
    # Scaled-down model_dim=512 / ffn_dim=2048 shapes.  rows = B*S = 1024 so
    # the auto-picked row tile (tm=512) gives an even 2-step "parallel" row
    # grid that shards across v7x's two TensorCores (no-op on v5e/v6e) and
    # divides rows exactly (no jnp.pad round-trip).
    B, S = 2, 512
    D, Fdim = 128, 512

    key = jax.random.PRNGKey(0)
    kx, k1, kb1, k2, kb2, kg, kb = jax.random.split(key, 7)

    x = jax.random.normal(kx, (B, S, D), dtype=jnp.float32)
    # Conv1d(model_dim, ffn_dim, 1) weight == dense (D -> F); stored as (D, F).
    w1 = jax.random.normal(k1, (D, Fdim), dtype=jnp.float32) * (1.0 / D ** 0.5)
    b1 = jax.random.normal(kb1, (Fdim,), dtype=jnp.float32) * 0.02
    w2 = jax.random.normal(k2, (Fdim, D), dtype=jnp.float32) * (1.0 / Fdim ** 0.5)
    b2 = jax.random.normal(kb2, (D,), dtype=jnp.float32) * 0.02
    gamma = 1.0 + 0.1 * jax.random.normal(kg, (D,), dtype=jnp.float32)
    beta = 0.1 * jax.random.normal(kb, (D,), dtype=jnp.float32)

    ref = _reference(x, w1, b1, w2, b2, gamma, beta)

    # Resident-weights path (nf == 1).
    out = positional_wise_feed_forward(x, w1, b1, w2, b2, gamma, beta)
    out = jax.block_until_ready(out)
    assert out.shape == (B, S, D)
    # bf16 MXU operands / f32 accumulation & LayerNorm vs full-f32 reference.
    assert jnp.allclose(out, ref, atol=5e-2, rtol=5e-2), "mismatch vs reference"

    # Streamed-F accumulator path (tf=256 -> 2 F-steps) exercises pl.when init
    # and the (tm, D) accumulator; must match the resident path.
    out_t = positional_wise_feed_forward(x, w1, b1, w2, b2, gamma, beta, tf=256)
    out_t = jax.block_until_ready(out_t)
    assert jnp.allclose(out_t, ref, atol=5e-2, rtol=5e-2), "mismatch (F-tiled) vs reference"
    assert jnp.allclose(out, out_t, atol=1e-3, rtol=1e-3), "resident vs F-tiled mismatch"

    # TODO(synk): dropout(p=0.0) is an identity and is omitted; a non-zero
    # rate would need pltpu.prng_seed / prng_random_bits inside the kernel.
    print("KERNEL_OK")
</pallas_src>

<mosaic_0001>
module attributes {stable_mosaic.version = 11 : i64} {
  func.func @_ffn_ln_kernel(%arg0: i32, %arg1: i32, %arg2: memref<512x128xf32, #tpu.memory_space<vmem>>, %arg3: memref<128x512xbf16, #tpu.memory_space<vmem>>, %arg4: memref<1x512xf32, #tpu.memory_space<vmem>>, %arg5: memref<512x128xbf16, #tpu.memory_space<vmem>>, %arg6: memref<3x128xf32, #tpu.memory_space<vmem>>, %arg7: memref<512x128xf32, #tpu.memory_space<vmem>>, %arg8: memref<512x128xf32, #tpu.memory_space<vmem>>) attributes {dimension_semantics = [#tpu.dimension_semantics<parallel>, #tpu.dimension_semantics<arbitrary>], iteration_bounds = array<i64: 2, 1>, scalar_prefetch = 0 : i64, scratch_operands = 1 : i64, tpu.core_type = #tpu.core_type<tc>, window_params = [{transform_indices = @transform_0, window_bounds = array<i64: 512, 128>}, {pipeline_mode = #tpu.pipeline_mode<synchronous>, transform_indices = @transform_1, window_bounds = array<i64: 128, 512>}, {pipeline_mode = #tpu.pipeline_mode<synchronous>, transform_indices = @transform_2, window_bounds = array<i64: 1, 512>}, {pipeline_mode = #tpu.pipeline_mode<synchronous>, transform_indices = @transform_3, window_bounds = array<i64: 512, 128>}, {pipeline_mode = #tpu.pipeline_mode<synchronous>, transform_indices = @transform_4, window_bounds = array<i64: 3, 128>}, {transform_indices = @transform_5, window_bounds = array<i64: 512, 128>}]} {
    %c0_i32 = arith.constant 0 : i32
    %0 = arith.cmpi eq, %arg1, %c0_i32 : i32
    %1 = arith.extui %0 : i1 to i32
    %c0_i32_0 = arith.constant 0 : i32
    %2 = arith.cmpi ne, %1, %c0_i32_0 : i32
    scf.if %2 {
      %cst_16 = arith.constant 0.000000e+00 : f32
      %21 = vector.broadcast %cst_16 : f32 to vector<512x128xf32>
      %c0_17 = arith.constant 0 : index
      %c0_18 = arith.constant 0 : index
      %22 = vector.load %arg8[%c0_17, %c0_18] : memref<512x128xf32, #tpu.memory_space<vmem>>, vector<512x128xf32>
      tpu.vector_store %arg8[%c0_17, %c0_18], %21 {strides = array<i32>} : memref<512x128xf32, #tpu.memory_space<vmem>>, vector<512x128xf32>,
    } else {
    }
    %c0 = arith.constant 0 : index
    %c0_1 = arith.constant 0 : index
    %3 = vector.load %arg2[%c0, %c0_1] : memref<512x128xf32, #tpu.memory_space<vmem>>, vector<512x128xf32>
    %4 = arith.truncf %3 : vector<512x128xf32> to vector<512x128xbf16>
    %c0_2 = arith.constant 0 : index
    %c0_3 = arith.constant 0 : index
    %5 = vector.load %arg3[%c0_2, %c0_3] : memref<128x512xbf16, #tpu.memory_space<vmem>>, vector<128x512xbf16>
    %cst = arith.constant dense<0.000000e+00> : vector<512x512xf32>
    %6 = tpu.matmul %4, %5, %cst {dimension_numbers = #tpu.dot_dimension_numbers<[1], [0], [0], [1], [0, 0, 1, 1], [], []>} : vector<512x128xbf16>, vector<128x512xbf16>, vector<512x512xf32> -> vector<512x512xf32>
    %c0_4 = arith.constant 0 : index
    %c0_5 = arith.constant 0 : index
    %7 = vector.load %arg4[%c0_4, %c0_5] : memref<1x512xf32, #tpu.memory_space<vmem>>, vector<1x512xf32>
    %8 = vector.broadcast %7 : vector<1x512xf32> to vector<512x512xf32>
    %9 = arith.addf %6, %8 : vector<512x512xf32>
    %cst_6 = arith.constant 0.000000e+00 : f32
    %10 = vector.broadcast %cst_6 : f32 to vector<512x512xf32>
    %11 = arith.maximumf %9, %10 : vector<512x512xf32>
    %c0_7 = arith.constant 0 : index
    %c0_8 = arith.constant 0 : index
    %12 = vector.load %arg8[%c0_7, %c0_8] : memref<512x128xf32, #tpu.memory_space<vmem>>, vector<512x128xf32>
    %13 = arith.truncf %11 : vector<512x512xf32> to vector<512x512xbf16>
    %c0_9 = arith.constant 0 : index
    %c0_10 = arith.constant 0 : index
    %14 = vector.load %arg5[%c0_9, %c0_10] : memref<512x128xbf16, #tpu.memory_space<vmem>>, vector<512x128xbf16>
    %cst_11 = arith.constant dense<0.000000e+00> : vector<512x128xf32>
    %15 = tpu.matmul %13, %14, %cst_11 {dimension_numbers = #tpu.dot_dimension_numbers<[1], [0], [0], [1], [0, 0, 1, 1], [], []>} : vector<512x512xbf16>, vector<512x128xbf16>, vector<512x128xf32> -> vector<512x128xf32>
    %16 = arith.addf %12, %15 : vector<512x128xf32>
    %c0_12 = arith.constant 0 : index
    %c0_13 = arith.constant 0 : index
    %17 = vector.load %arg8[%c0_12, %c0_13] : memref<512x128xf32, #tpu.memory_space<vmem>>, vector<512x128xf32>
    tpu.vector_store %arg8[%c0_12, %c0_13], %16 {strides = array<i32>} : memref<512x128xf32, #tpu.memory_space<vmem>>, vector<512x128xf32>,
    %c0_i32_14 = arith.constant 0 : i32
    %18 = arith.cmpi eq, %arg1, %c0_i32_14 : i32
    %19 = arith.extui %18 : i1 to i32
    %c0_i32_15 = arith.constant 0 : i32
    %20 = arith.cmpi ne, %19, %c0_i32_15 : i32
    scf.if %20 {
      %c0_16 = arith.constant 0 : index
      %c0_17 = arith.constant 0 : index
      %21 = vector.load %arg8[%c0_16, %c0_17] : memref<512x128xf32, #tpu.memory_space<vmem>>, vector<512x128xf32>
      %22 = arith.addf %3, %21 : vector<512x128xf32>
      %c0_18 = arith.constant 0 : index
      %c0_19 = arith.constant 0 : index
      %23 = vector.load %arg6[%c0_18, %c0_19] : memref<3x128xf32, #tpu.memory_space<vmem>>, vector<1x128xf32>
      %24 = vector.broadcast %23 : vector<1x128xf32> to vector<512x128xf32>
      %25 = arith.addf %22, %24 : vector<512x128xf32>
      %cst_20 = arith.constant dense<0.000000e+00> : vector<512xf32>
      %26 = vector.multi_reduction <add>, %25, %cst_20 [1] : vector<512x128xf32> to vector<512xf32>
      %27 = vector.shape_cast %26 : vector<512xf32> to vector<512x1xf32>
      %cst_21 = arith.constant 1.280000e+02 : f32
      %28 = vector.broadcast %cst_21 : f32 to vector<512x1xf32>
      %29 = arith.divf %27, %28 : vector<512x1xf32>
      %30 = vector.broadcast %29 : vector<512x1xf32> to vector<512x128xf32>
      %31 = arith.subf %25, %30 : vector<512x128xf32>
      %32 = arith.mulf %31, %31 : vector<512x128xf32>
      %cst_22 = arith.constant dense<0.000000e+00> : vector<512xf32>
      %33 = vector.multi_reduction <add>, %32, %cst_22 [1] : vector<512x128xf32> to vector<512xf32>
      %34 = vector.shape_cast %33 : vector<512xf32> to vector<512x1xf32>
      %cst_23 = arith.constant 1.280000e+02 : f32
      %35 = vector.broadcast %cst_23 : f32 to vector<512x1xf32>
      %36 = arith.divf %34, %35 : vector<512x1xf32>
      %cst_24 = arith.constant 9.99999974E-6 : f32
      %37 = vector.broadcast %cst_24 : f32 to vector<512x1xf32>
      %38 = arith.addf %36, %37 : vector<512x1xf32>
      %39 = math.rsqrt %38 : vector<512x1xf32>
      %40 = vector.broadcast %39 : vector<512x1xf32> to vector<512x128xf32>
      %41 = arith.mulf %31, %40 : vector<512x128xf32>
      %c1 = arith.constant 1 : index
      %c0_25 = arith.constant 0 : index
      %42 = vector.load %arg6[%c1, %c0_25] : memref<3x128xf32, #tpu.memory_space<vmem>>, vector<1x128xf32>
      %43 = vector.broadcast %42 : vector<1x128xf32> to vector<512x128xf32>
      %44 = arith.mulf %41, %43 : vector<512x128xf32>
      %c2 = arith.constant 2 : index
      %c0_26 = arith.constant 0 : index
      %45 = vector.load %arg6[%c2, %c0_26] : memref<3x128xf32, #tpu.memory_space<vmem>>, vector<1x128xf32>
      %46 = vector.broadcast %45 : vector<1x128xf32> to vector<512x128xf32>
      %47 = arith.addf %44, %46 : vector<512x128xf32>
      %c0_27 = arith.constant 0 : index
      %c0_28 = arith.constant 0 : index
      %48 = vector.load %arg7[%c0_27, %c0_28] : memref<512x128xf32, #tpu.memory_space<vmem>>, vector<512x128xf32>
      tpu.vector_store %arg7[%c0_27, %c0_28], %47 {strides = array<i32>} : memref<512x128xf32, #tpu.memory_space<vmem>>, vector<512x128xf32>,
    } else {
    }
    return
  }
  func.func @transform_0(%arg0: i32, %arg1: i32) -> (i32, i32) {
    %c0_i32 = arith.constant 0 : i32
    %c0_i32_0 = arith.constant 0 : i32
    return %arg0, %c0_i32 : i32, i32
  }
  func.func @transform_1(%arg0: i32, %arg1: i32) -> (i32, i32) {
    %c0_i32 = arith.constant 0 : i32
    %c0_i32_0 = arith.constant 0 : i32
    return %c0_i32, %arg1 : i32, i32
  }
  func.func @transform_2(%arg0: i32, %arg1: i32) -> (i32, i32) {
    %c0_i32 = arith.constant 0 : i32
    %c0_i32_0 = arith.constant 0 : i32
    return %c0_i32, %arg1 : i32, i32
  }
  func.func @transform_3(%arg0: i32, %arg1: i32) -> (i32, i32) {
    %c0_i32 = arith.constant 0 : i32
    %c0_i32_0 = arith.constant 0 : i32
    return %arg1, %c0_i32 : i32, i32
  }
  func.func @transform_4(%arg0: i32, %arg1: i32) -> (i32, i32) {
    %c0_i32 = arith.constant 0 : i32
    %c0_i32_0 = arith.constant 0 : i32
    %c0_i32_1 = arith.constant 0 : i32
    return %c0_i32, %c0_i32_0 : i32, i32
  }
  func.func @transform_5(%arg0: i32, %arg1: i32) -> (i32, i32) {
    %c0_i32 = arith.constant 0 : i32
    %c0_i32_0 = arith.constant 0 : i32
    return %arg0, %c0_i32 : i32, i32
  }
}

module attributes {stable_mosaic.version = 11 : i64} {
  func.func @_ffn_ln_kernel(%arg0: i32, %arg1: i32, %arg2: memref<512x128xf32, #tpu.memory_space<vmem>>, %arg3: memref<128x512xbf16, #tpu.memory_space<vmem>>, %arg4: memref<1x512xf32, #tpu.memory_space<vmem>>, %arg5: memref<512x128xbf16, #tpu.memory_space<vmem>>, %arg6: memref<3x128xf32, #tpu.memory_space<vmem>>, %arg7: memref<512x128xf32, #tpu.memory_space<vmem>>, %arg8: memref<512x128xf32, #tpu.memory_space<vmem>>) attributes {dimension_semantics = [#tpu.dimension_semantics<parallel>, #tpu.dimension_semantics<arbitrary>], iteration_bounds = array<i64: 2, 1>, scalar_prefetch = 0 : i64, scratch_operands = 1 : i64, tpu.core_type = #tpu.core_type<tc>, window_params = [{transform_indices = @transform_0, window_bounds = array<i64: 512, 128>}, {transform_indices = @transform_1, window_bounds = array<i64: 128, 512>}, {transform_indices = @transform_2, window_bounds = array<i64: 1, 512>}, {transform_indices = @transform_3, window_bounds = array<i64: 512, 128>}, {pipeline_mode = #tpu.pipeline_mode<synchronous>, transform_indices = @transform_4, window_bounds = array<i64: 3, 128>}, {transform_indices = @transform_5, window_bounds = array<i64: 512, 128>}]} {
    %c0_i32 = arith.constant 0 : i32
    %0 = arith.cmpi eq, %arg1, %c0_i32 : i32
    %1 = arith.extui %0 : i1 to i32
    %c0_i32_0 = arith.constant 0 : i32
    %2 = arith.cmpi ne, %1, %c0_i32_0 : i32
    scf.if %2 {
      %cst_16 = arith.constant 0.000000e+00 : f32
      %21 = vector.broadcast %cst_16 : f32 to vector<512x128xf32>
      %c0_17 = arith.constant 0 : index
      %c0_18 = arith.constant 0 : index
      %22 = vector.load %arg8[%c0_17, %c0_18] : memref<512x128xf32, #tpu.memory_space<vmem>>, vector<512x128xf32>
      tpu.vector_store %arg8[%c0_17, %c0_18], %21 {strides = array<i32>} : memref<512x128xf32, #tpu.memory_space<vmem>>, vector<512x128xf32>,
    } else {
    }
    %c0 = arith.constant 0 : index
    %c0_1 = arith.constant 0 : index
    %3 = vector.load %arg2[%c0, %c0_1] : memref<512x128xf32, #tpu.memory_space<vmem>>, vector<512x128xf32>
    %4 = arith.truncf %3 : vector<512x128xf32> to vector<512x128xbf16>
    %c0_2 = arith.constant 0 : index
    %c0_3 = arith.constant 0 : index
    %5 = vector.load %arg3[%c0_2, %c0_3] : memref<128x512xbf16, #tpu.memory_space<vmem>>, vector<128x512xbf16>
    %cst = arith.constant dense<0.000000e+00> : vector<512x512xf32>
    %6 = tpu.matmul %4, %5, %cst {dimension_numbers = #tpu.dot_dimension_numbers<[1], [0], [0], [1], [0, 0, 1, 1], [], []>} : vector<512x128xbf16>, vector<128x512xbf16>, vector<512x512xf32> -> vector<512x512xf32>
    %c0_4 = arith.constant 0 : index
    %c0_5 = arith.constant 0 : index
    %7 = vector.load %arg4[%c0_4, %c0_5] : memref<1x512xf32, #tpu.memory_space<vmem>>, vector<1x512xf32>
    %8 = vector.broadcast %7 : vector<1x512xf32> to vector<512x512xf32>
    %9 = arith.addf %6, %8 : vector<512x512xf32>
    %cst_6 = arith.constant 0.000000e+00 : f32
    %10 = vector.broadcast %cst_6 : f32 to vector<512x512xf32>
    %11 = arith.maximumf %9, %10 : vector<512x512xf32>
    %c0_7 = arith.constant 0 : index
    %c0_8 = arith.constant 0 : index
    %12 = vector.load %arg8[%c0_7, %c0_8] : memref<512x128xf32, #tpu.memory_space<vmem>>, vector<512x128xf32>
    %13 = arith.truncf %11 : vector<512x512xf32> to vector<512x512xbf16>
    %c0_9 = arith.constant 0 : index
    %c0_10 = arith.constant 0 : index
    %14 = vector.load %arg5[%c0_9, %c0_10] : memref<512x128xbf16, #tpu.memory_space<vmem>>, vector<512x128xbf16>
    %cst_11 = arith.constant dense<0.000000e+00> : vector<512x128xf32>
    %15 = tpu.matmul %13, %14, %cst_11 {dimension_numbers = #tpu.dot_dimension_numbers<[1], [0], [0], [1], [0, 0, 1, 1], [], []>} : vector<512x512xbf16>, vector<512x128xbf16>, vector<512x128xf32> -> vector<512x128xf32>
    %16 = arith.addf %12, %15 : vector<512x128xf32>
    %c0_12 = arith.constant 0 : index
    %c0_13 = arith.constant 0 : index
    %17 = vector.load %arg8[%c0_12, %c0_13] : memref<512x128xf32, #tpu.memory_space<vmem>>, vector<512x128xf32>
    tpu.vector_store %arg8[%c0_12, %c0_13], %16 {strides = array<i32>} : memref<512x128xf32, #tpu.memory_space<vmem>>, vector<512x128xf32>,
    %c0_i32_14 = arith.constant 0 : i32
    %18 = arith.cmpi eq, %arg1, %c0_i32_14 : i32
    %19 = arith.extui %18 : i1 to i32
    %c0_i32_15 = arith.constant 0 : i32
    %20 = arith.cmpi ne, %19, %c0_i32_15 : i32
    scf.if %20 {
      %c0_16 = arith.constant 0 : index
      %c0_17 = arith.constant 0 : index
      %21 = vector.load %arg8[%c0_16, %c0_17] : memref<512x128xf32, #tpu.memory_space<vmem>>, vector<512x128xf32>
      %22 = arith.addf %3, %21 : vector<512x128xf32>
      %c0_18 = arith.constant 0 : index
      %c0_19 = arith.constant 0 : index
      %23 = vector.load %arg6[%c0_18, %c0_19] : memref<3x128xf32, #tpu.memory_space<vmem>>, vector<1x128xf32>
      %24 = vector.broadcast %23 : vector<1x128xf32> to vector<512x128xf32>
      %25 = arith.addf %22, %24 : vector<512x128xf32>
      %cst_20 = arith.constant dense<0.000000e+00> : vector<512xf32>
      %26 = vector.multi_reduction <add>, %25, %cst_20 [1] : vector<512x128xf32> to vector<512xf32>
      %27 = vector.shape_cast %26 : vector<512xf32> to vector<512x1xf32>
      %cst_21 = arith.constant 1.280000e+02 : f32
      %28 = vector.broadcast %cst_21 : f32 to vector<512x1xf32>
      %29 = arith.divf %27, %28 : vector<512x1xf32>
      %30 = vector.broadcast %29 : vector<512x1xf32> to vector<512x128xf32>
      %31 = arith.subf %25, %30 : vector<512x128xf32>
      %32 = arith.mulf %31, %31 : vector<512x128xf32>
      %cst_22 = arith.constant dense<0.000000e+00> : vector<512xf32>
      %33 = vector.multi_reduction <add>, %32, %cst_22 [1] : vector<512x128xf32> to vector<512xf32>
      %34 = vector.shape_cast %33 : vector<512xf32> to vector<512x1xf32>
      %cst_23 = arith.constant 1.280000e+02 : f32
      %35 = vector.broadcast %cst_23 : f32 to vector<512x1xf32>
      %36 = arith.divf %34, %35 : vector<512x1xf32>
      %cst_24 = arith.constant 9.99999974E-6 : f32
      %37 = vector.broadcast %cst_24 : f32 to vector<512x1xf32>
      %38 = arith.addf %36, %37 : vector<512x1xf32>
      %39 = math.rsqrt %38 : vector<512x1xf32>
      %40 = vector.broadcast %39 : vector<512x1xf32> to vector<512x128xf32>
      %41 = arith.mulf %31, %40 : vector<512x128xf32>
      %c1 = arith.constant 1 : index
      %c0_25 = arith.constant 0 : index
      %42 = vector.load %arg6[%c1, %c0_25] : memref<3x128xf32, #tpu.memory_space<vmem>>, vector<1x128xf32>
      %43 = vector.broadcast %42 : vector<1x128xf32> to vector<512x128xf32>
      %44 = arith.mulf %41, %43 : vector<512x128xf32>
      %c2 = arith.constant 2 : index
      %c0_26 = arith.constant 0 : index
      %45 = vector.load %arg6[%c2, %c0_26] : memref<3x128xf32, #tpu.memory_space<vmem>>, vector<1x128xf32>
      %46 = vector.broadcast %45 : vector<1x128xf32> to vector<512x128xf32>
      %47 = arith.addf %44, %46 : vector<512x128xf32>
      %c0_27 = arith.constant 0 : index
      %c0_28 = arith.constant 0 : index
      %48 = vector.load %arg7[%c0_27, %c0_28] : memref<512x128xf32, #tpu.memory_space<vmem>>, vector<512x128xf32>
      tpu.vector_store %arg7[%c0_27, %c0_28], %47 {strides = array<i32>} : memref<512x128xf32, #tpu.memory_space<vmem>>, vector<512x128xf32>,
    } else {
    }
    return
  }
  func.func @transform_0(%arg0: i32, %arg1: i32) -> (i32, i32) {
    %c0_i32 = arith.constant 0 : i32
    %c0_i32_0 = arith.constant 0 : i32
    return %arg0, %c0_i32 : i32, i32
  }
  func.func @transform_1(%arg0: i32, %arg1: i32) -> (i32, i32) {
    %c0_i32 = arith.constant 0 : i32
    %c0_i32_0 = arith.constant 0 : i32
    return %c0_i32, %arg1 : i32, i32
  }
  func.func @transform_2(%arg0: i32, %arg1: i32) -> (i32, i32) {
    %c0_i32 = arith.constant 0 : i32
    %c0_i32_0 = arith.constant 0 : i32
    return %c0_i32, %arg1 : i32, i32
  }
  func.func @transform_3(%arg0: i32, %arg1: i32) -> (i32, i32) {
    %c0_i32 = arith.constant 0 : i32
    %c0_i32_0 = arith.constant 0 : i32
    return %arg1, %c0_i32 : i32, i32
  }
  func.func @transform_4(%arg0: i32, %arg1: i32) -> (i32, i32) {
    %c0_i32 = arith.constant 0 : i32
    %c0_i32_0 = arith.constant 0 : i32
    %c0_i32_1 = arith.constant 0 : i32
    return %c0_i32, %c0_i32_0 : i32, i32
  }
  func.func @transform_5(%arg0: i32, %arg1: i32) -> (i32, i32) {
    %c0_i32 = arith.constant 0 : i32
    %c0_i32_0 = arith.constant 0 : i32
    return %arg0, %c0_i32 : i32, i32
  }
}

</mosaic_0001>

<llo_original>
// kernel: tpu_custom_call.1
$region0: #{tpu_custom_call.1}
  #allocation0 [shape = 'u32[]', space=smem, size = 0x4, offset = 0x4, fixed_abs, tag = 'smem constant byte address 0x4 - core index']
  #allocation1 [shape = 'u32[144,128]{1,0:T(1,128)}', space=vmem, size = 0x12000, scoped, tag = 'internal scratch']
  #allocation2 [shape = 'f32[512,128]{1,0:T(8,128)}', space=vmem, size = 0x40000, scoped, tag = 'scratch operand']
  %s0 = inlined_call_operand.hbm [shape: f32[1024,128], index: 0, kind: input, shape index: {}]
  %s1 = inlined_call_operand.hbm [shape: bf16[128,512], index: 1, kind: input, shape index: {}]
  %s2 = inlined_call_operand.vmem [shape: f32[1,512], index: 2, kind: input, shape index: {}]
  %s3 = inlined_call_operand.hbm [shape: bf16[512,128], index: 3, kind: input, shape index: {}]
  %s4 = inlined_call_operand.vmem [shape: f32[3,128], index: 4, kind: input, shape index: {}]
  %s5 = inlined_call_operand.hbm [shape: f32[1024,128], index: 5, kind: output, shape index: {}]
  %s6 = sld [smem:[#allocation0]]
  $region73: #{tpu_custom_call.1} parent=0
    _
  %s8 = ssub.s32 1, %s6
  %s9 = scalar_select 0, %s8, %s6
  $region1: #{tpu_custom_call.1} parent=0
    #allocation3 [shape = 'u8[524288]{0}', space=vmem, size = 0x80000, scoped, tag = 'input window, operand 0']
    #allocation4 [shape = 's32[2]{0}', space=sflag, size = 0x8, scoped, tag = 'scoped memory for tpu_custom_call.1']
    #allocation5 [shape = 's32[2]{0}', space=sflag, size = 0x8, scoped, tag = 'scoped memory for tpu_custom_call.1']
    #allocation6 [shape = 'u8[131072]{0}', space=vmem, size = 0x20000, scoped, tag = 'input window, operand 1, single buffered']
    #allocation7 [shape = 's32[1]{0}', space=sflag, size = 0x4, scoped, tag = 'scoped memory for tpu_custom_call.1']
    #allocation8 [shape = 'u8[131072]{0}', space=vmem, size = 0x20000, scoped, tag = 'input window, operand 3, single buffered']
    #allocation9 [shape = 'u8[524288]{0}', space=vmem, size = 0x80000, scoped, tag = 'output window, operand 0']
    %10 = vsyncpa [#allocation4], 0
    %s11 = scalar_lea.sflag [#allocation4], 1
    %12 = vsyncpa %s11, 0
    %13 = vsyncpa [#allocation7], 0
    %14 = vsyncpa [#allocation5], 0
    %s15 = scalar_lea.sflag [#allocation5], 1
    %16 = vsyncpa %s15, 0
    loop: start=0, step=1, limit=4
    $region2: #{tpu_custom_call.1} parent=1 // loop_pre_header
      _
    $region3: #{tpu_custom_call.1} parent=1 // loop_header
      %s18 = sphi 0, %s22
      %p19 = scmp.ge.s32.totalorder %s18, 4
      %s25 = sphi 0, %s37
      %s26 = sphi 0, %s33
      %s27 = sphi 0, %s25
      %s28 = sphi 0, %s26
      %s29 = sphi 0, %s27
      %s30 = sphi 0, %s28
      %s40 = sphi 0, %s42
      %s43 = sphi 0, %s40
      %s44 = sphi 0, %s43
      %s60 = sphi 0, %s44
      %s66 = sphi 0, %s68
      %s69 = sphi 0, %s66
      %s70 = sphi 0, %s69
      %s86 = sphi 0, %s70
      %s92 = sphi 0, %s94
      %s95 = sphi 0, %s92
      %s96 = sphi 0, %s95
      %s112 = sphi 0, %s96
      %s118 = sphi 0, %s120
      %s121 = sphi 0, %s118
      %s122 = sphi 0, %s121
      %s138 = sphi 0, %s122
      %s142 = sphi 0, %s142
      %s144 = sphi 0, %s142
      %s145 = sphi 0, %s144
      %s159 = sphi 0, %s145
      %s165 = sphi 0, %s167
      %s168 = sphi 0, %s165
      %s169 = sphi 0, %s168
      %s185 = sphi 0, %s169
    $region4: #{tpu_custom_call.1} parent=1 // loop_header_branch
      %21 = sbr.rel (%p19) target = $region8
    $region5: #{tpu_custom_call.1} parent=1 // loop_body
      %s23 = ssub.s32 %s18, 1
      %s24 = ssub.s32 %s18, 2
      %s31 = sadd.s32 1, %s26
      %p32 = scmp.ge.s32.totalorder %s31, 1
      %s33 = scalar_select %p32, 0, %s31
      %s34 = sadd.s32 1, %s25
      %s35 = scalar_select %p32, %s34, %s25
      %p36 = scmp.ge.s32.totalorder %s35, 2
      %s37 = scalar_select %p36, 0, %s35
      %s38 = ssub.s32 %s25, %s37
      %p39 = scmp.eq.s32.totalorder %s38, 0
      %s41 = sadd.s32 %s40, 1
      %s42 = scalar_select %p39, %s40, %s41
      %p45 = pneg %p39
      %p46 = scmp.eq.s32.totalorder %s18, 1
      %p47 = por %p45, %p46
      %p48 = scmp.ne.s32.totalorder %s40, %s43
      %p49 = scmp.eq.s32.totalorder %s18, 0
      %p50 = por %p48, %p49
      %p51 = scmp.ne.s32.totalorder %s40, %s43
      %p52 = scmp.eq.s32.totalorder %s23, 1
      %p53 = por %p51, %p52
      %p54 = scmp.ne.s32.totalorder %s43, %s44
      %p55 = scmp.eq.s32.totalorder %s23, 0
      %p56 = por %p54, %p55
      %p57 = scmp.ne.s32.totalorder %s43, %s44
      %p58 = scmp.eq.s32.totalorder %s24, 1
      %p59 = por %p57, %p58
      %p61 = scmp.ne.s32.totalorder %s44, %s60
      %p62 = scmp.eq.s32.totalorder %s24, 0
      %p63 = por %p61, %p62
      %s64 = ssub.s32 %s26, %s33
      %p65 = scmp.eq.s32.totalorder %s64, 0
      %s67 = sadd.s32 %s66, 1
      %s68 = scalar_select %p65, %s66, %s67
      %p71 = pneg %p65
      %p72 = scmp.eq.s32.totalorder %s18, 1
      %p73 = por %p71, %p72
      %p74 = scmp.ne.s32.totalorder %s66, %s69
      %p75 = scmp.eq.s32.totalorder %s18, 0
      %p76 = por %p74, %p75
      %p77 = scmp.ne.s32.totalorder %s66, %s69
      %p78 = scmp.eq.s32.totalorder %s23, 1
      %p79 = por %p77, %p78
      %p80 = scmp.ne.s32.totalorder %s69, %s70
      %p81 = scmp.eq.s32.totalorder %s23, 0
      %p82 = por %p80, %p81
      %p83 = scmp.ne.s32.totalorder %s69, %s70
      %p84 = scmp.eq.s32.totalorder %s24, 1
      %p85 = por %p83, %p84
      %p87 = scmp.ne.s32.totalorder %s70, %s86
      %p88 = scmp.eq.s32.totalorder %s24, 0
      %p89 = por %p87, %p88
      %s90 = ssub.s32 %s26, %s33
      %p91 = scmp.eq.s32.totalorder %s90, 0
      %s93 = sadd.s32 %s92, 1
      %s94 = scalar_select %p91, %s92, %s93
      %p97 = pneg %p91
      %p98 = scmp.eq.s32.totalorder %s18, 1
      %p99 = por %p97, %p98
      %p100 = scmp.ne.s32.totalorder %s92, %s95
      %p101 = scmp.eq.s32.totalorder %s18, 0
      %p102 = por %p100, %p101
      %p103 = scmp.ne.s32.totalorder %s92, %s95
      %p104 = scmp.eq.s32.totalorder %s23, 1
      %p105 = por %p103, %p104
      %p106 = scmp.ne.s32.totalorder %s95, %s96
      %p107 = scmp.eq.s32.totalorder %s23, 0
      %p108 = por %p106, %p107
      %p109 = scmp.ne.s32.totalorder %s95, %s96
      %p110 = scmp.eq.s32.totalorder %s24, 1
      %p111 = por %p109, %p110
      %p113 = scmp.ne.s32.totalorder %s96, %s112
      %p114 = scmp.eq.s32.totalorder %s24, 0
      %p115 = por %p113, %p114
      %s116 = ssub.s32 %s26, %s33
      %p117 = scmp.eq.s32.totalorder %s116, 0
      %s119 = sadd.s32 %s118, 1
      %s120 = scalar_select %p117, %s118, %s119
      %p123 = pneg %p117
      %p124 = scmp.eq.s32.totalorder %s18, 1
      %p125 = por %p123, %p124
      %p126 = scmp.ne.s32.totalorder %s118, %s121
      %p127 = scmp.eq.s32.totalorder %s18, 0
      %p128 = por %p126, %p127
      %p129 = scmp.ne.s32.totalorder %s118, %s121
      %p130 = scmp.eq.s32.totalorder %s23, 1
      %p131 = por %p129, %p130
      %p132 = scmp.ne.s32.totalorder %s121, %s122
      %p133 = scmp.eq.s32.totalorder %s23, 0
      %p134 = por %p132, %p133
      %p135 = scmp.ne.s32.totalorder %s121, %s122
      %p136 = scmp.eq.s32.totalorder %s24, 1
      %p137 = por %p135, %p136
      %p139 = scmp.ne.s32.totalorder %s122, %s138
      %p140 = scmp.eq.s32.totalorder %s24, 0
      %p141 = por %p139, %p140
      %s143 = sadd.s32 %s142, 1
      %p146 = scmp.eq.s32.totalorder %s18, 1
      %p147 = scmp.ne.s32.totalorder %s142, %s144
      %p148 = scmp.eq.s32.totalorder %s18, 0
      %p149 = por %p147, %p148
      %p150 = scmp.ne.s32.totalorder %s142, %s144
      %p151 = scmp.eq.s32.totalorder %s23, 1
      %p152 = por %p150, %p151
      %p153 = scmp.ne.s32.totalorder %s144, %s145
      %p154 = scmp.eq.s32.totalorder %s23, 0
      %p155 = por %p153, %p154
      %p156 = scmp.ne.s32.totalorder %s144, %s145
      %p157 = scmp.eq.s32.totalorder %s24, 1
      %p158 = por %p156, %p157
      %p160 = scmp.ne.s32.totalorder %s145, %s159
      %p161 = scmp.eq.s32.totalorder %s24, 0
      %p162 = por %p160, %p161
      %s163 = ssub.s32 %s25, %s37
      %p164 = scmp.eq.s32.totalorder %s163, 0
      %s166 = sadd.s32 %s165, 1
      %s167 = scalar_select %p164, %s165, %s166
      %p170 = pneg %p164
      %p171 = scmp.eq.s32.totalorder %s18, 1
      %p172 = por %p170, %p171
      %p173 = scmp.ne.s32.totalorder %s165, %s168
      %p174 = scmp.eq.s32.totalorder %s18, 0
      %p175 = por %p173, %p174
      %p176 = scmp.ne.s32.totalorder %s165, %s168
      %p177 = scmp.eq.s32.totalorder %s23, 1
      %p178 = por %p176, %p177
      %p179 = scmp.ne.s32.totalorder %s168, %s169
      %p180 = scmp.eq.s32.totalorder %s23, 0
      %p181 = por %p179, %p180
      %p182 = scmp.ne.s32.totalorder %s168, %s169
      %p183 = scmp.eq.s32.totalorder %s24, 1
      %p184 = por %p182, %p183
      %p186 = scmp.ne.s32.totalorder %s169, %s185
      %p187 = scmp.eq.s32.totalorder %s24, 0
      %p188 = por %p186, %p187
      %p189 = scmp.le.s32.totalorder 1, %s18
      %p190 = scmp.lt.s32.totalorder %s18, 3
      %p191 = pnand %p189, %p190
      %p192 = pneg %p191
      // Predicated region
      $region9: #{tpu_custom_call.1} parent=5 // pred_check
        _
      $region10: #{tpu_custom_call.1} parent=5 // pred_check_branch
        %194 = sbr.rel (%p191) target = $region12
      $region11: #{tpu_custom_call.1} parent=5 // pred_region
        %s195 = ssub.s32 %s18, 1
        // Predicated region
        $region13: #{tpu_custom_call.1} parent=11 // pred_check
          %p196 = pneg %p82
        $region14: #{tpu_custom_call.1} parent=11 // pred_check_branch
          %198 = sbr.rel (%p196) target = $region16
        $region15: #{tpu_custom_call.1} parent=11 // pred_region
          %s199 = smul.u32 4, %s28
          %s201 = ssub.s32 4096, 4096
          %202 = vsyncadd [#allocation7], %s201
          %s203 = smul.addr %s199, 64
          %s204 = scalar_lea.hbm %s1, %s203
          %s205 = sshll.u32 [#allocation6], 4
          %s206 = int_to_ptr.vmem [resolvable:$true] %s205
          %211 = dma.hbm_to_vmem [thread:$0]  %s204, 4096, %s206, [#allocation7], 256, 256, 16
        $region16: #{tpu_custom_call.1} parent=11 // pred_fallthru
          _
        // Predicated region
        $region17: #{tpu_custom_call.1} parent=11 // pred_check
          %p212 = pneg %p108
        $region18: #{tpu_custom_call.1} parent=11 // pred_check_branch
          %214 = sbr.rel (%p212) target = $region20
        $region19: #{tpu_custom_call.1} parent=11 // pred_region
          %s215 = smul.u32 4, %s28
          %p216 = scmp.lt.s32.totalorder %s215, 3
          %s217 = scalar_select %p216, %s215, 3
          %s218 = scalar_lea.vmem %s2, %s217
          %s219 = smul.u32 4, %s28
        $region20: #{tpu_custom_call.1} parent=11 // pred_fallthru
          _
        // Predicated region
        $region21: #{tpu_custom_call.1} parent=11 // pred_check
          %p220 = pneg %p134
        $region22: #{tpu_custom_call.1} parent=11 // pred_check_branch
          %222 = sbr.rel (%p220) target = $region24
        $region23: #{tpu_custom_call.1} parent=11 // pred_region
          %s223 = smul.u32 64, %s28
          %s225 = ssub.s32 4096, 4096
          %226 = vsyncadd [#allocation7], %s225
          %s227 = smul.addr %s223, 64
          %s228 = scalar_lea.hbm %s3, %s227
          %s229 = sshll.u32 [#allocation8], 4
          %s230 = int_to_ptr.vmem [resolvable:$true] %s229
          %235 = dma.hbm_to_vmem [thread:$0]  %s228, 4096, %s230, [#allocation7], 64, 64, 4
        $region24: #{tpu_custom_call.1} parent=11 // pred_fallthru
          _
        // Predicated region
        $region25: #{tpu_custom_call.1} parent=11 // pred_check
          %p236 = pneg %p155
        $region26: #{tpu_custom_call.1} parent=11 // pred_check_branch
          %238 = sbr.rel (%p236) target = $region28
        $region27: #{tpu_custom_call.1} parent=11 // pred_region
          _
        $region28: #{tpu_custom_call.1} parent=11 // pred_fallthru
          _
      $region12: #{tpu_custom_call.1} parent=5 // pred_fallthru
        _
      %p239 = scmp.lt.s32.totalorder %s18, 2
      // Predicated region
      $region29: #{tpu_custom_call.1} parent=5 // pred_check
        %p240 = pneg %p239
      $region30: #{tpu_custom_call.1} parent=5 // pred_check_branch
        %242 = sbr.rel (%p240) target = $region32
      $region31: #{tpu_custom_call.1} parent=5 // pred_region
        // Predicated region
        $region33: #{tpu_custom_call.1} parent=31 // pred_check
          %p243 = pneg %p50
        $region34: #{tpu_custom_call.1} parent=31 // pred_check_branch
          %245 = sbr.rel (%p243) target = $region36
        $region35: #{tpu_custom_call.1} parent=31 // pred_region
          %s246 = sand.u32 %s40, 1
          %s247 = scalar_lea.sflag [#allocation4], %s246
          %s248 = sand.u32 %s40, 1
          %s249 = smul.addr %s248, 512
          %s250 = scalar_lea.vmem [#allocation3], %s249
          %s251 = smul.u32 64, %s25
          %s253 = ssub.s32 8192, 8192
          %254 = vsyncadd %s247, %s253
          %s255 = smul.addr %s251, 128
          %s256 = scalar_lea.hbm %s0, %s255
          %s257 = sshll.u32 %s250, 4
          %s258 = int_to_ptr.vmem [resolvable:$true] %s257
          %263 = dma.hbm_to_vmem [thread:$0]  %s256, 8192, %s258, %s247, 128, 128, 8
        $region36: #{tpu_custom_call.1} parent=31 // pred_fallthru
          _
      $region32: #{tpu_custom_call.1} parent=5 // pred_fallthru
        _
      %p264 = scmp.le.s32.totalorder 1, %s18
      %p265 = scmp.lt.s32.totalorder %s18, 3
      %p266 = pnand %p264, %p265
      %p267 = pneg %p266
      // Predicated region
      $region37: #{tpu_custom_call.1} parent=5 // pred_check
        _
      $region38: #{tpu_custom_call.1} parent=5 // pred_check_branch
        %269 = sbr.rel (%p266) target = $region40
      $region39: #{tpu_custom_call.1} parent=5 // pred_region
        %s270 = ssub.s32 %s18, 1
        %s271 = sand.u32 %s43, 1
        %s272 = scalar_lea.sflag [#allocation4], %s271
        %s273 = sand.u32 %s43, 1
        %s274 = smul.addr %s273, 512
        %s275 = scalar_lea.vmem [#allocation3], %s274
        // Predicated region
        $region41: #{tpu_custom_call.1} parent=39 // pred_check
          %p276 = pneg %p56
        $region42: #{tpu_custom_call.1} parent=39 // pred_check_branch
          %278 = sbr.rel (%p276) target = $region44
        $region43: #{tpu_custom_call.1} parent=39 // pred_region
          %279 = dma.done %s272, 8192
        $region44: #{tpu_custom_call.1} parent=39 // pred_fallthru
          _
        // Predicated region
        $region45: #{tpu_custom_call.1} parent=39 // pred_check
          %p280 = pneg %p82
        $region46: #{tpu_custom_call.1} parent=39 // pred_check_branch
          %282 = sbr.rel (%p280) target = $region48
        $region47: #{tpu_custom_call.1} parent=39 // pred_region
          %283 = dma.done [#allocation7], 4096
        $region48: #{tpu_custom_call.1} parent=39 // pred_fallthru
          _
        // Predicated region
        $region49: #{tpu_custom_call.1} parent=39 // pred_check
          %p284 = pneg %p134
        $region50: #{tpu_custom_call.1} parent=39 // pred_check_branch
          %286 = sbr.rel (%p284) target = $region52
        $region51: #{tpu_custom_call.1} parent=39 // pred_region
          %287 = dma.done [#allocation7], 4096
        $region52: #{tpu_custom_call.1} parent=39 // pred_fallthru
          _
        %s288 = sand.u32 %s43, 1
        %s289 = scalar_lea.sflag [#allocation4], %s288
        %s290 = sand.u32 %s43, 1
        %s291 = smul.addr %s290, 512
        %s292 = scalar_lea.vmem [#allocation3], %s291
        %p293 = pneg %p56
        %p294 = pneg %p53
        %p295 = pneg %p82
        %p296 = pneg %p79
        %s297 = smul.u32 4, %s28
        %p298 = scmp.lt.s32.totalorder %s297, 3
        %s299 = scalar_select %p298, %s297, 3
        %s300 = scalar_lea.vmem %s2, %s299
        %p301 = pneg %p108
        %p302 = pneg %p105
        %p303 = pneg %p134
        %p304 = pneg %p131
        %p305 = pneg %p155
        %p306 = pneg %p152
        %p307 = pneg %p181
        %p308 = pneg %p178
        %s309 = sand.u32 %s168, 1
        %s310 = scalar_lea.sflag [#allocation5], %s309
        %s311 = sand.u32 %s168, 1
        %s312 = smul.addr %s311, 512
        %s313 = scalar_lea.vmem [#allocation9], %s312
        %s314 = smul.u32 64, %s27
        %s315 = smul.u32 4, %s28
        %s316 = smul.u32 4, %s28
        %p317 = scmp.lt.s32.totalorder %s316, 3
        %s318 = scalar_select %p317, %s316, 3
        %s319 = scalar_lea.vmem %s2, %s318
        %s320 = smul.u32 4, %s28
        %s321 = smul.u32 64, %s28
        %s322 = smul.u32 64, %s27
        %p324 = scmp.eq.s32.totalorder %s28, 0
        // Predicated region
        $region53: #{tpu_custom_call.1} parent=39 // pred_check
          %p325 = pneg %p324
        $region54: #{tpu_custom_call.1} parent=39 // pred_check_branch
          %327 = sbr.rel (%p325) target = $region56
        $region55: #{tpu_custom_call.1} parent=39 // pred_region
          %328 = vst [vmem:[#allocation2] sm:$0xff] 0.0
          %329 = vst [vmem:[#allocation2 + $0x8] sm:$0xff] 0.0
          %330 = vst [vmem:[#allocation2 + $0x10] sm:$0xff] 0.0
          %331 = vst [vmem:[#allocation2 + $0x18] sm:$0xff] 0.0
          %332 = vst [vmem:[#allocation2 + $0x20] sm:$0xff] 0.0
          %333 = vst [vmem:[#allocation2 + $0x28] sm:$0xff] 0.0
          %334 = vst [vmem:[#allocation2 + $0x30] sm:$0xff] 0.0
          %335 = vst [vmem:[#allocation2 + $0x38] sm:$0xff] 0.0
          %336 = vst [vmem:[#allocation2 + $0x40] sm:$0xff] 0.0
          %337 = vst [vmem:[#allocation2 + $0x48] sm:$0xff] 0.0
          %338 = vst [vmem:[#allocation2 + $0x50] sm:$0xff] 0.0
          %339 = vst [vmem:[#allocation2 + $0x58] sm:$0xff] 0.0
          %340 = vst [vmem:[#allocation2 + $0x60] sm:$0xff] 0.0
          %341 = vst [vmem:[#allocation2 + $0x68] sm:$0xff] 0.0
          %342 = vst [vmem:[#allocation2 + $0x70] sm:$0xff] 0.0
          %343 = vst [vmem:[#allocation2 + $0x78] sm:$0xff] 0.0
          %344 = vst [vmem:[#allocation2 + $0x80] sm:$0xff] 0.0
          %345 = vst [vmem:[#allocation2 + $0x88] sm:$0xff] 0.0
          %346 = vst [vmem:[#allocation2 + $0x90] sm:$0xff] 0.0
          %347 = vst [vmem:[#allocation2 + $0x98] sm:$0xff] 0.0
          %348 = vst [vmem:[#allocation2 + $0xa0] sm:$0xff] 0.0
          %349 = vst [vmem:[#allocation2 + $0xa8] sm:$0xff] 0.0
          %350 = vst [vmem:[#allocation2 + $0xb0] sm:$0xff] 0.0
          %351 = vst [vmem:[#allocation2 + $0xb8] sm:$0xff] 0.0
          %352 = vst [vmem:[#allocation2 + $0xc0] sm:$0xff] 0.0
          %353 = vst [vmem:[#allocation2 + $0xc8] sm:$0xff] 0.0
          %354 = vst [vmem:[#allocation2 + $0xd0] sm:$0xff] 0.0
          %355 = vst [vmem:[#allocation2 + $0xd8] sm:$0xff] 0.0
          %356 = vst [vmem:[#allocation2 + $0xe0] sm:$0xff] 0.0
          %357 = vst [vmem:[#allocation2 + $0xe8] sm:$0xff] 0.0
          %358 = vst [vmem:[#allocation2 + $0xf0] sm:$0xff] 0.0
          %359 = vst [vmem:[#allocation2 + $0xf8] sm:$0xff] 0.0
          %360 = vst [vmem:[#allocation2 + $0x100] sm:$0xff] 0.0
          %361 = vst [vmem:[#allocation2 + $0x108] sm:$0xff] 0.0
          %362 = vst [vmem:[#allocation2 + $0x110] sm:$0xff] 0.0
          %363 = vst [vmem:[#allocation2 + $0x118] sm:$0xff] 0.0
          %364 = vst [vmem:[#allocation2 + $0x120] sm:$0xff] 0.0
          %365 = vst [vmem:[#allocation2 + $0x128] sm:$0xff] 0.0
          %366 = vst [vmem:[#allocation2 + $0x130] sm:$0xff] 0.0
          %367 = vst [vmem:[#allocation2 + $0x138] sm:$0xff] 0.0
          %368 = vst [vmem:[#allocation2 + $0x140] sm:$0xff] 0.0
          %369 = vst [vmem:[#allocation2 + $0x148] sm:$0xff] 0.0
          %370 = vst [vmem:[#allocation2 + $0x150] sm:$0xff] 0.0
          %371 = vst [vmem:[#allocation2 + $0x158] sm:$0xff] 0.0
          %372 = vst [vmem:[#allocation2 + $0x160] sm:$0xff] 0.0
          %373 = vst [vmem:[#allocation2 + $0x168] sm:$0xff] 0.0
          %374 = vst [vmem:[#allocation2 + $0x170] sm:$0xff] 0.0
          %375 = vst [vmem:[#allocation2 + $0x178] sm:$0xff] 0.0
          %376 = vst [vmem:[#allocation2 + $0x180] sm:$0xff] 0.0
          %377 = vst [vmem:[#allocation2 + $0x188] sm:$0xff] 0.0
          %378 = vst [vmem:[#allocation2 + $0x190] sm:$0xff] 0.0
          %379 = vst [vmem:[#allocation2 + $0x198] sm:$0xff] 0.0
          %380 = vst [vmem:[#allocation2 + $0x1a0] sm:$0xff] 0.0
          %381 = vst [vmem:[#allocation2 + $0x1a8] sm:$0xff] 0.0
          %382 = vst [vmem:[#allocation2 + $0x1b0] sm:$0xff] 0.0
          %383 = vst [vmem:[#allocation2 + $0x1b8] sm:$0xff] 0.0
          %384 = vst [vmem:[#allocation2 + $0x1c0] sm:$0xff] 0.0
          %385 = vst [vmem:[#allocation2 + $0x1c8] sm:$0xff] 0.0
          %386 = vst [vmem:[#allocation2 + $0x1d0] sm:$0xff] 0.0
          %387 = vst [vmem:[#allocation2 + $0x1d8] sm:$0xff] 0.0
          %388 = vst [vmem:[#allocation2 + $0x1e0] sm:$0xff] 0.0
          %389 = vst [vmem:[#allocation2 + $0x1e8] sm:$0xff] 0.0
          %390 = vst [vmem:[#allocation2 + $0x1f0] sm:$0xff] 0.0
          %391 = vst [vmem:[#allocation2 + $0x1f8] sm:$0xff] 0.0
        $region56: #{tpu_custom_call.1} parent=39 // pred_fallthru
          _
        %v392 = vld [vmem:[%s275] sm:$0xff]
        %v393 = vld [vmem:[%s275 + $0x8] sm:$0xff]
        %v394 = vld [vmem:[%s275 + $0x10] sm:$0xff]
        %v395 = vld [vmem:[%s275 + $0x18] sm:$0xff]
        %v396 = vld [vmem:[%s275 + $0x20] sm:$0xff]
        %v397 = vld [vmem:[%s275 + $0x28] sm:$0xff]
        %v398 = vld [vmem:[%s275 + $0x30] sm:$0xff]
        %v399 = vld [vmem:[%s275 + $0x38] sm:$0xff]
        %v400 = vld [vmem:[%s275 + $0x40] sm:$0xff]
        %v401 = vld [vmem:[%s275 + $0x48] sm:$0xff]
        %v402 = vld [vmem:[%s275 + $0x50] sm:$0xff]
        %v403 = vld [vmem:[%s275 + $0x58] sm:$0xff]
        %v404 = vld [vmem:[%s275 + $0x60] sm:$0xff]
        %v405 = vld [vmem:[%s275 + $0x68] sm:$0xff]
        %v406 = vld [vmem:[%s275 + $0x70] sm:$0xff]
        %v407 = vld [vmem:[%s275 + $0x78] sm:$0xff]
        %v408 = vld [vmem:[%s275 + $0x80] sm:$0xff]
        %v409 = vld [vmem:[%s275 + $0x88] sm:$0xff]
        %v410 = vld [vmem:[%s275 + $0x90] sm:$0xff]
        %v411 = vld [vmem:[%s275 + $0x98] sm:$0xff]
        %v412 = vld [vmem:[%s275 + $0xa0] sm:$0xff]
        %v413 = vld [vmem:[%s275 + $0xa8] sm:$0xff]
        %v414 = vld [vmem:[%s275 + $0xb0] sm:$0xff]
        %v415 = vld [vmem:[%s275 + $0xb8] sm:$0xff]
        %v416 = vld [vmem:[%s275 + $0xc0] sm:$0xff]
        %v417 = vld [vmem:[%s275 + $0xc8] sm:$0xff]
        %v418 = vld [vmem:[%s275 + $0xd0] sm:$0xff]
        %v419 = vld [vmem:[%s275 + $0xd8] sm:$0xff]
        %v420 = vld [vmem:[%s275 + $0xe0] sm:$0xff]
        %v421 = vld [vmem:[%s275 + $0xe8] sm:$0xff]
        %v422 = vld [vmem:[%s275 + $0xf0] sm:$0xff]
        %v423 = vld [vmem:[%s275 + $0xf8] sm:$0xff]
        %v424 = vld [vmem:[%s275 + $0x100] sm:$0xff]
        %v425 = vld [vmem:[%s275 + $0x108] sm:$0xff]
        %v426 = vld [vmem:[%s275 + $0x110] sm:$0xff]
        %v427 = vld [vmem:[%s275 + $0x118] sm:$0xff]
        %v428 = vld [vmem:[%s275 + $0x120] sm:$0xff]
        %v429 = vld [vmem:[%s275 + $0x128] sm:$0xff]
        %v430 = vld [vmem:[%s275 + $0x130] sm:$0xff]
        %v431 = vld [vmem:[%s275 + $0x138] sm:$0xff]
        %v432 = vld [vmem:[%s275 + $0x140] sm:$0xff]
        %v433 = vld [vmem:[%s275 + $0x148] sm:$0xff]
        %v434 = vld [vmem:[%s275 + $0x150] sm:$0xff]
        %v435 = vld [vmem:[%s275 + $0x158] sm:$0xff]
        %v436 = vld [vmem:[%s275 + $0x160] sm:$0xff]
        %v437 = vld [vmem:[%s275 + $0x168] sm:$0xff]
        %v438 = vld [vmem:[%s275 + $0x170] sm:$0xff]
        %v439 = vld [vmem:[%s275 + $0x178] sm:$0xff]
        %v440 = vld [vmem:[%s275 + $0x180] sm:$0xff]
        %v441 = vld [vmem:[%s275 + $0x188] sm:$0xff]
        %v442 = vld [vmem:[%s275 + $0x190] sm:$0xff]
        %v443 = vld [vmem:[%s275 + $0x198] sm:$0xff]
        %v444 = vld [vmem:[%s275 + $0x1a0] sm:$0xff]
        %v445 = vld [vmem:[%s275 + $0x1a8] sm:$0xff]
        %v446 = vld [vmem:[%s275 + $0x1b0] sm:$0xff]
        %v447 = vld [vmem:[%s275 + $0x1b8] sm:$0xff]
        %v448 = vld [vmem:[%s275 + $0x1c0] sm:$0xff]
        %v449 = vld [vmem:[%s275 + $0x1c8] sm:$0xff]
        %v450 = vld [vmem:[%s275 + $0x1d0] sm:$0xff]
        %v451 = vld [vmem:[%s275 + $0x1d8] sm:$0xff]
        %v452 = vld [vmem:[%s275 + $0x1e0] sm:$0xff]
        %v453 = vld [vmem:[%s275 + $0x1e8] sm:$0xff]
        %v454 = vld [vmem:[%s275 + $0x1f0] sm:$0xff]
        %v455 = vld [vmem:[%s275 + $0x1f8] sm:$0xff]
        %v456 = vpack.c.bf16 %v393, %v392
        %v457 = vpack.c.bf16 %v395, %v394
        %v458 = vpack.c.bf16 %v397, %v396
        %v459 = vpack.c.bf16 %v399, %v398
        %v460 = vpack.c.bf16 %v401, %v400
        %v461 = vpack.c.bf16 %v403, %v402
        %v462 = vpack.c.bf16 %v405, %v404
        %v463 = vpack.c.bf16 %v407, %v406
        %v464 = vpack.c.bf16 %v409, %v408
        %v465 = vpack.c.bf16 %v411, %v410
        %v466 = vpack.c.bf16 %v413, %v412
        %v467 = vpack.c.bf16 %v415, %v414
        %v468 = vpack.c.bf16 %v417, %v416
        %v469 = vpack.c.bf16 %v419, %v418
        %v470 = vpack.c.bf16 %v421, %v420
        %v471 = vpack.c.bf16 %v423, %v422
        %v472 = vpack.c.bf16 %v425, %v424
        %v473 = vpack.c.bf16 %v427, %v426
        %v474 = vpack.c.bf16 %v429, %v428
        %v475 = vpack.c.bf16 %v431, %v430
        %v476 = vpack.c.bf16 %v433, %v432
        %v477 = vpack.c.bf16 %v435, %v434
        %v478 = vpack.c.bf16 %v437, %v436
        %v479 = vpack.c.bf16 %v439, %v438
        %v480 = vpack.c.bf16 %v441, %v440
        %v481 = vpack.c.bf16 %v443, %v442
        %v482 = vpack.c.bf16 %v445, %v444
        %v483 = vpack.c.bf16 %v447, %v446
        %v484 = vpack.c.bf16 %v449, %v448
        %v485 = vpack.c.bf16 %v451, %v450
        %v486 = vpack.c.bf16 %v453, %v452
        %v487 = vpack.c.bf16 %v455, %v454
        %v488 = vld [vmem:[#allocation6] sm:$0xff]
        %v489 = vld [vmem:[#allocation6 + $0x8] sm:$0xff]
        %v490 = vld [vmem:[#allocation6 + $0x10] sm:$0xff]
        %v491 = vld [vmem:[#allocation6 + $0x18] sm:$0xff]
        %v492 = vld [vmem:[#allocation6 + $0x20] sm:$0xff]
        %v493 = vld [vmem:[#allocation6 + $0x28] sm:$0xff]
        %v494 = vld [vmem:[#allocation6 + $0x30] sm:$0xff]
        %v495 = vld [vmem:[#allocation6 + $0x38] sm:$0xff]
        %v496 = vld [vmem:[#allocation6 + $0x40] sm:$0xff]
        %v497 = vld [vmem:[#allocation6 + $0x48] sm:$0xff]
        %v498 = vld [vmem:[#allocation6 + $0x50] sm:$0xff]
        %v499 = vld [vmem:[#allocation6 + $0x58] sm:$0xff]
        %v500 = vld [vmem:[#allocation6 + $0x60] sm:$0xff]
        %v501 = vld [vmem:[#allocation6 + $0x68] sm:$0xff]
        %v502 = vld [vmem:[#allocation6 + $0x70] sm:$0xff]
        %v503 = vld [vmem:[#allocation6 + $0x78] sm:$0xff]
        %v504 = vld [vmem:[#allocation6 + $0x80] sm:$0xff]
        %v505 = vld [vmem:[#allocation6 + $0x88] sm:$0xff]
        %v506 = vld [vmem:[#allocation6 + $0x90] sm:$0xff]
        %v507 = vld [vmem:[#allocation6 + $0x98] sm:$0xff]
        %v508 = vld [vmem:[#allocation6 + $0xa0] sm:$0xff]
        %v509 = vld [vmem:[#allocation6 + $0xa8] sm:$0xff]
        %v510 = vld [vmem:[#allocation6 + $0xb0] sm:$0xff]
        %v511 = vld [vmem:[#allocation6 + $0xb8] sm:$0xff]
        %v512 = vld [vmem:[#allocation6 + $0xc0] sm:$0xff]
        %v513 = vld [vmem:[#allocation6 + $0xc8] sm:$0xff]
        %v514 = vld [vmem:[#allocation6 + $0xd0] sm:$0xff]
        %v515 = vld [vmem:[#allocation6 + $0xd8] sm:$0xff]
        %v516 = vld [vmem:[#allocation6 + $0xe0] sm:$0xff]
        %v517 = vld [vmem:[#allocation6 + $0xe8] sm:$0xff]
        %v518 = vld [vmem:[#allocation6 + $0xf0] sm:$0xff]
        %v519 = vld [vmem:[#allocation6 + $0xf8] sm:$0xff]
        %v520 = vld [vmem:[%s319] sm:$0xf]
        %v522 = vlaneseq
        %v523 = vshrl.u32 %v522, 7
        %v524 = vsub.s32 0, %v523
        %v525 = vrot.slane %v520, %v524
        %v526 = vlaneseq
        %v527 = vshrl.u32 %v526, 7
        %v528 = vsub.s32 1, %v527
        %v529 = vrot.slane %v520, %v528
        %v530 = vlaneseq
        %v531 = vshrl.u32 %v530, 7
        %v532 = vsub.s32 2, %v531
        %v533 = vrot.slane %v520, %v532
        %v534 = vlaneseq
        %v535 = vshrl.u32 %v534, 7
        %v536 = vsub.s32 3, %v535
        %v537 = vrot.slane %v520, %v536
        %v574 = vunpack.c.l.b16 %v488
        %v575 = vunpack.c.h.b16 %v488
        %v576 = vunpack.c.l.b16 %v489
        %v577 = vunpack.c.h.b16 %v489
        %v578 = vunpack.c.l.b16 %v490
        %v579 = vunpack.c.h.b16 %v490
        %v580 = vunpack.c.l.b16 %v491
        %v581 = vunpack.c.h.b16 %v491
        %v582 = vunpack.c.l.b16 %v492
        %v583 = vunpack.c.h.b16 %v492
        %v584 = vunpack.c.l.b16 %v493
        %v585 = vunpack.c.h.b16 %v493
        %v586 = vunpack.c.l.b16 %v494
        %v587 = vunpack.c.h.b16 %v494
        %v588 = vunpack.c.l.b16 %v495
        %v589 = vunpack.c.h.b16 %v495
        %v590 = vunpack.c.l.b16 %v496
        %v591 = vunpack.c.h.b16 %v496
        %v592 = vunpack.c.l.b16 %v497
        %v593 = vunpack.c.h.b16 %v497
        %v594 = vunpack.c.l.b16 %v498
        %v595 = vunpack.c.h.b16 %v498
        %v596 = vunpack.c.l.b16 %v499
        %v597 = vunpack.c.h.b16 %v499
        %v598 = vunpack.c.l.b16 %v500
        %v599 = vunpack.c.h.b16 %v500
        %v600 = vunpack.c.l.b16 %v501
        %v601 = vunpack.c.h.b16 %v501
        %v602 = vunpack.c.l.b16 %v502
        %v603 = vunpack.c.h.b16 %v502
        %v604 = vunpack.c.l.b16 %v503
        %v605 = vunpack.c.h.b16 %v503
        %v606 = vunpack.c.l.b16 %v504
        %v607 = vunpack.c.h.b16 %v504
        %v608 = vunpack.c.l.b16 %v505
        %v609 = vunpack.c.h.b16 %v505
        %v610 = vunpack.c.l.b16 %v506
        %v611 = vunpack.c.h.b16 %v506
        %v612 = vunpack.c.l.b16 %v507
        %v613 = vunpack.c.h.b16 %v507
        %v614 = vunpack.c.l.b16 %v508
        %v615 = vunpack.c.h.b16 %v508
        %v616 = vunpack.c.l.b16 %v509
        %v617 = vunpack.c.h.b16 %v509
        %v618 = vunpack.c.l.b16 %v510
        %v619 = vunpack.c.h.b16 %v510
        %v620 = vunpack.c.l.b16 %v511
        %v621 = vunpack.c.h.b16 %v511
        %v622 = vunpack.c.l.b16 %v512
        %v623 = vunpack.c.h.b16 %v512
        %v624 = vunpack.c.l.b16 %v513
        %v625 = vunpack.c.h.b16 %v513
        %v626 = vunpack.c.l.b16 %v514
        %v627 = vunpack.c.h.b16 %v514
        %v628 = vunpack.c.l.b16 %v515
        %v629 = vunpack.c.h.b16 %v515
        %v630 = vunpack.c.l.b16 %v516
        %v631 = vunpack.c.h.b16 %v516
        %v632 = vunpack.c.l.b16 %v517
        %v633 = vunpack.c.h.b16 %v517
        %v634 = vunpack.c.l.b16 %v518
        %v635 = vunpack.c.h.b16 %v518
        %v636 = vunpack.c.l.b16 %v519
        %v637 = vunpack.c.h.b16 %v519
        %v638 = vpack.c.b16 %v578, %v574
        %v639 = vpack.c.b16 %v579, %v575
        %v640 = vpack.c.b16 %v580, %v576
        %v641 = vpack.c.b16 %v581, %v577
        %v642 = vpack.c.b16 %v586, %v582
        %v643 = vpack.c.b16 %v587, %v583
        %v644 = vpack.c.b16 %v588, %v584
        %v645 = vpack.c.b16 %v589, %v585
        %v646 = vpack.c.b16 %v594, %v590
        %v647 = vpack.c.b16 %v595, %v591
        %v648 = vpack.c.b16 %v596, %v592
        %v649 = vpack.c.b16 %v597, %v593
        %v650 = vpack.c.b16 %v602, %v598
        %v651 = vpack.c.b16 %v603, %v599
        %v652 = vpack.c.b16 %v604, %v600
        %v653 = vpack.c.b16 %v605, %v601
        %v654 = vpack.c.b16 %v610, %v606
        %v655 = vpack.c.b16 %v611, %v607
        %v656 = vpack.c.b16 %v612, %v608
        %v657 = vpack.c.b16 %v613, %v609
        %v658 = vpack.c.b16 %v618, %v614
        %v659 = vpack.c.b16 %v619, %v615
        %v660 = vpack.c.b16 %v620, %v616
        %v661 = vpack.c.b16 %v621, %v617
        %v662 = vpack.c.b16 %v626, %v622
        %v663 = vpack.c.b16 %v627, %v623
        %v664 = vpack.c.b16 %v628, %v624
        %v665 = vpack.c.b16 %v629, %v625
        %v666 = vpack.c.b16 %v634, %v630
        %v667 = vpack.c.b16 %v635, %v631
        %v668 = vpack.c.b16 %v636, %v632
        %v669 = vpack.c.b16 %v637, %v633
        %702 = vmatprep.subr.bf16.mxu0 %v639
        %703 = vmatpush1.bf16.msra.mxu0 %v638
        %704 = vmatprep.subr.bf16.mxu0 %v643
        %705 = vmatpush1.bf16.msra.mxu0 %v642
        %706 = vmatprep.subr.bf16.mxu0 %v647
        %707 = vmatpush1.bf16.msra.mxu0 %v646
        %708 = vmatprep.subr.bf16.mxu0 %v651
        %709 = vmatpush1.bf16.msra.mxu0 %v650
        %710 = vmatprep.subr.bf16.mxu0 %v655
        %711 = vmatpush1.bf16.msra.mxu0 %v654
        %712 = vmatprep.subr.bf16.mxu0 %v659
        %713 = vmatpush1.bf16.msra.mxu0 %v658
        %714 = vmatprep.subr.bf16.mxu0 %v663
        %715 = vmatpush1.bf16.msra.mxu0 %v662
        %716 = vmatprep.subr.bf16.mxu0 %v667
        %717 = vmatpush1.bf16.msra.mxu0 %v666
        %718 = vmatprep.subr.bf16.mxu0 0
        %719 = vmatpush1.bf16.msra.mxu0 0
        %720 = vmatprep.subr.bf16.mxu0 0
        %721 = vmatpush1.bf16.msra.mxu0 0
        %722 = vmatprep.subr.bf16.mxu0 0
        %723 = vmatpush1.bf16.msra.mxu0 0
        %724 = vmatprep.subr.bf16.mxu0 0
        %725 = vmatpush1.bf16.msra.mxu0 0
        %726 = vmatprep.subr.bf16.mxu0 0
        %727 = vmatpush1.bf16.msra.mxu0 0
        %728 = vmatprep.subr.bf16.mxu0 0
        %729 = vmatpush1.bf16.msra.mxu0 0
        %730 = vmatprep.subr.bf16.mxu0 0
        %731 = vmatpush1.bf16.msra.mxu0 0
        %732 = vmatprep.subr.bf16.mxu0 0
        %733 = vmatpush1.bf16.msra.mxu0 0
        %734 = vmatprep.mubr.bf16.mxu0 0
        %735 = vmatmul.mubr.bf16.gmra.mrb[0].mxu0 %v456
        %v736 = vpop.f32.mrb[0].mxu0
        %v737 = vadd.f32 %v525, %v736
        %v738 = vpop.f32.mrb[0].mxu0
        %v739 = vadd.f32 %v529, %v738
        %v740 = vpop.f32.mrb[0].mxu0
        %v741 = vadd.f32 %v525, %v740
        %v742 = vpop.f32.mrb[0].mxu0
        %v743 = vadd.f32 %v529, %v742
        %744 = vmatprep.mubr.bf16.mxu0 0
        %745 = vmatmul.mubr.bf16.gmra.mrb[0].mxu0 %v457
        %v746 = vpop.f32.mrb[0].mxu0
        %v747 = vadd.f32 %v525, %v746
        %v748 = vpop.f32.mrb[0].mxu0
        %v749 = vadd.f32 %v529, %v748
        %v750 = vpop.f32.mrb[0].mxu0
        %v751 = vadd.f32 %v525, %v750
        %v752 = vpop.f32.mrb[0].mxu0
        %v753 = vadd.f32 %v529, %v752
        %754 = vmatprep.mubr.bf16.mxu0 0
        %755 = vmatmul.mubr.bf16.gmra.mrb[0].mxu0 %v458
        %v756 = vpop.f32.mrb[0].mxu0
        %v757 = vadd.f32 %v525, %v756
        %v758 = vpop.f32.mrb[0].mxu0
        %v759 = vadd.f32 %v529, %v758
        %v760 = vpop.f32.mrb[0].mxu0
        %v761 = vadd.f32 %v525, %v760
        %v762 = vpop.f32.mrb[0].mxu0
        %v763 = vadd.f32 %v529, %v762
        %764 = vmatprep.mubr.bf16.mxu0 0
        %765 = vmatmul.mubr.bf16.gmra.mrb[0].mxu0 %v459
        %v766 = vpop.f32.mrb[0].mxu0
        %v767 = vadd.f32 %v525, %v766
        %v768 = vpop.f32.mrb[0].mxu0
        %v769 = vadd.f32 %v529, %v768
        %v770 = vpop.f32.mrb[0].mxu0
        %v771 = vadd.f32 %v525, %v770
        %v772 = vpop.f32.mrb[0].mxu0
        %v773 = vadd.f32 %v529, %v772
        %774 = vmatprep.mubr.bf16.mxu0 0
        %775 = vmatmul.mubr.bf16.gmra.mrb[0].mxu0 %v460
        %v776 = vpop.f32.mrb[0].mxu0
        %v777 = vadd.f32 %v525, %v776
        %v778 = vpop.f32.mrb[0].mxu0
        %v779 = vadd.f32 %v529, %v778
        %v780 = vpop.f32.mrb[0].mxu0
        %v781 = vadd.f32 %v525, %v780
        %v782 = vpop.f32.mrb[0].mxu0
        %v783 = vadd.f32 %v529, %v782
        %784 = vmatprep.mubr.bf16.mxu0 0
        %785 = vmatmul.mubr.bf16.gmra.mrb[0].mxu0 %v461
        %v786 = vpop.f32.mrb[0].mxu0
        %v787 = vadd.f32 %v525, %v786
        %v788 = vpop.f32.mrb[0].mxu0
        %v789 = vadd.f32 %v529, %v788
        %v790 = vpop.f32.mrb[0].mxu0
        %v791 = vadd.f32 %v525, %v790
        %v792 = vpop.f32.mrb[0].mxu0
        %v793 = vadd.f32 %v529, %v792
        %794 = vmatprep.mubr.bf16.mxu0 0
        %795 = vmatmul.mubr.bf16.gmra.mrb[0].mxu0 %v462
        %v796 = vpop.f32.mrb[0].mxu0
        %v797 = vadd.f32 %v525, %v796
        %v798 = vpop.f32.mrb[0].mxu0
        %v799 = vadd.f32 %v529, %v798
        %v800 = vpop.f32.mrb[0].mxu0
        %v801 = vadd.f32 %v525, %v800
        %v802 = vpop.f32.mrb[0].mxu0
        %v803 = vadd.f32 %v529, %v802
        %804 = vmatprep.mubr.bf16.mxu0 0
        %805 = vmatmul.mubr.bf16.gmra.mrb[0].mxu0 %v463
        %v806 = vpop.f32.mrb[0].mxu0
        %v807 = vadd.f32 %v525, %v806
        %v808 = vpop.f32.mrb[0].mxu0
        %v809 = vadd.f32 %v529, %v808
        %v810 = vpop.f32.mrb[0].mxu0
        %v811 = vadd.f32 %v525, %v810
        %v812 = vpop.f32.mrb[0].mxu0
        %v813 = vadd.f32 %v529, %v812
        %814 = vmatprep.mubr.bf16.mxu0 0
        %815 = vmatmul.mubr.bf16.gmra.mrb[0].mxu0 %v464
        %v816 = vpop.f32.mrb[0].mxu0
        %v817 = vadd.f32 %v525, %v816
        %v818 = vpop.f32.mrb[0].mxu0
        %v819 = vadd.f32 %v529, %v818
        %v820 = vpop.f32.mrb[0].mxu0
        %v821 = vadd.f32 %v525, %v820
        %v822 = vpop.f32.mrb[0].mxu0
        %v823 = vadd.f32 %v529, %v822
        %824 = vmatprep.mubr.bf16.mxu0 0
        %825 = vmatmul.mubr.bf16.gmra.mrb[0].mxu0 %v465
        %v826 = vpop.f32.mrb[0].mxu0
        %v827 = vadd.f32 %v525, %v826
        %v828 = vpop.f32.mrb[0].mxu0
        %v829 = vadd.f32 %v529, %v828
        %v830 = vpop.f32.mrb[0].mxu0
        %v831 = vadd.f32 %v525, %v830
        %v832 = vpop.f32.mrb[0].mxu0
        %v833 = vadd.f32 %v529, %v832
        %834 = vmatprep.mubr.bf16.mxu0 0
        %835 = vmatmul.mubr.bf16.gmra.mrb[0].mxu0 %v466
        %v836 = vpop.f32.mrb[0].mxu0
        %v837 = vadd.f32 %v525, %v836
        %v838 = vpop.f32.mrb[0].mxu0
        %v839 = vadd.f32 %v529, %v838
        %v840 = vpop.f32.mrb[0].mxu0
        %v841 = vadd.f32 %v525, %v840
        %v842 = vpop.f32.mrb[0].mxu0
        %v843 = vadd.f32 %v529, %v842
        %844 = vmatprep.mubr.bf16.mxu0 0
        %845 = vmatmul.mubr.bf16.gmra.mrb[0].mxu0 %v467
        %v846 = vpop.f32.mrb[0].mxu0
        %v847 = vadd.f32 %v525, %v846
        %v848 = vpop.f32.mrb[0].mxu0
        %v849 = vadd.f32 %v529, %v848
        %v850 = vpop.f32.mrb[0].mxu0
        %v851 = vadd.f32 %v525, %v850
        %v852 = vpop.f32.mrb[0].mxu0
        %v853 = vadd.f32 %v529, %v852
        %854 = vmatprep.mubr.bf16.mxu0 0
        %855 = vmatmul.mubr.bf16.gmra.mrb[0].mxu0 %v468
        %v856 = vpop.f32.mrb[0].mxu0
        %v857 = vadd.f32 %v525, %v856
        %v858 = vpop.f32.mrb[0].mxu0
        %v859 = vadd.f32 %v529, %v858
        %v860 = vpop.f32.mrb[0].mxu0
        %v861 = vadd.f32 %v525, %v860
        %v862 = vpop.f32.mrb[0].mxu0
        %v863 = vadd.f32 %v529, %v862
        %864 = vmatprep.mubr.bf16.mxu0 0
        %865 = vmatmul.mubr.bf16.gmra.mrb[0].mxu0 %v469
        %v866 = vpop.f32.mrb[0].mxu0
        %v867 = vadd.f32 %v525, %v866
        %v868 = vpop.f32.mrb[0].mxu0
        %v869 = vadd.f32 %v529, %v868
        %v870 = vpop.f32.mrb[0].mxu0
        %v871 = vadd.f32 %v525, %v870
        %v872 = vpop.f32.mrb[0].mxu0
        %v873 = vadd.f32 %v529, %v872
        %874 = vmatprep.mubr.bf16.mxu0 0
        %875 = vmatmul.mubr.bf16.gmra.mrb[0].mxu0 %v470
        %v876 = vpop.f32.mrb[0].mxu0
        %v877 = vadd.f32 %v525, %v876
        %v878 = vpop.f32.mrb[0].mxu0
        %v879 = vadd.f32 %v529, %v878
        %v880 = vpop.f32.mrb[0].mxu0
        %v881 = vadd.f32 %v525, %v880
        %v882 = vpop.f32.mrb[0].mxu0
        %v883 = vadd.f32 %v529, %v882
        %884 = vmatprep.mubr.bf16.mxu0 0
        %885 = vmatmul.mubr.bf16.gmra.mrb[0].mxu0 %v471
        %v886 = vpop.f32.mrb[0].mxu0
        %v887 = vadd.f32 %v525, %v886
        %v888 = vpop.f32.mrb[0].mxu0
        %v889 = vadd.f32 %v529, %v888
        %v890 = vpop.f32.mrb[0].mxu0
        %v891 = vadd.f32 %v525, %v890
        %v892 = vpop.f32.mrb[0].mxu0
        %v893 = vadd.f32 %v529, %v892
        %894 = vmatprep.mubr.bf16.mxu0 0
        %895 = vmatmul.mubr.bf16.gmra.mrb[0].mxu0 %v472
        %v896 = vpop.f32.mrb[0].mxu0
        %v897 = vadd.f32 %v525, %v896
        %v898 = vpop.f32.mrb[0].mxu0
        %v899 = vadd.f32 %v529, %v898
        %v900 = vpop.f32.mrb[0].mxu0
        %v901 = vadd.f32 %v525, %v900
        %v902 = vpop.f32.mrb[0].mxu0
        %v903 = vadd.f32 %v529, %v902
        %904 = vmatprep.mubr.bf16.mxu0 0
        %905 = vmatmul.mubr.bf16.gmra.mrb[0].mxu0 %v473
        %v906 = vpop.f32.mrb[0].mxu0
        %v907 = vadd.f32 %v525, %v906
        %v908 = vpop.f32.mrb[0].mxu0
        %v909 = vadd.f32 %v529, %v908
        %v910 = vpop.f32.mrb[0].mxu0
        %v911 = vadd.f32 %v525, %v910
        %v912 = vpop.f32.mrb[0].mxu0
        %v913 = vadd.f32 %v529, %v912
        %914 = vmatprep.mubr.bf16.mxu0 0
        %915 = vmatmul.mubr.bf16.gmra.mrb[0].mxu0 %v474
        %v916 = vpop.f32.mrb[0].mxu0
        %v917 = vadd.f32 %v525, %v916
        %v918 = vpop.f32.mrb[0].mxu0
        %v919 = vadd.f32 %v529, %v918
        %v920 = vpop.f32.mrb[0].mxu0
        %v921 = vadd.f32 %v525, %v920
        %v922 = vpop.f32.mrb[0].mxu0
        %v923 = vadd.f32 %v529, %v922
        %924 = vmatprep.mubr.bf16.mxu0 0
        %925 = vmatmul.mubr.bf16.gmra.mrb[0].mxu0 %v475
        %v926 = vpop.f32.mrb[0].mxu0
        %v927 = vadd.f32 %v525, %v926
        %v928 = vpop.f32.mrb[0].mxu0
        %v929 = vadd.f32 %v529, %v928
        %v930 = vpop.f32.mrb[0].mxu0
        %v931 = vadd.f32 %v525, %v930
        %v932 = vpop.f32.mrb[0].mxu0
        %v933 = vadd.f32 %v529, %v932
        %934 = vmatprep.mubr.bf16.mxu0 0
        %935 = vmatmul.mubr.bf16.gmra.mrb[0].mxu0 %v476
        %v936 = vpop.f32.mrb[0].mxu0
        %v937 = vadd.f32 %v525, %v936
        %v938 = vpop.f32.mrb[0].mxu0
        %v939 = vadd.f32 %v529, %v938
        %v940 = vpop.f32.mrb[0].mxu0
        %v941 = vadd.f32 %v525, %v940
        %v942 = vpop.f32.mrb[0].mxu0
        %v943 = vadd.f32 %v529, %v942
        %944 = vmatprep.mubr.bf16.mxu0 0
        %945 = vmatmul.mubr.bf16.gmra.mrb[0].mxu0 %v477
        %v946 = vpop.f32.mrb[0].mxu0
        %v947 = vadd.f32 %v525, %v946
        %v948 = vpop.f32.mrb[0].mxu0
        %v949 = vadd.f32 %v529, %v948
        %v950 = vpop.f32.mrb[0].mxu0
        %v951 = vadd.f32 %v525, %v950
        %v952 = vpop.f32.mrb[0].mxu0
        %v953 = vadd.f32 %v529, %v952
        %954 = vmatprep.mubr.bf16.mxu0 0
        %955 = vmatmul.mubr.bf16.gmra.mrb[0].mxu0 %v478
        %v956 = vpop.f32.mrb[0].mxu0
        %v957 = vadd.f32 %v525, %v956
        %v958 = vpop.f32.mrb[0].mxu0
        %v959 = vadd.f32 %v529, %v958
        %v960 = vpop.f32.mrb[0].mxu0
        %v961 = vadd.f32 %v525, %v960
        %v962 = vpop.f32.mrb[0].mxu0
        %v963 = vadd.f32 %v529, %v962
        %964 = vmatprep.mubr.bf16.mxu0 0
        %965 = vmatmul.mubr.bf16.gmra.mrb[0].mxu0 %v479
        %v966 = vpop.f32.mrb[0].mxu0
        %v967 = vadd.f32 %v525, %v966
        %v968 = vpop.f32.mrb[0].mxu0
        %v969 = vadd.f32 %v529, %v968
        %v970 = vpop.f32.mrb[0].mxu0
        %v971 = vadd.f32 %v525, %v970
        %v972 = vpop.f32.mrb[0].mxu0
        %v973 = vadd.f32 %v529, %v972
        %974 = vmatprep.mubr.bf16.mxu0 0
        %975 = vmatmul.mubr.bf16.gmra.mrb[0].mxu0 %v480
        %v976 = vpop.f32.mrb[0].mxu0
        %v977 = vadd.f32 %v525, %v976
        %v978 = vpop.f32.mrb[0].mxu0
        %v979 = vadd.f32 %v529, %v978
        %v980 = vpop.f32.mrb[0].mxu0
        %v981 = vadd.f32 %v525, %v980
        %v982 = vpop.f32.mrb[0].mxu0
        %v983 = vadd.f32 %v529, %v982
        %984 = vmatprep.mubr.bf16.mxu0 0
        %985 = vmatmul.mubr.bf16.gmra.mrb[0].mxu0 %v481
        %v986 = vpop.f32.mrb[0].mxu0
        %v987 = vadd.f32 %v525, %v986
        %v988 = vpop.f32.mrb[0].mxu0
        %v989 = vadd.f32 %v529, %v988
        %v990 = vpop.f32.mrb[0].mxu0
        %v991 = vadd.f32 %v525, %v990
        %v992 = vpop.f32.mrb[0].mxu0
        %v993 = vadd.f32 %v529, %v992
        %994 = vmatprep.mubr.bf16.mxu0 0
        %995 = vmatmul.mubr.bf16.gmra.mrb[0].mxu0 %v482
        %v996 = vpop.f32.mrb[0].mxu0
        %v997 = vadd.f32 %v525, %v996
        %v998 = vpop.f32.mrb[0].mxu0
        %v999 = vadd.f32 %v529, %v998
        %v1000 = vpop.f32.mrb[0].mxu0
        %v1001 = vadd.f32 %v525, %v1000
        %v1002 = vpop.f32.mrb[0].mxu0
        %v1003 = vadd.f32 %v529, %v1002
        %1004 = vmatprep.mubr.bf16.mxu0 0
        %1005 = vmatmul.mubr.bf16.gmra.mrb[0].mxu0 %v483
        %v1006 = vpop.f32.mrb[0].mxu0
        %v1007 = vadd.f32 %v525, %v1006
        %v1008 = vpop.f32.mrb[0].mxu0
        %v1009 = vadd.f32 %v529, %v1008
        %v1010 = vpop.f32.mrb[0].mxu0
        %v1011 = vadd.f32 %v525, %v1010
        %v1012 = vpop.f32.mrb[0].mxu0
        %v1013 = vadd.f32 %v529, %v1012
        %1014 = vmatprep.mubr.bf16.mxu0 0
        %1015 = vmatmul.mubr.bf16.gmra.mrb[0].mxu0 %v484
        %v1016 = vpop.f32.mrb[0].mxu0
        %v1017 = vadd.f32 %v525, %v1016
        %v1018 = vpop.f32.mrb[0].mxu0
        %v1019 = vadd.f32 %v529, %v1018
        %v1020 = vpop.f32.mrb[0].mxu0
        %v1021 = vadd.f32 %v525, %v1020
        %v1022 = vpop.f32.mrb[0].mxu0
        %v1023 = vadd.f32 %v529, %v1022
        %1024 = vmatprep.mubr.bf16.mxu0 0
        %1025 = vmatmul.mubr.bf16.gmra.mrb[0].mxu0 %v485
        %v1026 = vpop.f32.mrb[0].mxu0
        %v1027 = vadd.f32 %v525, %v1026
        %v1028 = vpop.f32.mrb[0].mxu0
        %v1029 = vadd.f32 %v529, %v1028
        %v1030 = vpop.f32.mrb[0].mxu0
        %v1031 = vadd.f32 %v525, %v1030
        %v1032 = vpop.f32.mrb[0].mxu0
        %v1033 = vadd.f32 %v529, %v1032
        %1034 = vmatprep.mubr.bf16.mxu0 0
        %1035 = vmatmul.mubr.bf16.gmra.mrb[0].mxu0 %v486
        %v1036 = vpop.f32.mrb[0].mxu0
        %v1037 = vadd.f32 %v525, %v1036
        %v1038 = vpop.f32.mrb[0].mxu0
        %v1039 = vadd.f32 %v529, %v1038
        %v1040 = vpop.f32.mrb[0].mxu0
        %v1041 = vadd.f32 %v525, %v1040
        %v1042 = vpop.f32.mrb[0].mxu0
        %v1043 = vadd.f32 %v529, %v1042
        %1044 = vmatprep.mubr.bf16.mxu0 0
        %1045 = vmatmul.mubr.bf16.gmra.mrb[0].mxu0 %v487
        %v1046 = vpop.f32.mrb[0].mxu0
        %v1047 = vadd.f32 %v525, %v1046
        %v1048 = vpop.f32.mrb[0].mxu0
        %v1049 = vadd.f32 %v529, %v1048
        %v1050 = vpop.f32.mrb[0].mxu0
        %v1051 = vadd.f32 %v525, %v1050
        %v1052 = vpop.f32.mrb[0].mxu0
        %v1053 = vadd.f32 %v529, %v1052
        %1054 = vdwg.mxu0
        %1055 = vmatprep.subr.bf16.mxu0 %v641
        %1056 = vmatpush1.bf16.msra.mxu0 %v640
        %1057 = vmatprep.subr.bf16.mxu0 %v645
        %1058 = vmatpush1.bf16.msra.mxu0 %v644
        %1059 = vmatprep.subr.bf16.mxu0 %v649
        %1060 = vmatpush1.bf16.msra.mxu0 %v648
        %1061 = vmatprep.subr.bf16.mxu0 %v653
        %1062 = vmatpush1.bf16.msra.mxu0 %v652
        %1063 = vmatprep.subr.bf16.mxu0 %v657
        %1064 = vmatpush1.bf16.msra.mxu0 %v656
        %1065 = vmatprep.subr.bf16.mxu0 %v661
        %1066 = vmatpush1.bf16.msra.mxu0 %v660
        %1067 = vmatprep.subr.bf16.mxu0 %v665
        %1068 = vmatpush1.bf16.msra.mxu0 %v664
        %1069 = vmatprep.subr.bf16.mxu0 %v669
        %1070 = vmatpush1.bf16.msra.mxu0 %v668
        %1071 = vmatprep.subr.bf16.mxu0 0
        %1072 = vmatpush1.bf16.msra.mxu0 0
        %1073 = vmatprep.subr.bf16.mxu0 0
        %1074 = vmatpush1.bf16.msra.mxu0 0
        %1075 = vmatprep.subr.bf16.mxu0 0
        %1076 = vmatpush1.bf16.msra.mxu0 0
        %1077 = vmatprep.subr.bf16.mxu0 0
        %1078 = vmatpush1.bf16.msra.mxu0 0
        %1079 = vmatprep.subr.bf16.mxu0 0
        %1080 = vmatpush1.bf16.msra.mxu0 0
        %1081 = vmatprep.subr.bf16.mxu0 0
        %1082 = vmatpush1.bf16.msra.mxu0 0
        %1083 = vmatprep.subr.bf16.mxu0 0
        %1084 = vmatpush1.bf16.msra.mxu0 0
        %1085 = vmatprep.subr.bf16.mxu0 0
        %1086 = vmatpush1.bf16.msra.mxu0 0
        %1087 = vmatprep.mubr.bf16.mxu0 0
        %1088 = vmatmul.mubr.bf16.gmra.mrb[0].mxu0 %v456
        %v1089 = vpop.f32.mrb[0].mxu0
        %v1090 = vadd.f32 %v533, %v1089
        %v1091 = vpop.f32.mrb[0].mxu0
        %v1092 = vadd.f32 %v537, %v1091
        %v1093 = vpop.f32.mrb[0].mxu0
        %v1094 = vadd.f32 %v533, %v1093
        %v1095 = vpop.f32.mrb[0].mxu0
        %v1096 = vadd.f32 %v537, %v1095
        %1097 = vmatprep.mubr.bf16.mxu0 0
        %1098 = vmatmul.mubr.bf16.gmra.mrb[0].mxu0 %v457
        %v1099 = vpop.f32.mrb[0].mxu0
        %v1100 = vadd.f32 %v533, %v1099
        %v1101 = vpop.f32.mrb[0].mxu0
        %v1102 = vadd.f32 %v537, %v1101
        %v1103 = vpop.f32.mrb[0].mxu0
        %v1104 = vadd.f32 %v533, %v1103
        %v1105 = vpop.f32.mrb[0].mxu0
        %v1106 = vadd.f32 %v537, %v1105
        %1107 = vmatprep.mubr.bf16.mxu0 0
        %1108 = vmatmul.mubr.bf16.gmra.mrb[0].mxu0 %v458
        %v1109 = vpop.f32.mrb[0].mxu0
        %v1110 = vadd.f32 %v533, %v1109
        %v1111 = vpop.f32.mrb[0].mxu0
        %v1112 = vadd.f32 %v537, %v1111
        %v1113 = vpop.f32.mrb[0].mxu0
        %v1114 = vadd.f32 %v533, %v1113
        %v1115 = vpop.f32.mrb[0].mxu0
        %v1116 = vadd.f32 %v537, %v1115
        %1117 = vmatprep.mubr.bf16.mxu0 0
        %1118 = vmatmul.mubr.bf16.gmra.mrb[0].mxu0 %v459
        %v1119 = vpop.f32.mrb[0].mxu0
        %v1120 = vadd.f32 %v533, %v1119
        %v1121 = vpop.f32.mrb[0].mxu0
        %v1122 = vadd.f32 %v537, %v1121
        %v1123 = vpop.f32.mrb[0].mxu0
        %v1124 = vadd.f32 %v533, %v1123
        %v1125 = vpop.f32.mrb[0].mxu0
        %v1126 = vadd.f32 %v537, %v1125
        %1127 = vmatprep.mubr.bf16.mxu0 0
        %1128 = vmatmul.mubr.bf16.gmra.mrb[0].mxu0 %v460
        %v1129 = vpop.f32.mrb[0].mxu0
        %v1130 = vadd.f32 %v533, %v1129
        %v1131 = vpop.f32.mrb[0].mxu0
        %v1132 = vadd.f32 %v537, %v1131
        %v1133 = vpop.f32.mrb[0].mxu0
        %v1134 = vadd.f32 %v533, %v1133
        %v1135 = vpop.f32.mrb[0].mxu0
        %v1136 = vadd.f32 %v537, %v1135
        %1137 = vmatprep.mubr.bf16.mxu0 0
        %1138 = vmatmul.mubr.bf16.gmra.mrb[0].mxu0 %v461
        %v1139 = vpop.f32.mrb[0].mxu0
        %v1140 = vadd.f32 %v533, %v1139
        %v1141 = vpop.f32.mrb[0].mxu0
        %v1142 = vadd.f32 %v537, %v1141
        %v1143 = vpop.f32.mrb[0].mxu0
        %v1144 = vadd.f32 %v533, %v1143
        %v1145 = vpop.f32.mrb[0].mxu0
        %v1146 = vadd.f32 %v537, %v1145
        %1147 = vmatprep.mubr.bf16.mxu0 0
        %1148 = vmatmul.mubr.bf16.gmra.mrb[0].mxu0 %v462
        %v1149 = vpop.f32.mrb[0].mxu0
        %v1150 = vadd.f32 %v533, %v1149
        %v1151 = vpop.f32.mrb[0].mxu0
        %v1152 = vadd.f32 %v537, %v1151
        %v1153 = vpop.f32.mrb[0].mxu0
        %v1154 = vadd.f32 %v533, %v1153
        %v1155 = vpop.f32.mrb[0].mxu0
        %v1156 = vadd.f32 %v537, %v1155
        %1157 = vmatprep.mubr.bf16.mxu0 0
        %1158 = vmatmul.mubr.bf16.gmra.mrb[0].mxu0 %v463
        %v1159 = vpop.f32.mrb[0].mxu0
        %v1160 = vadd.f32 %v533, %v1159
        %v1161 = vpop.f32.mrb[0].mxu0
        %v1162 = vadd.f32 %v537, %v1161
        %v1163 = vpop.f32.mrb[0].mxu0
        %v1164 = vadd.f32 %v533, %v1163
        %v1165 = vpop.f32.mrb[0].mxu0
        %v1166 = vadd.f32 %v537, %v1165
        %1167 = vmatprep.mubr.bf16.mxu0 0
        %1168 = vmatmul.mubr.bf16.gmra.mrb[0].mxu0 %v464
        %v1169 = vpop.f32.mrb[0].mxu0
        %v1170 = vadd.f32 %v533, %v1169
        %v1171 = vpop.f32.mrb[0].mxu0
        %v1172 = vadd.f32 %v537, %v1171
        %v1173 = vpop.f32.mrb[0].mxu0
        %v1174 = vadd.f32 %v533, %v1173
        %v1175 = vpop.f32.mrb[0].mxu0
        %v1176 = vadd.f32 %v537, %v1175
        %1177 = vmatprep.mubr.bf16.mxu0 0
        %1178 = vmatmul.mubr.bf16.gmra.mrb[0].mxu0 %v465
        %v1179 = vpop.f32.mrb[0].mxu0
        %v1180 = vadd.f32 %v533, %v1179
        %v1181 = vpop.f32.mrb[0].mxu0
        %v1182 = vadd.f32 %v537, %v1181
        %v1183 = vpop.f32.mrb[0].mxu0
        %v1184 = vadd.f32 %v533, %v1183
        %v1185 = vpop.f32.mrb[0].mxu0
        %v1186 = vadd.f32 %v537, %v1185
        %1187 = vmatprep.mubr.bf16.mxu0 0
        %1188 = vmatmul.mubr.bf16.gmra.mrb[0].mxu0 %v466
        %v1189 = vpop.f32.mrb[0].mxu0
        %v1190 = vadd.f32 %v533, %v1189
        %v1191 = vpop.f32.mrb[0].mxu0
        %v1192 = vadd.f32 %v537, %v1191
        %v1193 = vpop.f32.mrb[0].mxu0
        %v1194 = vadd.f32 %v533, %v1193
        %v1195 = vpop.f32.mrb[0].mxu0
        %v1196 = vadd.f32 %v537, %v1195
        %1197 = vmatprep.mubr.bf16.mxu0 0
        %1198 = vmatmul.mubr.bf16.gmra.mrb[0].mxu0 %v467
        %v1199 = vpop.f32.mrb[0].mxu0
        %v1200 = vadd.f32 %v533, %v1199
        %v1201 = vpop.f32.mrb[0].mxu0
        %v1202 = vadd.f32 %v537, %v1201
        %v1203 = vpop.f32.mrb[0].mxu0
        %v1204 = vadd.f32 %v533, %v1203
        %v1205 = vpop.f32.mrb[0].mxu0
        %v1206 = vadd.f32 %v537, %v1205
        %1207 = vmatprep.mubr.bf16.mxu0 0
        %1208 = vmatmul.mubr.bf16.gmra.mrb[0].mxu0 %v468
        %v1209 = vpop.f32.mrb[0].mxu0
        %v1210 = vadd.f32 %v533, %v1209
        %v1211 = vpop.f32.mrb[0].mxu0
        %v1212 = vadd.f32 %v537, %v1211
        %v1213 = vpop.f32.mrb[0].mxu0
        %v1214 = vadd.f32 %v533, %v1213
        %v1215 = vpop.f32.mrb[0].mxu0
        %v1216 = vadd.f32 %v537, %v1215
        %1217 = vmatprep.mubr.bf16.mxu0 0
        %1218 = vmatmul.mubr.bf16.gmra.mrb[0].mxu0 %v469
        %v1219 = vpop.f32.mrb[0].mxu0
        %v1220 = vadd.f32 %v533, %v1219
        %v1221 = vpop.f32.mrb[0].mxu0
        %v1222 = vadd.f32 %v537, %v1221
        %v1223 = vpop.f32.mrb[0].mxu0
        %v1224 = vadd.f32 %v533, %v1223
        %v1225 = vpop.f32.mrb[0].mxu0
        %v1226 = vadd.f32 %v537, %v1225
        %1227 = vmatprep.mubr.bf16.mxu0 0
        %1228 = vmatmul.mubr.bf16.gmra.mrb[0].mxu0 %v470
        %v1229 = vpop.f32.mrb[0].mxu0
        %v1230 = vadd.f32 %v533, %v1229
        %v1231 = vpop.f32.mrb[0].mxu0
        %v1232 = vadd.f32 %v537, %v1231
        %v1233 = vpop.f32.mrb[0].mxu0
        %v1234 = vadd.f32 %v533, %v1233
        %v1235 = vpop.f32.mrb[0].mxu0
        %v1236 = vadd.f32 %v537, %v1235
        %1237 = vmatprep.mubr.bf16.mxu0 0
        %1238 = vmatmul.mubr.bf16.gmra.mrb[0].mxu0 %v471
        %v1239 = vpop.f32.mrb[0].mxu0
        %v1240 = vadd.f32 %v533, %v1239
        %v1241 = vpop.f32.mrb[0].mxu0
        %v1242 = vadd.f32 %v537, %v1241
        %v1243 = vpop.f32.mrb[0].mxu0
        %v1244 = vadd.f32 %v533, %v1243
        %v1245 = vpop.f32.mrb[0].mxu0
        %v1246 = vadd.f32 %v537, %v1245
        %1247 = vmatprep.mubr.bf16.mxu0 0
        %1248 = vmatmul.mubr.bf16.gmra.mrb[0].mxu0 %v472
        %v1249 = vpop.f32.mrb[0].mxu0
        %v1250 = vadd.f32 %v533, %v1249
        %v1251 = vpop.f32.mrb[0].mxu0
        %v1252 = vadd.f32 %v537, %v1251
        %v1253 = vpop.f32.mrb[0].mxu0
        %v1254 = vadd.f32 %v533, %v1253
        %v1255 = vpop.f32.mrb[0].mxu0
        %v1256 = vadd.f32 %v537, %v1255
        %1257 = vmatprep.mubr.bf16.mxu0 0
        %1258 = vmatmul.mubr.bf16.gmra.mrb[0].mxu0 %v473
        %v1259 = vpop.f32.mrb[0].mxu0
        %v1260 = vadd.f32 %v533, %v1259
        %v1261 = vpop.f32.mrb[0].mxu0
        %v1262 = vadd.f32 %v537, %v1261
        %v1263 = vpop.f32.mrb[0].mxu0
        %v1264 = vadd.f32 %v533, %v1263
        %v1265 = vpop.f32.mrb[0].mxu0
        %v1266 = vadd.f32 %v537, %v1265
        %1267 = vmatprep.mubr.bf16.mxu0 0
        %1268 = vmatmul.mubr.bf16.gmra.mrb[0].mxu0 %v474
        %v1269 = vpop.f32.mrb[0].mxu0
        %v1270 = vadd.f32 %v533, %v1269
        %v1271 = vpop.f32.mrb[0].mxu0
        %v1272 = vadd.f32 %v537, %v1271
        %v1273 = vpop.f32.mrb[0].mxu0
        %v1274 = vadd.f32 %v533, %v1273
        %v1275 = vpop.f32.mrb[0].mxu0
        %v1276 = vadd.f32 %v537, %v1275
        %1277 = vmatprep.mubr.bf16.mxu0 0
        %1278 = vmatmul.mubr.bf16.gmra.mrb[0].mxu0 %v475
        %v1279 = vpop.f32.mrb[0].mxu0
        %v1280 = vadd.f32 %v533, %v1279
        %v1281 = vpop.f32.mrb[0].mxu0
        %v1282 = vadd.f32 %v537, %v1281
        %v1283 = vpop.f32.mrb[0].mxu0
        %v1284 = vadd.f32 %v533, %v1283
        %v1285 = vpop.f32.mrb[0].mxu0
        %v1286 = vadd.f32 %v537, %v1285
        %1287 = vmatprep.mubr.bf16.mxu0 0
        %1288 = vmatmul.mubr.bf16.gmra.mrb[0].mxu0 %v476
        %v1289 = vpop.f32.mrb[0].mxu0
        %v1290 = vadd.f32 %v533, %v1289
        %v1291 = vpop.f32.mrb[0].mxu0
        %v1292 = vadd.f32 %v537, %v1291
        %v1293 = vpop.f32.mrb[0].mxu0
        %v1294 = vadd.f32 %v533, %v1293
        %v1295 = vpop.f32.mrb[0].mxu0
        %v1296 = vadd.f32 %v537, %v1295
        %1297 = vmatprep.mubr.bf16.mxu0 0
        %1298 = vmatmul.mubr.bf16.gmra.mrb[0].mxu0 %v477
        %v1299 = vpop.f32.mrb[0].mxu0
        %v1300 = vadd.f32 %v533, %v1299
        %v1301 = vpop.f32.mrb[0].mxu0
        %v1302 = vadd.f32 %v537, %v1301
        %v1303 = vpop.f32.mrb[0].mxu0
        %v1304 = vadd.f32 %v533, %v1303
        %v1305 = vpop.f32.mrb[0].mxu0
        %v1306 = vadd.f32 %v537, %v1305
        %1307 = vmatprep.mubr.bf16.mxu0 0
        %1308 = vmatmul.mubr.bf16.gmra.mrb[0].mxu0 %v478
        %v1309 = vpop.f32.mrb[0].mxu0
        %v1310 = vadd.f32 %v533, %v1309
        %v1311 = vpop.f32.mrb[0].mxu0
        %v1312 = vadd.f32 %v537, %v1311
        %v1313 = vpop.f32.mrb[0].mxu0
        %v1314 = vadd.f32 %v533, %v1313
        %v1315 = vpop.f32.mrb[0].mxu0
        %v1316 = vadd.f32 %v537, %v1315
        %1317 = vmatprep.mubr.bf16.mxu0 0
        %1318 = vmatmul.mubr.bf16.gmra.mrb[0].mxu0 %v479
        %v1319 = vpop.f32.mrb[0].mxu0
        %v1320 = vadd.f32 %v533, %v1319
        %v1321 = vpop.f32.mrb[0].mxu0
        %v1322 = vadd.f32 %v537, %v1321
        %v1323 = vpop.f32.mrb[0].mxu0
        %v1324 = vadd.f32 %v533, %v1323
        %v1325 = vpop.f32.mrb[0].mxu0
        %v1326 = vadd.f32 %v537, %v1325
        %1327 = vmatprep.mubr.bf16.mxu0 0
        %1328 = vmatmul.mubr.bf16.gmra.mrb[0].mxu0 %v480
        %v1329 = vpop.f32.mrb[0].mxu0
        %v1330 = vadd.f32 %v533, %v1329
        %v1331 = vpop.f32.mrb[0].mxu0
        %v1332 = vadd.f32 %v537, %v1331
        %v1333 = vpop.f32.mrb[0].mxu0
        %v1334 = vadd.f32 %v533, %v1333
        %v1335 = vpop.f32.mrb[0].mxu0
        %v1336 = vadd.f32 %v537, %v1335
        %1337 = vmatprep.mubr.bf16.mxu0 0
        %1338 = vmatmul.mubr.bf16.gmra.mrb[0].mxu0 %v481
        %v1339 = vpop.f32.mrb[0].mxu0
        %v1340 = vadd.f32 %v533, %v1339
        %v1341 = vpop.f32.mrb[0].mxu0
        %v1342 = vadd.f32 %v537, %v1341
        %v1343 = vpop.f32.mrb[0].mxu0
        %v1344 = vadd.f32 %v533, %v1343
        %v1345 = vpop.f32.mrb[0].mxu0
        %v1346 = vadd.f32 %v537, %v1345
        %1347 = vmatprep.mubr.bf16.mxu0 0
        %1348 = vmatmul.mubr.bf16.gmra.mrb[0].mxu0 %v482
        %v1349 = vpop.f32.mrb[0].mxu0
        %v1350 = vadd.f32 %v533, %v1349
        %v1351 = vpop.f32.mrb[0].mxu0
        %v1352 = vadd.f32 %v537, %v1351
        %v1353 = vpop.f32.mrb[0].mxu0
        %v1354 = vadd.f32 %v533, %v1353
        %v1355 = vpop.f32.mrb[0].mxu0
        %v1356 = vadd.f32 %v537, %v1355
        %1357 = vmatprep.mubr.bf16.mxu0 0
        %1358 = vmatmul.mubr.bf16.gmra.mrb[0].mxu0 %v483
        %v1359 = vpop.f32.mrb[0].mxu0
        %v1360 = vadd.f32 %v533, %v1359
        %v1361 = vpop.f32.mrb[0].mxu0
        %v1362 = vadd.f32 %v537, %v1361
        %v1363 = vpop.f32.mrb[0].mxu0
        %v1364 = vadd.f32 %v533, %v1363
        %v1365 = vpop.f32.mrb[0].mxu0
        %v1366 = vadd.f32 %v537, %v1365
        %1367 = vmatprep.mubr.bf16.mxu0 0
        %1368 = vmatmul.mubr.bf16.gmra.mrb[0].mxu0 %v484
        %v1369 = vpop.f32.mrb[0].mxu0
        %v1370 = vadd.f32 %v533, %v1369
        %v1371 = vpop.f32.mrb[0].mxu0
        %v1372 = vadd.f32 %v537, %v1371
        %v1373 = vpop.f32.mrb[0].mxu0
        %v1374 = vadd.f32 %v533, %v1373
        %v1375 = vpop.f32.mrb[0].mxu0
        %v1376 = vadd.f32 %v537, %v1375
        %1377 = vmatprep.mubr.bf16.mxu0 0
        %1378 = vmatmul.mubr.bf16.gmra.mrb[0].mxu0 %v485
        %v1379 = vpop.f32.mrb[0].mxu0
        %v1380 = vadd.f32 %v533, %v1379
        %v1381 = vpop.f32.mrb[0].mxu0
        %v1382 = vadd.f32 %v537, %v1381
        %v1383 = vpop.f32.mrb[0].mxu0
        %v1384 = vadd.f32 %v533, %v1383
        %v1385 = vpop.f32.mrb[0].mxu0
        %v1386 = vadd.f32 %v537, %v1385
        %1387 = vmatprep.mubr.bf16.mxu0 0
        %1388 = vmatmul.mubr.bf16.gmra.mrb[0].mxu0 %v486
        %v1389 = vpop.f32.mrb[0].mxu0
        %v1390 = vadd.f32 %v533, %v1389
        %v1391 = vpop.f32.mrb[0].mxu0
        %v1392 = vadd.f32 %v537, %v1391
        %v1393 = vpop.f32.mrb[0].mxu0
        %v1394 = vadd.f32 %v533, %v1393
        %v1395 = vpop.f32.mrb[0].mxu0
        %v1396 = vadd.f32 %v537, %v1395
        %1397 = vmatprep.mubr.bf16.mxu0 0
        %1398 = vmatmul.mubr.bf16.gmra.mrb[0].mxu0 %v487
        %v1399 = vpop.f32.mrb[0].mxu0
        %v1400 = vadd.f32 %v533, %v1399
        %v1401 = vpop.f32.mrb[0].mxu0
        %v1402 = vadd.f32 %v537, %v1401
        %v1403 = vpop.f32.mrb[0].mxu0
        %v1404 = vadd.f32 %v533, %v1403
        %v1405 = vpop.f32.mrb[0].mxu0
        %v1406 = vadd.f32 %v537, %v1405
        %1407 = vdwg.mxu0
        %v1408 = vmax.f32 %v737, 0.0
        %v1409 = vmax.f32 %v739, 0.0
        %v1410 = vmax.f32 %v1090, 0.0
        %v1411 = vmax.f32 %v1092, 0.0
        %v1412 = vmax.f32 %v741, 0.0
        %v1413 = vmax.f32 %v743, 0.0
        %v1414 = vmax.f32 %v1094, 0.0
        %v1415 = vmax.f32 %v1096, 0.0
        %v1416 = vmax.f32 %v747, 0.0
        %v1417 = vmax.f32 %v749, 0.0
        %v1418 = vmax.f32 %v1100, 0.0
        %v1419 = vmax.f32 %v1102, 0.0
        %v1420 = vmax.f32 %v751, 0.0
        %v1421 = vmax.f32 %v753, 0.0
        %v1422 = vmax.f32 %v1104, 0.0
        %v1423 = vmax.f32 %v1106, 0.0
        %v1424 = vmax.f32 %v757, 0.0
        %v1425 = vmax.f32 %v759, 0.0
        %v1426 = vmax.f32 %v1110, 0.0
        %v1427 = vmax.f32 %v1112, 0.0
        %v1428 = vmax.f32 %v761, 0.0
        %v1429 = vmax.f32 %v763, 0.0
        %v1430 = vmax.f32 %v1114, 0.0
        %v1431 = vmax.f32 %v1116, 0.0
        %v1432 = vmax.f32 %v767, 0.0
        %v1433 = vmax.f32 %v769, 0.0
        %v1434 = vmax.f32 %v1120, 0.0
        %v1435 = vmax.f32 %v1122, 0.0
        %v1436 = vmax.f32 %v771, 0.0
        %v1437 = vmax.f32 %v773, 0.0
        %v1438 = vmax.f32 %v1124, 0.0
        %v1439 = vmax.f32 %v1126, 0.0
        %v1440 = vmax.f32 %v777, 0.0
        %v1441 = vmax.f32 %v779, 0.0
        %v1442 = vmax.f32 %v1130, 0.0
        %v1443 = vmax.f32 %v1132, 0.0
        %v1444 = vmax.f32 %v781, 0.0
        %v1445 = vmax.f32 %v783, 0.0
        %v1446 = vmax.f32 %v1134, 0.0
        %v1447 = vmax.f32 %v1136, 0.0
        %v1448 = vmax.f32 %v787, 0.0
        %v1449 = vmax.f32 %v789, 0.0
        %v1450 = vmax.f32 %v1140, 0.0
        %v1451 = vmax.f32 %v1142, 0.0
        %v1452 = vmax.f32 %v791, 0.0
        %v1453 = vmax.f32 %v793, 0.0
        %v1454 = vmax.f32 %v1144, 0.0
        %v1455 = vmax.f32 %v1146, 0.0
        %v1456 = vmax.f32 %v797, 0.0
        %v1457 = vmax.f32 %v799, 0.0
        %v1458 = vmax.f32 %v1150, 0.0
        %v1459 = vmax.f32 %v1152, 0.0
        %v1460 = vmax.f32 %v801, 0.0
        %v1461 = vmax.f32 %v803, 0.0
        %v1462 = vmax.f32 %v1154, 0.0
        %v1463 = vmax.f32 %v1156, 0.0
        %v1464 = vmax.f32 %v807, 0.0
        %v1465 = vmax.f32 %v809, 0.0
        %v1466 = vmax.f32 %v1160, 0.0
        %v1467 = vmax.f32 %v1162, 0.0
        %v1468 = vmax.f32 %v811, 0.0
        %v1469 = vmax.f32 %v813, 0.0
        %v1470 = vmax.f32 %v1164, 0.0
        %v1471 = vmax.f32 %v1166, 0.0
        %v1472 = vmax.f32 %v817, 0.0
        %v1473 = vmax.f32 %v819, 0.0
        %v1474 = vmax.f32 %v1170, 0.0
        %v1475 = vmax.f32 %v1172, 0.0
        %v1476 = vmax.f32 %v821, 0.0
        %v1477 = vmax.f32 %v823, 0.0
        %v1478 = vmax.f32 %v1174, 0.0
        %v1479 = vmax.f32 %v1176, 0.0
        %v1480 = vmax.f32 %v827, 0.0
        %v1481 = vmax.f32 %v829, 0.0
        %v1482 = vmax.f32 %v1180, 0.0
        %v1483 = vmax.f32 %v1182, 0.0
        %v1484 = vmax.f32 %v831, 0.0
        %v1485 = vmax.f32 %v833, 0.0
        %v1486 = vmax.f32 %v1184, 0.0
        %v1487 = vmax.f32 %v1186, 0.0
        %v1488 = vmax.f32 %v837, 0.0
        %v1489 = vmax.f32 %v839, 0.0
        %v1490 = vmax.f32 %v1190, 0.0
        %v1491 = vmax.f32 %v1192, 0.0
        %v1492 = vmax.f32 %v841, 0.0
        %v1493 = vmax.f32 %v843, 0.0
        %v1494 = vmax.f32 %v1194, 0.0
        %v1495 = vmax.f32 %v1196, 0.0
        %v1496 = vmax.f32 %v847, 0.0
        %v1497 = vmax.f32 %v849, 0.0
        %v1498 = vmax.f32 %v1200, 0.0
        %v1499 = vmax.f32 %v1202, 0.0
        %v1500 = vmax.f32 %v851, 0.0
        %v1501 = vmax.f32 %v853, 0.0
        %v1502 = vmax.f32 %v1204, 0.0
        %v1503 = vmax.f32 %v1206, 0.0
        %v1504 = vmax.f32 %v857, 0.0
        %v1505 = vmax.f32 %v859, 0.0
        %v1506 = vmax.f32 %v1210, 0.0
        %v1507 = vmax.f32 %v1212, 0.0
        %v1508 = vmax.f32 %v861, 0.0
        %v1509 = vmax.f32 %v863, 0.0
        %v1510 = vmax.f32 %v1214, 0.0
        %v1511 = vmax.f32 %v1216, 0.0
        %v1512 = vmax.f32 %v867, 0.0
        %v1513 = vmax.f32 %v869, 0.0
        %v1514 = vmax.f32 %v1220, 0.0
        %v1515 = vmax.f32 %v1222, 0.0
        %v1516 = vmax.f32 %v871, 0.0
        %v1517 = vmax.f32 %v873, 0.0
        %v1518 = vmax.f32 %v1224, 0.0
        %v1519 = vmax.f32 %v1226, 0.0
        %v1520 = vmax.f32 %v877, 0.0
        %v1521 = vmax.f32 %v879, 0.0
        %v1522 = vmax.f32 %v1230, 0.0
        %v1523 = vmax.f32 %v1232, 0.0
        %v1524 = vmax.f32 %v881, 0.0
        %v1525 = vmax.f32 %v883, 0.0
        %v1526 = vmax.f32 %v1234, 0.0
        %v1527 = vmax.f32 %v1236, 0.0
        %v1528 = vmax.f32 %v887, 0.0
        %v1529 = vmax.f32 %v889, 0.0
        %v1530 = vmax.f32 %v1240, 0.0
        %v1531 = vmax.f32 %v1242, 0.0
        %v1532 = vmax.f32 %v891, 0.0
        %v1533 = vmax.f32 %v893, 0.0
        %v1534 = vmax.f32 %v1244, 0.0
        %v1535 = vmax.f32 %v1246, 0.0
        %v1536 = vmax.f32 %v897, 0.0
        %v1537 = vmax.f32 %v899, 0.0
        %v1538 = vmax.f32 %v1250, 0.0
        %v1539 = vmax.f32 %v1252, 0.0
        %v1540 = vmax.f32 %v901, 0.0
        %v1541 = vmax.f32 %v903, 0.0
        %v1542 = vmax.f32 %v1254, 0.0
        %v1543 = vmax.f32 %v1256, 0.0
        %v1544 = vmax.f32 %v907, 0.0
        %v1545 = vmax.f32 %v909, 0.0
        %v1546 = vmax.f32 %v1260, 0.0
        %v1547 = vmax.f32 %v1262, 0.0
        %v1548 = vmax.f32 %v911, 0.0
        %v1549 = vmax.f32 %v913, 0.0
        %v1550 = vmax.f32 %v1264, 0.0
        %v1551 = vmax.f32 %v1266, 0.0
        %v1552 = vmax.f32 %v917, 0.0
        %v1553 = vmax.f32 %v919, 0.0
        %v1554 = vmax.f32 %v1270, 0.0
        %v1555 = vmax.f32 %v1272, 0.0
        %v1556 = vmax.f32 %v921, 0.0
        %v1557 = vmax.f32 %v923, 0.0
        %v1558 = vmax.f32 %v1274, 0.0
        %v1559 = vmax.f32 %v1276, 0.0
        %v1560 = vmax.f32 %v927, 0.0
        %v1561 = vmax.f32 %v929, 0.0
        %v1562 = vmax.f32 %v1280, 0.0
        %v1563 = vmax.f32 %v1282, 0.0
        %v1564 = vmax.f32 %v931, 0.0
        %v1565 = vmax.f32 %v933, 0.0
        %v1566 = vmax.f32 %v1284, 0.0
        %v1567 = vmax.f32 %v1286, 0.0
        %v1568 = vmax.f32 %v937, 0.0
        %v1569 = vmax.f32 %v939, 0.0
        %v1570 = vmax.f32 %v1290, 0.0
        %v1571 = vmax.f32 %v1292, 0.0
        %v1572 = vmax.f32 %v941, 0.0
        %v1573 = vmax.f32 %v943, 0.0
        %v1574 = vmax.f32 %v1294, 0.0
        %v1575 = vmax.f32 %v1296, 0.0
        %v1576 = vmax.f32 %v947, 0.0
        %v1577 = vmax.f32 %v949, 0.0
        %v1578 = vmax.f32 %v1300, 0.0
        %v1579 = vmax.f32 %v1302, 0.0
        %v1580 = vmax.f32 %v951, 0.0
        %v1581 = vmax.f32 %v953, 0.0
        %v1582 = vmax.f32 %v1304, 0.0
        %v1583 = vmax.f32 %v1306, 0.0
        %v1584 = vmax.f32 %v957, 0.0
        %v1585 = vmax.f32 %v959, 0.0
        %v1586 = vmax.f32 %v1310, 0.0
        %v1587 = vmax.f32 %v1312, 0.0
        %v1588 = vmax.f32 %v961, 0.0
        %v1589 = vmax.f32 %v963, 0.0
        %v1590 = vmax.f32 %v1314, 0.0
        %v1591 = vmax.f32 %v1316, 0.0
        %v1592 = vmax.f32 %v967, 0.0
        %v1593 = vmax.f32 %v969, 0.0
        %v1594 = vmax.f32 %v1320, 0.0
        %v1595 = vmax.f32 %v1322, 0.0
        %v1596 = vmax.f32 %v971, 0.0
        %v1597 = vmax.f32 %v973, 0.0
        %v1598 = vmax.f32 %v1324, 0.0
        %v1599 = vmax.f32 %v1326, 0.0
        %v1600 = vmax.f32 %v977, 0.0
        %v1601 = vmax.f32 %v979, 0.0
        %v1602 = vmax.f32 %v1330, 0.0
        %v1603 = vmax.f32 %v1332, 0.0
        %v1604 = vmax.f32 %v981, 0.0
        %v1605 = vmax.f32 %v983, 0.0
        %v1606 = vmax.f32 %v1334, 0.0
        %v1607 = vmax.f32 %v1336, 0.0
        %v1608 = vmax.f32 %v987, 0.0
        %v1609 = vmax.f32 %v989, 0.0
        %v1610 = vmax.f32 %v1340, 0.0
        %v1611 = vmax.f32 %v1342, 0.0
        %v1612 = vmax.f32 %v991, 0.0
        %v1613 = vmax.f32 %v993, 0.0
        %v1614 = vmax.f32 %v1344, 0.0
        %v1615 = vmax.f32 %v1346, 0.0
        %v1616 = vmax.f32 %v997, 0.0
        %v1617 = vmax.f32 %v999, 0.0
        %v1618 = vmax.f32 %v1350, 0.0
        %v1619 = vmax.f32 %v1352, 0.0
        %v1620 = vmax.f32 %v1001, 0.0
        %v1621 = vmax.f32 %v1003, 0.0
        %v1622 = vmax.f32 %v1354, 0.0
        %v1623 = vmax.f32 %v1356, 0.0
        %v1624 = vmax.f32 %v1007, 0.0
        %v1625 = vmax.f32 %v1009, 0.0
        %v1626 = vmax.f32 %v1360, 0.0
        %v1627 = vmax.f32 %v1362, 0.0
        %v1628 = vmax.f32 %v1011, 0.0
        %v1629 = vmax.f32 %v1013, 0.0
        %v1630 = vmax.f32 %v1364, 0.0
        %v1631 = vmax.f32 %v1366, 0.0
        %v1632 = vmax.f32 %v1017, 0.0
        %v1633 = vmax.f32 %v1019, 0.0
        %v1634 = vmax.f32 %v1370, 0.0
        %v1635 = vmax.f32 %v1372, 0.0
        %v1636 = vmax.f32 %v1021, 0.0
        %v1637 = vmax.f32 %v1023, 0.0
        %v1638 = vmax.f32 %v1374, 0.0
        %v1639 = vmax.f32 %v1376, 0.0
        %v1640 = vmax.f32 %v1027, 0.0
        %v1641 = vmax.f32 %v1029, 0.0
        %v1642 = vmax.f32 %v1380, 0.0
        %v1643 = vmax.f32 %v1382, 0.0
        %v1644 = vmax.f32 %v1031, 0.0
        %v1645 = vmax.f32 %v1033, 0.0
        %v1646 = vmax.f32 %v1384, 0.0
        %v1647 = vmax.f32 %v1386, 0.0
        %v1648 = vmax.f32 %v1037, 0.0
        %v1649 = vmax.f32 %v1039, 0.0
        %v1650 = vmax.f32 %v1390, 0.0
        %v1651 = vmax.f32 %v1392, 0.0
        %v1652 = vmax.f32 %v1041, 0.0
        %v1653 = vmax.f32 %v1043, 0.0
        %v1654 = vmax.f32 %v1394, 0.0
        %v1655 = vmax.f32 %v1396, 0.0
        %v1656 = vmax.f32 %v1047, 0.0
        %v1657 = vmax.f32 %v1049, 0.0
        %v1658 = vmax.f32 %v1400, 0.0
        %v1659 = vmax.f32 %v1402, 0.0
        %v1660 = vmax.f32 %v1051, 0.0
        %v1661 = vmax.f32 %v1053, 0.0
        %v1662 = vmax.f32 %v1404, 0.0
        %v1663 = vmax.f32 %v1406, 0.0
        %v1664 = vld [vmem:[#allocation2] sm:$0xff]
        %v1665 = vld [vmem:[#allocation2 + $0x8] sm:$0xff]
        %v1666 = vld [vmem:[#allocation2 + $0x10] sm:$0xff]
        %v1667 = vld [vmem:[#allocation2 + $0x18] sm:$0xff]
        %v1668 = vld [vmem:[#allocation2 + $0x20] sm:$0xff]
        %v1669 = vld [vmem:[#allocation2 + $0x28] sm:$0xff]
        %v1670 = vld [vmem:[#allocation2 + $0x30] sm:$0xff]
        %v1671 = vld [vmem:[#allocation2 + $0x38] sm:$0xff]
        %v1672 = vld [vmem:[#allocation2 + $0x40] sm:$0xff]
        %v1673 = vld [vmem:[#allocation2 + $0x48] sm:$0xff]
        %v1674 = vld [vmem:[#allocation2 + $0x50] sm:$0xff]
        %v1675 = vld [vmem:[#allocation2 + $0x58] sm:$0xff]
        %v1676 = vld [vmem:[#allocation2 + $0x60] sm:$0xff]
        %v1677 = vld [vmem:[#allocation2 + $0x68] sm:$0xff]
        %v1678 = vld [vmem:[#allocation2 + $0x70] sm:$0xff]
        %v1679 = vld [vmem:[#allocation2 + $0x78] sm:$0xff]
        %v1680 = vld [vmem:[#allocation2 + $0x80] sm:$0xff]
        %v1681 = vld [vmem:[#allocation2 + $0x88] sm:$0xff]
        %v1682 = vld [vmem:[#allocation2 + $0x90] sm:$0xff]
        %v1683 = vld [vmem:[#allocation2 + $0x98] sm:$0xff]
        %v1684 = vld [vmem:[#allocation2 + $0xa0] sm:$0xff]
        %v1685 = vld [vmem:[#allocation2 + $0xa8] sm:$0xff]
        %v1686 = vld [vmem:[#allocation2 + $0xb0] sm:$0xff]
        %v1687 = vld [vmem:[#allocation2 + $0xb8] sm:$0xff]
        %v1688 = vld [vmem:[#allocation2 + $0xc0] sm:$0xff]
        %v1689 = vld [vmem:[#allocation2 + $0xc8] sm:$0xff]
        %v1690 = vld [vmem:[#allocation2 + $0xd0] sm:$0xff]
        %v1691 = vld [vmem:[#allocation2 + $0xd8] sm:$0xff]
        %v1692 = vld [vmem:[#allocation2 + $0xe0] sm:$0xff]
        %v1693 = vld [vmem:[#allocation2 + $0xe8] sm:$0xff]
        %v1694 = vld [vmem:[#allocation2 + $0xf0] sm:$0xff]
        %v1695 = vld [vmem:[#allocation2 + $0xf8] sm:$0xff]
        %v1696 = vld [vmem:[#allocation2 + $0x100] sm:$0xff]
        %v1697 = vld [vmem:[#allocation2 + $0x108] sm:$0xff]
        %v1698 = vld [vmem:[#allocation2 + $0x110] sm:$0xff]
        %v1699 = vld [vmem:[#allocation2 + $0x118] sm:$0xff]
        %v1700 = vld [vmem:[#allocation2 + $0x120] sm:$0xff]
        %v1701 = vld [vmem:[#allocation2 + $0x128] sm:$0xff]
        %v1702 = vld [vmem:[#allocation2 + $0x130] sm:$0xff]
        %v1703 = vld [vmem:[#allocation2 + $0x138] sm:$0xff]
        %v1704 = vld [vmem:[#allocation2 + $0x140] sm:$0xff]
        %v1705 = vld [vmem:[#allocation2 + $0x148] sm:$0xff]
        %v1706 = vld [vmem:[#allocation2 + $0x150] sm:$0xff]
        %v1707 = vld [vmem:[#allocation2 + $0x158] sm:$0xff]
        %v1708 = vld [vmem:[#allocation2 + $0x160] sm:$0xff]
        %v1709 = vld [vmem:[#allocation2 + $0x168] sm:$0xff]
        %v1710 = vld [vmem:[#allocation2 + $0x170] sm:$0xff]
        %v1711 = vld [vmem:[#allocation2 + $0x178] sm:$0xff]
        %v1712 = vld [vmem:[#allocation2 + $0x180] sm:$0xff]
        %v1713 = vld [vmem:[#allocation2 + $0x188] sm:$0xff]
        %v1714 = vld [vmem:[#allocation2 + $0x190] sm:$0xff]
        %v1715 = vld [vmem:[#allocation2 + $0x198] sm:$0xff]
        %v1716 = vld [vmem:[#allocation2 + $0x1a0] sm:$0xff]
        %v1717 = vld [vmem:[#allocation2 + $0x1a8] sm:$0xff]
        %v1718 = vld [vmem:[#allocation2 + $0x1b0] sm:$0xff]
        %v1719 = vld [vmem:[#allocation2 + $0x1b8] sm:$0xff]
        %v1720 = vld [vmem:[#allocation2 + $0x1c0] sm:$0xff]
        %v1721 = vld [vmem:[#allocation2 + $0x1c8] sm:$0xff]
        %v1722 = vld [vmem:[#allocation2 + $0x1d0] sm:$0xff]
        %v1723 = vld [vmem:[#allocation2 + $0x1d8] sm:$0xff]
        %v1724 = vld [vmem:[#allocation2 + $0x1e0] sm:$0xff]
        %v1725 = vld [vmem:[#allocation2 + $0x1e8] sm:$0xff]
        %v1726 = vld [vmem:[#allocation2 + $0x1f0] sm:$0xff]
        %v1727 = vld [vmem:[#allocation2 + $0x1f8] sm:$0xff]
        %v1728 = vpack.c.bf16 %v1412, %v1408
        %v1729 = vpack.c.bf16 %v1413, %v1409
        %v1730 = vpack.c.bf16 %v1414, %v1410
        %v1731 = vpack.c.bf16 %v1415, %v1411
        %v1732 = vpack.c.bf16 %v1420, %v1416
        %v1733 = vpack.c.bf16 %v1421, %v1417
        %v1734 = vpack.c.bf16 %v1422, %v1418
        %v1735 = vpack.c.bf16 %v1423, %v1419
        %v1736 = vpack.c.bf16 %v1428, %v1424
        %v1737 = vpack.c.bf16 %v1429, %v1425
        %v1738 = vpack.c.bf16 %v1430, %v1426
        %v1739 = vpack.c.bf16 %v1431, %v1427
        %v1740 = vpack.c.bf16 %v1436, %v1432
        %v1741 = vpack.c.bf16 %v1437, %v1433
        %v1742 = vpack.c.bf16 %v1438, %v1434
        %v1743 = vpack.c.bf16 %v1439, %v1435
        %v1744 = vpack.c.bf16 %v1444, %v1440
        %v1745 = vpack.c.bf16 %v1445, %v1441
        %v1746 = vpack.c.bf16 %v1446, %v1442
        %v1747 = vpack.c.bf16 %v1447, %v1443
        %v1748 = vpack.c.bf16 %v1452, %v1448
        %v1749 = vpack.c.bf16 %v1453, %v1449
        %v1750 = vpack.c.bf16 %v1454, %v1450
        %v1751 = vpack.c.bf16 %v1455, %v1451
        %v1752 = vpack.c.bf16 %v1460, %v1456
        %v1753 = vpack.c.bf16 %v1461, %v1457
        %v1754 = vpack.c.bf16 %v1462, %v1458
        %v1755 = vpack.c.bf16 %v1463, %v1459
        %v1756 = vpack.c.bf16 %v1468, %v1464
        %v1757 = vpack.c.bf16 %v1469, %v1465
        %v1758 = vpack.c.bf16 %v1470, %v1466
        %v1759 = vpack.c.bf16 %v1471, %v1467
        %v1760 = vpack.c.bf16 %v1476, %v1472
        %v1761 = vpack.c.bf16 %v1477, %v1473
        %v1762 = vpack.c.bf16 %v1478, %v1474
        %v1763 = vpack.c.bf16 %v1479, %v1475
        %v1764 = vpack.c.bf16 %v1484, %v1480
        %v1765 = vpack.c.bf16 %v1485, %v1481
        %v1766 = vpack.c.bf16 %v1486, %v1482
        %v1767 = vpack.c.bf16 %v1487, %v1483
        %v1768 = vpack.c.bf16 %v1492, %v1488
        %v1769 = vpack.c.bf16 %v1493, %v1489
        %v1770 = vpack.c.bf16 %v1494, %v1490
        %v1771 = vpack.c.bf16 %v1495, %v1491
        %v1772 = vpack.c.bf16 %v1500, %v1496
        %v1773 = vpack.c.bf16 %v1501, %v1497
        %v1774 = vpack.c.bf16 %v1502, %v1498
        %v1775 = vpack.c.bf16 %v1503, %v1499
        %v1776 = vpack.c.bf16 %v1508, %v1504
        %v1777 = vpack.c.bf16 %v1509, %v1505
        %v1778 = vpack.c.bf16 %v1510, %v1506
        %v1779 = vpack.c.bf16 %v1511, %v1507
        %v1780 = vpack.c.bf16 %v1516, %v1512
        %v1781 = vpack.c.bf16 %v1517, %v1513
        %v1782 = vpack.c.bf16 %v1518, %v1514
        %v1783 = vpack.c.bf16 %v1519, %v1515
        %v1784 = vpack.c.bf16 %v1524, %v1520
        %v1785 = vpack.c.bf16 %v1525, %v1521
        %v1786 = vpack.c.bf16 %v1526, %v1522
        %v1787 = vpack.c.bf16 %v1527, %v1523
        %v1788 = vpack.c.bf16 %v1532, %v1528
        %v1789 = vpack.c.bf16 %v1533, %v1529
        %v1790 = vpack.c.bf16 %v1534, %v1530
        %v1791 = vpack.c.bf16 %v1535, %v1531
        %v1792 = vpack.c.bf16 %v1540, %v1536
        %v1793 = vpack.c.bf16 %v1541, %v1537
        %v1794 = vpack.c.bf16 %v1542, %v1538
        %v1795 = vpack.c.bf16 %v1543, %v1539
        %v1796 = vpack.c.bf16 %v1548, %v1544
        %v1797 = vpack.c.bf16 %v1549, %v1545
        %v1798 = vpack.c.bf16 %v1550, %v1546
        %v1799 = vpack.c.bf16 %v1551, %v1547
        %v1800 = vpack.c.bf16 %v1556, %v1552
        %v1801 = vpack.c.bf16 %v1557, %v1553
        %v1802 = vpack.c.bf16 %v1558, %v1554
        %v1803 = vpack.c.bf16 %v1559, %v1555
        %v1804 = vpack.c.bf16 %v1564, %v1560
        %v1805 = vpack.c.bf16 %v1565, %v1561
        %v1806 = vpack.c.bf16 %v1566, %v1562
        %v1807 = vpack.c.bf16 %v1567, %v1563
        %v1808 = vpack.c.bf16 %v1572, %v1568
        %v1809 = vpack.c.bf16 %v1573, %v1569
        %v1810 = vpack.c.bf16 %v1574, %v1570
        %v1811 = vpack.c.bf16 %v1575, %v1571
        %v1812 = vpack.c.bf16 %v1580, %v1576
        %v1813 = vpack.c.bf16 %v1581, %v1577
        %v1814 = vpack.c.bf16 %v1582, %v1578
        %v1815 = vpack.c.bf16 %v1583, %v1579
        %v1816 = vpack.c.bf16 %v1588, %v1584
        %v1817 = vpack.c.bf16 %v1589, %v1585
        %v1818 = vpack.c.bf16 %v1590, %v1586
        %v1819 = vpack.c.bf16 %v1591, %v1587
        %v1820 = vpack.c.bf16 %v1596, %v1592
        %v1821 = vpack.c.bf16 %v1597, %v1593
        %v1822 = vpack.c.bf16 %v1598, %v1594
        %v1823 = vpack.c.bf16 %v1599, %v1595
        %v1824 = vpack.c.bf16 %v1604, %v1600
        %v1825 = vpack.c.bf16 %v1605, %v1601
        %v1826 = vpack.c.bf16 %v1606, %v1602
        %v1827 = vpack.c.bf16 %v1607, %v1603
        %v1828 = vpack.c.bf16 %v1612, %v1608
        %v1829 = vpack.c.bf16 %v1613, %v1609
        %v1830 = vpack.c.bf16 %v1614, %v1610
        %v1831 = vpack.c.bf16 %v1615, %v1611
        %v1832 = vpack.c.bf16 %v1620, %v1616
        %v1833 = vpack.c.bf16 %v1621, %v1617
        %v1834 = vpack.c.bf16 %v1622, %v1618
        %v1835 = vpack.c.bf16 %v1623, %v1619
        %v1836 = vpack.c.bf16 %v1628, %v1624
        %v1837 = vpack.c.bf16 %v1629, %v1625
        %v1838 = vpack.c.bf16 %v1630, %v1626
        %v1839 = vpack.c.bf16 %v1631, %v1627
        %v1840 = vpack.c.bf16 %v1636, %v1632
        %v1841 = vpack.c.bf16 %v1637, %v1633
        %v1842 = vpack.c.bf16 %v1638, %v1634
        %v1843 = vpack.c.bf16 %v1639, %v1635
        %v1844 = vpack.c.bf16 %v1644, %v1640
        %v1845 = vpack.c.bf16 %v1645, %v1641
        %v1846 = vpack.c.bf16 %v1646, %v1642
        %v1847 = vpack.c.bf16 %v1647, %v1643
        %v1848 = vpack.c.bf16 %v1652, %v1648
        %v1849 = vpack.c.bf16 %v1653, %v1649
        %v1850 = vpack.c.bf16 %v1654, %v1650
        %v1851 = vpack.c.bf16 %v1655, %v1651
        %v1852 = vpack.c.bf16 %v1660, %v1656
        %v1853 = vpack.c.bf16 %v1661, %v1657
        %v1854 = vpack.c.bf16 %v1662, %v1658
        %v1855 = vpack.c.bf16 %v1663, %v1659
        %v1856 = vld [vmem:[#allocation8] sm:$0xf]
        %v1857 = vld [vmem:[#allocation8 + $0x4] sm:$0xf]
        %v1858 = vld [vmem:[#allocation8 + $0x8] sm:$0xf]
        %v1859 = vld [vmem:[#allocation8 + $0xc] sm:$0xf]
        %v1860 = vld [vmem:[#allocation8 + $0x10] sm:$0xf]
        %v1861 = vld [vmem:[#allocation8 + $0x14] sm:$0xf]
        %v1862 = vld [vmem:[#allocation8 + $0x18] sm:$0xf]
        %v1863 = vld [vmem:[#allocation8 + $0x1c] sm:$0xf]
        %v1864 = vld [vmem:[#allocation8 + $0x20] sm:$0xf]
        %v1865 = vld [vmem:[#allocation8 + $0x24] sm:$0xf]
        %v1866 = vld [vmem:[#allocation8 + $0x28] sm:$0xf]
        %v1867 = vld [vmem:[#allocation8 + $0x2c] sm:$0xf]
        %v1868 = vld [vmem:[#allocation8 + $0x30] sm:$0xf]
        %v1869 = vld [vmem:[#allocation8 + $0x34] sm:$0xf]
        %v1870 = vld [vmem:[#allocation8 + $0x38] sm:$0xf]
        %v1871 = vld [vmem:[#allocation8 + $0x3c] sm:$0xf]
        %v1872 = vld [vmem:[#allocation8 + $0x40] sm:$0xf]
        %v1873 = vld [vmem:[#allocation8 + $0x44] sm:$0xf]
        %v1874 = vld [vmem:[#allocation8 + $0x48] sm:$0xf]
        %v1875 = vld [vmem:[#allocation8 + $0x4c] sm:$0xf]
        %v1876 = vld [vmem:[#allocation8 + $0x50] sm:$0xf]
        %v1877 = vld [vmem:[#allocation8 + $0x54] sm:$0xf]
        %v1878 = vld [vmem:[#allocation8 + $0x58] sm:$0xf]
        %v1879 = vld [vmem:[#allocation8 + $0x5c] sm:$0xf]
        %v1880 = vld [vmem:[#allocation8 + $0x60] sm:$0xf]
        %v1881 = vld [vmem:[#allocation8 + $0x64] sm:$0xf]
        %v1882 = vld [vmem:[#allocation8 + $0x68] sm:$0xf]
        %v1883 = vld [vmem:[#allocation8 + $0x6c] sm:$0xf]
        %v1884 = vld [vmem:[#allocation8 + $0x70] sm:$0xf]
        %v1885 = vld [vmem:[#allocation8 + $0x74] sm:$0xf]
        %v1886 = vld [vmem:[#allocation8 + $0x78] sm:$0xf]
        %v1887 = vld [vmem:[#allocation8 + $0x7c] sm:$0xf]
        %v1888 = vld [vmem:[#allocation8 + $0x80] sm:$0xf]
        %v1889 = vld [vmem:[#allocation8 + $0x84] sm:$0xf]
        %v1890 = vld [vmem:[#allocation8 + $0x88] sm:$0xf]
        %v1891 = vld [vmem:[#allocation8 + $0x8c] sm:$0xf]
        %v1892 = vld [vmem:[#allocation8 + $0x90] sm:$0xf]
        %v1893 = vld [vmem:[#allocation8 + $0x94] sm:$0xf]
        %v1894 = vld [vmem:[#allocation8 + $0x98] sm:$0xf]
        %v1895 = vld [vmem:[#allocation8 + $0x9c] sm:$0xf]
        %v1896 = vld [vmem:[#allocation8 + $0xa0] sm:$0xf]
        %v1897 = vld [vmem:[#allocation8 + $0xa4] sm:$0xf]
        %v1898 = vld [vmem:[#allocation8 + $0xa8] sm:$0xf]
        %v1899 = vld [vmem:[#allocation8 + $0xac] sm:$0xf]
        %v1900 = vld [vmem:[#allocation8 + $0xb0] sm:$0xf]
        %v1901 = vld [vmem:[#allocation8 + $0xb4] sm:$0xf]
        %v1902 = vld [vmem:[#allocation8 + $0xb8] sm:$0xf]
        %v1903 = vld [vmem:[#allocation8 + $0xbc] sm:$0xf]
        %v1904 = vld [vmem:[#allocation8 + $0xc0] sm:$0xf]
        %v1905 = vld [vmem:[#allocation8 + $0xc4] sm:$0xf]
        %v1906 = vld [vmem:[#allocation8 + $0xc8] sm:$0xf]
        %v1907 = vld [vmem:[#allocation8 + $0xcc] sm:$0xf]
        %v1908 = vld [vmem:[#allocation8 + $0xd0] sm:$0xf]
        %v1909 = vld [vmem:[#allocation8 + $0xd4] sm:$0xf]
        %v1910 = vld [vmem:[#allocation8 + $0xd8] sm:$0xf]
        %v1911 = vld [vmem:[#allocation8 + $0xdc] sm:$0xf]
        %v1912 = vld [vmem:[#allocation8 + $0xe0] sm:$0xf]
        %v1913 = vld [vmem:[#allocation8 + $0xe4] sm:$0xf]
        %v1914 = vld [vmem:[#allocation8 + $0xe8] sm:$0xf]
        %v1915 = vld [vmem:[#allocation8 + $0xec] sm:$0xf]
        %v1916 = vld [vmem:[#allocation8 + $0xf0] sm:$0xf]
        %v1917 = vld [vmem:[#allocation8 + $0xf4] sm:$0xf]
        %v1918 = vld [vmem:[#allocation8 + $0xf8] sm:$0xf]
        %v1919 = vld [vmem:[#allocation8 + $0xfc] sm:$0xf]
        %v1984 = vunpack.c.l.b16 %v1856
        %v1985 = vunpack.c.l.b16 %v1857
        %v1986 = vunpack.c.l.b16 %v1858
        %v1987 = vunpack.c.l.b16 %v1859
        %v1988 = vunpack.c.l.b16 %v1860
        %v1989 = vunpack.c.l.b16 %v1861
        %v1990 = vunpack.c.l.b16 %v1862
        %v1991 = vunpack.c.l.b16 %v1863
        %v1992 = vunpack.c.l.b16 %v1864
        %v1993 = vunpack.c.l.b16 %v1865
        %v1994 = vunpack.c.l.b16 %v1866
        %v1995 = vunpack.c.l.b16 %v1867
        %v1996 = vunpack.c.l.b16 %v1868
        %v1997 = vunpack.c.l.b16 %v1869
        %v1998 = vunpack.c.l.b16 %v1870
        %v1999 = vunpack.c.l.b16 %v1871
        %v2000 = vunpack.c.l.b16 %v1872
        %v2001 = vunpack.c.l.b16 %v1873
        %v2002 = vunpack.c.l.b16 %v1874
        %v2003 = vunpack.c.l.b16 %v1875
        %v2004 = vunpack.c.l.b16 %v1876
        %v2005 = vunpack.c.l.b16 %v1877
        %v2006 = vunpack.c.l.b16 %v1878
        %v2007 = vunpack.c.l.b16 %v1879
        %v2008 = vunpack.c.l.b16 %v1880
        %v2009 = vunpack.c.l.b16 %v1881
        %v2010 = vunpack.c.l.b16 %v1882
        %v2011 = vunpack.c.l.b16 %v1883
        %v2012 = vunpack.c.l.b16 %v1884
        %v2013 = vunpack.c.l.b16 %v1885
        %v2014 = vunpack.c.l.b16 %v1886
        %v2015 = vunpack.c.l.b16 %v1887
        %v2016 = vunpack.c.l.b16 %v1888
        %v2017 = vunpack.c.l.b16 %v1889
        %v2018 = vunpack.c.l.b16 %v1890
        %v2019 = vunpack.c.l.b16 %v1891
        %v2020 = vunpack.c.l.b16 %v1892
        %v2021 = vunpack.c.l.b16 %v1893
        %v2022 = vunpack.c.l.b16 %v1894
        %v2023 = vunpack.c.l.b16 %v1895
        %v2024 = vunpack.c.l.b16 %v1896
        %v2025 = vunpack.c.l.b16 %v1897
        %v2026 = vunpack.c.l.b16 %v1898
        %v2027 = vunpack.c.l.b16 %v1899
        %v2028 = vunpack.c.l.b16 %v1900
        %v2029 = vunpack.c.l.b16 %v1901
        %v2030 = vunpack.c.l.b16 %v1902
        %v2031 = vunpack.c.l.b16 %v1903
        %v2032 = vunpack.c.l.b16 %v1904
        %v2033 = vunpack.c.l.b16 %v1905
        %v2034 = vunpack.c.l.b16 %v1906
        %v2035 = vunpack.c.l.b16 %v1907
        %v2036 = vunpack.c.l.b16 %v1908
        %v2037 = vunpack.c.l.b16 %v1909
        %v2038 = vunpack.c.l.b16 %v1910
        %v2039 = vunpack.c.l.b16 %v1911
        %v2040 = vunpack.c.l.b16 %v1912
        %v2041 = vunpack.c.l.b16 %v1913
        %v2042 = vunpack.c.l.b16 %v1914
        %v2043 = vunpack.c.l.b16 %v1915
        %v2044 = vunpack.c.l.b16 %v1916
        %v2045 = vunpack.c.l.b16 %v1917
        %v2046 = vunpack.c.l.b16 %v1918
        %v2047 = vunpack.c.l.b16 %v1919
        %v2048 = vpack.c.b16 %v1985, %v1984
        %v2049 = vpack.c.b16 %v1987, %v1986
        %v2050 = vpack.c.b16 %v1989, %v1988
        %v2051 = vpack.c.b16 %v1991, %v1990
        %v2052 = vpack.c.b16 %v1993, %v1992
        %v2053 = vpack.c.b16 %v1995, %v1994
        %v2054 = vpack.c.b16 %v1997, %v1996
        %v2055 = vpack.c.b16 %v1999, %v1998
        %v2056 = vpack.c.b16 %v2001, %v2000
        %v2057 = vpack.c.b16 %v2003, %v2002
        %v2058 = vpack.c.b16 %v2005, %v2004
        %v2059 = vpack.c.b16 %v2007, %v2006
        %v2060 = vpack.c.b16 %v2009, %v2008
        %v2061 = vpack.c.b16 %v2011, %v2010
        %v2062 = vpack.c.b16 %v2013, %v2012
        %v2063 = vpack.c.b16 %v2015, %v2014
        %v2064 = vpack.c.b16 %v2017, %v2016
        %v2065 = vpack.c.b16 %v2019, %v2018
        %v2066 = vpack.c.b16 %v2021, %v2020
        %v2067 = vpack.c.b16 %v2023, %v2022
        %v2068 = vpack.c.b16 %v2025, %v2024
        %v2069 = vpack.c.b16 %v2027, %v2026
        %v2070 = vpack.c.b16 %v2029, %v2028
        %v2071 = vpack.c.b16 %v2031, %v2030
        %v2072 = vpack.c.b16 %v2033, %v2032
        %v2073 = vpack.c.b16 %v2035, %v2034
        %v2074 = vpack.c.b16 %v2037, %v2036
        %v2075 = vpack.c.b16 %v2039, %v2038
        %v2076 = vpack.c.b16 %v2041, %v2040
        %v2077 = vpack.c.b16 %v2043, %v2042
        %v2078 = vpack.c.b16 %v2045, %v2044
        %v2079 = vpack.c.b16 %v2047, %v2046
        %2112 = vmatprep.subr.bf16.mxu0 0
        %2113 = vmatpush1.bf16.msra.mxu0 %v2048
        %2114 = vmatprep.subr.bf16.mxu0 0
        %2115 = vmatpush1.bf16.msra.mxu0 %v2049
        %2116 = vmatprep.subr.bf16.mxu0 0
        %2117 = vmatpush1.bf16.msra.mxu0 %v2050
        %2118 = vmatprep.subr.bf16.mxu0 0
        %2119 = vmatpush1.bf16.msra.mxu0 %v2051
        %2120 = vmatprep.subr.bf16.mxu0 0
        %2121 = vmatpush1.bf16.msra.mxu0 %v2052
        %2122 = vmatprep.subr.bf16.mxu0 0
        %2123 = vmatpush1.bf16.msra.mxu0 %v2053
        %2124 = vmatprep.subr.bf16.mxu0 0
        %2125 = vmatpush1.bf16.msra.mxu0 %v2054
        %2126 = vmatprep.subr.bf16.mxu0 0
        %2127 = vmatpush1.bf16.msra.mxu0 %v2055
        %2128 = vmatprep.subr.bf16.mxu0 0
        %2129 = vmatpush1.bf16.msra.mxu0 %v2056
        %2130 = vmatprep.subr.bf16.mxu0 0
        %2131 = vmatpush1.bf16.msra.mxu0 %v2057
        %2132 = vmatprep.subr.bf16.mxu0 0
        %2133 = vmatpush1.bf16.msra.mxu0 %v2058
        %2134 = vmatprep.subr.bf16.mxu0 0
        %2135 = vmatpush1.bf16.msra.mxu0 %v2059
        %2136 = vmatprep.subr.bf16.mxu0 0
        %2137 = vmatpush1.bf16.msra.mxu0 %v2060
        %2138 = vmatprep.subr.bf16.mxu0 0
        %2139 = vmatpush1.bf16.msra.mxu0 %v2061
        %2140 = vmatprep.subr.bf16.mxu0 0
        %2141 = vmatpush1.bf16.msra.mxu0 %v2062
        %2142 = vmatprep.subr.bf16.mxu0 0
        %2143 = vmatpush1.bf16.msra.mxu0 %v2063
        %2144 = vmatprep.mubr.bf16.mxu0 %v1729
        %2145 = vmatmul.mubr.bf16.gmra.mrb[0].mxu0 %v1728
        %v2146 = vpop.f32.mrb[0].mxu0
        %v2147 = vadd.f32 0.0, %v2146
        %v2148 = vpop.f32.mrb[0].mxu0
        %v2149 = vpop.f32.mrb[0].mxu0
        %v2150 = vadd.f32 0.0, %v2149
        %v2151 = vpop.f32.mrb[0].mxu0
        %2152 = vmatprep.mubr.bf16.mxu0 %v1733
        %2153 = vmatmul.mubr.bf16.gmra.mrb[0].mxu0 %v1732
        %v2154 = vpop.f32.mrb[0].mxu0
        %v2155 = vadd.f32 0.0, %v2154
        %v2156 = vpop.f32.mrb[0].mxu0
        %v2157 = vpop.f32.mrb[0].mxu0
        %v2158 = vadd.f32 0.0, %v2157
        %v2159 = vpop.f32.mrb[0].mxu0
        %2160 = vmatprep.mubr.bf16.mxu0 %v1737
        %2161 = vmatmul.mubr.bf16.gmra.mrb[0].mxu0 %v1736
        %v2162 = vpop.f32.mrb[0].mxu0
        %v2163 = vadd.f32 0.0, %v2162
        %v2164 = vpop.f32.mrb[0].mxu0
        %v2165 = vpop.f32.mrb[0].mxu0
        %v2166 = vadd.f32 0.0, %v2165
        %v2167 = vpop.f32.mrb[0].mxu0
        %2168 = vmatprep.mubr.bf16.mxu0 %v1741
        %2169 = vmatmul.mubr.bf16.gmra.mrb[0].mxu0 %v1740
        %v2170 = vpop.f32.mrb[0].mxu0
        %v2171 = vadd.f32 0.0, %v2170
        %v2172 = vpop.f32.mrb[0].mxu0
        %v2173 = vpop.f32.mrb[0].mxu0
        %v2174 = vadd.f32 0.0, %v2173
        %v2175 = vpop.f32.mrb[0].mxu0
        %2176 = vmatprep.mubr.bf16.mxu0 %v1745
        %2177 = vmatmul.mubr.bf16.gmra.mrb[0].mxu0 %v1744
        %v2178 = vpop.f32.mrb[0].mxu0
        %v2179 = vadd.f32 0.0, %v2178
        %v2180 = vpop.f32.mrb[0].mxu0
        %v2181 = vpop.f32.mrb[0].mxu0
        %v2182 = vadd.f32 0.0, %v2181
        %v2183 = vpop.f32.mrb[0].mxu0
        %2184 = vmatprep.mubr.bf16.mxu0 %v1749
        %2185 = vmatmul.mubr.bf16.gmra.mrb[0].mxu0 %v1748
        %v2186 = vpop.f32.mrb[0].mxu0
        %v2187 = vadd.f32 0.0, %v2186
        %v2188 = vpop.f32.mrb[0].mxu0
        %v2189 = vpop.f32.mrb[0].mxu0
        %v2190 = vadd.f32 0.0, %v2189
        %v2191 = vpop.f32.mrb[0].mxu0
        %2192 = vmatprep.mubr.bf16.mxu0 %v1753
        %2193 = vmatmul.mubr.bf16.gmra.mrb[0].mxu0 %v1752
        %v2194 = vpop.f32.mrb[0].mxu0
        %v2195 = vadd.f32 0.0, %v2194
        %v2196 = vpop.f32.mrb[0].mxu0
        %v2197 = vpop.f32.mrb[0].mxu0
        %v2198 = vadd.f32 0.0, %v2197
        %v2199 = vpop.f32.mrb[0].mxu0
        %2200 = vmatprep.mubr.bf16.mxu0 %v1757
        %2201 = vmatmul.mubr.bf16.gmra.mrb[0].mxu0 %v1756
        %v2202 = vpop.f32.mrb[0].mxu0
        %v2203 = vadd.f32 0.0, %v2202
        %v2204 = vpop.f32.mrb[0].mxu0
        %v2205 = vpop.f32.mrb[0].mxu0
        %v2206 = vadd.f32 0.0, %v2205
        %v2207 = vpop.f32.mrb[0].mxu0
        %2208 = vmatprep.mubr.bf16.mxu0 %v1761
        %2209 = vmatmul.mubr.bf16.gmra.mrb[0].mxu0 %v1760
        %v2210 = vpop.f32.mrb[0].mxu0
        %v2211 = vadd.f32 0.0, %v2210
        %v2212 = vpop.f32.mrb[0].mxu0
        %v2213 = vpop.f32.mrb[0].mxu0
        %v2214 = vadd.f32 0.0, %v2213
        %v2215 = vpop.f32.mrb[0].mxu0
        %2216 = vmatprep.mubr.bf16.mxu0 %v1765
        %2217 = vmatmul.mubr.bf16.gmra.mrb[0].mxu0 %v1764
        %v2218 = vpop.f32.mrb[0].mxu0
        %v2219 = vadd.f32 0.0, %v2218
        %v2220 = vpop.f32.mrb[0].mxu0
        %v2221 = vpop.f32.mrb[0].mxu0
        %v2222 = vadd.f32 0.0, %v2221
        %v2223 = vpop.f32.mrb[0].mxu0
        %2224 = vmatprep.mubr.bf16.mxu0 %v1769
        %2225 = vmatmul.mubr.bf16.gmra.mrb[0].mxu0 %v1768
        %v2226 = vpop.f32.mrb[0].mxu0
        %v2227 = vadd.f32 0.0, %v2226
        %v2228 = vpop.f32.mrb[0].mxu0
        %v2229 = vpop.f32.mrb[0].mxu0
        %v2230 = vadd.f32 0.0, %v2229
        %v2231 = vpop.f32.mrb[0].mxu0
        %2232 = vmatprep.mubr.bf16.mxu0 %v1773
        %2233 = vmatmul.mubr.bf16.gmra.mrb[0].mxu0 %v1772
        %v2234 = vpop.f32.mrb[0].mxu0
        %v2235 = vadd.f32 0.0, %v2234
        %v2236 = vpop.f32.mrb[0].mxu0
        %v2237 = vpop.f32.mrb[0].mxu0
        %v2238 = vadd.f32 0.0, %v2237
        %v2239 = vpop.f32.mrb[0].mxu0
        %2240 = vmatprep.mubr.bf16.mxu0 %v1777
        %2241 = vmatmul.mubr.bf16.gmra.mrb[0].mxu0 %v1776
        %v2242 = vpop.f32.mrb[0].mxu0
        %v2243 = vadd.f32 0.0, %v2242
        %v2244 = vpop.f32.mrb[0].mxu0
        %v2245 = vpop.f32.mrb[0].mxu0
        %v2246 = vadd.f32 0.0, %v2245
        %v2247 = vpop.f32.mrb[0].mxu0
        %2248 = vmatprep.mubr.bf16.mxu0 %v1781
        %2249 = vmatmul.mubr.bf16.gmra.mrb[0].mxu0 %v1780
        %v2250 = vpop.f32.mrb[0].mxu0
        %v2251 = vadd.f32 0.0, %v2250
        %v2252 = vpop.f32.mrb[0].mxu0
        %v2253 = vpop.f32.mrb[0].mxu0
        %v2254 = vadd.f32 0.0, %v2253
        %v2255 = vpop.f32.mrb[0].mxu0
        %2256 = vmatprep.mubr.bf16.mxu0 %v1785
        %2257 = vmatmul.mubr.bf16.gmra.mrb[0].mxu0 %v1784
        %v2258 = vpop.f32.mrb[0].mxu0
        %v2259 = vadd.f32 0.0, %v2258
        %v2260 = vpop.f32.mrb[0].mxu0
        %v2261 = vpop.f32.mrb[0].mxu0
        %v2262 = vadd.f32 0.0, %v2261
        %v2263 = vpop.f32.mrb[0].mxu0
        %2264 = vmatprep.mubr.bf16.mxu0 %v1789
        %2265 = vmatmul.mubr.bf16.gmra.mrb[0].mxu0 %v1788
        %v2266 = vpop.f32.mrb[0].mxu0
        %v2267 = vadd.f32 0.0, %v2266
        %v2268 = vpop.f32.mrb[0].mxu0
        %v2269 = vpop.f32.mrb[0].mxu0
        %v2270 = vadd.f32 0.0, %v2269
        %v2271 = vpop.f32.mrb[0].mxu0
        %2272 = vmatprep.mubr.bf16.mxu0 %v1793
        %2273 = vmatmul.mubr.bf16.gmra.mrb[0].mxu0 %v1792
        %v2274 = vpop.f32.mrb[0].mxu0
        %v2275 = vadd.f32 0.0, %v2274
        %v2276 = vpop.f32.mrb[0].mxu0
        %v2277 = vpop.f32.mrb[0].mxu0
        %v2278 = vadd.f32 0.0, %v2277
        %v2279 = vpop.f32.mrb[0].mxu0
        %2280 = vmatprep.mubr.bf16.mxu0 %v1797
        %2281 = vmatmul.mubr.bf16.gmra.mrb[0].mxu0 %v1796
        %v2282 = vpop.f32.mrb[0].mxu0
        %v2283 = vadd.f32 0.0, %v2282
        %v2284 = vpop.f32.mrb[0].mxu0
        %v2285 = vpop.f32.mrb[0].mxu0
        %v2286 = vadd.f32 0.0, %v2285
        %v2287 = vpop.f32.mrb[0].mxu0
        %2288 = vmatprep.mubr.bf16.mxu0 %v1801
        %2289 = vmatmul.mubr.bf16.gmra.mrb[0].mxu0 %v1800
        %v2290 = vpop.f32.mrb[0].mxu0
        %v2291 = vadd.f32 0.0, %v2290
        %v2292 = vpop.f32.mrb[0].mxu0
        %v2293 = vpop.f32.mrb[0].mxu0
        %v2294 = vadd.f32 0.0, %v2293
        %v2295 = vpop.f32.mrb[0].mxu0
        %2296 = vmatprep.mubr.bf16.mxu0 %v1805
        %2297 = vmatmul.mubr.bf16.gmra.mrb[0].mxu0 %v1804
        %v2298 = vpop.f32.mrb[0].mxu0
        %v2299 = vadd.f32 0.0, %v2298
        %v2300 = vpop.f32.mrb[0].mxu0
        %v2301 = vpop.f32.mrb[0].mxu0
        %v2302 = vadd.f32 0.0, %v2301
        %v2303 = vpop.f32.mrb[0].mxu0
        %2304 = vmatprep.mubr.bf16.mxu0 %v1809
        %2305 = vmatmul.mubr.bf16.gmra.mrb[0].mxu0 %v1808
        %v2306 = vpop.f32.mrb[0].mxu0
        %v2307 = vadd.f32 0.0, %v2306
        %v2308 = vpop.f32.mrb[0].mxu0
        %v2309 = vpop.f32.mrb[0].mxu0
        %v2310 = vadd.f32 0.0, %v2309
        %v2311 = vpop.f32.mrb[0].mxu0
        %2312 = vmatprep.mubr.bf16.mxu0 %v1813
        %2313 = vmatmul.mubr.bf16.gmra.mrb[0].mxu0 %v1812
        %v2314 = vpop.f32.mrb[0].mxu0
        %v2315 = vadd.f32 0.0, %v2314
        %v2316 = vpop.f32.mrb[0].mxu0
        %v2317 = vpop.f32.mrb[0].mxu0
        %v2318 = vadd.f32 0.0, %v2317
        %v2319 = vpop.f32.mrb[0].mxu0
        %2320 = vmatprep.mubr.bf16.mxu0 %v1817
        %2321 = vmatmul.mubr.bf16.gmra.mrb[0].mxu0 %v1816
        %v2322 = vpop.f32.mrb[0].mxu0
        %v2323 = vadd.f32 0.0, %v2322
        %v2324 = vpop.f32.mrb[0].mxu0
        %v2325 = vpop.f32.mrb[0].mxu0
        %v2326 = vadd.f32 0.0, %v2325
        %v2327 = vpop.f32.mrb[0].mxu0
        %2328 = vmatprep.mubr.bf16.mxu0 %v1821
        %2329 = vmatmul.mubr.bf16.gmra.mrb[0].mxu0 %v1820
        %v2330 = vpop.f32.mrb[0].mxu0
        %v2331 = vadd.f32 0.0, %v2330
        %v2332 = vpop.f32.mrb[0].mxu0
        %v2333 = vpop.f32.mrb[0].mxu0
        %v2334 = vadd.f32 0.0, %v2333
        %v2335 = vpop.f32.mrb[0].mxu0
        %2336 = vmatprep.mubr.bf16.mxu0 %v1825
        %2337 = vmatmul.mubr.bf16.gmra.mrb[0].mxu0 %v1824
        %v2338 = vpop.f32.mrb[0].mxu0
        %v2339 = vadd.f32 0.0, %v2338
        %v2340 = vpop.f32.mrb[0].mxu0
        %v2341 = vpop.f32.mrb[0].mxu0
        %v2342 = vadd.f32 0.0, %v2341
        %v2343 = vpop.f32.mrb[0].mxu0
        %2344 = vmatprep.mubr.bf16.mxu0 %v1829
        %2345 = vmatmul.mubr.bf16.gmra.mrb[0].mxu0 %v1828
        %v2346 = vpop.f32.mrb[0].mxu0
        %v2347 = vadd.f32 0.0, %v2346
        %v2348 = vpop.f32.mrb[0].mxu0
        %v2349 = vpop.f32.mrb[0].mxu0
        %v2350 = vadd.f32 0.0, %v2349
        %v2351 = vpop.f32.mrb[0].mxu0
        %2352 = vmatprep.mubr.bf16.mxu0 %v1833
        %2353 = vmatmul.mubr.bf16.gmra.mrb[0].mxu0 %v1832
        %v2354 = vpop.f32.mrb[0].mxu0
        %v2355 = vadd.f32 0.0, %v2354
        %v2356 = vpop.f32.mrb[0].mxu0
        %v2357 = vpop.f32.mrb[0].mxu0
        %v2358 = vadd.f32 0.0, %v2357
        %v2359 = vpop.f32.mrb[0].mxu0
        %2360 = vmatprep.mubr.bf16.mxu0 %v1837
        %2361 = vmatmul.mubr.bf16.gmra.mrb[0].mxu0 %v1836
        %v2362 = vpop.f32.mrb[0].mxu0
        %v2363 = vadd.f32 0.0, %v2362
        %v2364 = vpop.f32.mrb[0].mxu0
        %v2365 = vpop.f32.mrb[0].mxu0
        %v2366 = vadd.f32 0.0, %v2365
        %v2367 = vpop.f32.mrb[0].mxu0
        %2368 = vmatprep.mubr.bf16.mxu0 %v1841
        %2369 = vmatmul.mubr.bf16.gmra.mrb[0].mxu0 %v1840
        %v2370 = vpop.f32.mrb[0].mxu0
        %v2371 = vadd.f32 0.0, %v2370
        %v2372 = vpop.f32.mrb[0].mxu0
        %v2373 = vpop.f32.mrb[0].mxu0
        %v2374 = vadd.f32 0.0, %v2373
        %v2375 = vpop.f32.mrb[0].mxu0
        %2376 = vmatprep.mubr.bf16.mxu0 %v1845
        %2377 = vmatmul.mubr.bf16.gmra.mrb[0].mxu0 %v1844
        %v2378 = vpop.f32.mrb[0].mxu0
        %v2379 = vadd.f32 0.0, %v2378
        %v2380 = vpop.f32.mrb[0].mxu0
        %v2381 = vpop.f32.mrb[0].mxu0
        %v2382 = vadd.f32 0.0, %v2381
        %v2383 = vpop.f32.mrb[0].mxu0
        %2384 = vmatprep.mubr.bf16.mxu0 %v1849
        %2385 = vmatmul.mubr.bf16.gmra.mrb[0].mxu0 %v1848
        %v2386 = vpop.f32.mrb[0].mxu0
        %v2387 = vadd.f32 0.0, %v2386
        %v2388 = vpop.f32.mrb[0].mxu0
        %v2389 = vpop.f32.mrb[0].mxu0
        %v2390 = vadd.f32 0.0, %v2389
        %v2391 = vpop.f32.mrb[0].mxu0
        %2392 = vmatprep.mubr.bf16.mxu0 %v1853
        %2393 = vmatmul.mubr.bf16.gmra.mrb[0].mxu0 %v1852
        %v2394 = vpop.f32.mrb[0].mxu0
        %v2395 = vadd.f32 0.0, %v2394
        %v2396 = vpop.f32.mrb[0].mxu0
        %v2397 = vpop.f32.mrb[0].mxu0
        %v2398 = vadd.f32 0.0, %v2397
        %v2399 = vpop.f32.mrb[0].mxu0
        %2400 = vdwg.mxu0
        %2401 = vmatprep.subr.bf16.mxu0 0
        %2402 = vmatpush1.bf16.msra.mxu0 %v2064
        %2403 = vmatprep.subr.bf16.mxu0 0
        %2404 = vmatpush1.bf16.msra.mxu0 %v2065
        %2405 = vmatprep.subr.bf16.mxu0 0
        %2406 = vmatpush1.bf16.msra.mxu0 %v2066
        %2407 = vmatprep.subr.bf16.mxu0 0
        %2408 = vmatpush1.bf16.msra.mxu0 %v2067
        %2409 = vmatprep.subr.bf16.mxu0 0
        %2410 = vmatpush1.bf16.msra.mxu0 %v2068
        %2411 = vmatprep.subr.bf16.mxu0 0
        %2412 = vmatpush1.bf16.msra.mxu0 %v2069
        %2413 = vmatprep.subr.bf16.mxu0 0
        %2414 = vmatpush1.bf16.msra.mxu0 %v2070
        %2415 = vmatprep.subr.bf16.mxu0 0
        %2416 = vmatpush1.bf16.msra.mxu0 %v2071
        %2417 = vmatprep.subr.bf16.mxu0 0
        %2418 = vmatpush1.bf16.msra.mxu0 %v2072
        %2419 = vmatprep.subr.bf16.mxu0 0
        %2420 = vmatpush1.bf16.msra.mxu0 %v2073
        %2421 = vmatprep.subr.bf16.mxu0 0
        %2422 = vmatpush1.bf16.msra.mxu0 %v2074
        %2423 = vmatprep.subr.bf16.mxu0 0
        %2424 = vmatpush1.bf16.msra.mxu0 %v2075
        %2425 = vmatprep.subr.bf16.mxu0 0
        %2426 = vmatpush1.bf16.msra.mxu0 %v2076
        %2427 = vmatprep.subr.bf16.mxu0 0
        %2428 = vmatpush1.bf16.msra.mxu0 %v2077
        %2429 = vmatprep.subr.bf16.mxu0 0
        %2430 = vmatpush1.bf16.msra.mxu0 %v2078
        %2431 = vmatprep.subr.bf16.mxu0 0
        %2432 = vmatpush1.bf16.msra.mxu0 %v2079
        %2433 = vmatprep.mubr.bf16.mxu0 %v1731
        %2434 = vmatmul.mubr.bf16.gmra.mrb[0].mxu0 %v1730
        %v2435 = vpop.f32.mrb[0].mxu0
        %v2436 = vadd.f32 %v2147, %v2435
        %v2437 = vpop.f32.mrb[0].mxu0
        %v2438 = vpop.f32.mrb[0].mxu0
        %v2439 = vadd.f32 %v2150, %v2438
        %v2440 = vpop.f32.mrb[0].mxu0
        %2441 = vmatprep.mubr.bf16.mxu0 %v1735
        %2442 = vmatmul.mubr.bf16.gmra.mrb[0].mxu0 %v1734
        %v2443 = vpop.f32.mrb[0].mxu0
        %v2444 = vadd.f32 %v2155, %v2443
        %v2445 = vpop.f32.mrb[0].mxu0
        %v2446 = vpop.f32.mrb[0].mxu0
        %v2447 = vadd.f32 %v2158, %v2446
        %v2448 = vpop.f32.mrb[0].mxu0
        %2449 = vmatprep.mubr.bf16.mxu0 %v1739
        %2450 = vmatmul.mubr.bf16.gmra.mrb[0].mxu0 %v1738
        %v2451 = vpop.f32.mrb[0].mxu0
        %v2452 = vadd.f32 %v2163, %v2451
        %v2453 = vpop.f32.mrb[0].mxu0
        %v2454 = vpop.f32.mrb[0].mxu0
        %v2455 = vadd.f32 %v2166, %v2454
        %v2456 = vpop.f32.mrb[0].mxu0
        %2457 = vmatprep.mubr.bf16.mxu0 %v1743
        %2458 = vmatmul.mubr.bf16.gmra.mrb[0].mxu0 %v1742
        %v2459 = vpop.f32.mrb[0].mxu0
        %v2460 = vadd.f32 %v2171, %v2459
        %v2461 = vpop.f32.mrb[0].mxu0
        %v2462 = vpop.f32.mrb[0].mxu0
        %v2463 = vadd.f32 %v2174, %v2462
        %v2464 = vpop.f32.mrb[0].mxu0
        %2465 = vmatprep.mubr.bf16.mxu0 %v1747
        %2466 = vmatmul.mubr.bf16.gmra.mrb[0].mxu0 %v1746
        %v2467 = vpop.f32.mrb[0].mxu0
        %v2468 = vadd.f32 %v2179, %v2467
        %v2469 = vpop.f32.mrb[0].mxu0
        %v2470 = vpop.f32.mrb[0].mxu0
        %v2471 = vadd.f32 %v2182, %v2470
        %v2472 = vpop.f32.mrb[0].mxu0
        %2473 = vmatprep.mubr.bf16.mxu0 %v1751
        %2474 = vmatmul.mubr.bf16.gmra.mrb[0].mxu0 %v1750
        %v2475 = vpop.f32.mrb[0].mxu0
        %v2476 = vadd.f32 %v2187, %v2475
        %v2477 = vpop.f32.mrb[0].mxu0
        %v2478 = vpop.f32.mrb[0].mxu0
        %v2479 = vadd.f32 %v2190, %v2478
        %v2480 = vpop.f32.mrb[0].mxu0
        %2481 = vmatprep.mubr.bf16.mxu0 %v1755
        %2482 = vmatmul.mubr.bf16.gmra.mrb[0].mxu0 %v1754
        %v2483 = vpop.f32.mrb[0].mxu0
        %v2484 = vadd.f32 %v2195, %v2483
        %v2485 = vpop.f32.mrb[0].mxu0
        %v2486 = vpop.f32.mrb[0].mxu0
        %v2487 = vadd.f32 %v2198, %v2486
        %v2488 = vpop.f32.mrb[0].mxu0
        %2489 = vmatprep.mubr.bf16.mxu0 %v1759
        %2490 = vmatmul.mubr.bf16.gmra.mrb[0].mxu0 %v1758
        %v2491 = vpop.f32.mrb[0].mxu0
        %v2492 = vadd.f32 %v2203, %v2491
        %v2493 = vpop.f32.mrb[0].mxu0
        %v2494 = vpop.f32.mrb[0].mxu0
        %v2495 = vadd.f32 %v2206, %v2494
        %v2496 = vpop.f32.mrb[0].mxu0
        %2497 = vmatprep.mubr.bf16.mxu0 %v1763
        %2498 = vmatmul.mubr.bf16.gmra.mrb[0].mxu0 %v1762
        %v2499 = vpop.f32.mrb[0].mxu0
        %v2500 = vadd.f32 %v2211, %v2499
        %v2501 = vpop.f32.mrb[0].mxu0
        %v2502 = vpop.f32.mrb[0].mxu0
        %v2503 = vadd.f32 %v2214, %v2502
        %v2504 = vpop.f32.mrb[0].mxu0
        %2505 = vmatprep.mubr.bf16.mxu0 %v1767
        %2506 = vmatmul.mubr.bf16.gmra.mrb[0].mxu0 %v1766
        %v2507 = vpop.f32.mrb[0].mxu0
        %v2508 = vadd.f32 %v2219, %v2507
        %v2509 = vpop.f32.mrb[0].mxu0
        %v2510 = vpop.f32.mrb[0].mxu0
        %v2511 = vadd.f32 %v2222, %v2510
        %v2512 = vpop.f32.mrb[0].mxu0
        %2513 = vmatprep.mubr.bf16.mxu0 %v1771
        %2514 = vmatmul.mubr.bf16.gmra.mrb[0].mxu0 %v1770
        %v2515 = vpop.f32.mrb[0].mxu0
        %v2516 = vadd.f32 %v2227, %v2515
        %v2517 = vpop.f32.mrb[0].mxu0
        %v2518 = vpop.f32.mrb[0].mxu0
        %v2519 = vadd.f32 %v2230, %v2518
        %v2520 = vpop.f32.mrb[0].mxu0
        %2521 = vmatprep.mubr.bf16.mxu0 %v1775
        %2522 = vmatmul.mubr.bf16.gmra.mrb[0].mxu0 %v1774
        %v2523 = vpop.f32.mrb[0].mxu0
        %v2524 = vadd.f32 %v2235, %v2523
        %v2525 = vpop.f32.mrb[0].mxu0
        %v2526 = vpop.f32.mrb[0].mxu0
        %v2527 = vadd.f32 %v2238, %v2526
        %v2528 = vpop.f32.mrb[0].mxu0
        %2529 = vmatprep.mubr.bf16.mxu0 %v1779
        %2530 = vmatmul.mubr.bf16.gmra.mrb[0].mxu0 %v1778
        %v2531 = vpop.f32.mrb[0].mxu0
        %v2532 = vadd.f32 %v2243, %v2531
        %v2533 = vpop.f32.mrb[0].mxu0
        %v2534 = vpop.f32.mrb[0].mxu0
        %v2535 = vadd.f32 %v2246, %v2534
        %v2536 = vpop.f32.mrb[0].mxu0
        %2537 = vmatprep.mubr.bf16.mxu0 %v1783
        %2538 = vmatmul.mubr.bf16.gmra.mrb[0].mxu0 %v1782
        %v2539 = vpop.f32.mrb[0].mxu0
        %v2540 = vadd.f32 %v2251, %v2539
        %v2541 = vpop.f32.mrb[0].mxu0
        %v2542 = vpop.f32.mrb[0].mxu0
        %v2543 = vadd.f32 %v2254, %v2542
        %v2544 = vpop.f32.mrb[0].mxu0
        %2545 = vmatprep.mubr.bf16.mxu0 %v1787
        %2546 = vmatmul.mubr.bf16.gmra.mrb[0].mxu0 %v1786
        %v2547 = vpop.f32.mrb[0].mxu0
        %v2548 = vadd.f32 %v2259, %v2547
        %v2549 = vpop.f32.mrb[0].mxu0
        %v2550 = vpop.f32.mrb[0].mxu0
        %v2551 = vadd.f32 %v2262, %v2550
        %v2552 = vpop.f32.mrb[0].mxu0
        %2553 = vmatprep.mubr.bf16.mxu0 %v1791
        %2554 = vmatmul.mubr.bf16.gmra.mrb[0].mxu0 %v1790
        %v2555 = vpop.f32.mrb[0].mxu0
        %v2556 = vadd.f32 %v2267, %v2555
        %v2557 = vpop.f32.mrb[0].mxu0
        %v2558 = vpop.f32.mrb[0].mxu0
        %v2559 = vadd.f32 %v2270, %v2558
        %v2560 = vpop.f32.mrb[0].mxu0
        %2561 = vmatprep.mubr.bf16.mxu0 %v1795
        %2562 = vmatmul.mubr.bf16.gmra.mrb[0].mxu0 %v1794
        %v2563 = vpop.f32.mrb[0].mxu0
        %v2564 = vadd.f32 %v2275, %v2563
        %v2565 = vpop.f32.mrb[0].mxu0
        %v2566 = vpop.f32.mrb[0].mxu0
        %v2567 = vadd.f32 %v2278, %v2566
        %v2568 = vpop.f32.mrb[0].mxu0
        %2569 = vmatprep.mubr.bf16.mxu0 %v1799
        %2570 = vmatmul.mubr.bf16.gmra.mrb[0].mxu0 %v1798
        %v2571 = vpop.f32.mrb[0].mxu0
        %v2572 = vadd.f32 %v2283, %v2571
        %v2573 = vpop.f32.mrb[0].mxu0
        %v2574 = vpop.f32.mrb[0].mxu0
        %v2575 = vadd.f32 %v2286, %v2574
        %v2576 = vpop.f32.mrb[0].mxu0
        %2577 = vmatprep.mubr.bf16.mxu0 %v1803
        %2578 = vmatmul.mubr.bf16.gmra.mrb[0].mxu0 %v1802
        %v2579 = vpop.f32.mrb[0].mxu0
        %v2580 = vadd.f32 %v2291, %v2579
        %v2581 = vpop.f32.mrb[0].mxu0
        %v2582 = vpop.f32.mrb[0].mxu0
        %v2583 = vadd.f32 %v2294, %v2582
        %v2584 = vpop.f32.mrb[0].mxu0
        %2585 = vmatprep.mubr.bf16.mxu0 %v1807
        %2586 = vmatmul.mubr.bf16.gmra.mrb[0].mxu0 %v1806
        %v2587 = vpop.f32.mrb[0].mxu0
        %v2588 = vadd.f32 %v2299, %v2587
        %v2589 = vpop.f32.mrb[0].mxu0
        %v2590 = vpop.f32.mrb[0].mxu0
        %v2591 = vadd.f32 %v2302, %v2590
        %v2592 = vpop.f32.mrb[0].mxu0
        %2593 = vmatprep.mubr.bf16.mxu0 %v1811
        %2594 = vmatmul.mubr.bf16.gmra.mrb[0].mxu0 %v1810
        %v2595 = vpop.f32.mrb[0].mxu0
        %v2596 = vadd.f32 %v2307, %v2595
        %v2597 = vpop.f32.mrb[0].mxu0
        %v2598 = vpop.f32.mrb[0].mxu0
        %v2599 = vadd.f32 %v2310, %v2598
        %v2600 = vpop.f32.mrb[0].mxu0
        %2601 = vmatprep.mubr.bf16.mxu0 %v1815
        %2602 = vmatmul.mubr.bf16.gmra.mrb[0].mxu0 %v1814
        %v2603 = vpop.f32.mrb[0].mxu0
        %v2604 = vadd.f32 %v2315, %v2603
        %v2605 = vpop.f32.mrb[0].mxu0
        %v2606 = vpop.f32.mrb[0].mxu0
        %v2607 = vadd.f32 %v2318, %v2606
        %v2608 = vpop.f32.mrb[0].mxu0
        %2609 = vmatprep.mubr.bf16.mxu0 %v1819
        %2610 = vmatmul.mubr.bf16.gmra.mrb[0].mxu0 %v1818
        %v2611 = vpop.f32.mrb[0].mxu0
        %v2612 = vadd.f32 %v2323, %v2611
        %v2613 = vpop.f32.mrb[0].mxu0
        %v2614 = vpop.f32.mrb[0].mxu0
        %v2615 = vadd.f32 %v2326, %v2614
        %v2616 = vpop.f32.mrb[0].mxu0
        %2617 = vmatprep.mubr.bf16.mxu0 %v1823
        %2618 = vmatmul.mubr.bf16.gmra.mrb[0].mxu0 %v1822
        %v2619 = vpop.f32.mrb[0].mxu0
        %v2620 = vadd.f32 %v2331, %v2619
        %v2621 = vpop.f32.mrb[0].mxu0
        %v2622 = vpop.f32.mrb[0].mxu0
        %v2623 = vadd.f32 %v2334, %v2622
        %v2624 = vpop.f32.mrb[0].mxu0
        %2625 = vmatprep.mubr.bf16.mxu0 %v1827
        %2626 = vmatmul.mubr.bf16.gmra.mrb[0].mxu0 %v1826
        %v2627 = vpop.f32.mrb[0].mxu0
        %v2628 = vadd.f32 %v2339, %v2627
        %v2629 = vpop.f32.mrb[0].mxu0
        %v2630 = vpop.f32.mrb[0].mxu0
        %v2631 = vadd.f32 %v2342, %v2630
        %v2632 = vpop.f32.mrb[0].mxu0
        %2633 = vmatprep.mubr.bf16.mxu0 %v1831
        %2634 = vmatmul.mubr.bf16.gmra.mrb[0].mxu0 %v1830
        %v2635 = vpop.f32.mrb[0].mxu0
        %v2636 = vadd.f32 %v2347, %v2635
        %v2637 = vpop.f32.mrb[0].mxu0
        %v2638 = vpop.f32.mrb[0].mxu0
        %v2639 = vadd.f32 %v2350, %v2638
        %v2640 = vpop.f32.mrb[0].mxu0
        %2641 = vmatprep.mubr.bf16.mxu0 %v1835
        %2642 = vmatmul.mubr.bf16.gmra.mrb[0].mxu0 %v1834
        %v2643 = vpop.f32.mrb[0].mxu0
        %v2644 = vadd.f32 %v2355, %v2643
        %v2645 = vpop.f32.mrb[0].mxu0
        %v2646 = vpop.f32.mrb[0].mxu0
        %v2647 = vadd.f32 %v2358, %v2646
        %v2648 = vpop.f32.mrb[0].mxu0
        %2649 = vmatprep.mubr.bf16.mxu0 %v1839
        %2650 = vmatmul.mubr.bf16.gmra.mrb[0].mxu0 %v1838
        %v2651 = vpop.f32.mrb[0].mxu0
        %v2652 = vadd.f32 %v2363, %v2651
        %v2653 = vpop.f32.mrb[0].mxu0
        %v2654 = vpop.f32.mrb[0].mxu0
        %v2655 = vadd.f32 %v2366, %v2654
        %v2656 = vpop.f32.mrb[0].mxu0
        %2657 = vmatprep.mubr.bf16.mxu0 %v1843
        %2658 = vmatmul.mubr.bf16.gmra.mrb[0].mxu0 %v1842
        %v2659 = vpop.f32.mrb[0].mxu0
        %v2660 = vadd.f32 %v2371, %v2659
        %v2661 = vpop.f32.mrb[0].mxu0
        %v2662 = vpop.f32.mrb[0].mxu0
        %v2663 = vadd.f32 %v2374, %v2662
        %v2664 = vpop.f32.mrb[0].mxu0
        %2665 = vmatprep.mubr.bf16.mxu0 %v1847
        %2666 = vmatmul.mubr.bf16.gmra.mrb[0].mxu0 %v1846
        %v2667 = vpop.f32.mrb[0].mxu0
        %v2668 = vadd.f32 %v2379, %v2667
        %v2669 = vpop.f32.mrb[0].mxu0
        %v2670 = vpop.f32.mrb[0].mxu0
        %v2671 = vadd.f32 %v2382, %v2670
        %v2672 = vpop.f32.mrb[0].mxu0
        %2673 = vmatprep.mubr.bf16.mxu0 %v1851
        %2674 = vmatmul.mubr.bf16.gmra.mrb[0].mxu0 %v1850
        %v2675 = vpop.f32.mrb[0].mxu0
        %v2676 = vadd.f32 %v2387, %v2675
        %v2677 = vpop.f32.mrb[0].mxu0
        %v2678 = vpop.f32.mrb[0].mxu0
        %v2679 = vadd.f32 %v2390, %v2678
        %v2680 = vpop.f32.mrb[0].mxu0
        %2681 = vmatprep.mubr.bf16.mxu0 %v1855
        %2682 = vmatmul.mubr.bf16.gmra.mrb[0].mxu0 %v1854
        %v2683 = vpop.f32.mrb[0].mxu0
        %v2684 = vadd.f32 %v2395, %v2683
        %v2685 = vpop.f32.mrb[0].mxu0
        %v2686 = vpop.f32.mrb[0].mxu0
        %v2687 = vadd.f32 %v2398, %v2686
        %v2688 = vpop.f32.mrb[0].mxu0
        %2689 = vdwg.mxu0
        %v2690 = vadd.f32 %v1664, %v2436
        %v2691 = vadd.f32 %v1665, %v2439
        %v2692 = vadd.f32 %v1666, %v2444
        %v2693 = vadd.f32 %v1667, %v2447
        %v2694 = vadd.f32 %v1668, %v2452
        %v2695 = vadd.f32 %v1669, %v2455
        %v2696 = vadd.f32 %v1670, %v2460
        %v2697 = vadd.f32 %v1671, %v2463
        %v2698 = vadd.f32 %v1672, %v2468
        %v2699 = vadd.f32 %v1673, %v2471
        %v2700 = vadd.f32 %v1674, %v2476
        %v2701 = vadd.f32 %v1675, %v2479
        %v2702 = vadd.f32 %v1676, %v2484
        %v2703 = vadd.f32 %v1677, %v2487
        %v2704 = vadd.f32 %v1678, %v2492
        %v2705 = vadd.f32 %v1679, %v2495
        %v2706 = vadd.f32 %v1680, %v2500
        %v2707 = vadd.f32 %v1681, %v2503
        %v2708 = vadd.f32 %v1682, %v2508
        %v2709 = vadd.f32 %v1683, %v2511
        %v2710 = vadd.f32 %v1684, %v2516
        %v2711 = vadd.f32 %v1685, %v2519
        %v2712 = vadd.f32 %v1686, %v2524
        %v2713 = vadd.f32 %v1687, %v2527
        %v2714 = vadd.f32 %v1688, %v2532
        %v2715 = vadd.f32 %v1689, %v2535
        %v2716 = vadd.f32 %v1690, %v2540
        %v2717 = vadd.f32 %v1691, %v2543
        %v2718 = vadd.f32 %v1692, %v2548
        %v2719 = vadd.f32 %v1693, %v2551
        %v2720 = vadd.f32 %v1694, %v2556
        %v2721 = vadd.f32 %v1695, %v2559
        %v2722 = vadd.f32 %v1696, %v2564
        %v2723 = vadd.f32 %v1697, %v2567
        %v2724 = vadd.f32 %v1698, %v2572
        %v2725 = vadd.f32 %v1699, %v2575
        %v2726 = vadd.f32 %v1700, %v2580
        %v2727 = vadd.f32 %v1701, %v2583
        %v2728 = vadd.f32 %v1702, %v2588
        %v2729 = vadd.f32 %v1703, %v2591
        %v2730 = vadd.f32 %v1704, %v2596
        %v2731 = vadd.f32 %v1705, %v2599
        %v2732 = vadd.f32 %v1706, %v2604
        %v2733 = vadd.f32 %v1707, %v2607
        %v2734 = vadd.f32 %v1708, %v2612
        %v2735 = vadd.f32 %v1709, %v2615
        %v2736 = vadd.f32 %v1710, %v2620
        %v2737 = vadd.f32 %v1711, %v2623
        %v2738 = vadd.f32 %v1712, %v2628
        %v2739 = vadd.f32 %v1713, %v2631
        %v2740 = vadd.f32 %v1714, %v2636
        %v2741 = vadd.f32 %v1715, %v2639
        %v2742 = vadd.f32 %v1716, %v2644
        %v2743 = vadd.f32 %v1717, %v2647
        %v2744 = vadd.f32 %v1718, %v2652
        %v2745 = vadd.f32 %v1719, %v2655
        %v2746 = vadd.f32 %v1720, %v2660
        %v2747 = vadd.f32 %v1721, %v2663
        %v2748 = vadd.f32 %v1722, %v2668
        %v2749 = vadd.f32 %v1723, %v2671
        %v2750 = vadd.f32 %v1724, %v2676
        %v2751 = vadd.f32 %v1725, %v2679
        %v2752 = vadd.f32 %v1726, %v2684
        %v2753 = vadd.f32 %v1727, %v2687
        %2754 = vst [vmem:[#allocation2] sm:$0xff] %v2690
        %2755 = vst [vmem:[#allocation2 + $0x8] sm:$0xff] %v2691
        %2756 = vst [vmem:[#allocation2 + $0x10] sm:$0xff] %v2692
        %2757 = vst [vmem:[#allocation2 + $0x18] sm:$0xff] %v2693
        %2758 = vst [vmem:[#allocation2 + $0x20] sm:$0xff] %v2694
        %2759 = vst [vmem:[#allocation2 + $0x28] sm:$0xff] %v2695
        %2760 = vst [vmem:[#allocation2 + $0x30] sm:$0xff] %v2696
        %2761 = vst [vmem:[#allocation2 + $0x38] sm:$0xff] %v2697
        %2762 = vst [vmem:[#allocation2 + $0x40] sm:$0xff] %v2698
        %2763 = vst [vmem:[#allocation2 + $0x48] sm:$0xff] %v2699
        %2764 = vst [vmem:[#allocation2 + $0x50] sm:$0xff] %v2700
        %2765 = vst [vmem:[#allocation2 + $0x58] sm:$0xff] %v2701
        %2766 = vst [vmem:[#allocation2 + $0x60] sm:$0xff] %v2702
        %2767 = vst [vmem:[#allocation2 + $0x68] sm:$0xff] %v2703
        %2768 = vst [vmem:[#allocation2 + $0x70] sm:$0xff] %v2704
        %2769 = vst [vmem:[#allocation2 + $0x78] sm:$0xff] %v2705
        %2770 = vst [vmem:[#allocation2 + $0x80] sm:$0xff] %v2706
        %2771 = vst [vmem:[#allocation2 + $0x88] sm:$0xff] %v2707
        %2772 = vst [vmem:[#allocation2 + $0x90] sm:$0xff] %v2708
        %2773 = vst [vmem:[#allocation2 + $0x98] sm:$0xff] %v2709
        %2774 = vst [vmem:[#allocation2 + $0xa0] sm:$0xff] %v2710
        %2775 = vst [vmem:[#allocation2 + $0xa8] sm:$0xff] %v2711
        %2776 = vst [vmem:[#allocation2 + $0xb0] sm:$0xff] %v2712
        %2777 = vst [vmem:[#allocation2 + $0xb8] sm:$0xff] %v2713
        %2778 = vst [vmem:[#allocation2 + $0xc0] sm:$0xff] %v2714
        %2779 = vst [vmem:[#allocation2 + $0xc8] sm:$0xff] %v2715
        %2780 = vst [vmem:[#allocation2 + $0xd0] sm:$0xff] %v2716
        %2781 = vst [vmem:[#allocation2 + $0xd8] sm:$0xff] %v2717
        %2782 = vst [vmem:[#allocation2 + $0xe0] sm:$0xff] %v2718
        %2783 = vst [vmem:[#allocation2 + $0xe8] sm:$0xff] %v2719
        %2784 = vst [vmem:[#allocation2 + $0xf0] sm:$0xff] %v2720
        %2785 = vst [vmem:[#allocation2 + $0xf8] sm:$0xff] %v2721
        %2786 = vst [vmem:[#allocation2 + $0x100] sm:$0xff] %v2722
        %2787 = vst [vmem:[#allocation2 + $0x108] sm:$0xff] %v2723
        %2788 = vst [vmem:[#allocation2 + $0x110] sm:$0xff] %v2724
        %2789 = vst [vmem:[#allocation2 + $0x118] sm:$0xff] %v2725
        %2790 = vst [vmem:[#allocation2 + $0x120] sm:$0xff] %v2726
        %2791 = vst [vmem:[#allocation2 + $0x128] sm:$0xff] %v2727
        %2792 = vst [vmem:[#allocation2 + $0x130] sm:$0xff] %v2728
        %2793 = vst [vmem:[#allocation2 + $0x138] sm:$0xff] %v2729
        %2794 = vst [vmem:[#allocation2 + $0x140] sm:$0xff] %v2730
        %2795 = vst [vmem:[#allocation2 + $0x148] sm:$0xff] %v2731
        %2796 = vst [vmem:[#allocation2 + $0x150] sm:$0xff] %v2732
        %2797 = vst [vmem:[#allocation2 + $0x158] sm:$0xff] %v2733
        %2798 = vst [vmem:[#allocation2 + $0x160] sm:$0xff] %v2734
        %2799 = vst [vmem:[#allocation2 + $0x168] sm:$0xff] %v2735
        %2800 = vst [vmem:[#allocation2 + $0x170] sm:$0xff] %v2736
        %2801 = vst [vmem:[#allocation2 + $0x178] sm:$0xff] %v2737
        %2802 = vst [vmem:[#allocation2 + $0x180] sm:$0xff] %v2738
        %2803 = vst [vmem:[#allocation2 + $0x188] sm:$0xff] %v2739
        %2804 = vst [vmem:[#allocation2 + $0x190] sm:$0xff] %v2740
        %2805 = vst [vmem:[#allocation2 + $0x198] sm:$0xff] %v2741
        %2806 = vst [vmem:[#allocation2 + $0x1a0] sm:$0xff] %v2742
        %2807 = vst [vmem:[#allocation2 + $0x1a8] sm:$0xff] %v2743
        %2808 = vst [vmem:[#allocation2 + $0x1b0] sm:$0xff] %v2744
        %2809 = vst [vmem:[#allocation2 + $0x1b8] sm:$0xff] %v2745
        %2810 = vst [vmem:[#allocation2 + $0x1c0] sm:$0xff] %v2746
        %2811 = vst [vmem:[#allocation2 + $0x1c8] sm:$0xff] %v2747
        %2812 = vst [vmem:[#allocation2 + $0x1d0] sm:$0xff] %v2748
        %2813 = vst [vmem:[#allocation2 + $0x1d8] sm:$0xff] %v2749
        %2814 = vst [vmem:[#allocation2 + $0x1e0] sm:$0xff] %v2750
        %2815 = vst [vmem:[#allocation2 + $0x1e8] sm:$0xff] %v2751
        %2816 = vst [vmem:[#allocation2 + $0x1f0] sm:$0xff] %v2752
        %2817 = vst [vmem:[#allocation2 + $0x1f8] sm:$0xff] %v2753
        // Predicated region
        $region57: #{tpu_custom_call.1} parent=39 // pred_check
          %p2818 = pneg %p324
        $region58: #{tpu_custom_call.1} parent=39 // pred_check_branch
          %2820 = sbr.rel (%p2818) target = $region60
        $region59: #{tpu_custom_call.1} parent=39 // pred_region
          %v2821 = vld [vmem:[#allocation2] sm:$0xff]
          %v2822 = vld [vmem:[#allocation2 + $0x8] sm:$0xff]
          %v2823 = vld [vmem:[#allocation2 + $0x10] sm:$0xff]
          %v2824 = vld [vmem:[#allocation2 + $0x18] sm:$0xff]
          %v2825 = vld [vmem:[#allocation2 + $0x20] sm:$0xff]
          %v2826 = vld [vmem:[#allocation2 + $0x28] sm:$0xff]
          %v2827 = vld [vmem:[#allocation2 + $0x30] sm:$0xff]
          %v2828 = vld [vmem:[#allocation2 + $0x38] sm:$0xff]
          %v2829 = vld [vmem:[#allocation2 + $0x40] sm:$0xff]
          %v2830 = vld [vmem:[#allocation2 + $0x48] sm:$0xff]
          %v2831 = vld [vmem:[#allocation2 + $0x50] sm:$0xff]
          %v2832 = vld [vmem:[#allocation2 + $0x58] sm:$0xff]
          %v2833 = vld [vmem:[#allocation2 + $0x60] sm:$0xff]
          %v2834 = vld [vmem:[#allocation2 + $0x68] sm:$0xff]
          %v2835 = vld [vmem:[#allocation2 + $0x70] sm:$0xff]
          %v2836 = vld [vmem:[#allocation2 + $0x78] sm:$0xff]
          %v2837 = vld [vmem:[#allocation2 + $0x80] sm:$0xff]
          %v2838 = vld [vmem:[#allocation2 + $0x88] sm:$0xff]
          %v2839 = vld [vmem:[#allocation2 + $0x90] sm:$0xff]
          %v2840 = vld [vmem:[#allocation2 + $0x98] sm:$0xff]
          %v2841 = vld [vmem:[#allocation2 + $0xa0] sm:$0xff]
          %v2842 = vld [vmem:[#allocation2 + $0xa8] sm:$0xff]
          %v2843 = vld [vmem:[#allocation2 + $0xb0] sm:$0xff]
          %v2844 = vld [vmem:[#allocation2 + $0xb8] sm:$0xff]
          %v2845 = vld [vmem:[#allocation2 + $0xc0] sm:$0xff]
          %v2846 = vld [vmem:[#allocation2 + $0xc8] sm:$0xff]
          %v2847 = vld [vmem:[#allocation2 + $0xd0] sm:$0xff]
          %v2848 = vld [vmem:[#allocation2 + $0xd8] sm:$0xff]
          %v2849 = vld [vmem:[#allocation2 + $0xe0] sm:$0xff]
          %v2850 = vld [vmem:[#allocation2 + $0xe8] sm:$0xff]
          %v2851 = vld [vmem:[#allocation2 + $0xf0] sm:$0xff]
          %v2852 = vld [vmem:[#allocation2 + $0xf8] sm:$0xff]
          %v2853 = vld [vmem:[#allocation2 + $0x100] sm:$0xff]
          %v2854 = vld [vmem:[#allocation2 + $0x108] sm:$0xff]
          %v2855 = vld [vmem:[#allocation2 + $0x110] sm:$0xff]
          %v2856 = vld [vmem:[#allocation2 + $0x118] sm:$0xff]
          %v2857 = vld [vmem:[#allocation2 + $0x120] sm:$0xff]
          %v2858 = vld [vmem:[#allocation2 + $0x128] sm:$0xff]
          %v2859 = vld [vmem:[#allocation2 + $0x130] sm:$0xff]
          %v2860 = vld [vmem:[#allocation2 + $0x138] sm:$0xff]
          %v2861 = vld [vmem:[#allocation2 + $0x140] sm:$0xff]
          %v2862 = vld [vmem:[#allocation2 + $0x148] sm:$0xff]
          %v2863 = vld [vmem:[#allocation2 + $0x150] sm:$0xff]
          %v2864 = vld [vmem:[#allocation2 + $0x158] sm:$0xff]
          %v2865 = vld [vmem:[#allocation2 + $0x160] sm:$0xff]
          %v2866 = vld [vmem:[#allocation2 + $0x168] sm:$0xff]
          %v2867 = vld [vmem:[#allocation2 + $0x170] sm:$0xff]
          %v2868 = vld [vmem:[#allocation2 + $0x178] sm:$0xff]
          %v2869 = vld [vmem:[#allocation2 + $0x180] sm:$0xff]
          %v2870 = vld [vmem:[#allocation2 + $0x188] sm:$0xff]
          %v2871 = vld [vmem:[#allocation2 + $0x190] sm:$0xff]
          %v2872 = vld [vmem:[#allocation2 + $0x198] sm:$0xff]
          %v2873 = vld [vmem:[#allocation2 + $0x1a0] sm:$0xff]
          %v2874 = vld [vmem:[#allocation2 + $0x1a8] sm:$0xff]
          %v2875 = vld [vmem:[#allocation2 + $0x1b0] sm:$0xff]
          %v2876 = vld [vmem:[#allocation2 + $0x1b8] sm:$0xff]
          %v2877 = vld [vmem:[#allocation2 + $0x1c0] sm:$0xff]
          %v2878 = vld [vmem:[#allocation2 + $0x1c8] sm:$0xff]
          %v2879 = vld [vmem:[#allocation2 + $0x1d0] sm:$0xff]
          %v2880 = vld [vmem:[#allocation2 + $0x1d8] sm:$0xff]
          %v2881 = vld [vmem:[#allocation2 + $0x1e0] sm:$0xff]
          %v2882 = vld [vmem:[#allocation2 + $0x1e8] sm:$0xff]
          %v2883 = vld [vmem:[#allocation2 + $0x1f0] sm:$0xff]
          %v2884 = vld [vmem:[#allocation2 + $0x1f8] sm:$0xff]
          %v2885 = vadd.f32 %v392, %v2821
          %v2886 = vadd.f32 %v393, %v2822
          %v2887 = vadd.f32 %v394, %v2823
          %v2888 = vadd.f32 %v395, %v2824
          %v2889 = vadd.f32 %v396, %v2825
          %v2890 = vadd.f32 %v397, %v2826
          %v2891 = vadd.f32 %v398, %v2827
          %v2892 = vadd.f32 %v399, %v2828
          %v2893 = vadd.f32 %v400, %v2829
          %v2894 = vadd.f32 %v401, %v2830
          %v2895 = vadd.f32 %v402, %v2831
          %v2896 = vadd.f32 %v403, %v2832
          %v2897 = vadd.f32 %v404, %v2833
          %v2898 = vadd.f32 %v405, %v2834
          %v2899 = vadd.f32 %v406, %v2835
          %v2900 = vadd.f32 %v407, %v2836
          %v2901 = vadd.f32 %v408, %v2837
          %v2902 = vadd.f32 %v409, %v2838
          %v2903 = vadd.f32 %v410, %v2839
          %v2904 = vadd.f32 %v411, %v2840
          %v2905 = vadd.f32 %v412, %v2841
          %v2906 = vadd.f32 %v413, %v2842
          %v2907 = vadd.f32 %v414, %v2843
          %v2908 = vadd.f32 %v415, %v2844
          %v2909 = vadd.f32 %v416, %v2845
          %v2910 = vadd.f32 %v417, %v2846
          %v2911 = vadd.f32 %v418, %v2847
          %v2912 = vadd.f32 %v419, %v2848
          %v2913 = vadd.f32 %v420, %v2849
          %v2914 = vadd.f32 %v421, %v2850
          %v2915 = vadd.f32 %v422, %v2851
          %v2916 = vadd.f32 %v423, %v2852
          %v2917 = vadd.f32 %v424, %v2853
          %v2918 = vadd.f32 %v425, %v2854
          %v2919 = vadd.f32 %v426, %v2855
          %v2920 = vadd.f32 %v427, %v2856
          %v2921 = vadd.f32 %v428, %v2857
          %v2922 = vadd.f32 %v429, %v2858
          %v2923 = vadd.f32 %v430, %v2859
          %v2924 = vadd.f32 %v431, %v2860
          %v2925 = vadd.f32 %v432, %v2861
          %v2926 = vadd.f32 %v433, %v2862
          %v2927 = vadd.f32 %v434, %v2863
          %v2928 = vadd.f32 %v435, %v2864
          %v2929 = vadd.f32 %v436, %v2865
          %v2930 = vadd.f32 %v437, %v2866
          %v2931 = vadd.f32 %v438, %v2867
          %v2932 = vadd.f32 %v439, %v2868
          %v2933 = vadd.f32 %v440, %v2869
          %v2934 = vadd.f32 %v441, %v2870
          %v2935 = vadd.f32 %v442, %v2871
          %v2936 = vadd.f32 %v443, %v2872
          %v2937 = vadd.f32 %v444, %v2873
          %v2938 = vadd.f32 %v445, %v2874
          %v2939 = vadd.f32 %v446, %v2875
          %v2940 = vadd.f32 %v447, %v2876
          %v2941 = vadd.f32 %v448, %v2877
          %v2942 = vadd.f32 %v449, %v2878
          %v2943 = vadd.f32 %v450, %v2879
          %v2944 = vadd.f32 %v451, %v2880
          %v2945 = vadd.f32 %v452, %v2881
          %v2946 = vadd.f32 %v453, %v2882
          %v2947 = vadd.f32 %v454, %v2883
          %v2948 = vadd.f32 %v455, %v2884
          %v2949 = vld [vmem:[%s4] sm:$0x1]
          %v2950 = vlaneseq
          %v2951 = vshrl.u32 %v2950, 7
          %v2952 = vsub.s32 0, %v2951
          %v2953 = vrot.slane %v2949, %v2952
          %v2954 = vadd.f32 %v2885, %v2953
          %v2955 = vadd.f32 %v2886, %v2953
          %v2956 = vadd.f32 %v2887, %v2953
          %v2957 = vadd.f32 %v2888, %v2953
          %v2958 = vadd.f32 %v2889, %v2953
          %v2959 = vadd.f32 %v2890, %v2953
          %v2960 = vadd.f32 %v2891, %v2953
          %v2961 = vadd.f32 %v2892, %v2953
          %v2962 = vadd.f32 %v2893, %v2953
          %v2963 = vadd.f32 %v2894, %v2953
          %v2964 = vadd.f32 %v2895, %v2953
          %v2965 = vadd.f32 %v2896, %v2953
          %v2966 = vadd.f32 %v2897, %v2953
          %v2967 = vadd.f32 %v2898, %v2953
          %v2968 = vadd.f32 %v2899, %v2953
          %v2969 = vadd.f32 %v2900, %v2953
          %v2970 = vadd.f32 %v2901, %v2953
          %v2971 = vadd.f32 %v2902, %v2953
          %v2972 = vadd.f32 %v2903, %v2953
          %v2973 = vadd.f32 %v2904, %v2953
          %v2974 = vadd.f32 %v2905, %v2953
          %v2975 = vadd.f32 %v2906, %v2953
          %v2976 = vadd.f32 %v2907, %v2953
          %v2977 = vadd.f32 %v2908, %v2953
          %v2978 = vadd.f32 %v2909, %v2953
          %v2979 = vadd.f32 %v2910, %v2953
          %v2980 = vadd.f32 %v2911, %v2953
          %v2981 = vadd.f32 %v2912, %v2953
          %v2982 = vadd.f32 %v2913, %v2953
          %v2983 = vadd.f32 %v2914, %v2953
          %v2984 = vadd.f32 %v2915, %v2953
          %v2985 = vadd.f32 %v2916, %v2953
          %v2986 = vadd.f32 %v2917, %v2953
          %v2987 = vadd.f32 %v2918, %v2953
          %v2988 = vadd.f32 %v2919, %v2953
          %v2989 = vadd.f32 %v2920, %v2953
          %v2990 = vadd.f32 %v2921, %v2953
          %v2991 = vadd.f32 %v2922, %v2953
          %v2992 = vadd.f32 %v2923, %v2953
          %v2993 = vadd.f32 %v2924, %v2953
          %v2994 = vadd.f32 %v2925, %v2953
          %v2995 = vadd.f32 %v2926, %v2953
          %v2996 = vadd.f32 %v2927, %v2953
          %v2997 = vadd.f32 %v2928, %v2953
          %v2998 = vadd.f32 %v2929, %v2953
          %v2999 = vadd.f32 %v2930, %v2953
          %v3000 = vadd.f32 %v2931, %v2953
          %v3001 = vadd.f32 %v2932, %v2953
          %v3002 = vadd.f32 %v2933, %v2953
          %v3003 = vadd.f32 %v2934, %v2953
          %v3004 = vadd.f32 %v2935, %v2953
          %v3005 = vadd.f32 %v2936, %v2953
          %v3006 = vadd.f32 %v2937, %v2953
          %v3007 = vadd.f32 %v2938, %v2953
          %v3008 = vadd.f32 %v2939, %v2953
          %v3009 = vadd.f32 %v2940, %v2953
          %v3010 = vadd.f32 %v2941, %v2953
          %v3011 = vadd.f32 %v2942, %v2953
          %v3012 = vadd.f32 %v2943, %v2953
          %v3013 = vadd.f32 %v2944, %v2953
          %v3014 = vadd.f32 %v2945, %v2953
          %v3015 = vadd.f32 %v2946, %v2953
          %v3016 = vadd.f32 %v2947, %v2953
          %v3017 = vadd.f32 %v2948, %v2953
          %3018 = vadd.xlane.f32.xlu0 %v2954
          %v3019 = vpop.xlane.xlu0 %3018
          %3020 = vadd.xlane.f32.xlu0 %v2955
          %v3021 = vpop.xlane.xlu0 %3020
          %3022 = vadd.xlane.f32.xlu0 %v2956
          %v3023 = vpop.xlane.xlu0 %3022
          %3024 = vadd.xlane.f32.xlu0 %v2957
          %v3025 = vpop.xlane.xlu0 %3024
          %3026 = vadd.xlane.f32.xlu0 %v2958
          %v3027 = vpop.xlane.xlu0 %3026
          %3028 = vadd.xlane.f32.xlu0 %v2959
          %v3029 = vpop.xlane.xlu0 %3028
          %3030 = vadd.xlane.f32.xlu0 %v2960
          %v3031 = vpop.xlane.xlu0 %3030
          %3032 = vadd.xlane.f32.xlu0 %v2961
          %v3033 = vpop.xlane.xlu0 %3032
          %3034 = vadd.xlane.f32.xlu0 %v2962
          %v3035 = vpop.xlane.xlu0 %3034
          %3036 = vadd.xlane.f32.xlu0 %v2963
          %v3037 = vpop.xlane.xlu0 %3036
          %3038 = vadd.xlane.f32.xlu0 %v2964
          %v3039 = vpop.xlane.xlu0 %3038
          %3040 = vadd.xlane.f32.xlu0 %v2965
          %v3041 = vpop.xlane.xlu0 %3040
          %3042 = vadd.xlane.f32.xlu0 %v2966
          %v3043 = vpop.xlane.xlu0 %3042
          %3044 = vadd.xlane.f32.xlu0 %v2967
          %v3045 = vpop.xlane.xlu0 %3044
          %3046 = vadd.xlane.f32.xlu0 %v2968
          %v3047 = vpop.xlane.xlu0 %3046
          %3048 = vadd.xlane.f32.xlu0 %v2969
          %v3049 = vpop.xlane.xlu0 %3048
          %3050 = vadd.xlane.f32.xlu0 %v2970
          %v3051 = vpop.xlane.xlu0 %3050
          %3052 = vadd.xlane.f32.xlu0 %v2971
          %v3053 = vpop.xlane.xlu0 %3052
          %3054 = vadd.xlane.f32.xlu0 %v2972
          %v3055 = vpop.xlane.xlu0 %3054
          %3056 = vadd.xlane.f32.xlu0 %v2973
          %v3057 = vpop.xlane.xlu0 %3056
          %3058 = vadd.xlane.f32.xlu0 %v2974
          %v3059 = vpop.xlane.xlu0 %3058
          %3060 = vadd.xlane.f32.xlu0 %v2975
          %v3061 = vpop.xlane.xlu0 %3060
          %3062 = vadd.xlane.f32.xlu0 %v2976
          %v3063 = vpop.xlane.xlu0 %3062
          %3064 = vadd.xlane.f32.xlu0 %v2977
          %v3065 = vpop.xlane.xlu0 %3064
          %3066 = vadd.xlane.f32.xlu0 %v2978
          %v3067 = vpop.xlane.xlu0 %3066
          %3068 = vadd.xlane.f32.xlu0 %v2979
          %v3069 = vpop.xlane.xlu0 %3068
          %3070 = vadd.xlane.f32.xlu0 %v2980
          %v3071 = vpop.xlane.xlu0 %3070
          %3072 = vadd.xlane.f32.xlu0 %v2981
          %v3073 = vpop.xlane.xlu0 %3072
          %3074 = vadd.xlane.f32.xlu0 %v2982
          %v3075 = vpop.xlane.xlu0 %3074
          %3076 = vadd.xlane.f32.xlu0 %v2983
          %v3077 = vpop.xlane.xlu0 %3076
          %3078 = vadd.xlane.f32.xlu0 %v2984
          %v3079 = vpop.xlane.xlu0 %3078
          %3080 = vadd.xlane.f32.xlu0 %v2985
          %v3081 = vpop.xlane.xlu0 %3080
          %3082 = vadd.xlane.f32.xlu0 %v2986
          %v3083 = vpop.xlane.xlu0 %3082
          %3084 = vadd.xlane.f32.xlu0 %v2987
          %v3085 = vpop.xlane.xlu0 %3084
          %3086 = vadd.xlane.f32.xlu0 %v2988
          %v3087 = vpop.xlane.xlu0 %3086
          %3088 = vadd.xlane.f32.xlu0 %v2989
          %v3089 = vpop.xlane.xlu0 %3088
          %3090 = vadd.xlane.f32.xlu0 %v2990
          %v3091 = vpop.xlane.xlu0 %3090
          %3092 = vadd.xlane.f32.xlu0 %v2991
          %v3093 = vpop.xlane.xlu0 %3092
          %3094 = vadd.xlane.f32.xlu0 %v2992
          %v3095 = vpop.xlane.xlu0 %3094
          %3096 = vadd.xlane.f32.xlu0 %v2993
          %v3097 = vpop.xlane.xlu0 %3096
          %3098 = vadd.xlane.f32.xlu0 %v2994
          %v3099 = vpop.xlane.xlu0 %3098
          %3100 = vadd.xlane.f32.xlu0 %v2995
          %v3101 = vpop.xlane.xlu0 %3100
          %3102 = vadd.xlane.f32.xlu0 %v2996
          %v3103 = vpop.xlane.xlu0 %3102
          %3104 = vadd.xlane.f32.xlu0 %v2997
          %v3105 = vpop.xlane.xlu0 %3104
          %3106 = vadd.xlane.f32.xlu0 %v2998
          %v3107 = vpop.xlane.xlu0 %3106
          %3108 = vadd.xlane.f32.xlu0 %v2999
          %v3109 = vpop.xlane.xlu0 %3108
          %3110 = vadd.xlane.f32.xlu0 %v3000
          %v3111 = vpop.xlane.xlu0 %3110
          %3112 = vadd.xlane.f32.xlu0 %v3001
          %v3113 = vpop.xlane.xlu0 %3112
          %3114 = vadd.xlane.f32.xlu0 %v3002
          %v3115 = vpop.xlane.xlu0 %3114
          %3116 = vadd.xlane.f32.xlu0 %v3003
          %v3117 = vpop.xlane.xlu0 %3116
          %3118 = vadd.xlane.f32.xlu0 %v3004
          %v3119 = vpop.xlane.xlu0 %3118
          %3120 = vadd.xlane.f32.xlu0 %v3005
          %v3121 = vpop.xlane.xlu0 %3120
          %3122 = vadd.xlane.f32.xlu0 %v3006
          %v3123 = vpop.xlane.xlu0 %3122
          %3124 = vadd.xlane.f32.xlu0 %v3007
          %v3125 = vpop.xlane.xlu0 %3124
          %3126 = vadd.xlane.f32.xlu0 %v3008
          %v3127 = vpop.xlane.xlu0 %3126
          %3128 = vadd.xlane.f32.xlu0 %v3009
          %v3129 = vpop.xlane.xlu0 %3128
          %3130 = vadd.xlane.f32.xlu0 %v3010
          %v3131 = vpop.xlane.xlu0 %3130
          %3132 = vadd.xlane.f32.xlu0 %v3011
          %v3133 = vpop.xlane.xlu0 %3132
          %3134 = vadd.xlane.f32.xlu0 %v3012
          %v3135 = vpop.xlane.xlu0 %3134
          %3136 = vadd.xlane.f32.xlu0 %v3013
          %v3137 = vpop.xlane.xlu0 %3136
          %3138 = vadd.xlane.f32.xlu0 %v3014
          %v3139 = vpop.xlane.xlu0 %3138
          %3140 = vadd.xlane.f32.xlu0 %v3015
          %v3141 = vpop.xlane.xlu0 %3140
          %3142 = vadd.xlane.f32.xlu0 %v3016
          %v3143 = vpop.xlane.xlu0 %3142
          %3144 = vadd.xlane.f32.xlu0 %v3017
          %v3145 = vpop.xlane.xlu0 %3144
          %v3146 = vrcp.pop 128.0
          %v3147 = vmul.f32 %v3019, %v3146
          %v3148 = vmul.f32 %v3021, %v3146
          %v3149 = vmul.f32 %v3023, %v3146
          %v3150 = vmul.f32 %v3025, %v3146
          %v3151 = vmul.f32 %v3027, %v3146
          %v3152 = vmul.f32 %v3029, %v3146
          %v3153 = vmul.f32 %v3031, %v3146
          %v3154 = vmul.f32 %v3033, %v3146
          %v3155 = vmul.f32 %v3035, %v3146
          %v3156 = vmul.f32 %v3037, %v3146
          %v3157 = vmul.f32 %v3039, %v3146
          %v3158 = vmul.f32 %v3041, %v3146
          %v3159 = vmul.f32 %v3043, %v3146
          %v3160 = vmul.f32 %v3045, %v3146
          %v3161 = vmul.f32 %v3047, %v3146
          %v3162 = vmul.f32 %v3049, %v3146
          %v3163 = vmul.f32 %v3051, %v3146
          %v3164 = vmul.f32 %v3053, %v3146
          %v3165 = vmul.f32 %v3055, %v3146
          %v3166 = vmul.f32 %v3057, %v3146
          %v3167 = vmul.f32 %v3059, %v3146
          %v3168 = vmul.f32 %v3061, %v3146
          %v3169 = vmul.f32 %v3063, %v3146
          %v3170 = vmul.f32 %v3065, %v3146
          %v3171 = vmul.f32 %v3067, %v3146
          %v3172 = vmul.f32 %v3069, %v3146
          %v3173 = vmul.f32 %v3071, %v3146
          %v3174 = vmul.f32 %v3073, %v3146
          %v3175 = vmul.f32 %v3075, %v3146
          %v3176 = vmul.f32 %v3077, %v3146
          %v3177 = vmul.f32 %v3079, %v3146
          %v3178 = vmul.f32 %v3081, %v3146
          %v3179 = vmul.f32 %v3083, %v3146
          %v3180 = vmul.f32 %v3085, %v3146
          %v3181 = vmul.f32 %v3087, %v3146
          %v3182 = vmul.f32 %v3089, %v3146
          %v3183 = vmul.f32 %v3091, %v3146
          %v3184 = vmul.f32 %v3093, %v3146
          %v3185 = vmul.f32 %v3095, %v3146
          %v3186 = vmul.f32 %v3097, %v3146
          %v3187 = vmul.f32 %v3099, %v3146
          %v3188 = vmul.f32 %v3101, %v3146
          %v3189 = vmul.f32 %v3103, %v3146
          %v3190 = vmul.f32 %v3105, %v3146
          %v3191 = vmul.f32 %v3107, %v3146
          %v3192 = vmul.f32 %v3109, %v3146
          %v3193 = vmul.f32 %v3111, %v3146
          %v3194 = vmul.f32 %v3113, %v3146
          %v3195 = vmul.f32 %v3115, %v3146
          %v3196 = vmul.f32 %v3117, %v3146
          %v3197 = vmul.f32 %v3119, %v3146
          %v3198 = vmul.f32 %v3121, %v3146
          %v3199 = vmul.f32 %v3123, %v3146
          %v3200 = vmul.f32 %v3125, %v3146
          %v3201 = vmul.f32 %v3127, %v3146
          %v3202 = vmul.f32 %v3129, %v3146
          %v3203 = vmul.f32 %v3131, %v3146
          %v3204 = vmul.f32 %v3133, %v3146
          %v3205 = vmul.f32 %v3135, %v3146
          %v3206 = vmul.f32 %v3137, %v3146
          %v3207 = vmul.f32 %v3139, %v3146
          %v3208 = vmul.f32 %v3141, %v3146
          %v3209 = vmul.f32 %v3143, %v3146
          %v3210 = vmul.f32 %v3145, %v3146
          %v3211 = vsub.f32 %v2954, %v3147
          %v3212 = vsub.f32 %v2955, %v3148
          %v3213 = vsub.f32 %v2956, %v3149
          %v3214 = vsub.f32 %v2957, %v3150
          %v3215 = vsub.f32 %v2958, %v3151
          %v3216 = vsub.f32 %v2959, %v3152
          %v3217 = vsub.f32 %v2960, %v3153
          %v3218 = vsub.f32 %v2961, %v3154
          %v3219 = vsub.f32 %v2962, %v3155
          %v3220 = vsub.f32 %v2963, %v3156
          %v3221 = vsub.f32 %v2964, %v3157
          %v3222 = vsub.f32 %v2965, %v3158
          %v3223 = vsub.f32 %v2966, %v3159
          %v3224 = vsub.f32 %v2967, %v3160
          %v3225 = vsub.f32 %v2968, %v3161
          %v3226 = vsub.f32 %v2969, %v3162
          %v3227 = vsub.f32 %v2970, %v3163
          %v3228 = vsub.f32 %v2971, %v3164
          %v3229 = vsub.f32 %v2972, %v3165
          %v3230 = vsub.f32 %v2973, %v3166
          %v3231 = vsub.f32 %v2974, %v3167
          %v3232 = vsub.f32 %v2975, %v3168
          %v3233 = vsub.f32 %v2976, %v3169
          %v3234 = vsub.f32 %v2977, %v3170
          %v3235 = vsub.f32 %v2978, %v3171
          %v3236 = vsub.f32 %v2979, %v3172
          %v3237 = vsub.f32 %v2980, %v3173
          %v3238 = vsub.f32 %v2981, %v3174
          %v3239 = vsub.f32 %v2982, %v3175
          %v3240 = vsub.f32 %v2983, %v3176
          %v3241 = vsub.f32 %v2984, %v3177
          %v3242 = vsub.f32 %v2985, %v3178
          %v3243 = vsub.f32 %v2986, %v3179
          %v3244 = vsub.f32 %v2987, %v3180
          %v3245 = vsub.f32 %v2988, %v3181
          %v3246 = vsub.f32 %v2989, %v3182
          %v3247 = vsub.f32 %v2990, %v3183
          %v3248 = vsub.f32 %v2991, %v3184
          %v3249 = vsub.f32 %v2992, %v3185
          %v3250 = vsub.f32 %v2993, %v3186
          %v3251 = vsub.f32 %v2994, %v3187
          %v3252 = vsub.f32 %v2995, %v3188
          %v3253 = vsub.f32 %v2996, %v3189
          %v3254 = vsub.f32 %v2997, %v3190
          %v3255 = vsub.f32 %v2998, %v3191
          %v3256 = vsub.f32 %v2999, %v3192
          %v3257 = vsub.f32 %v3000, %v3193
          %v3258 = vsub.f32 %v3001, %v3194
          %v3259 = vsub.f32 %v3002, %v3195
          %v3260 = vsub.f32 %v3003, %v3196
          %v3261 = vsub.f32 %v3004, %v3197
          %v3262 = vsub.f32 %v3005, %v3198
          %v3263 = vsub.f32 %v3006, %v3199
          %v3264 = vsub.f32 %v3007, %v3200
          %v3265 = vsub.f32 %v3008, %v3201
          %v3266 = vsub.f32 %v3009, %v3202
          %v3267 = vsub.f32 %v3010, %v3203
          %v3268 = vsub.f32 %v3011, %v3204
          %v3269 = vsub.f32 %v3012, %v3205
          %v3270 = vsub.f32 %v3013, %v3206
          %v3271 = vsub.f32 %v3014, %v3207
          %v3272 = vsub.f32 %v3015, %v3208
          %v3273 = vsub.f32 %v3016, %v3209
          %v3274 = vsub.f32 %v3017, %v3210
          %v3275 = vmul.f32 %v3211, %v3211
          %v3276 = vmul.f32 %v3212, %v3212
          %v3277 = vmul.f32 %v3213, %v3213
          %v3278 = vmul.f32 %v3214, %v3214
          %v3279 = vmul.f32 %v3215, %v3215
          %v3280 = vmul.f32 %v3216, %v3216
          %v3281 = vmul.f32 %v3217, %v3217
          %v3282 = vmul.f32 %v3218, %v3218
          %v3283 = vmul.f32 %v3219, %v3219
          %v3284 = vmul.f32 %v3220, %v3220
          %v3285 = vmul.f32 %v3221, %v3221
          %v3286 = vmul.f32 %v3222, %v3222
          %v3287 = vmul.f32 %v3223, %v3223
          %v3288 = vmul.f32 %v3224, %v3224
          %v3289 = vmul.f32 %v3225, %v3225
          %v3290 = vmul.f32 %v3226, %v3226
          %v3291 = vmul.f32 %v3227, %v3227
          %v3292 = vmul.f32 %v3228, %v3228
          %v3293 = vmul.f32 %v3229, %v3229
          %v3294 = vmul.f32 %v3230, %v3230
          %v3295 = vmul.f32 %v3231, %v3231
          %v3296 = vmul.f32 %v3232, %v3232
          %v3297 = vmul.f32 %v3233, %v3233
          %v3298 = vmul.f32 %v3234, %v3234
          %v3299 = vmul.f32 %v3235, %v3235
          %v3300 = vmul.f32 %v3236, %v3236
          %v3301 = vmul.f32 %v3237, %v3237
          %v3302 = vmul.f32 %v3238, %v3238
          %v3303 = vmul.f32 %v3239, %v3239
          %v3304 = vmul.f32 %v3240, %v3240
          %v3305 = vmul.f32 %v3241, %v3241
          %v3306 = vmul.f32 %v3242, %v3242
          %v3307 = vmul.f32 %v3243, %v3243
          %v3308 = vmul.f32 %v3244, %v3244
          %v3309 = vmul.f32 %v3245, %v3245
          %v3310 = vmul.f32 %v3246, %v3246
          %v3311 = vmul.f32 %v3247, %v3247
          %v3312 = vmul.f32 %v3248, %v3248
          %v3313 = vmul.f32 %v3249, %v3249
          %v3314 = vmul.f32 %v3250, %v3250
          %v3315 = vmul.f32 %v3251, %v3251
          %v3316 = vmul.f32 %v3252, %v3252
          %v3317 = vmul.f32 %v3253, %v3253
          %v3318 = vmul.f32 %v3254, %v3254
          %v3319 = vmul.f32 %v3255, %v3255
          %v3320 = vmul.f32 %v3256, %v3256
          %v3321 = vmul.f32 %v3257, %v3257
          %v3322 = vmul.f32 %v3258, %v3258
          %v3323 = vmul.f32 %v3259, %v3259
          %v3324 = vmul.f32 %v3260, %v3260
          %v3325 = vmul.f32 %v3261, %v3261
          %v3326 = vmul.f32 %v3262, %v3262
          %v3327 = vmul.f32 %v3263, %v3263
          %v3328 = vmul.f32 %v3264, %v3264
          %v3329 = vmul.f32 %v3265, %v3265
          %v3330 = vmul.f32 %v3266, %v3266
          %v3331 = vmul.f32 %v3267, %v3267
          %v3332 = vmul.f32 %v3268, %v3268
          %v3333 = vmul.f32 %v3269, %v3269
          %v3334 = vmul.f32 %v3270, %v3270
          %v3335 = vmul.f32 %v3271, %v3271
          %v3336 = vmul.f32 %v3272, %v3272
          %v3337 = vmul.f32 %v3273, %v3273
          %v3338 = vmul.f32 %v3274, %v3274
          %3339 = vadd.xlane.f32.xlu0 %v3275
          %v3340 = vpop.xlane.xlu0 %3339
          %3341 = vadd.xlane.f32.xlu0 %v3276
          %v3342 = vpop.xlane.xlu0 %3341
          %3343 = vadd.xlane.f32.xlu0 %v3277
          %v3344 = vpop.xlane.xlu0 %3343
          %3345 = vadd.xlane.f32.xlu0 %v3278
          %v3346 = vpop.xlane.xlu0 %3345
          %3347 = vadd.xlane.f32.xlu0 %v3279
          %v3348 = vpop.xlane.xlu0 %3347
          %3349 = vadd.xlane.f32.xlu0 %v3280
          %v3350 = vpop.xlane.xlu0 %3349
          %3351 = vadd.xlane.f32.xlu0 %v3281
          %v3352 = vpop.xlane.xlu0 %3351
          %3353 = vadd.xlane.f32.xlu0 %v3282
          %v3354 = vpop.xlane.xlu0 %3353
          %3355 = vadd.xlane.f32.xlu0 %v3283
          %v3356 = vpop.xlane.xlu0 %3355
          %3357 = vadd.xlane.f32.xlu0 %v3284
          %v3358 = vpop.xlane.xlu0 %3357
          %3359 = vadd.xlane.f32.xlu0 %v3285
          %v3360 = vpop.xlane.xlu0 %3359
          %3361 = vadd.xlane.f32.xlu0 %v3286
          %v3362 = vpop.xlane.xlu0 %3361
          %3363 = vadd.xlane.f32.xlu0 %v3287
          %v3364 = vpop.xlane.xlu0 %3363
          %3365 = vadd.xlane.f32.xlu0 %v3288
          %v3366 = vpop.xlane.xlu0 %3365
          %3367 = vadd.xlane.f32.xlu0 %v3289
          %v3368 = vpop.xlane.xlu0 %3367
          %3369 = vadd.xlane.f32.xlu0 %v3290
          %v3370 = vpop.xlane.xlu0 %3369
          %3371 = vadd.xlane.f32.xlu0 %v3291
          %v3372 = vpop.xlane.xlu0 %3371
          %3373 = vadd.xlane.f32.xlu0 %v3292
          %v3374 = vpop.xlane.xlu0 %3373
          %3375 = vadd.xlane.f32.xlu0 %v3293
          %v3376 = vpop.xlane.xlu0 %3375
          %3377 = vadd.xlane.f32.xlu0 %v3294
          %v3378 = vpop.xlane.xlu0 %3377
          %3379 = vadd.xlane.f32.xlu0 %v3295
          %v3380 = vpop.xlane.xlu0 %3379
          %3381 = vadd.xlane.f32.xlu0 %v3296
          %v3382 = vpop.xlane.xlu0 %3381
          %3383 = vadd.xlane.f32.xlu0 %v3297
          %v3384 = vpop.xlane.xlu0 %3383
          %3385 = vadd.xlane.f32.xlu0 %v3298
          %v3386 = vpop.xlane.xlu0 %3385
          %3387 = vadd.xlane.f32.xlu0 %v3299
          %v3388 = vpop.xlane.xlu0 %3387
          %3389 = vadd.xlane.f32.xlu0 %v3300
          %v3390 = vpop.xlane.xlu0 %3389
          %3391 = vadd.xlane.f32.xlu0 %v3301
          %v3392 = vpop.xlane.xlu0 %3391
          %3393 = vadd.xlane.f32.xlu0 %v3302
          %v3394 = vpop.xlane.xlu0 %3393
          %3395 = vadd.xlane.f32.xlu0 %v3303
          %v3396 = vpop.xlane.xlu0 %3395
          %3397 = vadd.xlane.f32.xlu0 %v3304
          %v3398 = vpop.xlane.xlu0 %3397
          %3399 = vadd.xlane.f32.xlu0 %v3305
          %v3400 = vpop.xlane.xlu0 %3399
          %3401 = vadd.xlane.f32.xlu0 %v3306
          %v3402 = vpop.xlane.xlu0 %3401
          %3403 = vadd.xlane.f32.xlu0 %v3307
          %v3404 = vpop.xlane.xlu0 %3403
          %3405 = vadd.xlane.f32.xlu0 %v3308
          %v3406 = vpop.xlane.xlu0 %3405
          %3407 = vadd.xlane.f32.xlu0 %v3309
          %v3408 = vpop.xlane.xlu0 %3407
          %3409 = vadd.xlane.f32.xlu0 %v3310
          %v3410 = vpop.xlane.xlu0 %3409
          %3411 = vadd.xlane.f32.xlu0 %v3311
          %v3412 = vpop.xlane.xlu0 %3411
          %3413 = vadd.xlane.f32.xlu0 %v3312
          %v3414 = vpop.xlane.xlu0 %3413
          %3415 = vadd.xlane.f32.xlu0 %v3313
          %v3416 = vpop.xlane.xlu0 %3415
          %3417 = vadd.xlane.f32.xlu0 %v3314
          %v3418 = vpop.xlane.xlu0 %3417
          %3419 = vadd.xlane.f32.xlu0 %v3315
          %v3420 = vpop.xlane.xlu0 %3419
          %3421 = vadd.xlane.f32.xlu0 %v3316
          %v3422 = vpop.xlane.xlu0 %3421
          %3423 = vadd.xlane.f32.xlu0 %v3317
          %v3424 = vpop.xlane.xlu0 %3423
          %3425 = vadd.xlane.f32.xlu0 %v3318
          %v3426 = vpop.xlane.xlu0 %3425
          %3427 = vadd.xlane.f32.xlu0 %v3319
          %v3428 = vpop.xlane.xlu0 %3427
          %3429 = vadd.xlane.f32.xlu0 %v3320
          %v3430 = vpop.xlane.xlu0 %3429
          %3431 = vadd.xlane.f32.xlu0 %v3321
          %v3432 = vpop.xlane.xlu0 %3431
          %3433 = vadd.xlane.f32.xlu0 %v3322
          %v3434 = vpop.xlane.xlu0 %3433
          %3435 = vadd.xlane.f32.xlu0 %v3323
          %v3436 = vpop.xlane.xlu0 %3435
          %3437 = vadd.xlane.f32.xlu0 %v3324
          %v3438 = vpop.xlane.xlu0 %3437
          %3439 = vadd.xlane.f32.xlu0 %v3325
          %v3440 = vpop.xlane.xlu0 %3439
          %3441 = vadd.xlane.f32.xlu0 %v3326
          %v3442 = vpop.xlane.xlu0 %3441
          %3443 = vadd.xlane.f32.xlu0 %v3327
          %v3444 = vpop.xlane.xlu0 %3443
          %3445 = vadd.xlane.f32.xlu0 %v3328
          %v3446 = vpop.xlane.xlu0 %3445
          %3447 = vadd.xlane.f32.xlu0 %v3329
          %v3448 = vpop.xlane.xlu0 %3447
          %3449 = vadd.xlane.f32.xlu0 %v3330
          %v3450 = vpop.xlane.xlu0 %3449
          %3451 = vadd.xlane.f32.xlu0 %v3331
          %v3452 = vpop.xlane.xlu0 %3451
          %3453 = vadd.xlane.f32.xlu0 %v3332
          %v3454 = vpop.xlane.xlu0 %3453
          %3455 = vadd.xlane.f32.xlu0 %v3333
          %v3456 = vpop.xlane.xlu0 %3455
          %3457 = vadd.xlane.f32.xlu0 %v3334
          %v3458 = vpop.xlane.xlu0 %3457
          %3459 = vadd.xlane.f32.xlu0 %v3335
          %v3460 = vpop.xlane.xlu0 %3459
          %3461 = vadd.xlane.f32.xlu0 %v3336
          %v3462 = vpop.xlane.xlu0 %3461
          %3463 = vadd.xlane.f32.xlu0 %v3337
          %v3464 = vpop.xlane.xlu0 %3463
          %3465 = vadd.xlane.f32.xlu0 %v3338
          %v3466 = vpop.xlane.xlu0 %3465
          %v3467 = vmul.f32 %v3340, %v3146
          %v3468 = vmul.f32 %v3342, %v3146
          %v3469 = vmul.f32 %v3344, %v3146
          %v3470 = vmul.f32 %v3346, %v3146
          %v3471 = vmul.f32 %v3348, %v3146
          %v3472 = vmul.f32 %v3350, %v3146
          %v3473 = vmul.f32 %v3352, %v3146
          %v3474 = vmul.f32 %v3354, %v3146
          %v3475 = vmul.f32 %v3356, %v3146
          %v3476 = vmul.f32 %v3358, %v3146
          %v3477 = vmul.f32 %v3360, %v3146
          %v3478 = vmul.f32 %v3362, %v3146
          %v3479 = vmul.f32 %v3364, %v3146
          %v3480 = vmul.f32 %v3366, %v3146
          %v3481 = vmul.f32 %v3368, %v3146
          %v3482 = vmul.f32 %v3370, %v3146
          %v3483 = vmul.f32 %v3372, %v3146
          %v3484 = vmul.f32 %v3374, %v3146
          %v3485 = vmul.f32 %v3376, %v3146
          %v3486 = vmul.f32 %v3378, %v3146
          %v3487 = vmul.f32 %v3380, %v3146
          %v3488 = vmul.f32 %v3382, %v3146
          %v3489 = vmul.f32 %v3384, %v3146
          %v3490 = vmul.f32 %v3386, %v3146
          %v3491 = vmul.f32 %v3388, %v3146
          %v3492 = vmul.f32 %v3390, %v3146
          %v3493 = vmul.f32 %v3392, %v3146
          %v3494 = vmul.f32 %v3394, %v3146
          %v3495 = vmul.f32 %v3396, %v3146
          %v3496 = vmul.f32 %v3398, %v3146
          %v3497 = vmul.f32 %v3400, %v3146
          %v3498 = vmul.f32 %v3402, %v3146
          %v3499 = vmul.f32 %v3404, %v3146
          %v3500 = vmul.f32 %v3406, %v3146
          %v3501 = vmul.f32 %v3408, %v3146
          %v3502 = vmul.f32 %v3410, %v3146
          %v3503 = vmul.f32 %v3412, %v3146
          %v3504 = vmul.f32 %v3414, %v3146
          %v3505 = vmul.f32 %v3416, %v3146
          %v3506 = vmul.f32 %v3418, %v3146
          %v3507 = vmul.f32 %v3420, %v3146
          %v3508 = vmul.f32 %v3422, %v3146
          %v3509 = vmul.f32 %v3424, %v3146
          %v3510 = vmul.f32 %v3426, %v3146
          %v3511 = vmul.f32 %v3428, %v3146
          %v3512 = vmul.f32 %v3430, %v3146
          %v3513 = vmul.f32 %v3432, %v3146
          %v3514 = vmul.f32 %v3434, %v3146
          %v3515 = vmul.f32 %v3436, %v3146
          %v3516 = vmul.f32 %v3438, %v3146
          %v3517 = vmul.f32 %v3440, %v3146
          %v3518 = vmul.f32 %v3442, %v3146
          %v3519 = vmul.f32 %v3444, %v3146
          %v3520 = vmul.f32 %v3446, %v3146
          %v3521 = vmul.f32 %v3448, %v3146
          %v3522 = vmul.f32 %v3450, %v3146
          %v3523 = vmul.f32 %v3452, %v3146
          %v3524 = vmul.f32 %v3454, %v3146
          %v3525 = vmul.f32 %v3456, %v3146
          %v3526 = vmul.f32 %v3458, %v3146
          %v3527 = vmul.f32 %v3460, %v3146
          %v3528 = vmul.f32 %v3462, %v3146
          %v3529 = vmul.f32 %v3464, %v3146
          %v3530 = vmul.f32 %v3466, %v3146
          %v3531 = vadd.f32 %v3467, 1e-05
          %v3532 = vadd.f32 %v3468, 1e-05
          %v3533 = vadd.f32 %v3469, 1e-05
          %v3534 = vadd.f32 %v3470, 1e-05
          %v3535 = vadd.f32 %v3471, 1e-05
          %v3536 = vadd.f32 %v3472, 1e-05
          %v3537 = vadd.f32 %v3473, 1e-05
          %v3538 = vadd.f32 %v3474, 1e-05
          %v3539 = vadd.f32 %v3475, 1e-05
          %v3540 = vadd.f32 %v3476, 1e-05
          %v3541 = vadd.f32 %v3477, 1e-05
          %v3542 = vadd.f32 %v3478, 1e-05
          %v3543 = vadd.f32 %v3479, 1e-05
          %v3544 = vadd.f32 %v3480, 1e-05
          %v3545 = vadd.f32 %v3481, 1e-05
          %v3546 = vadd.f32 %v3482, 1e-05
          %v3547 = vadd.f32 %v3483, 1e-05
          %v3548 = vadd.f32 %v3484, 1e-05
          %v3549 = vadd.f32 %v3485, 1e-05
          %v3550 = vadd.f32 %v3486, 1e-05
          %v3551 = vadd.f32 %v3487, 1e-05
          %v3552 = vadd.f32 %v3488, 1e-05
          %v3553 = vadd.f32 %v3489, 1e-05
          %v3554 = vadd.f32 %v3490, 1e-05
          %v3555 = vadd.f32 %v3491, 1e-05
          %v3556 = vadd.f32 %v3492, 1e-05
          %v3557 = vadd.f32 %v3493, 1e-05
          %v3558 = vadd.f32 %v3494, 1e-05
          %v3559 = vadd.f32 %v3495, 1e-05
          %v3560 = vadd.f32 %v3496, 1e-05
          %v3561 = vadd.f32 %v3497, 1e-05
          %v3562 = vadd.f32 %v3498, 1e-05
          %v3563 = vadd.f32 %v3499, 1e-05
          %v3564 = vadd.f32 %v3500, 1e-05
          %v3565 = vadd.f32 %v3501, 1e-05
          %v3566 = vadd.f32 %v3502, 1e-05
          %v3567 = vadd.f32 %v3503, 1e-05
          %v3568 = vadd.f32 %v3504, 1e-05
          %v3569 = vadd.f32 %v3505, 1e-05
          %v3570 = vadd.f32 %v3506, 1e-05
          %v3571 = vadd.f32 %v3507, 1e-05
          %v3572 = vadd.f32 %v3508, 1e-05
          %v3573 = vadd.f32 %v3509, 1e-05
          %v3574 = vadd.f32 %v3510, 1e-05
          %v3575 = vadd.f32 %v3511, 1e-05
          %v3576 = vadd.f32 %v3512, 1e-05
          %v3577 = vadd.f32 %v3513, 1e-05
          %v3578 = vadd.f32 %v3514, 1e-05
          %v3579 = vadd.f32 %v3515, 1e-05
          %v3580 = vadd.f32 %v3516, 1e-05
          %v3581 = vadd.f32 %v3517, 1e-05
          %v3582 = vadd.f32 %v3518, 1e-05
          %v3583 = vadd.f32 %v3519, 1e-05
          %v3584 = vadd.f32 %v3520, 1e-05
          %v3585 = vadd.f32 %v3521, 1e-05
          %v3586 = vadd.f32 %v3522, 1e-05
          %v3587 = vadd.f32 %v3523, 1e-05
          %v3588 = vadd.f32 %v3524, 1e-05
          %v3589 = vadd.f32 %v3525, 1e-05
          %v3590 = vadd.f32 %v3526, 1e-05
          %v3591 = vadd.f32 %v3527, 1e-05
          %v3592 = vadd.f32 %v3528, 1e-05
          %v3593 = vadd.f32 %v3529, 1e-05
          %v3594 = vadd.f32 %v3530, 1e-05
          %v3595 = vrsqrt.pop %v3531
          %v3596 = vrsqrt.pop %v3532
          %v3597 = vrsqrt.pop %v3533
          %v3598 = vrsqrt.pop %v3534
          %v3599 = vrsqrt.pop %v3535
          %v3600 = vrsqrt.pop %v3536
          %v3601 = vrsqrt.pop %v3537
          %v3602 = vrsqrt.pop %v3538
          %v3603 = vrsqrt.pop %v3539
          %v3604 = vrsqrt.pop %v3540
          %v3605 = vrsqrt.pop %v3541
          %v3606 = vrsqrt.pop %v3542
          %v3607 = vrsqrt.pop %v3543
          %v3608 = vrsqrt.pop %v3544
          %v3609 = vrsqrt.pop %v3545
          %v3610 = vrsqrt.pop %v3546
          %v3611 = vrsqrt.pop %v3547
          %v3612 = vrsqrt.pop %v3548
          %v3613 = vrsqrt.pop %v3549
          %v3614 = vrsqrt.pop %v3550
          %v3615 = vrsqrt.pop %v3551
          %v3616 = vrsqrt.pop %v3552
          %v3617 = vrsqrt.pop %v3553
          %v3618 = vrsqrt.pop %v3554
          %v3619 = vrsqrt.pop %v3555
          %v3620 = vrsqrt.pop %v3556
          %v3621 = vrsqrt.pop %v3557
          %v3622 = vrsqrt.pop %v3558
          %v3623 = vrsqrt.pop %v3559
          %v3624 = vrsqrt.pop %v3560
          %v3625 = vrsqrt.pop %v3561
          %v3626 = vrsqrt.pop %v3562
          %v3627 = vrsqrt.pop %v3563
          %v3628 = vrsqrt.pop %v3564
          %v3629 = vrsqrt.pop %v3565
          %v3630 = vrsqrt.pop %v3566
          %v3631 = vrsqrt.pop %v3567
          %v3632 = vrsqrt.pop %v3568
          %v3633 = vrsqrt.pop %v3569
          %v3634 = vrsqrt.pop %v3570
          %v3635 = vrsqrt.pop %v3571
          %v3636 = vrsqrt.pop %v3572
          %v3637 = vrsqrt.pop %v3573
          %v3638 = vrsqrt.pop %v3574
          %v3639 = vrsqrt.pop %v3575
          %v3640 = vrsqrt.pop %v3576
          %v3641 = vrsqrt.pop %v3577
          %v3642 = vrsqrt.pop %v3578
          %v3643 = vrsqrt.pop %v3579
          %v3644 = vrsqrt.pop %v3580
          %v3645 = vrsqrt.pop %v3581
          %v3646 = vrsqrt.pop %v3582
          %v3647 = vrsqrt.pop %v3583
          %v3648 = vrsqrt.pop %v3584
          %v3649 = vrsqrt.pop %v3585
          %v3650 = vrsqrt.pop %v3586
          %v3651 = vrsqrt.pop %v3587
          %v3652 = vrsqrt.pop %v3588
          %v3653 = vrsqrt.pop %v3589
          %v3654 = vrsqrt.pop %v3590
          %v3655 = vrsqrt.pop %v3591
          %v3656 = vrsqrt.pop %v3592
          %v3657 = vrsqrt.pop %v3593
          %v3658 = vrsqrt.pop %v3594
          %v3659 = vmul.f32 %v3211, %v3595
          %v3660 = vmul.f32 %v3212, %v3596
          %v3661 = vmul.f32 %v3213, %v3597
          %v3662 = vmul.f32 %v3214, %v3598
          %v3663 = vmul.f32 %v3215, %v3599
          %v3664 = vmul.f32 %v3216, %v3600
          %v3665 = vmul.f32 %v3217, %v3601
          %v3666 = vmul.f32 %v3218, %v3602
          %v3667 = vmul.f32 %v3219, %v3603
          %v3668 = vmul.f32 %v3220, %v3604
          %v3669 = vmul.f32 %v3221, %v3605
          %v3670 = vmul.f32 %v3222, %v3606
          %v3671 = vmul.f32 %v3223, %v3607
          %v3672 = vmul.f32 %v3224, %v3608
          %v3673 = vmul.f32 %v3225, %v3609
          %v3674 = vmul.f32 %v3226, %v3610
          %v3675 = vmul.f32 %v3227, %v3611
          %v3676 = vmul.f32 %v3228, %v3612
          %v3677 = vmul.f32 %v3229, %v3613
          %v3678 = vmul.f32 %v3230, %v3614
          %v3679 = vmul.f32 %v3231, %v3615
          %v3680 = vmul.f32 %v3232, %v3616
          %v3681 = vmul.f32 %v3233, %v3617
          %v3682 = vmul.f32 %v3234, %v3618
          %v3683 = vmul.f32 %v3235, %v3619
          %v3684 = vmul.f32 %v3236, %v3620
          %v3685 = vmul.f32 %v3237, %v3621
          %v3686 = vmul.f32 %v3238, %v3622
          %v3687 = vmul.f32 %v3239, %v3623
          %v3688 = vmul.f32 %v3240, %v3624
          %v3689 = vmul.f32 %v3241, %v3625
          %v3690 = vmul.f32 %v3242, %v3626
          %v3691 = vmul.f32 %v3243, %v3627
          %v3692 = vmul.f32 %v3244, %v3628
          %v3693 = vmul.f32 %v3245, %v3629
          %v3694 = vmul.f32 %v3246, %v3630
          %v3695 = vmul.f32 %v3247, %v3631
          %v3696 = vmul.f32 %v3248, %v3632
          %v3697 = vmul.f32 %v3249, %v3633
          %v3698 = vmul.f32 %v3250, %v3634
          %v3699 = vmul.f32 %v3251, %v3635
          %v3700 = vmul.f32 %v3252, %v3636
          %v3701 = vmul.f32 %v3253, %v3637
          %v3702 = vmul.f32 %v3254, %v3638
          %v3703 = vmul.f32 %v3255, %v3639
          %v3704 = vmul.f32 %v3256, %v3640
          %v3705 = vmul.f32 %v3257, %v3641
          %v3706 = vmul.f32 %v3258, %v3642
          %v3707 = vmul.f32 %v3259, %v3643
          %v3708 = vmul.f32 %v3260, %v3644
          %v3709 = vmul.f32 %v3261, %v3645
          %v3710 = vmul.f32 %v3262, %v3646
          %v3711 = vmul.f32 %v3263, %v3647
          %v3712 = vmul.f32 %v3264, %v3648
          %v3713 = vmul.f32 %v3265, %v3649
          %v3714 = vmul.f32 %v3266, %v3650
          %v3715 = vmul.f32 %v3267, %v3651
          %v3716 = vmul.f32 %v3268, %v3652
          %v3717 = vmul.f32 %v3269, %v3653
          %v3718 = vmul.f32 %v3270, %v3654
          %v3719 = vmul.f32 %v3271, %v3655
          %v3720 = vmul.f32 %v3272, %v3656
          %v3721 = vmul.f32 %v3273, %v3657
          %v3722 = vmul.f32 %v3274, %v3658
          %v3723 = vld [vmem:[%s4 + $0x1] sm:$0x1]
          %v3724 = vlaneseq
          %v3725 = vshrl.u32 %v3724, 7
          %v3726 = vsub.s32 0, %v3725
          %v3727 = vrot.slane %v3723, %v3726
          %v3728 = vmul.f32 %v3659, %v3727
          %v3729 = vmul.f32 %v3660, %v3727
          %v3730 = vmul.f32 %v3661, %v3727
          %v3731 = vmul.f32 %v3662, %v3727
          %v3732 = vmul.f32 %v3663, %v3727
          %v3733 = vmul.f32 %v3664, %v3727
          %v3734 = vmul.f32 %v3665, %v3727
          %v3735 = vmul.f32 %v3666, %v3727
          %v3736 = vmul.f32 %v3667, %v3727
          %v3737 = vmul.f32 %v3668, %v3727
          %v3738 = vmul.f32 %v3669, %v3727
          %v3739 = vmul.f32 %v3670, %v3727
          %v3740 = vmul.f32 %v3671, %v3727
          %v3741 = vmul.f32 %v3672, %v3727
          %v3742 = vmul.f32 %v3673, %v3727
          %v3743 = vmul.f32 %v3674, %v3727
          %v3744 = vmul.f32 %v3675, %v3727
          %v3745 = vmul.f32 %v3676, %v3727
          %v3746 = vmul.f32 %v3677, %v3727
          %v3747 = vmul.f32 %v3678, %v3727
          %v3748 = vmul.f32 %v3679, %v3727
          %v3749 = vmul.f32 %v3680, %v3727
          %v3750 = vmul.f32 %v3681, %v3727
          %v3751 = vmul.f32 %v3682, %v3727
          %v3752 = vmul.f32 %v3683, %v3727
          %v3753 = vmul.f32 %v3684, %v3727
          %v3754 = vmul.f32 %v3685, %v3727
          %v3755 = vmul.f32 %v3686, %v3727
          %v3756 = vmul.f32 %v3687, %v3727
          %v3757 = vmul.f32 %v3688, %v3727
          %v3758 = vmul.f32 %v3689, %v3727
          %v3759 = vmul.f32 %v3690, %v3727
          %v3760 = vmul.f32 %v3691, %v3727
          %v3761 = vmul.f32 %v3692, %v3727
          %v3762 = vmul.f32 %v3693, %v3727
          %v3763 = vmul.f32 %v3694, %v3727
          %v3764 = vmul.f32 %v3695, %v3727
          %v3765 = vmul.f32 %v3696, %v3727
          %v3766 = vmul.f32 %v3697, %v3727
          %v3767 = vmul.f32 %v3698, %v3727
          %v3768 = vmul.f32 %v3699, %v3727
          %v3769 = vmul.f32 %v3700, %v3727
          %v3770 = vmul.f32 %v3701, %v3727
          %v3771 = vmul.f32 %v3702, %v3727
          %v3772 = vmul.f32 %v3703, %v3727
          %v3773 = vmul.f32 %v3704, %v3727
          %v3774 = vmul.f32 %v3705, %v3727
          %v3775 = vmul.f32 %v3706, %v3727
          %v3776 = vmul.f32 %v3707, %v3727
          %v3777 = vmul.f32 %v3708, %v3727
          %v3778 = vmul.f32 %v3709, %v3727
          %v3779 = vmul.f32 %v3710, %v3727
          %v3780 = vmul.f32 %v3711, %v3727
          %v3781 = vmul.f32 %v3712, %v3727
          %v3782 = vmul.f32 %v3713, %v3727
          %v3783 = vmul.f32 %v3714, %v3727
          %v3784 = vmul.f32 %v3715, %v3727
          %v3785 = vmul.f32 %v3716, %v3727
          %v3786 = vmul.f32 %v3717, %v3727
          %v3787 = vmul.f32 %v3718, %v3727
          %v3788 = vmul.f32 %v3719, %v3727
          %v3789 = vmul.f32 %v3720, %v3727
          %v3790 = vmul.f32 %v3721, %v3727
          %v3791 = vmul.f32 %v3722, %v3727
          %v3792 = vld [vmem:[%s4 + $0x2] sm:$0x1]
          %v3793 = vlaneseq
          %v3794 = vshrl.u32 %v3793, 7
          %v3795 = vsub.s32 0, %v3794
          %v3796 = vrot.slane %v3792, %v3795
          %v3797 = vadd.f32 %v3728, %v3796
          %v3798 = vadd.f32 %v3729, %v3796
          %v3799 = vadd.f32 %v3730, %v3796
          %v3800 = vadd.f32 %v3731, %v3796
          %v3801 = vadd.f32 %v3732, %v3796
          %v3802 = vadd.f32 %v3733, %v3796
          %v3803 = vadd.f32 %v3734, %v3796
          %v3804 = vadd.f32 %v3735, %v3796
          %v3805 = vadd.f32 %v3736, %v3796
          %v3806 = vadd.f32 %v3737, %v3796
          %v3807 = vadd.f32 %v3738, %v3796
          %v3808 = vadd.f32 %v3739, %v3796
          %v3809 = vadd.f32 %v3740, %v3796
          %v3810 = vadd.f32 %v3741, %v3796
          %v3811 = vadd.f32 %v3742, %v3796
          %v3812 = vadd.f32 %v3743, %v3796
          %v3813 = vadd.f32 %v3744, %v3796
          %v3814 = vadd.f32 %v3745, %v3796
          %v3815 = vadd.f32 %v3746, %v3796
          %v3816 = vadd.f32 %v3747, %v3796
          %v3817 = vadd.f32 %v3748, %v3796
          %v3818 = vadd.f32 %v3749, %v3796
          %v3819 = vadd.f32 %v3750, %v3796
          %v3820 = vadd.f32 %v3751, %v3796
          %v3821 = vadd.f32 %v3752, %v3796
          %v3822 = vadd.f32 %v3753, %v3796
          %v3823 = vadd.f32 %v3754, %v3796
          %v3824 = vadd.f32 %v3755, %v3796
          %v3825 = vadd.f32 %v3756, %v3796
          %v3826 = vadd.f32 %v3757, %v3796
          %v3827 = vadd.f32 %v3758, %v3796
          %v3828 = vadd.f32 %v3759, %v3796
          %v3829 = vadd.f32 %v3760, %v3796
          %v3830 = vadd.f32 %v3761, %v3796
          %v3831 = vadd.f32 %v3762, %v3796
          %v3832 = vadd.f32 %v3763, %v3796
          %v3833 = vadd.f32 %v3764, %v3796
          %v3834 = vadd.f32 %v3765, %v3796
          %v3835 = vadd.f32 %v3766, %v3796
          %v3836 = vadd.f32 %v3767, %v3796
          %v3837 = vadd.f32 %v3768, %v3796
          %v3838 = vadd.f32 %v3769, %v3796
          %v3839 = vadd.f32 %v3770, %v3796
          %v3840 = vadd.f32 %v3771, %v3796
          %v3841 = vadd.f32 %v3772, %v3796
          %v3842 = vadd.f32 %v3773, %v3796
          %v3843 = vadd.f32 %v3774, %v3796
          %v3844 = vadd.f32 %v3775, %v3796
          %v3845 = vadd.f32 %v3776, %v3796
          %v3846 = vadd.f32 %v3777, %v3796
          %v3847 = vadd.f32 %v3778, %v3796
          %v3848 = vadd.f32 %v3779, %v3796
          %v3849 = vadd.f32 %v3780, %v3796
          %v3850 = vadd.f32 %v3781, %v3796
          %v3851 = vadd.f32 %v3782, %v3796
          %v3852 = vadd.f32 %v3783, %v3796
          %v3853 = vadd.f32 %v3784, %v3796
          %v3854 = vadd.f32 %v3785, %v3796
          %v3855 = vadd.f32 %v3786, %v3796
          %v3856 = vadd.f32 %v3787, %v3796
          %v3857 = vadd.f32 %v3788, %v3796
          %v3858 = vadd.f32 %v3789, %v3796
          %v3859 = vadd.f32 %v3790, %v3796
          %v3860 = vadd.f32 %v3791, %v3796
          %3861 = vst [vmem:[%s313] sm:$0xff] %v3797
          %3862 = vst [vmem:[%s313 + $0x8] sm:$0xff] %v3798
          %3863 = vst [vmem:[%s313 + $0x10] sm:$0xff] %v3799
          %3864 = vst [vmem:[%s313 + $0x18] sm:$0xff] %v3800
          %3865 = vst [vmem:[%s313 + $0x20] sm:$0xff] %v3801
          %3866 = vst [vmem:[%s313 + $0x28] sm:$0xff] %v3802
          %3867 = vst [vmem:[%s313 + $0x30] sm:$0xff] %v3803
          %3868 = vst [vmem:[%s313 + $0x38] sm:$0xff] %v3804
          %3869 = vst [vmem:[%s313 + $0x40] sm:$0xff] %v3805
          %3870 = vst [vmem:[%s313 + $0x48] sm:$0xff] %v3806
          %3871 = vst [vmem:[%s313 + $0x50] sm:$0xff] %v3807
          %3872 = vst [vmem:[%s313 + $0x58] sm:$0xff] %v3808
          %3873 = vst [vmem:[%s313 + $0x60] sm:$0xff] %v3809
          %3874 = vst [vmem:[%s313 + $0x68] sm:$0xff] %v3810
          %3875 = vst [vmem:[%s313 + $0x70] sm:$0xff] %v3811
          %3876 = vst [vmem:[%s313 + $0x78] sm:$0xff] %v3812
          %3877 = vst [vmem:[%s313 + $0x80] sm:$0xff] %v3813
          %3878 = vst [vmem:[%s313 + $0x88] sm:$0xff] %v3814
          %3879 = vst [vmem:[%s313 + $0x90] sm:$0xff] %v3815
          %3880 = vst [vmem:[%s313 + $0x98] sm:$0xff] %v3816
          %3881 = vst [vmem:[%s313 + $0xa0] sm:$0xff] %v3817
          %3882 = vst [vmem:[%s313 + $0xa8] sm:$0xff] %v3818
          %3883 = vst [vmem:[%s313 + $0xb0] sm:$0xff] %v3819
          %3884 = vst [vmem:[%s313 + $0xb8] sm:$0xff] %v3820
          %3885 = vst [vmem:[%s313 + $0xc0] sm:$0xff] %v3821
          %3886 = vst [vmem:[%s313 + $0xc8] sm:$0xff] %v3822
          %3887 = vst [vmem:[%s313 + $0xd0] sm:$0xff] %v3823
          %3888 = vst [vmem:[%s313 + $0xd8] sm:$0xff] %v3824
          %3889 = vst [vmem:[%s313 + $0xe0] sm:$0xff] %v3825
          %3890 = vst [vmem:[%s313 + $0xe8] sm:$0xff] %v3826
          %3891 = vst [vmem:[%s313 + $0xf0] sm:$0xff] %v3827
          %3892 = vst [vmem:[%s313 + $0xf8] sm:$0xff] %v3828
          %3893 = vst [vmem:[%s313 + $0x100] sm:$0xff] %v3829
          %3894 = vst [vmem:[%s313 + $0x108] sm:$0xff] %v3830
          %3895 = vst [vmem:[%s313 + $0x110] sm:$0xff] %v3831
          %3896 = vst [vmem:[%s313 + $0x118] sm:$0xff] %v3832
          %3897 = vst [vmem:[%s313 + $0x120] sm:$0xff] %v3833
          %3898 = vst [vmem:[%s313 + $0x128] sm:$0xff] %v3834
          %3899 = vst [vmem:[%s313 + $0x130] sm:$0xff] %v3835
          %3900 = vst [vmem:[%s313 + $0x138] sm:$0xff] %v3836
          %3901 = vst [vmem:[%s313 + $0x140] sm:$0xff] %v3837
          %3902 = vst [vmem:[%s313 + $0x148] sm:$0xff] %v3838
          %3903 = vst [vmem:[%s313 + $0x150] sm:$0xff] %v3839
          %3904 = vst [vmem:[%s313 + $0x158] sm:$0xff] %v3840
          %3905 = vst [vmem:[%s313 + $0x160] sm:$0xff] %v3841
          %3906 = vst [vmem:[%s313 + $0x168] sm:$0xff] %v3842
          %3907 = vst [vmem:[%s313 + $0x170] sm:$0xff] %v3843
          %3908 = vst [vmem:[%s313 + $0x178] sm:$0xff] %v3844
          %3909 = vst [vmem:[%s313 + $0x180] sm:$0xff] %v3845
          %3910 = vst [vmem:[%s313 + $0x188] sm:$0xff] %v3846
          %3911 = vst [vmem:[%s313 + $0x190] sm:$0xff] %v3847
          %3912 = vst [vmem:[%s313 + $0x198] sm:$0xff] %v3848
          %3913 = vst [vmem:[%s313 + $0x1a0] sm:$0xff] %v3849
          %3914 = vst [vmem:[%s313 + $0x1a8] sm:$0xff] %v3850
          %3915 = vst [vmem:[%s313 + $0x1b0] sm:$0xff] %v3851
          %3916 = vst [vmem:[%s313 + $0x1b8] sm:$0xff] %v3852
          %3917 = vst [vmem:[%s313 + $0x1c0] sm:$0xff] %v3853
          %3918 = vst [vmem:[%s313 + $0x1c8] sm:$0xff] %v3854
          %3919 = vst [vmem:[%s313 + $0x1d0] sm:$0xff] %v3855
          %3920 = vst [vmem:[%s313 + $0x1d8] sm:$0xff] %v3856
          %3921 = vst [vmem:[%s313 + $0x1e0] sm:$0xff] %v3857
          %3922 = vst [vmem:[%s313 + $0x1e8] sm:$0xff] %v3858
          %3923 = vst [vmem:[%s313 + $0x1f0] sm:$0xff] %v3859
          %3924 = vst [vmem:[%s313 + $0x1f8] sm:$0xff] %v3860
        $region60: #{tpu_custom_call.1} parent=39 // pred_fallthru
          _
        %s3925 = sand.u32 %s168, 1
        %s3926 = scalar_lea.sflag [#allocation5], %s3925
        %s3927 = sand.u32 %s168, 1
        %s3928 = smul.addr %s3927, 512
        %s3929 = scalar_lea.vmem [#allocation9], %s3928
        // Predicated region
        $region61: #{tpu_custom_call.1} parent=39 // pred_check
          %p3930 = pneg %p178
        $region62: #{tpu_custom_call.1} parent=39 // pred_check_branch
          %3932 = sbr.rel (%p3930) target = $region64
        $region63: #{tpu_custom_call.1} parent=39 // pred_region
          %s3933 = smul.u32 64, %s27
          %s3935 = ssub.s32 8192, 8192
          %3936 = vsyncadd %s3926, %s3935
          %s3937 = smul.addr %s3933, 128
          %s3938 = scalar_lea.hbm %s5, %s3937
          %s3939 = sshll.u32 %s3929, 4
          %s3940 = int_to_ptr.vmem [resolvable:$true] %s3939
          %3945 = dma.vmem_to_hbm [thread:$0]  %s3940, 8192, %s3938, %s3926, 128, 128, 8
        $region64: #{tpu_custom_call.1} parent=39 // pred_fallthru
          _
      $region40: #{tpu_custom_call.1} parent=5 // pred_fallthru
        _
      %p3946 = scmp.le.s32.totalorder 2, %s18
      // Predicated region
      $region65: #{tpu_custom_call.1} parent=5 // pred_check
        %p3947 = pneg %p3946
      $region66: #{tpu_custom_call.1} parent=5 // pred_check_branch
        %3949 = sbr.rel (%p3947) target = $region68
      $region67: #{tpu_custom_call.1} parent=5 // pred_region
        %s3950 = ssub.s32 %s18, 2
        // Predicated region
        $region69: #{tpu_custom_call.1} parent=67 // pred_check
          %p3951 = pneg %p184
        $region70: #{tpu_custom_call.1} parent=67 // pred_check_branch
          %3953 = sbr.rel (%p3951) target = $region72
        $region71: #{tpu_custom_call.1} parent=67 // pred_region
          %s3954 = sand.u32 %s169, 1
          %s3955 = scalar_lea.sflag [#allocation5], %s3954
          %s3956 = sand.u32 %s169, 1
          %s3957 = smul.addr %s3956, 512
          %s3958 = scalar_lea.vmem [#allocation9], %s3957
          %3959 = dma.done %s3955, 8192
        $region72: #{tpu_custom_call.1} parent=67 // pred_fallthru
          _
      $region68: #{tpu_custom_call.1} parent=5 // pred_fallthru
        _
    $region6: #{tpu_custom_call.1} parent=1 // loop_footer
      %s22 = sadd.s32 1, %s18
    $region7: #{tpu_custom_call.1} parent=1 // loop_footer_branch
      %17 = sbr.rel target = $region3
    $region8: #{tpu_custom_call.1} parent=1 // loop_exit
      _
    %3960 = vsyncpa [#allocation4], 1
    %s3961 = scalar_lea.sflag [#allocation4], 1
    %3962 = vsyncpa %s3961, 1
    %3963 = vsyncpa [#allocation7], 1
    %3964 = vsyncpa [#allocation5], 1
    %s3965 = scalar_lea.sflag [#allocation5], 1
    %3966 = vsyncpa %s3965, 1

// kernel: tpu_custom_call.1
$region0: #{tpu_custom_call.1}
  #allocation0 [shape = 'u32[]', space=smem, size = 0x4, offset = 0x4, fixed_abs, tag = 'smem constant byte address 0x4 - core index']
  #allocation1 [shape = 'u32[144,128]{1,0:T(1,128)}', space=vmem, size = 0x12000, scoped, tag = 'internal scratch']
  #allocation2 [shape = 'f32[512,128]{1,0:T(8,128)}', space=vmem, size = 0x40000, scoped, tag = 'scratch operand']
  %s0 = inlined_call_operand.hbm [shape: f32[1024,128], index: 0, kind: input, shape index: {}]
  %s1 = inlined_call_operand.hbm [shape: bf16[128,512], index: 1, kind: input, shape index: {}]
  %s2 = inlined_call_operand.vmem [shape: f32[1,512], index: 2, kind: input, shape index: {}]
  %s3 = inlined_call_operand.hbm [shape: bf16[512,128], index: 3, kind: input, shape index: {}]
  %s4 = inlined_call_operand.vmem [shape: f32[3,128], index: 4, kind: input, shape index: {}]
  %s5 = inlined_call_operand.hbm [shape: f32[1024,128], index: 5, kind: output, shape index: {}]
  %s6 = sld [smem:[#allocation0]]
  $region73: #{tpu_custom_call.1} parent=0
    _
  %s8 = ssub.s32 1, %s6
  %s9 = scalar_select 0, %s8, %s6
  $region1: #{tpu_custom_call.1} parent=0
    #allocation3 [shape = 'u8[524288]{0}', space=vmem, size = 0x80000, scoped, tag = 'input window, operand 0']
    #allocation4 [shape = 's32[2]{0}', space=sflag, size = 0x8, scoped, tag = 'scoped memory for tpu_custom_call.1']
    #allocation5 [shape = 's32[2]{0}', space=sflag, size = 0x8, scoped, tag = 'scoped memory for tpu_custom_call.1']
    #allocation6 [shape = 'u8[131072]{0}', space=vmem, size = 0x20000, scoped, tag = 'input window, operand 1, single buffered']
    #allocation7 [shape = 's32[1]{0}', space=sflag, size = 0x4, scoped, tag = 'scoped memory for tpu_custom_call.1']
    #allocation8 [shape = 'u8[131072]{0}', space=vmem, size = 0x20000, scoped, tag = 'input window, operand 3, single buffered']
    #allocation9 [shape = 'u8[524288]{0}', space=vmem, size = 0x80000, scoped, tag = 'output window, operand 0']
    %10 = vsyncpa [#allocation4], 0
    %s11 = scalar_lea.sflag [#allocation4], 1
    %12 = vsyncpa %s11, 0
    %13 = vsyncpa [#allocation7], 0
    %14 = vsyncpa [#allocation5], 0
    %s15 = scalar_lea.sflag [#allocation5], 1
    %16 = vsyncpa %s15, 0
    loop: start=0, step=1, limit=4
    $region2: #{tpu_custom_call.1} parent=1 // loop_pre_header
      _
    $region3: #{tpu_custom_call.1} parent=1 // loop_header
      %s18 = sphi 0, %s22
      %p19 = scmp.ge.s32.totalorder %s18, 4
      %s25 = sphi 0, %s37
      %s26 = sphi 0, %s33
      %s27 = sphi 0, %s25
      %s28 = sphi 0, %s26
      %s29 = sphi 0, %s27
      %s30 = sphi 0, %s28
      %s40 = sphi 0, %s42
      %s43 = sphi 0, %s40
      %s44 = sphi 0, %s43
      %s60 = sphi 0, %s44
      %s66 = sphi 0, %s68
      %s69 = sphi 0, %s66
      %s70 = sphi 0, %s69
      %s86 = sphi 0, %s70
      %s92 = sphi 0, %s94
      %s95 = sphi 0, %s92
      %s96 = sphi 0, %s95
      %s112 = sphi 0, %s96
      %s118 = sphi 0, %s120
      %s121 = sphi 0, %s118
      %s122 = sphi 0, %s121
      %s138 = sphi 0, %s122
      %s142 = sphi 0, %s142
      %s144 = sphi 0, %s142
      %s145 = sphi 0, %s144
      %s159 = sphi 0, %s145
      %s165 = sphi 0, %s167
      %s168 = sphi 0, %s165
      %s169 = sphi 0, %s168
      %s185 = sphi 0, %s169
    $region4: #{tpu_custom_call.1} parent=1 // loop_header_branch
      %21 = sbr.rel (%p19) target = $region8
    $region5: #{tpu_custom_call.1} parent=1 // loop_body
      %s23 = ssub.s32 %s18, 1
      %s24 = ssub.s32 %s18, 2
      %s31 = sadd.s32 1, %s26
      %p32 = scmp.ge.s32.totalorder %s31, 1
      %s33 = scalar_select %p32, 0, %s31
      %s34 = sadd.s32 1, %s25
      %s35 = scalar_select %p32, %s34, %s25
      %p36 = scmp.ge.s32.totalorder %s35, 2
      %s37 = scalar_select %p36, 0, %s35
      %s38 = ssub.s32 %s25, %s37
      %p39 = scmp.eq.s32.totalorder %s38, 0
      %s41 = sadd.s32 %s40, 1
      %s42 = scalar_select %p39, %s40, %s41
      %p45 = pneg %p39
      %p46 = scmp.eq.s32.totalorder %s18, 1
      %p47 = por %p45, %p46
      %p48 = scmp.ne.s32.totalorder %s40, %s43
      %p49 = scmp.eq.s32.totalorder %s18, 0
      %p50 = por %p48, %p49
      %p51 = scmp.ne.s32.totalorder %s40, %s43
      %p52 = scmp.eq.s32.totalorder %s23, 1
      %p53 = por %p51, %p52
      %p54 = scmp.ne.s32.totalorder %s43, %s44
      %p55 = scmp.eq.s32.totalorder %s23, 0
      %p56 = por %p54, %p55
      %p57 = scmp.ne.s32.totalorder %s43, %s44
      %p58 = scmp.eq.s32.totalorder %s24, 1
      %p59 = por %p57, %p58
      %p61 = scmp.ne.s32.totalorder %s44, %s60
      %p62 = scmp.eq.s32.totalorder %s24, 0
      %p63 = por %p61, %p62
      %s64 = ssub.s32 %s26, %s33
      %p65 = scmp.eq.s32.totalorder %s64, 0
      %s67 = sadd.s32 %s66, 1
      %s68 = scalar_select %p65, %s66, %s67
      %p71 = pneg %p65
      %p72 = scmp.eq.s32.totalorder %s18, 1
      %p73 = por %p71, %p72
      %p74 = scmp.ne.s32.totalorder %s66, %s69
      %p75 = scmp.eq.s32.totalorder %s18, 0
      %p76 = por %p74, %p75
      %p77 = scmp.ne.s32.totalorder %s66, %s69
      %p78 = scmp.eq.s32.totalorder %s23, 1
      %p79 = por %p77, %p78
      %p80 = scmp.ne.s32.totalorder %s69, %s70
      %p81 = scmp.eq.s32.totalorder %s23, 0
      %p82 = por %p80, %p81
      %p83 = scmp.ne.s32.totalorder %s69, %s70
      %p84 = scmp.eq.s32.totalorder %s24, 1
      %p85 = por %p83, %p84
      %p87 = scmp.ne.s32.totalorder %s70, %s86
      %p88 = scmp.eq.s32.totalorder %s24, 0
      %p89 = por %p87, %p88
      %s90 = ssub.s32 %s26, %s33
      %p91 = scmp.eq.s32.totalorder %s90, 0
      %s93 = sadd.s32 %s92, 1
      %s94 = scalar_select %p91, %s92, %s93
      %p97 = pneg %p91
      %p98 = scmp.eq.s32.totalorder %s18, 1
      %p99 = por %p97, %p98
      %p100 = scmp.ne.s32.totalorder %s92, %s95
      %p101 = scmp.eq.s32.totalorder %s18, 0
      %p102 = por %p100, %p101
      %p103 = scmp.ne.s32.totalorder %s92, %s95
      %p104 = scmp.eq.s32.totalorder %s23, 1
      %p105 = por %p103, %p104
      %p106 = scmp.ne.s32.totalorder %s95, %s96
      %p107 = scmp.eq.s32.totalorder %s23, 0
      %p108 = por %p106, %p107
      %p109 = scmp.ne.s32.totalorder %s95, %s96
      %p110 = scmp.eq.s32.totalorder %s24, 1
      %p111 = por %p109, %p110
      %p113 = scmp.ne.s32.totalorder %s96, %s112
      %p114 = scmp.eq.s32.totalorder %s24, 0
      %p115 = por %p113, %p114
      %s116 = ssub.s32 %s26, %s33
      %p117 = scmp.eq.s32.totalorder %s116, 0
      %s119 = sadd.s32 %s118, 1
      %s120 = scalar_select %p117, %s118, %s119
      %p123 = pneg %p117
      %p124 = scmp.eq.s32.totalorder %s18, 1
      %p125 = por %p123, %p124
      %p126 = scmp.ne.s32.totalorder %s118, %s121
      %p127 = scmp.eq.s32.totalorder %s18, 0
      %p128 = por %p126, %p127
      %p129 = scmp.ne.s32.totalorder %s118, %s121
      %p130 = scmp.eq.s32.totalorder %s23, 1
      %p131 = por %p129, %p130
      %p132 = scmp.ne.s32.totalorder %s121, %s122
      %p133 = scmp.eq.s32.totalorder %s23, 0
      %p134 = por %p132, %p133
      %p135 = scmp.ne.s32.totalorder %s121, %s122
      %p136 = scmp.eq.s32.totalorder %s24, 1
      %p137 = por %p135, %p136
      %p139 = scmp.ne.s32.totalorder %s122, %s138
      %p140 = scmp.eq.s32.totalorder %s24, 0
      %p141 = por %p139, %p140
      %s143 = sadd.s32 %s142, 1
      %p146 = scmp.eq.s32.totalorder %s18, 1
      %p147 = scmp.ne.s32.totalorder %s142, %s144
      %p148 = scmp.eq.s32.totalorder %s18, 0
      %p149 = por %p147, %p148
      %p150 = scmp.ne.s32.totalorder %s142, %s144
      %p151 = scmp.eq.s32.totalorder %s23, 1
      %p152 = por %p150, %p151
      %p153 = scmp.ne.s32.totalorder %s144, %s145
      %p154 = scmp.eq.s32.totalorder %s23, 0
      %p155 = por %p153, %p154
      %p156 = scmp.ne.s32.totalorder %s144, %s145
      %p157 = scmp.eq.s32.totalorder %s24, 1
      %p158 = por %p156, %p157
      %p160 = scmp.ne.s32.totalorder %s145, %s159
      %p161 = scmp.eq.s32.totalorder %s24, 0
      %p162 = por %p160, %p161
      %s163 = ssub.s32 %s25, %s37
      %p164 = scmp.eq.s32.totalorder %s163, 0
      %s166 = sadd.s32 %s165, 1
      %s167 = scalar_select %p164, %s165, %s166
      %p170 = pneg %p164
      %p171 = scmp.eq.s32.totalorder %s18, 1
      %p172 = por %p170, %p171
      %p173 = scmp.ne.s32.totalorder %s165, %s168
      %p174 = scmp.eq.s32.totalorder %s18, 0
      %p175 = por %p173, %p174
      %p176 = scmp.ne.s32.totalorder %s165, %s168
      %p177 = scmp.eq.s32.totalorder %s23, 1
      %p178 = por %p176, %p177
      %p179 = scmp.ne.s32.totalorder %s168, %s169
      %p180 = scmp.eq.s32.totalorder %s23, 0
      %p181 = por %p179, %p180
      %p182 = scmp.ne.s32.totalorder %s168, %s169
      %p183 = scmp.eq.s32.totalorder %s24, 1
      %p184 = por %p182, %p183
      %p186 = scmp.ne.s32.totalorder %s169, %s185
      %p187 = scmp.eq.s32.totalorder %s24, 0
      %p188 = por %p186, %p187
      %p189 = scmp.le.s32.totalorder 1, %s18
      %p190 = scmp.lt.s32.totalorder %s18, 3
      %p191 = pnand %p189, %p190
      %p192 = pneg %p191
      // Predicated region
      $region9: #{tpu_custom_call.1} parent=5 // pred_check
        _
      $region10: #{tpu_custom_call.1} parent=5 // pred_check_branch
        %194 = sbr.rel (%p191) target = $region12
      $region11: #{tpu_custom_call.1} parent=5 // pred_region
        %s195 = ssub.s32 %s18, 1
        // Predicated region
        $region13: #{tpu_custom_call.1} parent=11 // pred_check
          %p196 = pneg %p82
        $region14: #{tpu_custom_call.1} parent=11 // pred_check_branch
          %198 = sbr.rel (%p196) target = $region16
        $region15: #{tpu_custom_call.1} parent=11 // pred_region
          %s199 = smul.u32 4, %s28
          %s201 = ssub.s32 4096, 4096
          %202 = vsyncadd [#allocation7], %s201
          %s203 = smul.addr %s199, 64
          %s204 = scalar_lea.hbm %s1, %s203
          %s205 = sshll.u32 [#allocation6], 4
          %s206 = int_to_ptr.vmem [resolvable:$true] %s205
          %211 = dma.hbm_to_vmem [thread:$0]  %s204, 4096, %s206, [#allocation7], 256, 256, 16
        $region16: #{tpu_custom_call.1} parent=11 // pred_fallthru
          _
        // Predicated region
        $region17: #{tpu_custom_call.1} parent=11 // pred_check
          %p212 = pneg %p108
        $region18: #{tpu_custom_call.1} parent=11 // pred_check_branch
          %214 = sbr.rel (%p212) target = $region20
        $region19: #{tpu_custom_call.1} parent=11 // pred_region
          %s215 = smul.u32 4, %s28
          %p216 = scmp.lt.s32.totalorder %s215, 3
          %s217 = scalar_select %p216, %s215, 3
          %s218 = scalar_lea.vmem %s2, %s217
          %s219 = smul.u32 4, %s28
        $region20: #{tpu_custom_call.1} parent=11 // pred_fallthru
          _
        // Predicated region
        $region21: #{tpu_custom_call.1} parent=11 // pred_check
          %p220 = pneg %p134
        $region22: #{tpu_custom_call.1} parent=11 // pred_check_branch
          %222 = sbr.rel (%p220) target = $region24
        $region23: #{tpu_custom_call.1} parent=11 // pred_region
          %s223 = smul.u32 64, %s28
          %s225 = ssub.s32 4096, 4096
          %226 = vsyncadd [#allocation7], %s225
          %s227 = smul.addr %s223, 64
          %s228 = scalar_lea.hbm %s3, %s227
          %s229 = sshll.u32 [#allocation8], 4
          %s230 = int_to_ptr.vmem [resolvable:$true] %s229
          %235 = dma.hbm_to_vmem [thread:$0]  %s228, 4096, %s230, [#allocation7], 64, 64, 4
        $region24: #{tpu_custom_call.1} parent=11 // pred_fallthru
          _
        // Predicated region
        $region25: #{tpu_custom_call.1} parent=11 // pred_check
          %p236 = pneg %p155
        $region26: #{tpu_custom_call.1} parent=11 // pred_check_branch
          %238 = sbr.rel (%p236) target = $region28
        $region27: #{tpu_custom_call.1} parent=11 // pred_region
          _
        $region28: #{tpu_custom_call.1} parent=11 // pred_fallthru
          _
      $region12: #{tpu_custom_call.1} parent=5 // pred_fallthru
        _
      %p239 = scmp.lt.s32.totalorder %s18, 2
      // Predicated region
      $region29: #{tpu_custom_call.1} parent=5 // pred_check
        %p240 = pneg %p239
      $region30: #{tpu_custom_call.1} parent=5 // pred_check_branch
        %242 = sbr.rel (%p240) target = $region32
      $region31: #{tpu_custom_call.1} parent=5 // pred_region
        // Predicated region
        $region33: #{tpu_custom_call.1} parent=31 // pred_check
          %p243 = pneg %p50
        $region34: #{tpu_custom_call.1} parent=31 // pred_check_branch
          %245 = sbr.rel (%p243) target = $region36
        $region35: #{tpu_custom_call.1} parent=31 // pred_region
          %s246 = sand.u32 %s40, 1
          %s247 = scalar_lea.sflag [#allocation4], %s246
          %s248 = sand.u32 %s40, 1
          %s249 = smul.addr %s248, 512
          %s250 = scalar_lea.vmem [#allocation3], %s249
          %s251 = smul.u32 64, %s25
          %s253 = ssub.s32 8192, 8192
          %254 = vsyncadd %s247, %s253
          %s255 = smul.addr %s251, 128
          %s256 = scalar_lea.hbm %s0, %s255
          %s257 = sshll.u32 %s250, 4
          %s258 = int_to_ptr.vmem [resolvable:$true] %s257
          %263 = dma.hbm_to_vmem [thread:$0]  %s256, 8192, %s258, %s247, 128, 128, 8
        $region36: #{tpu_custom_call.1} parent=31 // pred_fallthru
          _
      $region32: #{tpu_custom_call.1} parent=5 // pred_fallthru
        _
      %p264 = scmp.le.s32.totalorder 1, %s18
      %p265 = scmp.lt.s32.totalorder %s18, 3
      %p266 = pnand %p264, %p265
      %p267 = pneg %p266
      // Predicated region
      $region37: #{tpu_custom_call.1} parent=5 // pred_check
        _
      $region38: #{tpu_custom_call.1} parent=5 // pred_check_branch
        %269 = sbr.rel (%p266) target = $region40
      $region39: #{tpu_custom_call.1} parent=5 // pred_region
        %s270 = ssub.s32 %s18, 1
        %s271 = sand.u32 %s43, 1
        %s272 = scalar_lea.sflag [#allocation4], %s271
        %s273 = sand.u32 %s43, 1
        %s274 = smul.addr %s273, 512
        %s275 = scalar_lea.vmem [#allocation3], %s274
        // Predicated region
        $region41: #{tpu_custom_call.1} parent=39 // pred_check
          %p276 = pneg %p56
        $region42: #{tpu_custom_call.1} parent=39 // pred_check_branch
          %278 = sbr.rel (%p276) target = $region44
        $region43: #{tpu_custom_call.1} parent=39 // pred_region
          %279 = dma.done %s272, 8192
        $region44: #{tpu_custom_call.1} parent=39 // pred_fallthru
          _
        // Predicated region
        $region45: #{tpu_custom_call.1} parent=39 // pred_check
          %p280 = pneg %p82
        $region46: #{tpu_custom_call.1} parent=39 // pred_check_branch
          %282 = sbr.rel (%p280) target = $region48
        $region47: #{tpu_custom_call.1} parent=39 // pred_region
          %283 = dma.done [#allocation7], 4096
        $region48: #{tpu_custom_call.1} parent=39 // pred_fallthru
          _
        // Predicated region
        $region49: #{tpu_custom_call.1} parent=39 // pred_check
          %p284 = pneg %p134
        $region50: #{tpu_custom_call.1} parent=39 // pred_check_branch
          %286 = sbr.rel (%p284) target = $region52
        $region51: #{tpu_custom_call.1} parent=39 // pred_region
          %287 = dma.done [#allocation7], 4096
        $region52: #{tpu_custom_call.1} parent=39 // pred_fallthru
          _
        %s288 = sand.u32 %s43, 1
        %s289 = scalar_lea.sflag [#allocation4], %s288
        %s290 = sand.u32 %s43, 1
        %s291 = smul.addr %s290, 512
        %s292 = scalar_lea.vmem [#allocation3], %s291
        %p293 = pneg %p56
        %p294 = pneg %p53
        %p295 = pneg %p82
        %p296 = pneg %p79
        %s297 = smul.u32 4, %s28
        %p298 = scmp.lt.s32.totalorder %s297, 3
        %s299 = scalar_select %p298, %s297, 3
        %s300 = scalar_lea.vmem %s2, %s299
        %p301 = pneg %p108
        %p302 = pneg %p105
        %p303 = pneg %p134
        %p304 = pneg %p131
        %p305 = pneg %p155
        %p306 = pneg %p152
        %p307 = pneg %p181
        %p308 = pneg %p178
        %s309 = sand.u32 %s168, 1
        %s310 = scalar_lea.sflag [#allocation5], %s309
        %s311 = sand.u32 %s168, 1
        %s312 = smul.addr %s311, 512
        %s313 = scalar_lea.vmem [#allocation9], %s312
        %s314 = smul.u32 64, %s27
        %s315 = smul.u32 4, %s28
        %s316 = smul.u32 4, %s28
        %p317 = scmp.lt.s32.totalorder %s316, 3
        %s318 = scalar_select %p317, %s316, 3
        %s319 = scalar_lea.vmem %s2, %s318
        %s320 = smul.u32 4, %s28
        %s321 = smul.u32 64, %s28
        %s322 = smul.u32 64, %s27
        %p324 = scmp.eq.s32.totalorder %s28, 0
        // Predicated region
        $region53: #{tpu_custom_call.1} parent=39 // pred_check
          %p325 = pneg %p324
        $region54: #{tpu_custom_call.1} parent=39 // pred_check_branch
          %327 = sbr.rel (%p325) target = $region56
        $region55: #{tpu_custom_call.1} parent=39 // pred_region
          %328 = vst [vmem:[#allocation2] sm:$0xff] 0.0
          %329 = vst [vmem:[#allocation2 + $0x8] sm:$0xff] 0.0
          %330 = vst [vmem:[#allocation2 + $0x10] sm:$0xff] 0.0
          %331 = vst [vmem:[#allocation2 + $0x18] sm:$0xff] 0.0
          %332 = vst [vmem:[#allocation2 + $0x20] sm:$0xff] 0.0
          %333 = vst [vmem:[#allocation2 + $0x28] sm:$0xff] 0.0
          %334 = vst [vmem:[#allocation2 + $0x30] sm:$0xff] 0.0
          %335 = vst [vmem:[#allocation2 + $0x38] sm:$0xff] 0.0
          %336 = vst [vmem:[#allocation2 + $0x40] sm:$0xff] 0.0
          %337 = vst [vmem:[#allocation2 + $0x48] sm:$0xff] 0.0
          %338 = vst [vmem:[#allocation2 + $0x50] sm:$0xff] 0.0
          %339 = vst [vmem:[#allocation2 + $0x58] sm:$0xff] 0.0
          %340 = vst [vmem:[#allocation2 + $0x60] sm:$0xff] 0.0
          %341 = vst [vmem:[#allocation2 + $0x68] sm:$0xff] 0.0
          %342 = vst [vmem:[#allocation2 + $0x70] sm:$0xff] 0.0
          %343 = vst [vmem:[#allocation2 + $0x78] sm:$0xff] 0.0
          %344 = vst [vmem:[#allocation2 + $0x80] sm:$0xff] 0.0
          %345 = vst [vmem:[#allocation2 + $0x88] sm:$0xff] 0.0
          %346 = vst [vmem:[#allocation2 + $0x90] sm:$0xff] 0.0
          %347 = vst [vmem:[#allocation2 + $0x98] sm:$0xff] 0.0
          %348 = vst [vmem:[#allocation2 + $0xa0] sm:$0xff] 0.0
          %349 = vst [vmem:[#allocation2 + $0xa8] sm:$0xff] 0.0
          %350 = vst [vmem:[#allocation2 + $0xb0] sm:$0xff] 0.0
          %351 = vst [vmem:[#allocation2 + $0xb8] sm:$0xff] 0.0
          %352 = vst [vmem:[#allocation2 + $0xc0] sm:$0xff] 0.0
          %353 = vst [vmem:[#allocation2 + $0xc8] sm:$0xff] 0.0
          %354 = vst [vmem:[#allocation2 + $0xd0] sm:$0xff] 0.0
          %355 = vst [vmem:[#allocation2 + $0xd8] sm:$0xff] 0.0
          %356 = vst [vmem:[#allocation2 + $0xe0] sm:$0xff] 0.0
          %357 = vst [vmem:[#allocation2 + $0xe8] sm:$0xff] 0.0
          %358 = vst [vmem:[#allocation2 + $0xf0] sm:$0xff] 0.0
          %359 = vst [vmem:[#allocation2 + $0xf8] sm:$0xff] 0.0
          %360 = vst [vmem:[#allocation2 + $0x100] sm:$0xff] 0.0
          %361 = vst [vmem:[#allocation2 + $0x108] sm:$0xff] 0.0
          %362 = vst [vmem:[#allocation2 + $0x110] sm:$0xff] 0.0
          %363 = vst [vmem:[#allocation2 + $0x118] sm:$0xff] 0.0
          %364 = vst [vmem:[#allocation2 + $0x120] sm:$0xff] 0.0
          %365 = vst [vmem:[#allocation2 + $0x128] sm:$0xff] 0.0
          %366 = vst [vmem:[#allocation2 + $0x130] sm:$0xff] 0.0
          %367 = vst [vmem:[#allocation2 + $0x138] sm:$0xff] 0.0
          %368 = vst [vmem:[#allocation2 + $0x140] sm:$0xff] 0.0
          %369 = vst [vmem:[#allocation2 + $0x148] sm:$0xff] 0.0
          %370 = vst [vmem:[#allocation2 + $0x150] sm:$0xff] 0.0
          %371 = vst [vmem:[#allocation2 + $0x158] sm:$0xff] 0.0
          %372 = vst [vmem:[#allocation2 + $0x160] sm:$0xff] 0.0
          %373 = vst [vmem:[#allocation2 + $0x168] sm:$0xff] 0.0
          %374 = vst [vmem:[#allocation2 + $0x170] sm:$0xff] 0.0
          %375 = vst [vmem:[#allocation2 + $0x178] sm:$0xff] 0.0
          %376 = vst [vmem:[#allocation2 + $0x180] sm:$0xff] 0.0
          %377 = vst [vmem:[#allocation2 + $0x188] sm:$0xff] 0.0
          %378 = vst [vmem:[#allocation2 + $0x190] sm:$0xff] 0.0
          %379 = vst [vmem:[#allocation2 + $0x198] sm:$0xff] 0.0
          %380 = vst [vmem:[#allocation2 + $0x1a0] sm:$0xff] 0.0
          %381 = vst [vmem:[#allocation2 + $0x1a8] sm:$0xff] 0.0
          %382 = vst [vmem:[#allocation2 + $0x1b0] sm:$0xff] 0.0
          %383 = vst [vmem:[#allocation2 + $0x1b8] sm:$0xff] 0.0
          %384 = vst [vmem:[#allocation2 + $0x1c0] sm:$0xff] 0.0
          %385 = vst [vmem:[#allocation2 + $0x1c8] sm:$0xff] 0.0
          %386 = vst [vmem:[#allocation2 + $0x1d0] sm:$0xff] 0.0
          %387 = vst [vmem:[#allocation2 + $0x1d8] sm:$0xff] 0.0
          %388 = vst [vmem:[#allocation2 + $0x1e0] sm:$0xff] 0.0
          %389 = vst [vmem:[#allocation2 + $0x1e8] sm:$0xff] 0.0
          %390 = vst [vmem:[#allocation2 + $0x1f0] sm:$0xff] 0.0
          %391 = vst [vmem:[#allocation2 + $0x1f8] sm:$0xff] 0.0
        $region56: #{tpu_custom_call.1} parent=39 // pred_fallthru
          _
        %v392 = vld [vmem:[%s275] sm:$0xff]
        %v393 = vld [vmem:[%s275 + $0x8] sm:$0xff]
        %v394 = vld [vmem:[%s275 + $0x10] sm:$0xff]
        %v395 = vld [vmem:[%s275 + $0x18] sm:$0xff]
        %v396 = vld [vmem:[%s275 + $0x20] sm:$0xff]
        %v397 = vld [vmem:[%s275 + $0x28] sm:$0xff]
        %v398 = vld [vmem:[%s275 + $0x30] sm:$0xff]
        %v399 = vld [vmem:[%s275 + $0x38] sm:$0xff]
        %v400 = vld [vmem:[%s275 + $0x40] sm:$0xff]
        %v401 = vld [vmem:[%s275 + $0x48] sm:$0xff]
        %v402 = vld [vmem:[%s275 + $0x50] sm:$0xff]
        %v403 = vld [vmem:[%s275 + $0x58] sm:$0xff]
        %v404 = vld [vmem:[%s275 + $0x60] sm:$0xff]
        %v405 = vld [vmem:[%s275 + $0x68] sm:$0xff]
        %v406 = vld [vmem:[%s275 + $0x70] sm:$0xff]
        %v407 = vld [vmem:[%s275 + $0x78] sm:$0xff]
        %v408 = vld [vmem:[%s275 + $0x80] sm:$0xff]
        %v409 = vld [vmem:[%s275 + $0x88] sm:$0xff]
        %v410 = vld [vmem:[%s275 + $0x90] sm:$0xff]
        %v411 = vld [vmem:[%s275 + $0x98] sm:$0xff]
        %v412 = vld [vmem:[%s275 + $0xa0] sm:$0xff]
        %v413 = vld [vmem:[%s275 + $0xa8] sm:$0xff]
        %v414 = vld [vmem:[%s275 + $0xb0] sm:$0xff]
        %v415 = vld [vmem:[%s275 + $0xb8] sm:$0xff]
        %v416 = vld [vmem:[%s275 + $0xc0] sm:$0xff]
        %v417 = vld [vmem:[%s275 + $0xc8] sm:$0xff]
        %v418 = vld [vmem:[%s275 + $0xd0] sm:$0xff]
        %v419 = vld [vmem:[%s275 + $0xd8] sm:$0xff]
        %v420 = vld [vmem:[%s275 + $0xe0] sm:$0xff]
        %v421 = vld [vmem:[%s275 + $0xe8] sm:$0xff]
        %v422 = vld [vmem:[%s275 + $0xf0] sm:$0xff]
        %v423 = vld [vmem:[%s275 + $0xf8] sm:$0xff]
        %v424 = vld [vmem:[%s275 + $0x100] sm:$0xff]
        %v425 = vld [vmem:[%s275 + $0x108] sm:$0xff]
        %v426 = vld [vmem:[%s275 + $0x110] sm:$0xff]
        %v427 = vld [vmem:[%s275 + $0x118] sm:$0xff]
        %v428 = vld [vmem:[%s275 + $0x120] sm:$0xff]
        %v429 = vld [vmem:[%s275 + $0x128] sm:$0xff]
        %v430 = vld [vmem:[%s275 + $0x130] sm:$0xff]
        %v431 = vld [vmem:[%s275 + $0x138] sm:$0xff]
        %v432 = vld [vmem:[%s275 + $0x140] sm:$0xff]
        %v433 = vld [vmem:[%s275 + $0x148] sm:$0xff]
        %v434 = vld [vmem:[%s275 + $0x150] sm:$0xff]
        %v435 = vld [vmem:[%s275 + $0x158] sm:$0xff]
        %v436 = vld [vmem:[%s275 + $0x160] sm:$0xff]
        %v437 = vld [vmem:[%s275 + $0x168] sm:$0xff]
        %v438 = vld [vmem:[%s275 + $0x170] sm:$0xff]
        %v439 = vld [vmem:[%s275 + $0x178] sm:$0xff]
        %v440 = vld [vmem:[%s275 + $0x180] sm:$0xff]
        %v441 = vld [vmem:[%s275 + $0x188] sm:$0xff]
        %v442 = vld [vmem:[%s275 + $0x190] sm:$0xff]
        %v443 = vld [vmem:[%s275 + $0x198] sm:$0xff]
        %v444 = vld [vmem:[%s275 + $0x1a0] sm:$0xff]
        %v445 = vld [vmem:[%s275 + $0x1a8] sm:$0xff]
        %v446 = vld [vmem:[%s275 + $0x1b0] sm:$0xff]
        %v447 = vld [vmem:[%s275 + $0x1b8] sm:$0xff]
        %v448 = vld [vmem:[%s275 + $0x1c0] sm:$0xff]
        %v449 = vld [vmem:[%s275 + $0x1c8] sm:$0xff]
        %v450 = vld [vmem:[%s275 + $0x1d0] sm:$0xff]
        %v451 = vld [vmem:[%s275 + $0x1d8] sm:$0xff]
        %v452 = vld [vmem:[%s275 + $0x1e0] sm:$0xff]
        %v453 = vld [vmem:[%s275 + $0x1e8] sm:$0xff]
        %v454 = vld [vmem:[%s275 + $0x1f0] sm:$0xff]
        %v455 = vld [vmem:[%s275 + $0x1f8] sm:$0xff]
        %v456 = vpack.c.bf16 %v393, %v392
        %v457 = vpack.c.bf16 %v395, %v394
        %v458 = vpack.c.bf16 %v397, %v396
        %v459 = vpack.c.bf16 %v399, %v398
        %v460 = vpack.c.bf16 %v401, %v400
        %v461 = vpack.c.bf16 %v403, %v402
        %v462 = vpack.c.bf16 %v405, %v404
        %v463 = vpack.c.bf16 %v407, %v406
        %v464 = vpack.c.bf16 %v409, %v408
        %v465 = vpack.c.bf16 %v411, %v410
        %v466 = vpack.c.bf16 %v413, %v412
        %v467 = vpack.c.bf16 %v415, %v414
        %v468 = vpack.c.bf16 %v417, %v416
        %v469 = vpack.c.bf16 %v419, %v418
        %v470 = vpack.c.bf16 %v421, %v420
        %v471 = vpack.c.bf16 %v423, %v422
        %v472 = vpack.c.bf16 %v425, %v424
        %v473 = vpack.c.bf16 %v427, %v426
        %v474 = vpack.c.bf16 %v429, %v428
        %v475 = vpack.c.bf16 %v431, %v430
        %v476 = vpack.c.bf16 %v433, %v432
        %v477 = vpack.c.bf16 %v435, %v434
        %v478 = vpack.c.bf16 %v437, %v436
        %v479 = vpack.c.bf16 %v439, %v438
        %v480 = vpack.c.bf16 %v441, %v440
        %v481 = vpack.c.bf16 %v443, %v442
        %v482 = vpack.c.bf16 %v445, %v444
        %v483 = vpack.c.bf16 %v447, %v446
        %v484 = vpack.c.bf16 %v449, %v448
        %v485 = vpack.c.bf16 %v451, %v450
        %v486 = vpack.c.bf16 %v453, %v452
        %v487 = vpack.c.bf16 %v455, %v454
        %v488 = vld [vmem:[#allocation6] sm:$0xff]
        %v489 = vld [vmem:[#allocation6 + $0x8] sm:$0xff]
        %v490 = vld [vmem:[#allocation6 + $0x10] sm:$0xff]
        %v491 = vld [vmem:[#allocation6 + $0x18] sm:$0xff]
        %v492 = vld [vmem:[#allocation6 + $0x20] sm:$0xff]
        %v493 = vld [vmem:[#allocation6 + $0x28] sm:$0xff]
        %v494 = vld [vmem:[#allocation6 + $0x30] sm:$0xff]
        %v495 = vld [vmem:[#allocation6 + $0x38] sm:$0xff]
        %v496 = vld [vmem:[#allocation6 + $0x40] sm:$0xff]
        %v497 = vld [vmem:[#allocation6 + $0x48] sm:$0xff]
        %v498 = vld [vmem:[#allocation6 + $0x50] sm:$0xff]
        %v499 = vld [vmem:[#allocation6 + $0x58] sm:$0xff]
        %v500 = vld [vmem:[#allocation6 + $0x60] sm:$0xff]
        %v501 = vld [vmem:[#allocation6 + $0x68] sm:$0xff]
        %v502 = vld [vmem:[#allocation6 + $0x70] sm:$0xff]
        %v503 = vld [vmem:[#allocation6 + $0x78] sm:$0xff]
        %v504 = vld [vmem:[#allocation6 + $0x80] sm:$0xff]
        %v505 = vld [vmem:[#allocation6 + $0x88] sm:$0xff]
        %v506 = vld [vmem:[#allocation6 + $0x90] sm:$0xff]
        %v507 = vld [vmem:[#allocation6 + $0x98] sm:$0xff]
        %v508 = vld [vmem:[#allocation6 + $0xa0] sm:$0xff]
        %v509 = vld [vmem:[#allocation6 + $0xa8] sm:$0xff]
        %v510 = vld [vmem:[#allocation6 + $0xb0] sm:$0xff]
        %v511 = vld [vmem:[#allocation6 + $0xb8] sm:$0xff]
        %v512 = vld [vmem:[#allocation6 + $0xc0] sm:$0xff]
        %v513 = vld [vmem:[#allocation6 + $0xc8] sm:$0xff]
        %v514 = vld [vmem:[#allocation6 + $0xd0] sm:$0xff]
        %v515 = vld [vmem:[#allocation6 + $0xd8] sm:$0xff]
        %v516 = vld [vmem:[#allocation6 + $0xe0] sm:$0xff]
        %v517 = vld [vmem:[#allocation6 + $0xe8] sm:$0xff]
        %v518 = vld [vmem:[#allocation6 + $0xf0] sm:$0xff]
        %v519 = vld [vmem:[#allocation6 + $0xf8] sm:$0xff]
        %v520 = vld [vmem:[%s319] sm:$0xf]
        %v522 = vlaneseq
        %v523 = vshrl.u32 %v522, 7
        %v524 = vsub.s32 0, %v523
        %v525 = vrot.slane %v520, %v524
        %v526 = vlaneseq
        %v527 = vshrl.u32 %v526, 7
        %v528 = vsub.s32 1, %v527
        %v529 = vrot.slane %v520, %v528
        %v530 = vlaneseq
        %v531 = vshrl.u32 %v530, 7
        %v532 = vsub.s32 2, %v531
        %v533 = vrot.slane %v520, %v532
        %v534 = vlaneseq
        %v535 = vshrl.u32 %v534, 7
        %v536 = vsub.s32 3, %v535
        %v537 = vrot.slane %v520, %v536
        %v574 = vunpack.c.l.b16 %v488
        %v575 = vunpack.c.h.b16 %v488
        %v576 = vunpack.c.l.b16 %v489
        %v577 = vunpack.c.h.b16 %v489
        %v578 = vunpack.c.l.b16 %v490
        %v579 = vunpack.c.h.b16 %v490
        %v580 = vunpack.c.l.b16 %v491
        %v581 = vunpack.c.h.b16 %v491
        %v582 = vunpack.c.l.b16 %v492
        %v583 = vunpack.c.h.b16 %v492
        %v584 = vunpack.c.l.b16 %v493
        %v585 = vunpack.c.h.b16 %v493
        %v586 = vunpack.c.l.b16 %v494
        %v587 = vunpack.c.h.b16 %v494
        %v588 = vunpack.c.l.b16 %v495
        %v589 = vunpack.c.h.b16 %v495
        %v590 = vunpack.c.l.b16 %v496
        %v591 = vunpack.c.h.b16 %v496
        %v592 = vunpack.c.l.b16 %v497
        %v593 = vunpack.c.h.b16 %v497
        %v594 = vunpack.c.l.b16 %v498
        %v595 = vunpack.c.h.b16 %v498
        %v596 = vunpack.c.l.b16 %v499
        %v597 = vunpack.c.h.b16 %v499
        %v598 = vunpack.c.l.b16 %v500
        %v599 = vunpack.c.h.b16 %v500
        %v600 = vunpack.c.l.b16 %v501
        %v601 = vunpack.c.h.b16 %v501
        %v602 = vunpack.c.l.b16 %v502
        %v603 = vunpack.c.h.b16 %v502
        %v604 = vunpack.c.l.b16 %v503
        %v605 = vunpack.c.h.b16 %v503
        %v606 = vunpack.c.l.b16 %v504
        %v607 = vunpack.c.h.b16 %v504
        %v608 = vunpack.c.l.b16 %v505
        %v609 = vunpack.c.h.b16 %v505
        %v610 = vunpack.c.l.b16 %v506
        %v611 = vunpack.c.h.b16 %v506
        %v612 = vunpack.c.l.b16 %v507
        %v613 = vunpack.c.h.b16 %v507
        %v614 = vunpack.c.l.b16 %v508
        %v615 = vunpack.c.h.b16 %v508
        %v616 = vunpack.c.l.b16 %v509
        %v617 = vunpack.c.h.b16 %v509
        %v618 = vunpack.c.l.b16 %v510
        %v619 = vunpack.c.h.b16 %v510
        %v620 = vunpack.c.l.b16 %v511
        %v621 = vunpack.c.h.b16 %v511
        %v622 = vunpack.c.l.b16 %v512
        %v623 = vunpack.c.h.b16 %v512
        %v624 = vunpack.c.l.b16 %v513
        %v625 = vunpack.c.h.b16 %v513
        %v626 = vunpack.c.l.b16 %v514
        %v627 = vunpack.c.h.b16 %v514
        %v628 = vunpack.c.l.b16 %v515
        %v629 = vunpack.c.h.b16 %v515
        %v630 = vunpack.c.l.b16 %v516
        %v631 = vunpack.c.h.b16 %v516
        %v632 = vunpack.c.l.b16 %v517
        %v633 = vunpack.c.h.b16 %v517
        %v634 = vunpack.c.l.b16 %v518
        %v635 = vunpack.c.h.b16 %v518
        %v636 = vunpack.c.l.b16 %v519
        %v637 = vunpack.c.h.b16 %v519
        %v638 = vpack.c.b16 %v578, %v574
        %v639 = vpack.c.b16 %v579, %v575
        %v640 = vpack.c.b16 %v580, %v576
        %v641 = vpack.c.b16 %v581, %v577
        %v642 = vpack.c.b16 %v586, %v582
        %v643 = vpack.c.b16 %v587, %v583
        %v644 = vpack.c.b16 %v588, %v584
        %v645 = vpack.c.b16 %v589, %v585
        %v646 = vpack.c.b16 %v594, %v590
        %v647 = vpack.c.b16 %v595, %v591
        %v648 = vpack.c.b16 %v596, %v592
        %v649 = vpack.c.b16 %v597, %v593
        %v650 = vpack.c.b16 %v602, %v598
        %v651 = vpack.c.b16 %v603, %v599
        %v652 = vpack.c.b16 %v604, %v600
        %v653 = vpack.c.b16 %v605, %v601
        %v654 = vpack.c.b16 %v610, %v606
        %v655 = vpack.c.b16 %v611, %v607
        %v656 = vpack.c.b16 %v612, %v608
        %v657 = vpack.c.b16 %v613, %v609
        %v658 = vpack.c.b16 %v618, %v614
        %v659 = vpack.c.b16 %v619, %v615
        %v660 = vpack.c.b16 %v620, %v616
        %v661 = vpack.c.b16 %v621, %v617
        %v662 = vpack.c.b16 %v626, %v622
        %v663 = vpack.c.b16 %v627, %v623
        %v664 = vpack.c.b16 %v628, %v624
        %v665 = vpack.c.b16 %v629, %v625
        %v666 = vpack.c.b16 %v634, %v630
        %v667 = vpack.c.b16 %v635, %v631
        %v668 = vpack.c.b16 %v636, %v632
        %v669 = vpack.c.b16 %v637, %v633
        %702 = vmatprep.subr.bf16.mxu0 %v639
        %703 = vmatpush1.bf16.msra.mxu0 %v638
        %704 = vmatprep.subr.bf16.mxu0 %v643
        %705 = vmatpush1.bf16.msra.mxu0 %v642
        %706 = vmatprep.subr.bf16.mxu0 %v647
        %707 = vmatpush1.bf16.msra.mxu0 %v646
        %708 = vmatprep.subr.bf16.mxu0 %v651
        %709 = vmatpush1.bf16.msra.mxu0 %v650
        %710 = vmatprep.subr.bf16.mxu0 %v655
        %711 = vmatpush1.bf16.msra.mxu0 %v654
        %712 = vmatprep.subr.bf16.mxu0 %v659
        %713 = vmatpush1.bf16.msra.mxu0 %v658
        %714 = vmatprep.subr.bf16.mxu0 %v663
        %715 = vmatpush1.bf16.msra.mxu0 %v662
        %716 = vmatprep.subr.bf16.mxu0 %v667
        %717 = vmatpush1.bf16.msra.mxu0 %v666
        %718 = vmatprep.subr.bf16.mxu0 0
        %719 = vmatpush1.bf16.msra.mxu0 0
        %720 = vmatprep.subr.bf16.mxu0 0
        %721 = vmatpush1.bf16.msra.mxu0 0
        %722 = vmatprep.subr.bf16.mxu0 0
        %723 = vmatpush1.bf16.msra.mxu0 0
        %724 = vmatprep.subr.bf16.mxu0 0
        %725 = vmatpush1.bf16.msra.mxu0 0
        %726 = vmatprep.subr.bf16.mxu0 0
        %727 = vmatpush1.bf16.msra.mxu0 0
        %728 = vmatprep.subr.bf16.mxu0 0
        %729 = vmatpush1.bf16.msra.mxu0 0
        %730 = vmatprep.subr.bf16.mxu0 0
        %731 = vmatpush1.bf16.msra.mxu0 0
        %732 = vmatprep.subr.bf16.mxu0 0
        %733 = vmatpush1.bf16.msra.mxu0 0
        %734 = vmatprep.mubr.bf16.mxu0 0
        %735 = vmatmul.mubr.bf16.gmra.mrb[0].mxu0 %v456
        %v736 = vpop.f32.mrb[0].mxu0
        %v737 = vadd.f32 %v525, %v736
        %v738 = vpop.f32.mrb[0].mxu0
        %v739 = vadd.f32 %v529, %v738
        %v740 = vpop.f32.mrb[0].mxu0
        %v741 = vadd.f32 %v525, %v740
        %v742 = vpop.f32.mrb[0].mxu0
        %v743 = vadd.f32 %v529, %v742
        %744 = vmatprep.mubr.bf16.mxu0 0
        %745 = vmatmul.mubr.bf16.gmra.mrb[0].mxu0 %v457
        %v746 = vpop.f32.mrb[0].mxu0
        %v747 = vadd.f32 %v525, %v746
        %v748 = vpop.f32.mrb[0].mxu0
        %v749 = vadd.f32 %v529, %v748
        %v750 = vpop.f32.mrb[0].mxu0
        %v751 = vadd.f32 %v525, %v750
        %v752 = vpop.f32.mrb[0].mxu0
        %v753 = vadd.f32 %v529, %v752
        %754 = vmatprep.mubr.bf16.mxu0 0
        %755 = vmatmul.mubr.bf16.gmra.mrb[0].mxu0 %v458
        %v756 = vpop.f32.mrb[0].mxu0
        %v757 = vadd.f32 %v525, %v756
        %v758 = vpop.f32.mrb[0].mxu0
        %v759 = vadd.f32 %v529, %v758
        %v760 = vpop.f32.mrb[0].mxu0
        %v761 = vadd.f32 %v525, %v760
        %v762 = vpop.f32.mrb[0].mxu0
        %v763 = vadd.f32 %v529, %v762
        %764 = vmatprep.mubr.bf16.mxu0 0
        %765 = vmatmul.mubr.bf16.gmra.mrb[0].mxu0 %v459
        %v766 = vpop.f32.mrb[0].mxu0
        %v767 = vadd.f32 %v525, %v766
        %v768 = vpop.f32.mrb[0].mxu0
        %v769 = vadd.f32 %v529, %v768
        %v770 = vpop.f32.mrb[0].mxu0
        %v771 = vadd.f32 %v525, %v770
        %v772 = vpop.f32.mrb[0].mxu0
        %v773 = vadd.f32 %v529, %v772
        %774 = vmatprep.mubr.bf16.mxu0 0
        %775 = vmatmul.mubr.bf16.gmra.mrb[0].mxu0 %v460
        %v776 = vpop.f32.mrb[0].mxu0
        %v777 = vadd.f32 %v525, %v776
        %v778 = vpop.f32.mrb[0].mxu0
        %v779 = vadd.f32 %v529, %v778
        %v780 = vpop.f32.mrb[0].mxu0
        %v781 = vadd.f32 %v525, %v780
        %v782 = vpop.f32.mrb[0].mxu0
        %v783 = vadd.f32 %v529, %v782
        %784 = vmatprep.mubr.bf16.mxu0 0
        %785 = vmatmul.mubr.bf16.gmra.mrb[0].mxu0 %v461
        %v786 = vpop.f32.mrb[0].mxu0
        %v787 = vadd.f32 %v525, %v786
        %v788 = vpop.f32.mrb[0].mxu0
        %v789 = vadd.f32 %v529, %v788
        %v790 = vpop.f32.mrb[0].mxu0
        %v791 = vadd.f32 %v525, %v790
        %v792 = vpop.f32.mrb[0].mxu0
        %v793 = vadd.f32 %v529, %v792
        %794 = vmatprep.mubr.bf16.mxu0 0
        %795 = vmatmul.mubr.bf16.gmra.mrb[0].mxu0 %v462
        %v796 = vpop.f32.mrb[0].mxu0
        %v797 = vadd.f32 %v525, %v796
        %v798 = vpop.f32.mrb[0].mxu0
        %v799 = vadd.f32 %v529, %v798
        %v800 = vpop.f32.mrb[0].mxu0
        %v801 = vadd.f32 %v525, %v800
        %v802 = vpop.f32.mrb[0].mxu0
        %v803 = vadd.f32 %v529, %v802
        %804 = vmatprep.mubr.bf16.mxu0 0
        %805 = vmatmul.mubr.bf16.gmra.mrb[0].mxu0 %v463
        %v806 = vpop.f32.mrb[0].mxu0
        %v807 = vadd.f32 %v525, %v806
        %v808 = vpop.f32.mrb[0].mxu0
        %v809 = vadd.f32 %v529, %v808
        %v810 = vpop.f32.mrb[0].mxu0
        %v811 = vadd.f32 %v525, %v810
        %v812 = vpop.f32.mrb[0].mxu0
        %v813 = vadd.f32 %v529, %v812
        %814 = vmatprep.mubr.bf16.mxu0 0
        %815 = vmatmul.mubr.bf16.gmra.mrb[0].mxu0 %v464
        %v816 = vpop.f32.mrb[0].mxu0
        %v817 = vadd.f32 %v525, %v816
        %v818 = vpop.f32.mrb[0].mxu0
        %v819 = vadd.f32 %v529, %v818
        %v820 = vpop.f32.mrb[0].mxu0
        %v821 = vadd.f32 %v525, %v820
        %v822 = vpop.f32.mrb[0].mxu0
        %v823 = vadd.f32 %v529, %v822
        %824 = vmatprep.mubr.bf16.mxu0 0
        %825 = vmatmul.mubr.bf16.gmra.mrb[0].mxu0 %v465
        %v826 = vpop.f32.mrb[0].mxu0
        %v827 = vadd.f32 %v525, %v826
        %v828 = vpop.f32.mrb[0].mxu0
        %v829 = vadd.f32 %v529, %v828
        %v830 = vpop.f32.mrb[0].mxu0
        %v831 = vadd.f32 %v525, %v830
        %v832 = vpop.f32.mrb[0].mxu0
        %v833 = vadd.f32 %v529, %v832
        %834 = vmatprep.mubr.bf16.mxu0 0
        %835 = vmatmul.mubr.bf16.gmra.mrb[0].mxu0 %v466
        %v836 = vpop.f32.mrb[0].mxu0
        %v837 = vadd.f32 %v525, %v836
        %v838 = vpop.f32.mrb[0].mxu0
        %v839 = vadd.f32 %v529, %v838
        %v840 = vpop.f32.mrb[0].mxu0
        %v841 = vadd.f32 %v525, %v840
        %v842 = vpop.f32.mrb[0].mxu0
        %v843 = vadd.f32 %v529, %v842
        %844 = vmatprep.mubr.bf16.mxu0 0
        %845 = vmatmul.mubr.bf16.gmra.mrb[0].mxu0 %v467
        %v846 = vpop.f32.mrb[0].mxu0
        %v847 = vadd.f32 %v525, %v846
        %v848 = vpop.f32.mrb[0].mxu0
        %v849 = vadd.f32 %v529, %v848
        %v850 = vpop.f32.mrb[0].mxu0
        %v851 = vadd.f32 %v525, %v850
        %v852 = vpop.f32.mrb[0].mxu0
        %v853 = vadd.f32 %v529, %v852
        %854 = vmatprep.mubr.bf16.mxu0 0
        %855 = vmatmul.mubr.bf16.gmra.mrb[0].mxu0 %v468
        %v856 = vpop.f32.mrb[0].mxu0
        %v857 = vadd.f32 %v525, %v856
        %v858 = vpop.f32.mrb[0].mxu0
        %v859 = vadd.f32 %v529, %v858
        %v860 = vpop.f32.mrb[0].mxu0
        %v861 = vadd.f32 %v525, %v860
        %v862 = vpop.f32.mrb[0].mxu0
        %v863 = vadd.f32 %v529, %v862
        %864 = vmatprep.mubr.bf16.mxu0 0
        %865 = vmatmul.mubr.bf16.gmra.mrb[0].mxu0 %v469
        %v866 = vpop.f32.mrb[0].mxu0
        %v867 = vadd.f32 %v525, %v866
        %v868 = vpop.f32.mrb[0].mxu0
        %v869 = vadd.f32 %v529, %v868
        %v870 = vpop.f32.mrb[0].mxu0
        %v871 = vadd.f32 %v525, %v870
        %v872 = vpop.f32.mrb[0].mxu0
        %v873 = vadd.f32 %v529, %v872
        %874 = vmatprep.mubr.bf16.mxu0 0
        %875 = vmatmul.mubr.bf16.gmra.mrb[0].mxu0 %v470
        %v876 = vpop.f32.mrb[0].mxu0
        %v877 = vadd.f32 %v525, %v876
        %v878 = vpop.f32.mrb[0].mxu0
        %v879 = vadd.f32 %v529, %v878
        %v880 = vpop.f32.mrb[0].mxu0
        %v881 = vadd.f32 %v525, %v880
        %v882 = vpop.f32.mrb[0].mxu0
        %v883 = vadd.f32 %v529, %v882
        %884 = vmatprep.mubr.bf16.mxu0 0
        %885 = vmatmul.mubr.bf16.gmra.mrb[0].mxu0 %v471
        %v886 = vpop.f32.mrb[0].mxu0
        %v887 = vadd.f32 %v525, %v886
        %v888 = vpop.f32.mrb[0].mxu0
        %v889 = vadd.f32 %v529, %v888
        %v890 = vpop.f32.mrb[0].mxu0
        %v891 = vadd.f32 %v525, %v890
        %v892 = vpop.f32.mrb[0].mxu0
        %v893 = vadd.f32 %v529, %v892
        %894 = vmatprep.mubr.bf16.mxu0 0
        %895 = vmatmul.mubr.bf16.gmra.mrb[0].mxu0 %v472
        %v896 = vpop.f32.mrb[0].mxu0
        %v897 = vadd.f32 %v525, %v896
        %v898 = vpop.f32.mrb[0].mxu0
        %v899 = vadd.f32 %v529, %v898
        %v900 = vpop.f32.mrb[0].mxu0
        %v901 = vadd.f32 %v525, %v900
        %v902 = vpop.f32.mrb[0].mxu0
        %v903 = vadd.f32 %v529, %v902
        %904 = vmatprep.mubr.bf16.mxu0 0
        %905 = vmatmul.mubr.bf16.gmra.mrb[0].mxu0 %v473
        %v906 = vpop.f32.mrb[0].mxu0
        %v907 = vadd.f32 %v525, %v906
        %v908 = vpop.f32.mrb[0].mxu0
        %v909 = vadd.f32 %v529, %v908
        %v910 = vpop.f32.mrb[0].mxu0
        %v911 = vadd.f32 %v525, %v910
        %v912 = vpop.f32.mrb[0].mxu0
        %v913 = vadd.f32 %v529, %v912
        %914 = vmatprep.mubr.bf16.mxu0 0
        %915 = vmatmul.mubr.bf16.gmra.mrb[0].mxu0 %v474
        %v916 = vpop.f32.mrb[0].mxu0
        %v917 = vadd.f32 %v525, %v916
        %v918 = vpop.f32.mrb[0].mxu0
        %v919 = vadd.f32 %v529, %v918
        %v920 = vpop.f32.mrb[0].mxu0
        %v921 = vadd.f32 %v525, %v920
        %v922 = vpop.f32.mrb[0].mxu0
        %v923 = vadd.f32 %v529, %v922
        %924 = vmatprep.mubr.bf16.mxu0 0
        %925 = vmatmul.mubr.bf16.gmra.mrb[0].mxu0 %v475
        %v926 = vpop.f32.mrb[0].mxu0
        %v927 = vadd.f32 %v525, %v926
        %v928 = vpop.f32.mrb[0].mxu0
        %v929 = vadd.f32 %v529, %v928
        %v930 = vpop.f32.mrb[0].mxu0
        %v931 = vadd.f32 %v525, %v930
        %v932 = vpop.f32.mrb[0].mxu0
        %v933 = vadd.f32 %v529, %v932
        %934 = vmatprep.mubr.bf16.mxu0 0
        %935 = vmatmul.mubr.bf16.gmra.mrb[0].mxu0 %v476
        %v936 = vpop.f32.mrb[0].mxu0
        %v937 = vadd.f32 %v525, %v936
        %v938 = vpop.f32.mrb[0].mxu0
        %v939 = vadd.f32 %v529, %v938
        %v940 = vpop.f32.mrb[0].mxu0
        %v941 = vadd.f32 %v525, %v940
        %v942 = vpop.f32.mrb[0].mxu0
        %v943 = vadd.f32 %v529, %v942
        %944 = vmatprep.mubr.bf16.mxu0 0
        %945 = vmatmul.mubr.bf16.gmra.mrb[0].mxu0 %v477
        %v946 = vpop.f32.mrb[0].mxu0
        %v947 = vadd.f32 %v525, %v946
        %v948 = vpop.f32.mrb[0].mxu0
        %v949 = vadd.f32 %v529, %v948
        %v950 = vpop.f32.mrb[0].mxu0
        %v951 = vadd.f32 %v525, %v950
        %v952 = vpop.f32.mrb[0].mxu0
        %v953 = vadd.f32 %v529, %v952
        %954 = vmatprep.mubr.bf16.mxu0 0
        %955 = vmatmul.mubr.bf16.gmra.mrb[0].mxu0 %v478
        %v956 = vpop.f32.mrb[0].mxu0
        %v957 = vadd.f32 %v525, %v956
        %v958 = vpop.f32.mrb[0].mxu0
        %v959 = vadd.f32 %v529, %v958
        %v960 = vpop.f32.mrb[0].mxu0
        %v961 = vadd.f32 %v525, %v960
        %v962 = vpop.f32.mrb[0].mxu0
        %v963 = vadd.f32 %v529, %v962
        %964 = vmatprep.mubr.bf16.mxu0 0
        %965 = vmatmul.mubr.bf16.gmra.mrb[0].mxu0 %v479
        %v966 = vpop.f32.mrb[0].mxu0
        %v967 = vadd.f32 %v525, %v966
        %v968 = vpop.f32.mrb[0].mxu0
        %v969 = vadd.f32 %v529, %v968
        %v970 = vpop.f32.mrb[0].mxu0
        %v971 = vadd.f32 %v525, %v970
        %v972 = vpop.f32.mrb[0].mxu0
        %v973 = vadd.f32 %v529, %v972
        %974 = vmatprep.mubr.bf16.mxu0 0
        %975 = vmatmul.mubr.bf16.gmra.mrb[0].mxu0 %v480
        %v976 = vpop.f32.mrb[0].mxu0
        %v977 = vadd.f32 %v525, %v976
        %v978 = vpop.f32.mrb[0].mxu0
        %v979 = vadd.f32 %v529, %v978
        %v980 = vpop.f32.mrb[0].mxu0
        %v981 = vadd.f32 %v525, %v980
        %v982 = vpop.f32.mrb[0].mxu0
        %v983 = vadd.f32 %v529, %v982
        %984 = vmatprep.mubr.bf16.mxu0 0
        %985 = vmatmul.mubr.bf16.gmra.mrb[0].mxu0 %v481
        %v986 = vpop.f32.mrb[0].mxu0
        %v987 = vadd.f32 %v525, %v986
        %v988 = vpop.f32.mrb[0].mxu0
        %v989 = vadd.f32 %v529, %v988
        %v990 = vpop.f32.mrb[0].mxu0
        %v991 = vadd.f32 %v525, %v990
        %v992 = vpop.f32.mrb[0].mxu0
        %v993 = vadd.f32 %v529, %v992
        %994 = vmatprep.mubr.bf16.mxu0 0
        %995 = vmatmul.mubr.bf16.gmra.mrb[0].mxu0 %v482
        %v996 = vpop.f32.mrb[0].mxu0
        %v997 = vadd.f32 %v525, %v996
        %v998 = vpop.f32.mrb[0].mxu0
        %v999 = vadd.f32 %v529, %v998
        %v1000 = vpop.f32.mrb[0].mxu0
        %v1001 = vadd.f32 %v525, %v1000
        %v1002 = vpop.f32.mrb[0].mxu0
        %v1003 = vadd.f32 %v529, %v1002
        %1004 = vmatprep.mubr.bf16.mxu0 0
        %1005 = vmatmul.mubr.bf16.gmra.mrb[0].mxu0 %v483
        %v1006 = vpop.f32.mrb[0].mxu0
        %v1007 = vadd.f32 %v525, %v1006
        %v1008 = vpop.f32.mrb[0].mxu0
        %v1009 = vadd.f32 %v529, %v1008
        %v1010 = vpop.f32.mrb[0].mxu0
        %v1011 = vadd.f32 %v525, %v1010
        %v1012 = vpop.f32.mrb[0].mxu0
        %v1013 = vadd.f32 %v529, %v1012
        %1014 = vmatprep.mubr.bf16.mxu0 0
        %1015 = vmatmul.mubr.bf16.gmra.mrb[0].mxu0 %v484
        %v1016 = vpop.f32.mrb[0].mxu0
        %v1017 = vadd.f32 %v525, %v1016
        %v1018 = vpop.f32.mrb[0].mxu0
        %v1019 = vadd.f32 %v529, %v1018
        %v1020 = vpop.f32.mrb[0].mxu0
        %v1021 = vadd.f32 %v525, %v1020
        %v1022 = vpop.f32.mrb[0].mxu0
        %v1023 = vadd.f32 %v529, %v1022
        %1024 = vmatprep.mubr.bf16.mxu0 0
        %1025 = vmatmul.mubr.bf16.gmra.mrb[0].mxu0 %v485
        %v1026 = vpop.f32.mrb[0].mxu0
        %v1027 = vadd.f32 %v525, %v1026
        %v1028 = vpop.f32.mrb[0].mxu0
        %v1029 = vadd.f32 %v529, %v1028
        %v1030 = vpop.f32.mrb[0].mxu0
        %v1031 = vadd.f32 %v525, %v1030
        %v1032 = vpop.f32.mrb[0].mxu0
        %v1033 = vadd.f32 %v529, %v1032
        %1034 = vmatprep.mubr.bf16.mxu0 0
        %1035 = vmatmul.mubr.bf16.gmra.mrb[0].mxu0 %v486
        %v1036 = vpop.f32.mrb[0].mxu0
        %v1037 = vadd.f32 %v525, %v1036
        %v1038 = vpop.f32.mrb[0].mxu0
        %v1039 = vadd.f32 %v529, %v1038
        %v1040 = vpop.f32.mrb[0].mxu0
        %v1041 = vadd.f32 %v525, %v1040
        %v1042 = vpop.f32.mrb[0].mxu0
        %v1043 = vadd.f32 %v529, %v1042
        %1044 = vmatprep.mubr.bf16.mxu0 0
        %1045 = vmatmul.mubr.bf16.gmra.mrb[0].mxu0 %v487
        %v1046 = vpop.f32.mrb[0].mxu0
        %v1047 = vadd.f32 %v525, %v1046
        %v1048 = vpop.f32.mrb[0].mxu0
        %v1049 = vadd.f32 %v529, %v1048
        %v1050 = vpop.f32.mrb[0].mxu0
        %v1051 = vadd.f32 %v525, %v1050
        %v1052 = vpop.f32.mrb[0].mxu0
        %v1053 = vadd.f32 %v529, %v1052
        %1054 = vdwg.mxu0
        %1055 = vmatprep.subr.bf16.mxu0 %v641
        %1056 = vmatpush1.bf16.msra.mxu0 %v640
        %1057 = vmatprep.subr.bf16.mxu0 %v645
        %1058 = vmatpush1.bf16.msra.mxu0 %v644
        %1059 = vmatprep.subr.bf16.mxu0 %v649
        %1060 = vmatpush1.bf16.msra.mxu0 %v648
        %1061 = vmatprep.subr.bf16.mxu0 %v653
        %1062 = vmatpush1.bf16.msra.mxu0 %v652
        %1063 = vmatprep.subr.bf16.mxu0 %v657
        %1064 = vmatpush1.bf16.msra.mxu0 %v656
        %1065 = vmatprep.subr.bf16.mxu0 %v661
        %1066 = vmatpush1.bf16.msra.mxu0 %v660
        %1067 = vmatprep.subr.bf16.mxu0 %v665
        %1068 = vmatpush1.bf16.msra.mxu0 %v664
        %1069 = vmatprep.subr.bf16.mxu0 %v669
        %1070 = vmatpush1.bf16.msra.mxu0 %v668
        %1071 = vmatprep.subr.bf16.mxu0 0
        %1072 = vmatpush1.bf16.msra.mxu0 0
        %1073 = vmatprep.subr.bf16.mxu0 0
        %1074 = vmatpush1.bf16.msra.mxu0 0
        %1075 = vmatprep.subr.bf16.mxu0 0
        %1076 = vmatpush1.bf16.msra.mxu0 0
        %1077 = vmatprep.subr.bf16.mxu0 0
        %1078 = vmatpush1.bf16.msra.mxu0 0
        %1079 = vmatprep.subr.bf16.mxu0 0
        %1080 = vmatpush1.bf16.msra.mxu0 0
        %1081 = vmatprep.subr.bf16.mxu0 0
        %1082 = vmatpush1.bf16.msra.mxu0 0
        %1083 = vmatprep.subr.bf16.mxu0 0
        %1084 = vmatpush1.bf16.msra.mxu0 0
        %1085 = vmatprep.subr.bf16.mxu0 0
        %1086 = vmatpush1.bf16.msra.mxu0 0
        %1087 = vmatprep.mubr.bf16.mxu0 0
        %1088 = vmatmul.mubr.bf16.gmra.mrb[0].mxu0 %v456
        %v1089 = vpop.f32.mrb[0].mxu0
        %v1090 = vadd.f32 %v533, %v1089
        %v1091 = vpop.f32.mrb[0].mxu0
        %v1092 = vadd.f32 %v537, %v1091
        %v1093 = vpop.f32.mrb[0].mxu0
        %v1094 = vadd.f32 %v533, %v1093
        %v1095 = vpop.f32.mrb[0].mxu0
        %v1096 = vadd.f32 %v537, %v1095
        %1097 = vmatprep.mubr.bf16.mxu0 0
        %1098 = vmatmul.mubr.bf16.gmra.mrb[0].mxu0 %v457
        %v1099 = vpop.f32.mrb[0].mxu0
        %v1100 = vadd.f32 %v533, %v1099
        %v1101 = vpop.f32.mrb[0].mxu0
        %v1102 = vadd.f32 %v537, %v1101
        %v1103 = vpop.f32.mrb[0].mxu0
        %v1104 = vadd.f32 %v533, %v1103
        %v1105 = vpop.f32.mrb[0].mxu0
        %v1106 = vadd.f32 %v537, %v1105
        %1107 = vmatprep.mubr.bf16.mxu0 0
        %1108 = vmatmul.mubr.bf16.gmra.mrb[0].mxu0 %v458
        %v1109 = vpop.f32.mrb[0].mxu0
        %v1110 = vadd.f32 %v533, %v1109
        %v1111 = vpop.f32.mrb[0].mxu0
        %v1112 = vadd.f32 %v537, %v1111
        %v1113 = vpop.f32.mrb[0].mxu0
        %v1114 = vadd.f32 %v533, %v1113
        %v1115 = vpop.f32.mrb[0].mxu0
        %v1116 = vadd.f32 %v537, %v1115
        %1117 = vmatprep.mubr.bf16.mxu0 0
        %1118 = vmatmul.mubr.bf16.gmra.mrb[0].mxu0 %v459
        %v1119 = vpop.f32.mrb[0].mxu0
        %v1120 = vadd.f32 %v533, %v1119
        %v1121 = vpop.f32.mrb[0].mxu0
        %v1122 = vadd.f32 %v537, %v1121
        %v1123 = vpop.f32.mrb[0].mxu0
        %v1124 = vadd.f32 %v533, %v1123
        %v1125 = vpop.f32.mrb[0].mxu0
        %v1126 = vadd.f32 %v537, %v1125
        %1127 = vmatprep.mubr.bf16.mxu0 0
        %1128 = vmatmul.mubr.bf16.gmra.mrb[0].mxu0 %v460
        %v1129 = vpop.f32.mrb[0].mxu0
        %v1130 = vadd.f32 %v533, %v1129
        %v1131 = vpop.f32.mrb[0].mxu0
        %v1132 = vadd.f32 %v537, %v1131
        %v1133 = vpop.f32.mrb[0].mxu0
        %v1134 = vadd.f32 %v533, %v1133
        %v1135 = vpop.f32.mrb[0].mxu0
        %v1136 = vadd.f32 %v537, %v1135
        %1137 = vmatprep.mubr.bf16.mxu0 0
        %1138 = vmatmul.mubr.bf16.gmra.mrb[0].mxu0 %v461
        %v1139 = vpop.f32.mrb[0].mxu0
        %v1140 = vadd.f32 %v533, %v1139
        %v1141 = vpop.f32.mrb[0].mxu0
        %v1142 = vadd.f32 %v537, %v1141
        %v1143 = vpop.f32.mrb[0].mxu0
        %v1144 = vadd.f32 %v533, %v1143
        %v1145 = vpop.f32.mrb[0].mxu0
        %v1146 = vadd.f32 %v537, %v1145
        %1147 = vmatprep.mubr.bf16.mxu0 0
        %1148 = vmatmul.mubr.bf16.gmra.mrb[0].mxu0 %v462
        %v1149 = vpop.f32.mrb[0].mxu0
        %v1150 = vadd.f32 %v533, %v1149
        %v1151 = vpop.f32.mrb[0].mxu0
        %v1152 = vadd.f32 %v537, %v1151
        %v1153 = vpop.f32.mrb[0].mxu0
        %v1154 = vadd.f32 %v533, %v1153
        %v1155 = vpop.f32.mrb[0].mxu0
        %v1156 = vadd.f32 %v537, %v1155
        %1157 = vmatprep.mubr.bf16.mxu0 0
        %1158 = vmatmul.mubr.bf16.gmra.mrb[0].mxu0 %v463
        %v1159 = vpop.f32.mrb[0].mxu0
        %v1160 = vadd.f32 %v533, %v1159
        %v1161 = vpop.f32.mrb[0].mxu0
        %v1162 = vadd.f32 %v537, %v1161
        %v1163 = vpop.f32.mrb[0].mxu0
        %v1164 = vadd.f32 %v533, %v1163
        %v1165 = vpop.f32.mrb[0].mxu0
        %v1166 = vadd.f32 %v537, %v1165
        %1167 = vmatprep.mubr.bf16.mxu0 0
        %1168 = vmatmul.mubr.bf16.gmra.mrb[0].mxu0 %v464
        %v1169 = vpop.f32.mrb[0].mxu0
        %v1170 = vadd.f32 %v533, %v1169
        %v1171 = vpop.f32.mrb[0].mxu0
        %v1172 = vadd.f32 %v537, %v1171
        %v1173 = vpop.f32.mrb[0].mxu0
        %v1174 = vadd.f32 %v533, %v1173
        %v1175 = vpop.f32.mrb[0].mxu0
        %v1176 = vadd.f32 %v537, %v1175
        %1177 = vmatprep.mubr.bf16.mxu0 0
        %1178 = vmatmul.mubr.bf16.gmra.mrb[0].mxu0 %v465
        %v1179 = vpop.f32.mrb[0].mxu0
        %v1180 = vadd.f32 %v533, %v1179
        %v1181 = vpop.f32.mrb[0].mxu0
        %v1182 = vadd.f32 %v537, %v1181
        %v1183 = vpop.f32.mrb[0].mxu0
        %v1184 = vadd.f32 %v533, %v1183
        %v1185 = vpop.f32.mrb[0].mxu0
        %v1186 = vadd.f32 %v537, %v1185
        %1187 = vmatprep.mubr.bf16.mxu0 0
        %1188 = vmatmul.mubr.bf16.gmra.mrb[0].mxu0 %v466
        %v1189 = vpop.f32.mrb[0].mxu0
        %v1190 = vadd.f32 %v533, %v1189
        %v1191 = vpop.f32.mrb[0].mxu0
        %v1192 = vadd.f32 %v537, %v1191
        %v1193 = vpop.f32.mrb[0].mxu0
        %v1194 = vadd.f32 %v533, %v1193
        %v1195 = vpop.f32.mrb[0].mxu0
        %v1196 = vadd.f32 %v537, %v1195
        %1197 = vmatprep.mubr.bf16.mxu0 0
        %1198 = vmatmul.mubr.bf16.gmra.mrb[0].mxu0 %v467
        %v1199 = vpop.f32.mrb[0].mxu0
        %v1200 = vadd.f32 %v533, %v1199
        %v1201 = vpop.f32.mrb[0].mxu0
        %v1202 = vadd.f32 %v537, %v1201
        %v1203 = vpop.f32.mrb[0].mxu0
        %v1204 = vadd.f32 %v533, %v1203
        %v1205 = vpop.f32.mrb[0].mxu0
        %v1206 = vadd.f32 %v537, %v1205
        %1207 = vmatprep.mubr.bf16.mxu0 0
        %1208 = vmatmul.mubr.bf16.gmra.mrb[0].mxu0 %v468
        %v1209 = vpop.f32.mrb[0].mxu0
        %v1210 = vadd.f32 %v533, %v1209
        %v1211 = vpop.f32.mrb[0].mxu0
        %v1212 = vadd.f32 %v537, %v1211
        %v1213 = vpop.f32.mrb[0].mxu0
        %v1214 = vadd.f32 %v533, %v1213
        %v1215 = vpop.f32.mrb[0].mxu0
        %v1216 = vadd.f32 %v537, %v1215
        %1217 = vmatprep.mubr.bf16.mxu0 0
        %1218 = vmatmul.mubr.bf16.gmra.mrb[0].mxu0 %v469
        %v1219 = vpop.f32.mrb[0].mxu0
        %v1220 = vadd.f32 %v533, %v1219
        %v1221 = vpop.f32.mrb[0].mxu0
        %v1222 = vadd.f32 %v537, %v1221
        %v1223 = vpop.f32.mrb[0].mxu0
        %v1224 = vadd.f32 %v533, %v1223
        %v1225 = vpop.f32.mrb[0].mxu0
        %v1226 = vadd.f32 %v537, %v1225
        %1227 = vmatprep.mubr.bf16.mxu0 0
        %1228 = vmatmul.mubr.bf16.gmra.mrb[0].mxu0 %v470
        %v1229 = vpop.f32.mrb[0].mxu0
        %v1230 = vadd.f32 %v533, %v1229
        %v1231 = vpop.f32.mrb[0].mxu0
        %v1232 = vadd.f32 %v537, %v1231
        %v1233 = vpop.f32.mrb[0].mxu0
        %v1234 = vadd.f32 %v533, %v1233
        %v1235 = vpop.f32.mrb[0].mxu0
        %v1236 = vadd.f32 %v537, %v1235
        %1237 = vmatprep.mubr.bf16.mxu0 0
        %1238 = vmatmul.mubr.bf16.gmra.mrb[0].mxu0 %v471
        %v1239 = vpop.f32.mrb[0].mxu0
        %v1240 = vadd.f32 %v533, %v1239
        %v1241 = vpop.f32.mrb[0].mxu0
        %v1242 = vadd.f32 %v537, %v1241
        %v1243 = vpop.f32.mrb[0].mxu0
        %v1244 = vadd.f32 %v533, %v1243
        %v1245 = vpop.f32.mrb[0].mxu0
        %v1246 = vadd.f32 %v537, %v1245
        %1247 = vmatprep.mubr.bf16.mxu0 0
        %1248 = vmatmul.mubr.bf16.gmra.mrb[0].mxu0 %v472
        %v1249 = vpop.f32.mrb[0].mxu0
        %v1250 = vadd.f32 %v533, %v1249
        %v1251 = vpop.f32.mrb[0].mxu0
        %v1252 = vadd.f32 %v537, %v1251
        %v1253 = vpop.f32.mrb[0].mxu0
        %v1254 = vadd.f32 %v533, %v1253
        %v1255 = vpop.f32.mrb[0].mxu0
        %v1256 = vadd.f32 %v537, %v1255
        %1257 = vmatprep.mubr.bf16.mxu0 0
        %1258 = vmatmul.mubr.bf16.gmra.mrb[0].mxu0 %v473
        %v1259 = vpop.f32.mrb[0].mxu0
        %v1260 = vadd.f32 %v533, %v1259
        %v1261 = vpop.f32.mrb[0].mxu0
        %v1262 = vadd.f32 %v537, %v1261
        %v1263 = vpop.f32.mrb[0].mxu0
        %v1264 = vadd.f32 %v533, %v1263
        %v1265 = vpop.f32.mrb[0].mxu0
        %v1266 = vadd.f32 %v537, %v1265
        %1267 = vmatprep.mubr.bf16.mxu0 0
        %1268 = vmatmul.mubr.bf16.gmra.mrb[0].mxu0 %v474
        %v1269 = vpop.f32.mrb[0].mxu0
        %v1270 = vadd.f32 %v533, %v1269
        %v1271 = vpop.f32.mrb[0].mxu0
        %v1272 = vadd.f32 %v537, %v1271
        %v1273 = vpop.f32.mrb[0].mxu0
        %v1274 = vadd.f32 %v533, %v1273
        %v1275 = vpop.f32.mrb[0].mxu0
        %v1276 = vadd.f32 %v537, %v1275
        %1277 = vmatprep.mubr.bf16.mxu0 0
        %1278 = vmatmul.mubr.bf16.gmra.mrb[0].mxu0 %v475
        %v1279 = vpop.f32.mrb[0].mxu0
        %v1280 = vadd.f32 %v533, %v1279
        %v1281 = vpop.f32.mrb[0].mxu0
        %v1282 = vadd.f32 %v537, %v1281
        %v1283 = vpop.f32.mrb[0].mxu0
        %v1284 = vadd.f32 %v533, %v1283
        %v1285 = vpop.f32.mrb[0].mxu0
        %v1286 = vadd.f32 %v537, %v1285
        %1287 = vmatprep.mubr.bf16.mxu0 0
        %1288 = vmatmul.mubr.bf16.gmra.mrb[0].mxu0 %v476
        %v1289 = vpop.f32.mrb[0].mxu0
        %v1290 = vadd.f32 %v533, %v1289
        %v1291 = vpop.f32.mrb[0].mxu0
        %v1292 = vadd.f32 %v537, %v1291
        %v1293 = vpop.f32.mrb[0].mxu0
        %v1294 = vadd.f32 %v533, %v1293
        %v1295 = vpop.f32.mrb[0].mxu0
        %v1296 = vadd.f32 %v537, %v1295
        %1297 = vmatprep.mubr.bf16.mxu0 0
        %1298 = vmatmul.mubr.bf16.gmra.mrb[0].mxu0 %v477
        %v1299 = vpop.f32.mrb[0].mxu0
        %v1300 = vadd.f32 %v533, %v1299
        %v1301 = vpop.f32.mrb[0].mxu0
        %v1302 = vadd.f32 %v537, %v1301
        %v1303 = vpop.f32.mrb[0].mxu0
        %v1304 = vadd.f32 %v533, %v1303
        %v1305 = vpop.f32.mrb[0].mxu0
        %v1306 = vadd.f32 %v537, %v1305
        %1307 = vmatprep.mubr.bf16.mxu0 0
        %1308 = vmatmul.mubr.bf16.gmra.mrb[0].mxu0 %v478
        %v1309 = vpop.f32.mrb[0].mxu0
        %v1310 = vadd.f32 %v533, %v1309
        %v1311 = vpop.f32.mrb[0].mxu0
        %v1312 = vadd.f32 %v537, %v1311
        %v1313 = vpop.f32.mrb[0].mxu0
        %v1314 = vadd.f32 %v533, %v1313
        %v1315 = vpop.f32.mrb[0].mxu0
        %v1316 = vadd.f32 %v537, %v1315
        %1317 = vmatprep.mubr.bf16.mxu0 0
        %1318 = vmatmul.mubr.bf16.gmra.mrb[0].mxu0 %v479
        %v1319 = vpop.f32.mrb[0].mxu0
        %v1320 = vadd.f32 %v533, %v1319
        %v1321 = vpop.f32.mrb[0].mxu0
        %v1322 = vadd.f32 %v537, %v1321
        %v1323 = vpop.f32.mrb[0].mxu0
        %v1324 = vadd.f32 %v533, %v1323
        %v1325 = vpop.f32.mrb[0].mxu0
        %v1326 = vadd.f32 %v537, %v1325
        %1327 = vmatprep.mubr.bf16.mxu0 0
        %1328 = vmatmul.mubr.bf16.gmra.mrb[0].mxu0 %v480
        %v1329 = vpop.f32.mrb[0].mxu0
        %v1330 = vadd.f32 %v533, %v1329
        %v1331 = vpop.f32.mrb[0].mxu0
        %v1332 = vadd.f32 %v537, %v1331
        %v1333 = vpop.f32.mrb[0].mxu0
        %v1334 = vadd.f32 %v533, %v1333
        %v1335 = vpop.f32.mrb[0].mxu0
        %v1336 = vadd.f32 %v537, %v1335
        %1337 = vmatprep.mubr.bf16.mxu0 0
        %1338 = vmatmul.mubr.bf16.gmra.mrb[0].mxu0 %v481
        %v1339 = vpop.f32.mrb[0].mxu0
        %v1340 = vadd.f32 %v533, %v1339
        %v1341 = vpop.f32.mrb[0].mxu0
        %v1342 = vadd.f32 %v537, %v1341
        %v1343 = vpop.f32.mrb[0].mxu0
        %v1344 = vadd.f32 %v533, %v1343
        %v1345 = vpop.f32.mrb[0].mxu0
        %v1346 = vadd.f32 %v537, %v1345
        %1347 = vmatprep.mubr.bf16.mxu0 0
        %1348 = vmatmul.mubr.bf16.gmra.mrb[0].mxu0 %v482
        %v1349 = vpop.f32.mrb[0].mxu0
        %v1350 = vadd.f32 %v533, %v1349
        %v1351 = vpop.f32.mrb[0].mxu0
        %v1352 = vadd.f32 %v537, %v1351
        %v1353 = vpop.f32.mrb[0].mxu0
        %v1354 = vadd.f32 %v533, %v1353
        %v1355 = vpop.f32.mrb[0].mxu0
        %v1356 = vadd.f32 %v537, %v1355
        %1357 = vmatprep.mubr.bf16.mxu0 0
        %1358 = vmatmul.mubr.bf16.gmra.mrb[0].mxu0 %v483
        %v1359 = vpop.f32.mrb[0].mxu0
        %v1360 = vadd.f32 %v533, %v1359
        %v1361 = vpop.f32.mrb[0].mxu0
        %v1362 = vadd.f32 %v537, %v1361
        %v1363 = vpop.f32.mrb[0].mxu0
        %v1364 = vadd.f32 %v533, %v1363
        %v1365 = vpop.f32.mrb[0].mxu0
        %v1366 = vadd.f32 %v537, %v1365
        %1367 = vmatprep.mubr.bf16.mxu0 0
        %1368 = vmatmul.mubr.bf16.gmra.mrb[0].mxu0 %v484
        %v1369 = vpop.f32.mrb[0].mxu0
        %v1370 = vadd.f32 %v533, %v1369
        %v1371 = vpop.f32.mrb[0].mxu0
        %v1372 = vadd.f32 %v537, %v1371
        %v1373 = vpop.f32.mrb[0].mxu0
        %v1374 = vadd.f32 %v533, %v1373
        %v1375 = vpop.f32.mrb[0].mxu0
        %v1376 = vadd.f32 %v537, %v1375
        %1377 = vmatprep.mubr.bf16.mxu0 0
        %1378 = vmatmul.mubr.bf16.gmra.mrb[0].mxu0 %v485
        %v1379 = vpop.f32.mrb[0].mxu0
        %v1380 = vadd.f32 %v533, %v1379
        %v1381 = vpop.f32.mrb[0].mxu0
        %v1382 = vadd.f32 %v537, %v1381
        %v1383 = vpop.f32.mrb[0].mxu0
        %v1384 = vadd.f32 %v533, %v1383
        %v1385 = vpop.f32.mrb[0].mxu0
        %v1386 = vadd.f32 %v537, %v1385
        %1387 = vmatprep.mubr.bf16.mxu0 0
        %1388 = vmatmul.mubr.bf16.gmra.mrb[0].mxu0 %v486
        %v1389 = vpop.f32.mrb[0].mxu0
        %v1390 = vadd.f32 %v533, %v1389
        %v1391 = vpop.f32.mrb[0].mxu0
        %v1392 = vadd.f32 %v537, %v1391
        %v1393 = vpop.f32.mrb[0].mxu0
        %v1394 = vadd.f32 %v533, %v1393
        %v1395 = vpop.f32.mrb[0].mxu0
        %v1396 = vadd.f32 %v537, %v1395
        %1397 = vmatprep.mubr.bf16.mxu0 0
        %1398 = vmatmul.mubr.bf16.gmra.mrb[0].mxu0 %v487
        %v1399 = vpop.f32.mrb[0].mxu0
        %v1400 = vadd.f32 %v533, %v1399
        %v1401 = vpop.f32.mrb[0].mxu0
        %v1402 = vadd.f32 %v537, %v1401
        %v1403 = vpop.f32.mrb[0].mxu0
        %v1404 = vadd.f32 %v533, %v1403
        %v1405 = vpop.f32.mrb[0].mxu0
        %v1406 = vadd.f32 %v537, %v1405
        %1407 = vdwg.mxu0
        %v1408 = vmax.f32 %v737, 0.0
        %v1409 = vmax.f32 %v739, 0.0
        %v1410 = vmax.f32 %v1090, 0.0
        %v1411 = vmax.f32 %v1092, 0.0
        %v1412 = vmax.f32 %v741, 0.0
        %v1413 = vmax.f32 %v743, 0.0
        %v1414 = vmax.f32 %v1094, 0.0
        %v1415 = vmax.f32 %v1096, 0.0
        %v1416 = vmax.f32 %v747, 0.0
        %v1417 = vmax.f32 %v749, 0.0
        %v1418 = vmax.f32 %v1100, 0.0
        %v1419 = vmax.f32 %v1102, 0.0
        %v1420 = vmax.f32 %v751, 0.0
        %v1421 = vmax.f32 %v753, 0.0
        %v1422 = vmax.f32 %v1104, 0.0
        %v1423 = vmax.f32 %v1106, 0.0
        %v1424 = vmax.f32 %v757, 0.0
        %v1425 = vmax.f32 %v759, 0.0
        %v1426 = vmax.f32 %v1110, 0.0
        %v1427 = vmax.f32 %v1112, 0.0
        %v1428 = vmax.f32 %v761, 0.0
        %v1429 = vmax.f32 %v763, 0.0
        %v1430 = vmax.f32 %v1114, 0.0
        %v1431 = vmax.f32 %v1116, 0.0
        %v1432 = vmax.f32 %v767, 0.0
        %v1433 = vmax.f32 %v769, 0.0
        %v1434 = vmax.f32 %v1120, 0.0
        %v1435 = vmax.f32 %v1122, 0.0
        %v1436 = vmax.f32 %v771, 0.0
        %v1437 = vmax.f32 %v773, 0.0
        %v1438 = vmax.f32 %v1124, 0.0
        %v1439 = vmax.f32 %v1126, 0.0
        %v1440 = vmax.f32 %v777, 0.0
        %v1441 = vmax.f32 %v779, 0.0
        %v1442 = vmax.f32 %v1130, 0.0
        %v1443 = vmax.f32 %v1132, 0.0
        %v1444 = vmax.f32 %v781, 0.0
        %v1445 = vmax.f32 %v783, 0.0
        %v1446 = vmax.f32 %v1134, 0.0
        %v1447 = vmax.f32 %v1136, 0.0
        %v1448 = vmax.f32 %v787, 0.0
        %v1449 = vmax.f32 %v789, 0.0
        %v1450 = vmax.f32 %v1140, 0.0
        %v1451 = vmax.f32 %v1142, 0.0
        %v1452 = vmax.f32 %v791, 0.0
        %v1453 = vmax.f32 %v793, 0.0
        %v1454 = vmax.f32 %v1144, 0.0
        %v1455 = vmax.f32 %v1146, 0.0
        %v1456 = vmax.f32 %v797, 0.0
        %v1457 = vmax.f32 %v799, 0.0
        %v1458 = vmax.f32 %v1150, 0.0
        %v1459 = vmax.f32 %v1152, 0.0
        %v1460 = vmax.f32 %v801, 0.0
        %v1461 = vmax.f32 %v803, 0.0
        %v1462 = vmax.f32 %v1154, 0.0
        %v1463 = vmax.f32 %v1156, 0.0
        %v1464 = vmax.f32 %v807, 0.0
        %v1465 = vmax.f32 %v809, 0.0
        %v1466 = vmax.f32 %v1160, 0.0
        %v1467 = vmax.f32 %v1162, 0.0
        %v1468 = vmax.f32 %v811, 0.0
        %v1469 = vmax.f32 %v813, 0.0
        %v1470 = vmax.f32 %v1164, 0.0
        %v1471 = vmax.f32 %v1166, 0.0
        %v1472 = vmax.f32 %v817, 0.0
        %v1473 = vmax.f32 %v819, 0.0
        %v1474 = vmax.f32 %v1170, 0.0
        %v1475 = vmax.f32 %v1172, 0.0
        %v1476 = vmax.f32 %v821, 0.0
        %v1477 = vmax.f32 %v823, 0.0
        %v1478 = vmax.f32 %v1174, 0.0
        %v1479 = vmax.f32 %v1176, 0.0
        %v1480 = vmax.f32 %v827, 0.0
        %v1481 = vmax.f32 %v829, 0.0
        %v1482 = vmax.f32 %v1180, 0.0
        %v1483 = vmax.f32 %v1182, 0.0
        %v1484 = vmax.f32 %v831, 0.0
        %v1485 = vmax.f32 %v833, 0.0
        %v1486 = vmax.f32 %v1184, 0.0
        %v1487 = vmax.f32 %v1186, 0.0
        %v1488 = vmax.f32 %v837, 0.0
        %v1489 = vmax.f32 %v839, 0.0
        %v1490 = vmax.f32 %v1190, 0.0
        %v1491 = vmax.f32 %v1192, 0.0
        %v1492 = vmax.f32 %v841, 0.0
        %v1493 = vmax.f32 %v843, 0.0
        %v1494 = vmax.f32 %v1194, 0.0
        %v1495 = vmax.f32 %v1196, 0.0
        %v1496 = vmax.f32 %v847, 0.0
        %v1497 = vmax.f32 %v849, 0.0
        %v1498 = vmax.f32 %v1200, 0.0
        %v1499 = vmax.f32 %v1202, 0.0
        %v1500 = vmax.f32 %v851, 0.0
        %v1501 = vmax.f32 %v853, 0.0
        %v1502 = vmax.f32 %v1204, 0.0
        %v1503 = vmax.f32 %v1206, 0.0
        %v1504 = vmax.f32 %v857, 0.0
        %v1505 = vmax.f32 %v859, 0.0
        %v1506 = vmax.f32 %v1210, 0.0
        %v1507 = vmax.f32 %v1212, 0.0
        %v1508 = vmax.f32 %v861, 0.0
        %v1509 = vmax.f32 %v863, 0.0
        %v1510 = vmax.f32 %v1214, 0.0
        %v1511 = vmax.f32 %v1216, 0.0
        %v1512 = vmax.f32 %v867, 0.0
        %v1513 = vmax.f32 %v869, 0.0
        %v1514 = vmax.f32 %v1220, 0.0
        %v1515 = vmax.f32 %v1222, 0.0
        %v1516 = vmax.f32 %v871, 0.0
        %v1517 = vmax.f32 %v873, 0.0
        %v1518 = vmax.f32 %v1224, 0.0
        %v1519 = vmax.f32 %v1226, 0.0
        %v1520 = vmax.f32 %v877, 0.0
        %v1521 = vmax.f32 %v879, 0.0
        %v1522 = vmax.f32 %v1230, 0.0
        %v1523 = vmax.f32 %v1232, 0.0
        %v1524 = vmax.f32 %v881, 0.0
        %v1525 = vmax.f32 %v883, 0.0
        %v1526 = vmax.f32 %v1234, 0.0
        %v1527 = vmax.f32 %v1236, 0.0
        %v1528 = vmax.f32 %v887, 0.0
        %v1529 = vmax.f32 %v889, 0.0
        %v1530 = vmax.f32 %v1240, 0.0
        %v1531 = vmax.f32 %v1242, 0.0
        %v1532 = vmax.f32 %v891, 0.0
        %v1533 = vmax.f32 %v893, 0.0
        %v1534 = vmax.f32 %v1244, 0.0
        %v1535 = vmax.f32 %v1246, 0.0
        %v1536 = vmax.f32 %v897, 0.0
        %v1537 = vmax.f32 %v899, 0.0
        %v1538 = vmax.f32 %v1250, 0.0
        %v1539 = vmax.f32 %v1252, 0.0
        %v1540 = vmax.f32 %v901, 0.0
        %v1541 = vmax.f32 %v903, 0.0
        %v1542 = vmax.f32 %v1254, 0.0
        %v1543 = vmax.f32 %v1256, 0.0
        %v1544 = vmax.f32 %v907, 0.0
        %v1545 = vmax.f32 %v909, 0.0
        %v1546 = vmax.f32 %v1260, 0.0
        %v1547 = vmax.f32 %v1262, 0.0
        %v1548 = vmax.f32 %v911, 0.0
        %v1549 = vmax.f32 %v913, 0.0
        %v1550 = vmax.f32 %v1264, 0.0
        %v1551 = vmax.f32 %v1266, 0.0
        %v1552 = vmax.f32 %v917, 0.0
        %v1553 = vmax.f32 %v919, 0.0
        %v1554 = vmax.f32 %v1270, 0.0
        %v1555 = vmax.f32 %v1272, 0.0
        %v1556 = vmax.f32 %v921, 0.0
        %v1557 = vmax.f32 %v923, 0.0
        %v1558 = vmax.f32 %v1274, 0.0
        %v1559 = vmax.f32 %v1276, 0.0
        %v1560 = vmax.f32 %v927, 0.0
        %v1561 = vmax.f32 %v929, 0.0
        %v1562 = vmax.f32 %v1280, 0.0
        %v1563 = vmax.f32 %v1282, 0.0
        %v1564 = vmax.f32 %v931, 0.0
        %v1565 = vmax.f32 %v933, 0.0
        %v1566 = vmax.f32 %v1284, 0.0
        %v1567 = vmax.f32 %v1286, 0.0
        %v1568 = vmax.f32 %v937, 0.0
        %v1569 = vmax.f32 %v939, 0.0
        %v1570 = vmax.f32 %v1290, 0.0
        %v1571 = vmax.f32 %v1292, 0.0
        %v1572 = vmax.f32 %v941, 0.0
        %v1573 = vmax.f32 %v943, 0.0
        %v1574 = vmax.f32 %v1294, 0.0
        %v1575 = vmax.f32 %v1296, 0.0
        %v1576 = vmax.f32 %v947, 0.0
        %v1577 = vmax.f32 %v949, 0.0
        %v1578 = vmax.f32 %v1300, 0.0
        %v1579 = vmax.f32 %v1302, 0.0
        %v1580 = vmax.f32 %v951, 0.0
        %v1581 = vmax.f32 %v953, 0.0
        %v1582 = vmax.f32 %v1304, 0.0
        %v1583 = vmax.f32 %v1306, 0.0
        %v1584 = vmax.f32 %v957, 0.0
        %v1585 = vmax.f32 %v959, 0.0
        %v1586 = vmax.f32 %v1310, 0.0
        %v1587 = vmax.f32 %v1312, 0.0
        %v1588 = vmax.f32 %v961, 0.0
        %v1589 = vmax.f32 %v963, 0.0
        %v1590 = vmax.f32 %v1314, 0.0
        %v1591 = vmax.f32 %v1316, 0.0
        %v1592 = vmax.f32 %v967, 0.0
        %v1593 = vmax.f32 %v969, 0.0
        %v1594 = vmax.f32 %v1320, 0.0
        %v1595 = vmax.f32 %v1322, 0.0
        %v1596 = vmax.f32 %v971, 0.0
        %v1597 = vmax.f32 %v973, 0.0
        %v1598 = vmax.f32 %v1324, 0.0
        %v1599 = vmax.f32 %v1326, 0.0
        %v1600 = vmax.f32 %v977, 0.0
        %v1601 = vmax.f32 %v979, 0.0
        %v1602 = vmax.f32 %v1330, 0.0
        %v1603 = vmax.f32 %v1332, 0.0
        %v1604 = vmax.f32 %v981, 0.0
        %v1605 = vmax.f32 %v983, 0.0
        %v1606 = vmax.f32 %v1334, 0.0
        %v1607 = vmax.f32 %v1336, 0.0
        %v1608 = vmax.f32 %v987, 0.0
        %v1609 = vmax.f32 %v989, 0.0
        %v1610 = vmax.f32 %v1340, 0.0
        %v1611 = vmax.f32 %v1342, 0.0
        %v1612 = vmax.f32 %v991, 0.0
        %v1613 = vmax.f32 %v993, 0.0
        %v1614 = vmax.f32 %v1344, 0.0
        %v1615 = vmax.f32 %v1346, 0.0
        %v1616 = vmax.f32 %v997, 0.0
        %v1617 = vmax.f32 %v999, 0.0
        %v1618 = vmax.f32 %v1350, 0.0
        %v1619 = vmax.f32 %v1352, 0.0
        %v1620 = vmax.f32 %v1001, 0.0
        %v1621 = vmax.f32 %v1003, 0.0
        %v1622 = vmax.f32 %v1354, 0.0
        %v1623 = vmax.f32 %v1356, 0.0
        %v1624 = vmax.f32 %v1007, 0.0
        %v1625 = vmax.f32 %v1009, 0.0
        %v1626 = vmax.f32 %v1360, 0.0
        %v1627 = vmax.f32 %v1362, 0.0
        %v1628 = vmax.f32 %v1011, 0.0
        %v1629 = vmax.f32 %v1013, 0.0
        %v1630 = vmax.f32 %v1364, 0.0
        %v1631 = vmax.f32 %v1366, 0.0
        %v1632 = vmax.f32 %v1017, 0.0
        %v1633 = vmax.f32 %v1019, 0.0
        %v1634 = vmax.f32 %v1370, 0.0
        %v1635 = vmax.f32 %v1372, 0.0
        %v1636 = vmax.f32 %v1021, 0.0
        %v1637 = vmax.f32 %v1023, 0.0
        %v1638 = vmax.f32 %v1374, 0.0
        %v1639 = vmax.f32 %v1376, 0.0
        %v1640 = vmax.f32 %v1027, 0.0
        %v1641 = vmax.f32 %v1029, 0.0
        %v1642 = vmax.f32 %v1380, 0.0
        %v1643 = vmax.f32 %v1382, 0.0
        %v1644 = vmax.f32 %v1031, 0.0
        %v1645 = vmax.f32 %v1033, 0.0
        %v1646 = vmax.f32 %v1384, 0.0
        %v1647 = vmax.f32 %v1386, 0.0
        %v1648 = vmax.f32 %v1037, 0.0
        %v1649 = vmax.f32 %v1039, 0.0
        %v1650 = vmax.f32 %v1390, 0.0
        %v1651 = vmax.f32 %v1392, 0.0
        %v1652 = vmax.f32 %v1041, 0.0
        %v1653 = vmax.f32 %v1043, 0.0
        %v1654 = vmax.f32 %v1394, 0.0
        %v1655 = vmax.f32 %v1396, 0.0
        %v1656 = vmax.f32 %v1047, 0.0
        %v1657 = vmax.f32 %v1049, 0.0
        %v1658 = vmax.f32 %v1400, 0.0
        %v1659 = vmax.f32 %v1402, 0.0
        %v1660 = vmax.f32 %v1051, 0.0
        %v1661 = vmax.f32 %v1053, 0.0
        %v1662 = vmax.f32 %v1404, 0.0
        %v1663 = vmax.f32 %v1406, 0.0
        %v1664 = vld [vmem:[#allocation2] sm:$0xff]
        %v1665 = vld [vmem:[#allocation2 + $0x8] sm:$0xff]
        %v1666 = vld [vmem:[#allocation2 + $0x10] sm:$0xff]
        %v1667 = vld [vmem:[#allocation2 + $0x18] sm:$0xff]
        %v1668 = vld [vmem:[#allocation2 + $0x20] sm:$0xff]
        %v1669 = vld [vmem:[#allocation2 + $0x28] sm:$0xff]
        %v1670 = vld [vmem:[#allocation2 + $0x30] sm:$0xff]
        %v1671 = vld [vmem:[#allocation2 + $0x38] sm:$0xff]
        %v1672 = vld [vmem:[#allocation2 + $0x40] sm:$0xff]
        %v1673 = vld [vmem:[#allocation2 + $0x48] sm:$0xff]
        %v1674 = vld [vmem:[#allocation2 + $0x50] sm:$0xff]
        %v1675 = vld [vmem:[#allocation2 + $0x58] sm:$0xff]
        %v1676 = vld [vmem:[#allocation2 + $0x60] sm:$0xff]
        %v1677 = vld [vmem:[#allocation2 + $0x68] sm:$0xff]
        %v1678 = vld [vmem:[#allocation2 + $0x70] sm:$0xff]
        %v1679 = vld [vmem:[#allocation2 + $0x78] sm:$0xff]
        %v1680 = vld [vmem:[#allocation2 + $0x80] sm:$0xff]
        %v1681 = vld [vmem:[#allocation2 + $0x88] sm:$0xff]
        %v1682 = vld [vmem:[#allocation2 + $0x90] sm:$0xff]
        %v1683 = vld [vmem:[#allocation2 + $0x98] sm:$0xff]
        %v1684 = vld [vmem:[#allocation2 + $0xa0] sm:$0xff]
        %v1685 = vld [vmem:[#allocation2 + $0xa8] sm:$0xff]
        %v1686 = vld [vmem:[#allocation2 + $0xb0] sm:$0xff]
        %v1687 = vld [vmem:[#allocation2 + $0xb8] sm:$0xff]
        %v1688 = vld [vmem:[#allocation2 + $0xc0] sm:$0xff]
        %v1689 = vld [vmem:[#allocation2 + $0xc8] sm:$0xff]
        %v1690 = vld [vmem:[#allocation2 + $0xd0] sm:$0xff]
        %v1691 = vld [vmem:[#allocation2 + $0xd8] sm:$0xff]
        %v1692 = vld [vmem:[#allocation2 + $0xe0] sm:$0xff]
        %v1693 = vld [vmem:[#allocation2 + $0xe8] sm:$0xff]
        %v1694 = vld [vmem:[#allocation2 + $0xf0] sm:$0xff]
        %v1695 = vld [vmem:[#allocation2 + $0xf8] sm:$0xff]
        %v1696 = vld [vmem:[#allocation2 + $0x100] sm:$0xff]
        %v1697 = vld [vmem:[#allocation2 + $0x108] sm:$0xff]
        %v1698 = vld [vmem:[#allocation2 + $0x110] sm:$0xff]
        %v1699 = vld [vmem:[#allocation2 + $0x118] sm:$0xff]
        %v1700 = vld [vmem:[#allocation2 + $0x120] sm:$0xff]
        %v1701 = vld [vmem:[#allocation2 + $0x128] sm:$0xff]
        %v1702 = vld [vmem:[#allocation2 + $0x130] sm:$0xff]
        %v1703 = vld [vmem:[#allocation2 + $0x138] sm:$0xff]
        %v1704 = vld [vmem:[#allocation2 + $0x140] sm:$0xff]
        %v1705 = vld [vmem:[#allocation2 + $0x148] sm:$0xff]
        %v1706 = vld [vmem:[#allocation2 + $0x150] sm:$0xff]
        %v1707 = vld [vmem:[#allocation2 + $0x158] sm:$0xff]
        %v1708 = vld [vmem:[#allocation2 + $0x160] sm:$0xff]
        %v1709 = vld [vmem:[#allocation2 + $0x168] sm:$0xff]
        %v1710 = vld [vmem:[#allocation2 + $0x170] sm:$0xff]
        %v1711 = vld [vmem:[#allocation2 + $0x178] sm:$0xff]
        %v1712 = vld [vmem:[#allocation2 + $0x180] sm:$0xff]
        %v1713 = vld [vmem:[#allocation2 + $0x188] sm:$0xff]
        %v1714 = vld [vmem:[#allocation2 + $0x190] sm:$0xff]
        %v1715 = vld [vmem:[#allocation2 + $0x198] sm:$0xff]
        %v1716 = vld [vmem:[#allocation2 + $0x1a0] sm:$0xff]
        %v1717 = vld [vmem:[#allocation2 + $0x1a8] sm:$0xff]
        %v1718 = vld [vmem:[#allocation2 + $0x1b0] sm:$0xff]
        %v1719 = vld [vmem:[#allocation2 + $0x1b8] sm:$0xff]
        %v1720 = vld [vmem:[#allocation2 + $0x1c0] sm:$0xff]
        %v1721 = vld [vmem:[#allocation2 + $0x1c8] sm:$0xff]
        %v1722 = vld [vmem:[#allocation2 + $0x1d0] sm:$0xff]
        %v1723 = vld [vmem:[#allocation2 + $0x1d8] sm:$0xff]
        %v1724 = vld [vmem:[#allocation2 + $0x1e0] sm:$0xff]
        %v1725 = vld [vmem:[#allocation2 + $0x1e8] sm:$0xff]
        %v1726 = vld [vmem:[#allocation2 + $0x1f0] sm:$0xff]
        %v1727 = vld [vmem:[#allocation2 + $0x1f8] sm:$0xff]
        %v1728 = vpack.c.bf16 %v1412, %v1408
        %v1729 = vpack.c.bf16 %v1413, %v1409
        %v1730 = vpack.c.bf16 %v1414, %v1410
        %v1731 = vpack.c.bf16 %v1415, %v1411
        %v1732 = vpack.c.bf16 %v1420, %v1416
        %v1733 = vpack.c.bf16 %v1421, %v1417
        %v1734 = vpack.c.bf16 %v1422, %v1418
        %v1735 = vpack.c.bf16 %v1423, %v1419
        %v1736 = vpack.c.bf16 %v1428, %v1424
        %v1737 = vpack.c.bf16 %v1429, %v1425
        %v1738 = vpack.c.bf16 %v1430, %v1426
        %v1739 = vpack.c.bf16 %v1431, %v1427
        %v1740 = vpack.c.bf16 %v1436, %v1432
        %v1741 = vpack.c.bf16 %v1437, %v1433
        %v1742 = vpack.c.bf16 %v1438, %v1434
        %v1743 = vpack.c.bf16 %v1439, %v1435
        %v1744 = vpack.c.bf16 %v1444, %v1440
        %v1745 = vpack.c.bf16 %v1445, %v1441
        %v1746 = vpack.c.bf16 %v1446, %v1442
        %v1747 = vpack.c.bf16 %v1447, %v1443
        %v1748 = vpack.c.bf16 %v1452, %v1448
        %v1749 = vpack.c.bf16 %v1453, %v1449
        %v1750 = vpack.c.bf16 %v1454, %v1450
        %v1751 = vpack.c.bf16 %v1455, %v1451
        %v1752 = vpack.c.bf16 %v1460, %v1456
        %v1753 = vpack.c.bf16 %v1461, %v1457
        %v1754 = vpack.c.bf16 %v1462, %v1458
        %v1755 = vpack.c.bf16 %v1463, %v1459
        %v1756 = vpack.c.bf16 %v1468, %v1464
        %v1757 = vpack.c.bf16 %v1469, %v1465
        %v1758 = vpack.c.bf16 %v1470, %v1466
        %v1759 = vpack.c.bf16 %v1471, %v1467
        %v1760 = vpack.c.bf16 %v1476, %v1472
        %v1761 = vpack.c.bf16 %v1477, %v1473
        %v1762 = vpack.c.bf16 %v1478, %v1474
        %v1763 = vpack.c.bf16 %v1479, %v1475
        %v1764 = vpack.c.bf16 %v1484, %v1480
        %v1765 = vpack.c.bf16 %v1485, %v1481
        %v1766 = vpack.c.bf16 %v1486, %v1482
        %v1767 = vpack.c.bf16 %v1487, %v1483
        %v1768 = vpack.c.bf16 %v1492, %v1488
        %v1769 = vpack.c.bf16 %v1493, %v1489
        %v1770 = vpack.c.bf16 %v1494, %v1490
        %v1771 = vpack.c.bf16 %v1495, %v1491
        %v1772 = vpack.c.bf16 %v1500, %v1496
        %v1773 = vpack.c.bf16 %v1501, %v1497
        %v1774 = vpack.c.bf16 %v1502, %v1498
        %v1775 = vpack.c.bf16 %v1503, %v1499
        %v1776 = vpack.c.bf16 %v1508, %v1504
        %v1777 = vpack.c.bf16 %v1509, %v1505
        %v1778 = vpack.c.bf16 %v1510, %v1506
        %v1779 = vpack.c.bf16 %v1511, %v1507
        %v1780 = vpack.c.bf16 %v1516, %v1512
        %v1781 = vpack.c.bf16 %v1517, %v1513
        %v1782 = vpack.c.bf16 %v1518, %v1514
        %v1783 = vpack.c.bf16 %v1519, %v1515
        %v1784 = vpack.c.bf16 %v1524, %v1520
        %v1785 = vpack.c.bf16 %v1525, %v1521
        %v1786 = vpack.c.bf16 %v1526, %v1522
        %v1787 = vpack.c.bf16 %v1527, %v1523
        %v1788 = vpack.c.bf16 %v1532, %v1528
        %v1789 = vpack.c.bf16 %v1533, %v1529
        %v1790 = vpack.c.bf16 %v1534, %v1530
        %v1791 = vpack.c.bf16 %v1535, %v1531
        %v1792 = vpack.c.bf16 %v1540, %v1536
        %v1793 = vpack.c.bf16 %v1541, %v1537
        %v1794 = vpack.c.bf16 %v1542, %v1538
        %v1795 = vpack.c.bf16 %v1543, %v1539
        %v1796 = vpack.c.bf16 %v1548, %v1544
        %v1797 = vpack.c.bf16 %v1549, %v1545
        %v1798 = vpack.c.bf16 %v1550, %v1546
        %v1799 = vpack.c.bf16 %v1551, %v1547
        %v1800 = vpack.c.bf16 %v1556, %v1552
        %v1801 = vpack.c.bf16 %v1557, %v1553
        %v1802 = vpack.c.bf16 %v1558, %v1554
        %v1803 = vpack.c.bf16 %v1559, %v1555
        %v1804 = vpack.c.bf16 %v1564, %v1560
        %v1805 = vpack.c.bf16 %v1565, %v1561
        %v1806 = vpack.c.bf16 %v1566, %v1562
        %v1807 = vpack.c.bf16 %v1567, %v1563
        %v1808 = vpack.c.bf16 %v1572, %v1568
        %v1809 = vpack.c.bf16 %v1573, %v1569
        %v1810 = vpack.c.bf16 %v1574, %v1570
        %v1811 = vpack.c.bf16 %v1575, %v1571
        %v1812 = vpack.c.bf16 %v1580, %v1576
        %v1813 = vpack.c.bf16 %v1581, %v1577
        %v1814 = vpack.c.bf16 %v1582, %v1578
        %v1815 = vpack.c.bf16 %v1583, %v1579
        %v1816 = vpack.c.bf16 %v1588, %v1584
        %v1817 = vpack.c.bf16 %v1589, %v1585
        %v1818 = vpack.c.bf16 %v1590, %v1586
        %v1819 = vpack.c.bf16 %v1591, %v1587
        %v1820 = vpack.c.bf16 %v1596, %v1592
        %v1821 = vpack.c.bf16 %v1597, %v1593
        %v1822 = vpack.c.bf16 %v1598, %v1594
        %v1823 = vpack.c.bf16 %v1599, %v1595
        %v1824 = vpack.c.bf16 %v1604, %v1600
        %v1825 = vpack.c.bf16 %v1605, %v1601
        %v1826 = vpack.c.bf16 %v1606, %v1602
        %v1827 = vpack.c.bf16 %v1607, %v1603
        %v1828 = vpack.c.bf16 %v1612, %v1608
        %v1829 = vpack.c.bf16 %v1613, %v1609
        %v1830 = vpack.c.bf16 %v1614, %v1610
        %v1831 = vpack.c.bf16 %v1615, %v1611
        %v1832 = vpack.c.bf16 %v1620, %v1616
        %v1833 = vpack.c.bf16 %v1621, %v1617
        %v1834 = vpack.c.bf16 %v1622, %v1618
        %v1835 = vpack.c.bf16 %v1623, %v1619
        %v1836 = vpack.c.bf16 %v1628, %v1624
        %v1837 = vpack.c.bf16 %v1629, %v1625
        %v1838 = vpack.c.bf16 %v1630, %v1626
        %v1839 = vpack.c.bf16 %v1631, %v1627
        %v1840 = vpack.c.bf16 %v1636, %v1632
        %v1841 = vpack.c.bf16 %v1637, %v1633
        %v1842 = vpack.c.bf16 %v1638, %v1634
        %v1843 = vpack.c.bf16 %v1639, %v1635
        %v1844 = vpack.c.bf16 %v1644, %v1640
        %v1845 = vpack.c.bf16 %v1645, %v1641
        %v1846 = vpack.c.bf16 %v1646, %v1642
        %v1847 = vpack.c.bf16 %v1647, %v1643
        %v1848 = vpack.c.bf16 %v1652, %v1648
        %v1849 = vpack.c.bf16 %v1653, %v1649
        %v1850 = vpack.c.bf16 %v1654, %v1650
        %v1851 = vpack.c.bf16 %v1655, %v1651
        %v1852 = vpack.c.bf16 %v1660, %v1656
        %v1853 = vpack.c.bf16 %v1661, %v1657
        %v1854 = vpack.c.bf16 %v1662, %v1658
        %v1855 = vpack.c.bf16 %v1663, %v1659
        %v1856 = vld [vmem:[#allocation8] sm:$0xf]
        %v1857 = vld [vmem:[#allocation8 + $0x4] sm:$0xf]
        %v1858 = vld [vmem:[#allocation8 + $0x8] sm:$0xf]
        %v1859 = vld [vmem:[#allocation8 + $0xc] sm:$0xf]
        %v1860 = vld [vmem:[#allocation8 + $0x10] sm:$0xf]
        %v1861 = vld [vmem:[#allocation8 + $0x14] sm:$0xf]
        %v1862 = vld [vmem:[#allocation8 + $0x18] sm:$0xf]
        %v1863 = vld [vmem:[#allocation8 + $0x1c] sm:$0xf]
        %v1864 = vld [vmem:[#allocation8 + $0x20] sm:$0xf]
        %v1865 = vld [vmem:[#allocation8 + $0x24] sm:$0xf]
        %v1866 = vld [vmem:[#allocation8 + $0x28] sm:$0xf]
        %v1867 = vld [vmem:[#allocation8 + $0x2c] sm:$0xf]
        %v1868 = vld [vmem:[#allocation8 + $0x30] sm:$0xf]
        %v1869 = vld [vmem:[#allocation8 + $0x34] sm:$0xf]
        %v1870 = vld [vmem:[#allocation8 + $0x38] sm:$0xf]
        %v1871 = vld [vmem:[#allocation8 + $0x3c] sm:$0xf]
        %v1872 = vld [vmem:[#allocation8 + $0x40] sm:$0xf]
        %v1873 = vld [vmem:[#allocation8 + $0x44] sm:$0xf]
        %v1874 = vld [vmem:[#allocation8 + $0x48] sm:$0xf]
        %v1875 = vld [vmem:[#allocation8 + $0x4c] sm:$0xf]
        %v1876 = vld [vmem:[#allocation8 + $0x50] sm:$0xf]
        %v1877 = vld [vmem:[#allocation8 + $0x54] sm:$0xf]
        %v1878 = vld [vmem:[#allocation8 + $0x58] sm:$0xf]
        %v1879 = vld [vmem:[#allocation8 + $0x5c] sm:$0xf]
        %v1880 = vld [vmem:[#allocation8 + $0x60] sm:$0xf]
        %v1881 = vld [vmem:[#allocation8 + $0x64] sm:$0xf]
        %v1882 = vld [vmem:[#allocation8 + $0x68] sm:$0xf]
        %v1883 = vld [vmem:[#allocation8 + $0x6c] sm:$0xf]
        %v1884 = vld [vmem:[#allocation8 + $0x70] sm:$0xf]
        %v1885 = vld [vmem:[#allocation8 + $0x74] sm:$0xf]
        %v1886 = vld [vmem:[#allocation8 + $0x78] sm:$0xf]
        %v1887 = vld [vmem:[#allocation8 + $0x7c] sm:$0xf]
        %v1888 = vld [vmem:[#allocation8 + $0x80] sm:$0xf]
        %v1889 = vld [vmem:[#allocation8 + $0x84] sm:$0xf]
        %v1890 = vld [vmem:[#allocation8 + $0x88] sm:$0xf]
        %v1891 = vld [vmem:[#allocation8 + $0x8c] sm:$0xf]
        %v1892 = vld [vmem:[#allocation8 + $0x90] sm:$0xf]
        %v1893 = vld [vmem:[#allocation8 + $0x94] sm:$0xf]
        %v1894 = vld [vmem:[#allocation8 + $0x98] sm:$0xf]
        %v1895 = vld [vmem:[#allocation8 + $0x9c] sm:$0xf]
        %v1896 = vld [vmem:[#allocation8 + $0xa0] sm:$0xf]
        %v1897 = vld [vmem:[#allocation8 + $0xa4] sm:$0xf]
        %v1898 = vld [vmem:[#allocation8 + $0xa8] sm:$0xf]
        %v1899 = vld [vmem:[#allocation8 + $0xac] sm:$0xf]
        %v1900 = vld [vmem:[#allocation8 + $0xb0] sm:$0xf]
        %v1901 = vld [vmem:[#allocation8 + $0xb4] sm:$0xf]
        %v1902 = vld [vmem:[#allocation8 + $0xb8] sm:$0xf]
        %v1903 = vld [vmem:[#allocation8 + $0xbc] sm:$0xf]
        %v1904 = vld [vmem:[#allocation8 + $0xc0] sm:$0xf]
        %v1905 = vld [vmem:[#allocation8 + $0xc4] sm:$0xf]
        %v1906 = vld [vmem:[#allocation8 + $0xc8] sm:$0xf]
        %v1907 = vld [vmem:[#allocation8 + $0xcc] sm:$0xf]
        %v1908 = vld [vmem:[#allocation8 + $0xd0] sm:$0xf]
        %v1909 = vld [vmem:[#allocation8 + $0xd4] sm:$0xf]
        %v1910 = vld [vmem:[#allocation8 + $0xd8] sm:$0xf]
        %v1911 = vld [vmem:[#allocation8 + $0xdc] sm:$0xf]
        %v1912 = vld [vmem:[#allocation8 + $0xe0] sm:$0xf]
        %v1913 = vld [vmem:[#allocation8 + $0xe4] sm:$0xf]
        %v1914 = vld [vmem:[#allocation8 + $0xe8] sm:$0xf]
        %v1915 = vld [vmem:[#allocation8 + $0xec] sm:$0xf]
        %v1916 = vld [vmem:[#allocation8 + $0xf0] sm:$0xf]
        %v1917 = vld [vmem:[#allocation8 + $0xf4] sm:$0xf]
        %v1918 = vld [vmem:[#allocation8 + $0xf8] sm:$0xf]
        %v1919 = vld [vmem:[#allocation8 + $0xfc] sm:$0xf]
        %v1984 = vunpack.c.l.b16 %v1856
        %v1985 = vunpack.c.l.b16 %v1857
        %v1986 = vunpack.c.l.b16 %v1858
        %v1987 = vunpack.c.l.b16 %v1859
        %v1988 = vunpack.c.l.b16 %v1860
        %v1989 = vunpack.c.l.b16 %v1861
        %v1990 = vunpack.c.l.b16 %v1862
        %v1991 = vunpack.c.l.b16 %v1863
        %v1992 = vunpack.c.l.b16 %v1864
        %v1993 = vunpack.c.l.b16 %v1865
        %v1994 = vunpack.c.l.b16 %v1866
        %v1995 = vunpack.c.l.b16 %v1867
        %v1996 = vunpack.c.l.b16 %v1868
        %v1997 = vunpack.c.l.b16 %v1869
        %v1998 = vunpack.c.l.b16 %v1870
        %v1999 = vunpack.c.l.b16 %v1871
        %v2000 = vunpack.c.l.b16 %v1872
        %v2001 = vunpack.c.l.b16 %v1873
        %v2002 = vunpack.c.l.b16 %v1874
        %v2003 = vunpack.c.l.b16 %v1875
        %v2004 = vunpack.c.l.b16 %v1876
        %v2005 = vunpack.c.l.b16 %v1877
        %v2006 = vunpack.c.l.b16 %v1878
        %v2007 = vunpack.c.l.b16 %v1879
        %v2008 = vunpack.c.l.b16 %v1880
        %v2009 = vunpack.c.l.b16 %v1881
        %v2010 = vunpack.c.l.b16 %v1882
        %v2011 = vunpack.c.l.b16 %v1883
        %v2012 = vunpack.c.l.b16 %v1884
        %v2013 = vunpack.c.l.b16 %v1885
        %v2014 = vunpack.c.l.b16 %v1886
        %v2015 = vunpack.c.l.b16 %v1887
        %v2016 = vunpack.c.l.b16 %v1888
        %v2017 = vunpack.c.l.b16 %v1889
        %v2018 = vunpack.c.l.b16 %v1890
        %v2019 = vunpack.c.l.b16 %v1891
        %v2020 = vunpack.c.l.b16 %v1892
        %v2021 = vunpack.c.l.b16 %v1893
        %v2022 = vunpack.c.l.b16 %v1894
        %v2023 = vunpack.c.l.b16 %v1895
        %v2024 = vunpack.c.l.b16 %v1896
        %v2025 = vunpack.c.l.b16 %v1897
        %v2026 = vunpack.c.l.b16 %v1898
        %v2027 = vunpack.c.l.b16 %v1899
        %v2028 = vunpack.c.l.b16 %v1900
        %v2029 = vunpack.c.l.b16 %v1901
        %v2030 = vunpack.c.l.b16 %v1902
        %v2031 = vunpack.c.l.b16 %v1903
        %v2032 = vunpack.c.l.b16 %v1904
        %v2033 = vunpack.c.l.b16 %v1905
        %v2034 = vunpack.c.l.b16 %v1906
        %v2035 = vunpack.c.l.b16 %v1907
        %v2036 = vunpack.c.l.b16 %v1908
        %v2037 = vunpack.c.l.b16 %v1909
        %v2038 = vunpack.c.l.b16 %v1910
        %v2039 = vunpack.c.l.b16 %v1911
        %v2040 = vunpack.c.l.b16 %v1912
        %v2041 = vunpack.c.l.b16 %v1913
        %v2042 = vunpack.c.l.b16 %v1914
        %v2043 = vunpack.c.l.b16 %v1915
        %v2044 = vunpack.c.l.b16 %v1916
        %v2045 = vunpack.c.l.b16 %v1917
        %v2046 = vunpack.c.l.b16 %v1918
        %v2047 = vunpack.c.l.b16 %v1919
        %v2048 = vpack.c.b16 %v1985, %v1984
        %v2049 = vpack.c.b16 %v1987, %v1986
        %v2050 = vpack.c.b16 %v1989, %v1988
        %v2051 = vpack.c.b16 %v1991, %v1990
        %v2052 = vpack.c.b16 %v1993, %v1992
        %v2053 = vpack.c.b16 %v1995, %v1994
        %v2054 = vpack.c.b16 %v1997, %v1996
        %v2055 = vpack.c.b16 %v1999, %v1998
        %v2056 = vpack.c.b16 %v2001, %v2000
        %v2057 = vpack.c.b16 %v2003, %v2002
        %v2058 = vpack.c.b16 %v2005, %v2004
        %v2059 = vpack.c.b16 %v2007, %v2006
        %v2060 = vpack.c.b16 %v2009, %v2008
        %v2061 = vpack.c.b16 %v2011, %v2010
        %v2062 = vpack.c.b16 %v2013, %v2012
        %v2063 = vpack.c.b16 %v2015, %v2014
        %v2064 = vpack.c.b16 %v2017, %v2016
        %v2065 = vpack.c.b16 %v2019, %v2018
        %v2066 = vpack.c.b16 %v2021, %v2020
        %v2067 = vpack.c.b16 %v2023, %v2022
        %v2068 = vpack.c.b16 %v2025, %v2024
        %v2069 = vpack.c.b16 %v2027, %v2026
        %v2070 = vpack.c.b16 %v2029, %v2028
        %v2071 = vpack.c.b16 %v2031, %v2030
        %v2072 = vpack.c.b16 %v2033, %v2032
        %v2073 = vpack.c.b16 %v2035, %v2034
        %v2074 = vpack.c.b16 %v2037, %v2036
        %v2075 = vpack.c.b16 %v2039, %v2038
        %v2076 = vpack.c.b16 %v2041, %v2040
        %v2077 = vpack.c.b16 %v2043, %v2042
        %v2078 = vpack.c.b16 %v2045, %v2044
        %v2079 = vpack.c.b16 %v2047, %v2046
        %2112 = vmatprep.subr.bf16.mxu0 0
        %2113 = vmatpush1.bf16.msra.mxu0 %v2048
        %2114 = vmatprep.subr.bf16.mxu0 0
        %2115 = vmatpush1.bf16.msra.mxu0 %v2049
        %2116 = vmatprep.subr.bf16.mxu0 0
        %2117 = vmatpush1.bf16.msra.mxu0 %v2050
        %2118 = vmatprep.subr.bf16.mxu0 0
        %2119 = vmatpush1.bf16.msra.mxu0 %v2051
        %2120 = vmatprep.subr.bf16.mxu0 0
        %2121 = vmatpush1.bf16.msra.mxu0 %v2052
        %2122 = vmatprep.subr.bf16.mxu0 0
        %2123 = vmatpush1.bf16.msra.mxu0 %v2053
        %2124 = vmatprep.subr.bf16.mxu0 0
        %2125 = vmatpush1.bf16.msra.mxu0 %v2054
        %2126 = vmatprep.subr.bf16.mxu0 0
        %2127 = vmatpush1.bf16.msra.mxu0 %v2055
        %2128 = vmatprep.subr.bf16.mxu0 0
        %2129 = vmatpush1.bf16.msra.mxu0 %v2056
        %2130 = vmatprep.subr.bf16.mxu0 0
        %2131 = vmatpush1.bf16.msra.mxu0 %v2057
        %2132 = vmatprep.subr.bf16.mxu0 0
        %2133 = vmatpush1.bf16.msra.mxu0 %v2058
        %2134 = vmatprep.subr.bf16.mxu0 0
        %2135 = vmatpush1.bf16.msra.mxu0 %v2059
        %2136 = vmatprep.subr.bf16.mxu0 0
        %2137 = vmatpush1.bf16.msra.mxu0 %v2060
        %2138 = vmatprep.subr.bf16.mxu0 0
        %2139 = vmatpush1.bf16.msra.mxu0 %v2061
        %2140 = vmatprep.subr.bf16.mxu0 0
        %2141 = vmatpush1.bf16.msra.mxu0 %v2062
        %2142 = vmatprep.subr.bf16.mxu0 0
        %2143 = vmatpush1.bf16.msra.mxu0 %v2063
        %2144 = vmatprep.mubr.bf16.mxu0 %v1729
        %2145 = vmatmul.mubr.bf16.gmra.mrb[0].mxu0 %v1728
        %v2146 = vpop.f32.mrb[0].mxu0
        %v2147 = vadd.f32 0.0, %v2146
        %v2148 = vpop.f32.mrb[0].mxu0
        %v2149 = vpop.f32.mrb[0].mxu0
        %v2150 = vadd.f32 0.0, %v2149
        %v2151 = vpop.f32.mrb[0].mxu0
        %2152 = vmatprep.mubr.bf16.mxu0 %v1733
        %2153 = vmatmul.mubr.bf16.gmra.mrb[0].mxu0 %v1732
        %v2154 = vpop.f32.mrb[0].mxu0
        %v2155 = vadd.f32 0.0, %v2154
        %v2156 = vpop.f32.mrb[0].mxu0
        %v2157 = vpop.f32.mrb[0].mxu0
        %v2158 = vadd.f32 0.0, %v2157
        %v2159 = vpop.f32.mrb[0].mxu0
        %2160 = vmatprep.mubr.bf16.mxu0 %v1737
        %2161 = vmatmul.mubr.bf16.gmra.mrb[0].mxu0 %v1736
        %v2162 = vpop.f32.mrb[0].mxu0
        %v2163 = vadd.f32 0.0, %v2162
        %v2164 = vpop.f32.mrb[0].mxu0
        %v2165 = vpop.f32.mrb[0].mxu0
        %v2166 = vadd.f32 0.0, %v2165
        %v2167 = vpop.f32.mrb[0].mxu0
        %2168 = vmatprep.mubr.bf16.mxu0 %v1741
        %2169 = vmatmul.mubr.bf16.gmra.mrb[0].mxu0 %v1740
        %v2170 = vpop.f32.mrb[0].mxu0
        %v2171 = vadd.f32 0.0, %v2170
        %v2172 = vpop.f32.mrb[0].mxu0
        %v2173 = vpop.f32.mrb[0].mxu0
        %v2174 = vadd.f32 0.0, %v2173
        %v2175 = vpop.f32.mrb[0].mxu0
        %2176 = vmatprep.mubr.bf16.mxu0 %v1745
        %2177 = vmatmul.mubr.bf16.gmra.mrb[0].mxu0 %v1744
        %v2178 = vpop.f32.mrb[0].mxu0
        %v2179 = vadd.f32 0.0, %v2178
        %v2180 = vpop.f32.mrb[0].mxu0
        %v2181 = vpop.f32.mrb[0].mxu0
        %v2182 = vadd.f32 0.0, %v2181
        %v2183 = vpop.f32.mrb[0].mxu0
        %2184 = vmatprep.mubr.bf16.mxu0 %v1749
        %2185 = vmatmul.mubr.bf16.gmra.mrb[0].mxu0 %v1748
        %v2186 = vpop.f32.mrb[0].mxu0
        %v2187 = vadd.f32 0.0, %v2186
        %v2188 = vpop.f32.mrb[0].mxu0
        %v2189 = vpop.f32.mrb[0].mxu0
        %v2190 = vadd.f32 0.0, %v2189
        %v2191 = vpop.f32.mrb[0].mxu0
        %2192 = vmatprep.mubr.bf16.mxu0 %v1753
        %2193 = vmatmul.mubr.bf16.gmra.mrb[0].mxu0 %v1752
        %v2194 = vpop.f32.mrb[0].mxu0
        %v2195 = vadd.f32 0.0, %v2194
        %v2196 = vpop.f32.mrb[0].mxu0
        %v2197 = vpop.f32.mrb[0].mxu0
        %v2198 = vadd.f32 0.0, %v2197
        %v2199 = vpop.f32.mrb[0].mxu0
        %2200 = vmatprep.mubr.bf16.mxu0 %v1757
        %2201 = vmatmul.mubr.bf16.gmra.mrb[0].mxu0 %v1756
        %v2202 = vpop.f32.mrb[0].mxu0
        %v2203 = vadd.f32 0.0, %v2202
        %v2204 = vpop.f32.mrb[0].mxu0
        %v2205 = vpop.f32.mrb[0].mxu0
        %v2206 = vadd.f32 0.0, %v2205
        %v2207 = vpop.f32.mrb[0].mxu0
        %2208 = vmatprep.mubr.bf16.mxu0 %v1761
        %2209 = vmatmul.mubr.bf16.gmra.mrb[0].mxu0 %v1760
        %v2210 = vpop.f32.mrb[0].mxu0
        %v2211 = vadd.f32 0.0, %v2210
        %v2212 = vpop.f32.mrb[0].mxu0
        %v2213 = vpop.f32.mrb[0].mxu0
        %v2214 = vadd.f32 0.0, %v2213
        %v2215 = vpop.f32.mrb[0].mxu0
        %2216 = vmatprep.mubr.bf16.mxu0 %v1765
        %2217 = vmatmul.mubr.bf16.gmra.mrb[0].mxu0 %v1764
        %v2218 = vpop.f32.mrb[0].mxu0
        %v2219 = vadd.f32 0.0, %v2218
        %v2220 = vpop.f32.mrb[0].mxu0
        %v2221 = vpop.f32.mrb[0].mxu0
        %v2222 = vadd.f32 0.0, %v2221
        %v2223 = vpop.f32.mrb[0].mxu0
        %2224 = vmatprep.mubr.bf16.mxu0 %v1769
        %2225 = vmatmul.mubr.bf16.gmra.mrb[0].mxu0 %v1768
        %v2226 = vpop.f32.mrb[0].mxu0
        %v2227 = vadd.f32 0.0, %v2226
        %v2228 = vpop.f32.mrb[0].mxu0
        %v2229 = vpop.f32.mrb[0].mxu0
        %v2230 = vadd.f32 0.0, %v2229
        %v2231 = vpop.f32.mrb[0].mxu0
        %2232 = vmatprep.mubr.bf16.mxu0 %v1773
        %2233 = vmatmul.mubr.bf16.gmra.mrb[0].mxu0 %v1772
        %v2234 = vpop.f32.mrb[0].mxu0
        %v2235 = vadd.f32 0.0, %v2234
        %v2236 = vpop.f32.mrb[0].mxu0
        %v2237 = vpop.f32.mrb[0].mxu0
        %v2238 = vadd.f32 0.0, %v2237
        %v2239 = vpop.f32.mrb[0].mxu0
        %2240 = vmatprep.mubr.bf16.mxu0 %v1777
        %2241 = vmatmul.mubr.bf16.gmra.mrb[0].mxu0 %v1776
        %v2242 = vpop.f32.mrb[0].mxu0
        %v2243 = vadd.f32 0.0, %v2242
        %v2244 = vpop.f32.mrb[0].mxu0
        %v2245 = vpop.f32.mrb[0].mxu0
        %v2246 = vadd.f32 0.0, %v2245
        %v2247 = vpop.f32.mrb[0].mxu0
        %2248 = vmatprep.mubr.bf16.mxu0 %v1781
        %2249 = vmatmul.mubr.bf16.gmra.mrb[0].mxu0 %v1780
        %v2250 = vpop.f32.mrb[0].mxu0
        %v2251 = vadd.f32 0.0, %v2250
        %v2252 = vpop.f32.mrb[0].mxu0
        %v2253 = vpop.f32.mrb[0].mxu0
        %v2254 = vadd.f32 0.0, %v2253
        %v2255 = vpop.f32.mrb[0].mxu0
        %2256 = vmatprep.mubr.bf16.mxu0 %v1785
        %2257 = vmatmul.mubr.bf16.gmra.mrb[0].mxu0 %v1784
        %v2258 = vpop.f32.mrb[0].mxu0
        %v2259 = vadd.f32 0.0, %v2258
        %v2260 = vpop.f32.mrb[0].mxu0
        %v2261 = vpop.f32.mrb[0].mxu0
        %v2262 = vadd.f32 0.0, %v2261
        %v2263 = vpop.f32.mrb[0].mxu0
        %2264 = vmatprep.mubr.bf16.mxu0 %v1789
        %2265 = vmatmul.mubr.bf16.gmra.mrb[0].mxu0 %v1788
        %v2266 = vpop.f32.mrb[0].mxu0
        %v2267 = vadd.f32 0.0, %v2266
        %v2268 = vpop.f32.mrb[0].mxu0
        %v2269 = vpop.f32.mrb[0].mxu0
        %v2270 = vadd.f32 0.0, %v2269
        %v2271 = vpop.f32.mrb[0].mxu0
        %2272 = vmatprep.mubr.bf16.mxu0 %v1793
        %2273 = vmatmul.mubr.bf16.gmra.mrb[0].mxu0 %v1792
        %v2274 = vpop.f32.mrb[0].mxu0
        %v2275 = vadd.f32 0.0, %v2274
        %v2276 = vpop.f32.mrb[0].mxu0
        %v2277 = vpop.f32.mrb[0].mxu0
        %v2278 = vadd.f32 0.0, %v2277
        %v2279 = vpop.f32.mrb[0].mxu0
        %2280 = vmatprep.mubr.bf16.mxu0 %v1797
        %2281 = vmatmul.mubr.bf16.gmra.mrb[0].mxu0 %v1796
        %v2282 = vpop.f32.mrb[0].mxu0
        %v2283 = vadd.f32 0.0, %v2282
        %v2284 = vpop.f32.mrb[0].mxu0
        %v2285 = vpop.f32.mrb[0].mxu0
        %v2286 = vadd.f32 0.0, %v2285
        %v2287 = vpop.f32.mrb[0].mxu0
        %2288 = vmatprep.mubr.bf16.mxu0 %v1801
        %2289 = vmatmul.mubr.bf16.gmra.mrb[0].mxu0 %v1800
        %v2290 = vpop.f32.mrb[0].mxu0
        %v2291 = vadd.f32 0.0, %v2290
        %v2292 = vpop.f32.mrb[0].mxu0
        %v2293 = vpop.f32.mrb[0].mxu0
        %v2294 = vadd.f32 0.0, %v2293
        %v2295 = vpop.f32.mrb[0].mxu0
        %2296 = vmatprep.mubr.bf16.mxu0 %v1805
        %2297 = vmatmul.mubr.bf16.gmra.mrb[0].mxu0 %v1804
        %v2298 = vpop.f32.mrb[0].mxu0
        %v2299 = vadd.f32 0.0, %v2298
        %v2300 = vpop.f32.mrb[0].mxu0
        %v2301 = vpop.f32.mrb[0].mxu0
        %v2302 = vadd.f32 0.0, %v2301
        %v2303 = vpop.f32.mrb[0].mxu0
        %2304 = vmatprep.mubr.bf16.mxu0 %v1809
        %2305 = vmatmul.mubr.bf16.gmra.mrb[0].mxu0 %v1808
        %v2306 = vpop.f32.mrb[0].mxu0
        %v2307 = vadd.f32 0.0, %v2306
        %v2308 = vpop.f32.mrb[0].mxu0
        %v2309 = vpop.f32.mrb[0].mxu0
        %v2310 = vadd.f32 0.0, %v2309
        %v2311 = vpop.f32.mrb[0].mxu0
        %2312 = vmatprep.mubr.bf16.mxu0 %v1813
        %2313 = vmatmul.mubr.bf16.gmra.mrb[0].mxu0 %v1812
        %v2314 = vpop.f32.mrb[0].mxu0
        %v2315 = vadd.f32 0.0, %v2314
        %v2316 = vpop.f32.mrb[0].mxu0
        %v2317 = vpop.f32.mrb[0].mxu0
        %v2318 = vadd.f32 0.0, %v2317
        %v2319 = vpop.f32.mrb[0].mxu0
        %2320 = vmatprep.mubr.bf16.mxu0 %v1817
        %2321 = vmatmul.mubr.bf16.gmra.mrb[0].mxu0 %v1816
        %v2322 = vpop.f32.mrb[0].mxu0
        %v2323 = vadd.f32 0.0, %v2322
        %v2324 = vpop.f32.mrb[0].mxu0
        %v2325 = vpop.f32.mrb[0].mxu0
        %v2326 = vadd.f32 0.0, %v2325
        %v2327 = vpop.f32.mrb[0].mxu0
        %2328 = vmatprep.mubr.bf16.mxu0 %v1821
        %2329 = vmatmul.mubr.bf16.gmra.mrb[0].mxu0 %v1820
        %v2330 = vpop.f32.mrb[0].mxu0
        %v2331 = vadd.f32 0.0, %v2330
        %v2332 = vpop.f32.mrb[0].mxu0
        %v2333 = vpop.f32.mrb[0].mxu0
        %v2334 = vadd.f32 0.0, %v2333
        %v2335 = vpop.f32.mrb[0].mxu0
        %2336 = vmatprep.mubr.bf16.mxu0 %v1825
        %2337 = vmatmul.mubr.bf16.gmra.mrb[0].mxu0 %v1824
        %v2338 = vpop.f32.mrb[0].mxu0
        %v2339 = vadd.f32 0.0, %v2338
        %v2340 = vpop.f32.mrb[0].mxu0
        %v2341 = vpop.f32.mrb[0].mxu0
        %v2342 = vadd.f32 0.0, %v2341
        %v2343 = vpop.f32.mrb[0].mxu0
        %2344 = vmatprep.mubr.bf16.mxu0 %v1829
        %2345 = vmatmul.mubr.bf16.gmra.mrb[0].mxu0 %v1828
        %v2346 = vpop.f32.mrb[0].mxu0
        %v2347 = vadd.f32 0.0, %v2346
        %v2348 = vpop.f32.mrb[0].mxu0
        %v2349 = vpop.f32.mrb[0].mxu0
        %v2350 = vadd.f32 0.0, %v2349
        %v2351 = vpop.f32.mrb[0].mxu0
        %2352 = vmatprep.mubr.bf16.mxu0 %v1833
        %2353 = vmatmul.mubr.bf16.gmra.mrb[0].mxu0 %v1832
        %v2354 = vpop.f32.mrb[0].mxu0
        %v2355 = vadd.f32 0.0, %v2354
        %v2356 = vpop.f32.mrb[0].mxu0
        %v2357 = vpop.f32.mrb[0].mxu0
        %v2358 = vadd.f32 0.0, %v2357
        %v2359 = vpop.f32.mrb[0].mxu0
        %2360 = vmatprep.mubr.bf16.mxu0 %v1837
        %2361 = vmatmul.mubr.bf16.gmra.mrb[0].mxu0 %v1836
        %v2362 = vpop.f32.mrb[0].mxu0
        %v2363 = vadd.f32 0.0, %v2362
        %v2364 = vpop.f32.mrb[0].mxu0
        %v2365 = vpop.f32.mrb[0].mxu0
        %v2366 = vadd.f32 0.0, %v2365
        %v2367 = vpop.f32.mrb[0].mxu0
        %2368 = vmatprep.mubr.bf16.mxu0 %v1841
        %2369 = vmatmul.mubr.bf16.gmra.mrb[0].mxu0 %v1840
        %v2370 = vpop.f32.mrb[0].mxu0
        %v2371 = vadd.f32 0.0, %v2370
        %v2372 = vpop.f32.mrb[0].mxu0
        %v2373 = vpop.f32.mrb[0].mxu0
        %v2374 = vadd.f32 0.0, %v2373
        %v2375 = vpop.f32.mrb[0].mxu0
        %2376 = vmatprep.mubr.bf16.mxu0 %v1845
        %2377 = vmatmul.mubr.bf16.gmra.mrb[0].mxu0 %v1844
        %v2378 = vpop.f32.mrb[0].mxu0
        %v2379 = vadd.f32 0.0, %v2378
        %v2380 = vpop.f32.mrb[0].mxu0
        %v2381 = vpop.f32.mrb[0].mxu0
        %v2382 = vadd.f32 0.0, %v2381
        %v2383 = vpop.f32.mrb[0].mxu0
        %2384 = vmatprep.mubr.bf16.mxu0 %v1849
        %2385 = vmatmul.mubr.bf16.gmra.mrb[0].mxu0 %v1848
        %v2386 = vpop.f32.mrb[0].mxu0
        %v2387 = vadd.f32 0.0, %v2386
        %v2388 = vpop.f32.mrb[0].mxu0
        %v2389 = vpop.f32.mrb[0].mxu0
        %v2390 = vadd.f32 0.0, %v2389
        %v2391 = vpop.f32.mrb[0].mxu0
        %2392 = vmatprep.mubr.bf16.mxu0 %v1853
        %2393 = vmatmul.mubr.bf16.gmra.mrb[0].mxu0 %v1852
        %v2394 = vpop.f32.mrb[0].mxu0
        %v2395 = vadd.f32 0.0, %v2394
        %v2396 = vpop.f32.mrb[0].mxu0
        %v2397 = vpop.f32.mrb[0].mxu0
        %v2398 = vadd.f32 0.0, %v2397
        %v2399 = vpop.f32.mrb[0].mxu0
        %2400 = vdwg.mxu0
        %2401 = vmatprep.subr.bf16.mxu0 0
        %2402 = vmatpush1.bf16.msra.mxu0 %v2064
        %2403 = vmatprep.subr.bf16.mxu0 0
        %2404 = vmatpush1.bf16.msra.mxu0 %v2065
        %2405 = vmatprep.subr.bf16.mxu0 0
        %2406 = vmatpush1.bf16.msra.mxu0 %v2066
        %2407 = vmatprep.subr.bf16.mxu0 0
        %2408 = vmatpush1.bf16.msra.mxu0 %v2067
        %2409 = vmatprep.subr.bf16.mxu0 0
        %2410 = vmatpush1.bf16.msra.mxu0 %v2068
        %2411 = vmatprep.subr.bf16.mxu0 0
        %2412 = vmatpush1.bf16.msra.mxu0 %v2069
        %2413 = vmatprep.subr.bf16.mxu0 0
        %2414 = vmatpush1.bf16.msra.mxu0 %v2070
        %2415 = vmatprep.subr.bf16.mxu0 0
        %2416 = vmatpush1.bf16.msra.mxu0 %v2071
        %2417 = vmatprep.subr.bf16.mxu0 0
        %2418 = vmatpush1.bf16.msra.mxu0 %v2072
        %2419 = vmatprep.subr.bf16.mxu0 0
        %2420 = vmatpush1.bf16.msra.mxu0 %v2073
        %2421 = vmatprep.subr.bf16.mxu0 0
        %2422 = vmatpush1.bf16.msra.mxu0 %v2074
        %2423 = vmatprep.subr.bf16.mxu0 0
        %2424 = vmatpush1.bf16.msra.mxu0 %v2075
        %2425 = vmatprep.subr.bf16.mxu0 0
        %2426 = vmatpush1.bf16.msra.mxu0 %v2076
        %2427 = vmatprep.subr.bf16.mxu0 0
        %2428 = vmatpush1.bf16.msra.mxu0 %v2077
        %2429 = vmatprep.subr.bf16.mxu0 0
        %2430 = vmatpush1.bf16.msra.mxu0 %v2078
        %2431 = vmatprep.subr.bf16.mxu0 0
        %2432 = vmatpush1.bf16.msra.mxu0 %v2079
        %2433 = vmatprep.mubr.bf16.mxu0 %v1731
        %2434 = vmatmul.mubr.bf16.gmra.mrb[0].mxu0 %v1730
        %v2435 = vpop.f32.mrb[0].mxu0
        %v2436 = vadd.f32 %v2147, %v2435
        %v2437 = vpop.f32.mrb[0].mxu0
        %v2438 = vpop.f32.mrb[0].mxu0
        %v2439 = vadd.f32 %v2150, %v2438
        %v2440 = vpop.f32.mrb[0].mxu0
        %2441 = vmatprep.mubr.bf16.mxu0 %v1735
        %2442 = vmatmul.mubr.bf16.gmra.mrb[0].mxu0 %v1734
        %v2443 = vpop.f32.mrb[0].mxu0
        %v2444 = vadd.f32 %v2155, %v2443
        %v2445 = vpop.f32.mrb[0].mxu0
        %v2446 = vpop.f32.mrb[0].mxu0
        %v2447 = vadd.f32 %v2158, %v2446
        %v2448 = vpop.f32.mrb[0].mxu0
        %2449 = vmatprep.mubr.bf16.mxu0 %v1739
        %2450 = vmatmul.mubr.bf16.gmra.mrb[0].mxu0 %v1738
        %v2451 = vpop.f32.mrb[0].mxu0
        %v2452 = vadd.f32 %v2163, %v2451
        %v2453 = vpop.f32.mrb[0].mxu0
        %v2454 = vpop.f32.mrb[0].mxu0
        %v2455 = vadd.f32 %v2166, %v2454
        %v2456 = vpop.f32.mrb[0].mxu0
        %2457 = vmatprep.mubr.bf16.mxu0 %v1743
        %2458 = vmatmul.mubr.bf16.gmra.mrb[0].mxu0 %v1742
        %v2459 = vpop.f32.mrb[0].mxu0
        %v2460 = vadd.f32 %v2171, %v2459
        %v2461 = vpop.f32.mrb[0].mxu0
        %v2462 = vpop.f32.mrb[0].mxu0
        %v2463 = vadd.f32 %v2174, %v2462
        %v2464 = vpop.f32.mrb[0].mxu0
        %2465 = vmatprep.mubr.bf16.mxu0 %v1747
        %2466 = vmatmul.mubr.bf16.gmra.mrb[0].mxu0 %v1746
        %v2467 = vpop.f32.mrb[0].mxu0
        %v2468 = vadd.f32 %v2179, %v2467
        %v2469 = vpop.f32.mrb[0].mxu0
        %v2470 = vpop.f32.mrb[0].mxu0
        %v2471 = vadd.f32 %v2182, %v2470
        %v2472 = vpop.f32.mrb[0].mxu0
        %2473 = vmatprep.mubr.bf16.mxu0 %v1751
        %2474 = vmatmul.mubr.bf16.gmra.mrb[0].mxu0 %v1750
        %v2475 = vpop.f32.mrb[0].mxu0
        %v2476 = vadd.f32 %v2187, %v2475
        %v2477 = vpop.f32.mrb[0].mxu0
        %v2478 = vpop.f32.mrb[0].mxu0
        %v2479 = vadd.f32 %v2190, %v2478
        %v2480 = vpop.f32.mrb[0].mxu0
        %2481 = vmatprep.mubr.bf16.mxu0 %v1755
        %2482 = vmatmul.mubr.bf16.gmra.mrb[0].mxu0 %v1754
        %v2483 = vpop.f32.mrb[0].mxu0
        %v2484 = vadd.f32 %v2195, %v2483
        %v2485 = vpop.f32.mrb[0].mxu0
        %v2486 = vpop.f32.mrb[0].mxu0
        %v2487 = vadd.f32 %v2198, %v2486
        %v2488 = vpop.f32.mrb[0].mxu0
        %2489 = vmatprep.mubr.bf16.mxu0 %v1759
        %2490 = vmatmul.mubr.bf16.gmra.mrb[0].mxu0 %v1758
        %v2491 = vpop.f32.mrb[0].mxu0
        %v2492 = vadd.f32 %v2203, %v2491
        %v2493 = vpop.f32.mrb[0].mxu0
        %v2494 = vpop.f32.mrb[0].mxu0
        %v2495 = vadd.f32 %v2206, %v2494
        %v2496 = vpop.f32.mrb[0].mxu0
        %2497 = vmatprep.mubr.bf16.mxu0 %v1763
        %2498 = vmatmul.mubr.bf16.gmra.mrb[0].mxu0 %v1762
        %v2499 = vpop.f32.mrb[0].mxu0
        %v2500 = vadd.f32 %v2211, %v2499
        %v2501 = vpop.f32.mrb[0].mxu0
        %v2502 = vpop.f32.mrb[0].mxu0
        %v2503 = vadd.f32 %v2214, %v2502
        %v2504 = vpop.f32.mrb[0].mxu0
        %2505 = vmatprep.mubr.bf16.mxu0 %v1767
        %2506 = vmatmul.mubr.bf16.gmra.mrb[0].mxu0 %v1766
        %v2507 = vpop.f32.mrb[0].mxu0
        %v2508 = vadd.f32 %v2219, %v2507
        %v2509 = vpop.f32.mrb[0].mxu0
        %v2510 = vpop.f32.mrb[0].mxu0
        %v2511 = vadd.f32 %v2222, %v2510
        %v2512 = vpop.f32.mrb[0].mxu0
        %2513 = vmatprep.mubr.bf16.mxu0 %v1771
        %2514 = vmatmul.mubr.bf16.gmra.mrb[0].mxu0 %v1770
        %v2515 = vpop.f32.mrb[0].mxu0
        %v2516 = vadd.f32 %v2227, %v2515
        %v2517 = vpop.f32.mrb[0].mxu0
        %v2518 = vpop.f32.mrb[0].mxu0
        %v2519 = vadd.f32 %v2230, %v2518
        %v2520 = vpop.f32.mrb[0].mxu0
        %2521 = vmatprep.mubr.bf16.mxu0 %v1775
        %2522 = vmatmul.mubr.bf16.gmra.mrb[0].mxu0 %v1774
        %v2523 = vpop.f32.mrb[0].mxu0
        %v2524 = vadd.f32 %v2235, %v2523
        %v2525 = vpop.f32.mrb[0].mxu0
        %v2526 = vpop.f32.mrb[0].mxu0
        %v2527 = vadd.f32 %v2238, %v2526
        %v2528 = vpop.f32.mrb[0].mxu0
        %2529 = vmatprep.mubr.bf16.mxu0 %v1779
        %2530 = vmatmul.mubr.bf16.gmra.mrb[0].mxu0 %v1778
        %v2531 = vpop.f32.mrb[0].mxu0
        %v2532 = vadd.f32 %v2243, %v2531
        %v2533 = vpop.f32.mrb[0].mxu0
        %v2534 = vpop.f32.mrb[0].mxu0
        %v2535 = vadd.f32 %v2246, %v2534
        %v2536 = vpop.f32.mrb[0].mxu0
        %2537 = vmatprep.mubr.bf16.mxu0 %v1783
        %2538 = vmatmul.mubr.bf16.gmra.mrb[0].mxu0 %v1782
        %v2539 = vpop.f32.mrb[0].mxu0
        %v2540 = vadd.f32 %v2251, %v2539
        %v2541 = vpop.f32.mrb[0].mxu0
        %v2542 = vpop.f32.mrb[0].mxu0
        %v2543 = vadd.f32 %v2254, %v2542
        %v2544 = vpop.f32.mrb[0].mxu0
        %2545 = vmatprep.mubr.bf16.mxu0 %v1787
        %2546 = vmatmul.mubr.bf16.gmra.mrb[0].mxu0 %v1786
        %v2547 = vpop.f32.mrb[0].mxu0
        %v2548 = vadd.f32 %v2259, %v2547
        %v2549 = vpop.f32.mrb[0].mxu0
        %v2550 = vpop.f32.mrb[0].mxu0
        %v2551 = vadd.f32 %v2262, %v2550
        %v2552 = vpop.f32.mrb[0].mxu0
        %2553 = vmatprep.mubr.bf16.mxu0 %v1791
        %2554 = vmatmul.mubr.bf16.gmra.mrb[0].mxu0 %v1790
        %v2555 = vpop.f32.mrb[0].mxu0
        %v2556 = vadd.f32 %v2267, %v2555
        %v2557 = vpop.f32.mrb[0].mxu0
        %v2558 = vpop.f32.mrb[0].mxu0
        %v2559 = vadd.f32 %v2270, %v2558
        %v2560 = vpop.f32.mrb[0].mxu0
        %2561 = vmatprep.mubr.bf16.mxu0 %v1795
        %2562 = vmatmul.mubr.bf16.gmra.mrb[0].mxu0 %v1794
        %v2563 = vpop.f32.mrb[0].mxu0
        %v2564 = vadd.f32 %v2275, %v2563
        %v2565 = vpop.f32.mrb[0].mxu0
        %v2566 = vpop.f32.mrb[0].mxu0
        %v2567 = vadd.f32 %v2278, %v2566
        %v2568 = vpop.f32.mrb[0].mxu0
        %2569 = vmatprep.mubr.bf16.mxu0 %v1799
        %2570 = vmatmul.mubr.bf16.gmra.mrb[0].mxu0 %v1798
        %v2571 = vpop.f32.mrb[0].mxu0
        %v2572 = vadd.f32 %v2283, %v2571
        %v2573 = vpop.f32.mrb[0].mxu0
        %v2574 = vpop.f32.mrb[0].mxu0
        %v2575 = vadd.f32 %v2286, %v2574
        %v2576 = vpop.f32.mrb[0].mxu0
        %2577 = vmatprep.mubr.bf16.mxu0 %v1803
        %2578 = vmatmul.mubr.bf16.gmra.mrb[0].mxu0 %v1802
        %v2579 = vpop.f32.mrb[0].mxu0
        %v2580 = vadd.f32 %v2291, %v2579
        %v2581 = vpop.f32.mrb[0].mxu0
        %v2582 = vpop.f32.mrb[0].mxu0
        %v2583 = vadd.f32 %v2294, %v2582
        %v2584 = vpop.f32.mrb[0].mxu0
        %2585 = vmatprep.mubr.bf16.mxu0 %v1807
        %2586 = vmatmul.mubr.bf16.gmra.mrb[0].mxu0 %v1806
        %v2587 = vpop.f32.mrb[0].mxu0
        %v2588 = vadd.f32 %v2299, %v2587
        %v2589 = vpop.f32.mrb[0].mxu0
        %v2590 = vpop.f32.mrb[0].mxu0
        %v2591 = vadd.f32 %v2302, %v2590
        %v2592 = vpop.f32.mrb[0].mxu0
        %2593 = vmatprep.mubr.bf16.mxu0 %v1811
        %2594 = vmatmul.mubr.bf16.gmra.mrb[0].mxu0 %v1810
        %v2595 = vpop.f32.mrb[0].mxu0
        %v2596 = vadd.f32 %v2307, %v2595
        %v2597 = vpop.f32.mrb[0].mxu0
        %v2598 = vpop.f32.mrb[0].mxu0
        %v2599 = vadd.f32 %v2310, %v2598
        %v2600 = vpop.f32.mrb[0].mxu0
        %2601 = vmatprep.mubr.bf16.mxu0 %v1815
        %2602 = vmatmul.mubr.bf16.gmra.mrb[0].mxu0 %v1814
        %v2603 = vpop.f32.mrb[0].mxu0
        %v2604 = vadd.f32 %v2315, %v2603
        %v2605 = vpop.f32.mrb[0].mxu0
        %v2606 = vpop.f32.mrb[0].mxu0
        %v2607 = vadd.f32 %v2318, %v2606
        %v2608 = vpop.f32.mrb[0].mxu0
        %2609 = vmatprep.mubr.bf16.mxu0 %v1819
        %2610 = vmatmul.mubr.bf16.gmra.mrb[0].mxu0 %v1818
        %v2611 = vpop.f32.mrb[0].mxu0
        %v2612 = vadd.f32 %v2323, %v2611
        %v2613 = vpop.f32.mrb[0].mxu0
        %v2614 = vpop.f32.mrb[0].mxu0
        %v2615 = vadd.f32 %v2326, %v2614
        %v2616 = vpop.f32.mrb[0].mxu0
        %2617 = vmatprep.mubr.bf16.mxu0 %v1823
        %2618 = vmatmul.mubr.bf16.gmra.mrb[0].mxu0 %v1822
        %v2619 = vpop.f32.mrb[0].mxu0
        %v2620 = vadd.f32 %v2331, %v2619
        %v2621 = vpop.f32.mrb[0].mxu0
        %v2622 = vpop.f32.mrb[0].mxu0
        %v2623 = vadd.f32 %v2334, %v2622
        %v2624 = vpop.f32.mrb[0].mxu0
        %2625 = vmatprep.mubr.bf16.mxu0 %v1827
        %2626 = vmatmul.mubr.bf16.gmra.mrb[0].mxu0 %v1826
        %v2627 = vpop.f32.mrb[0].mxu0
        %v2628 = vadd.f32 %v2339, %v2627
        %v2629 = vpop.f32.mrb[0].mxu0
        %v2630 = vpop.f32.mrb[0].mxu0
        %v2631 = vadd.f32 %v2342, %v2630
        %v2632 = vpop.f32.mrb[0].mxu0
        %2633 = vmatprep.mubr.bf16.mxu0 %v1831
        %2634 = vmatmul.mubr.bf16.gmra.mrb[0].mxu0 %v1830
        %v2635 = vpop.f32.mrb[0].mxu0
        %v2636 = vadd.f32 %v2347, %v2635
        %v2637 = vpop.f32.mrb[0].mxu0
        %v2638 = vpop.f32.mrb[0].mxu0
        %v2639 = vadd.f32 %v2350, %v2638
        %v2640 = vpop.f32.mrb[0].mxu0
        %2641 = vmatprep.mubr.bf16.mxu0 %v1835
        %2642 = vmatmul.mubr.bf16.gmra.mrb[0].mxu0 %v1834
        %v2643 = vpop.f32.mrb[0].mxu0
        %v2644 = vadd.f32 %v2355, %v2643
        %v2645 = vpop.f32.mrb[0].mxu0
        %v2646 = vpop.f32.mrb[0].mxu0
        %v2647 = vadd.f32 %v2358, %v2646
        %v2648 = vpop.f32.mrb[0].mxu0
        %2649 = vmatprep.mubr.bf16.mxu0 %v1839
        %2650 = vmatmul.mubr.bf16.gmra.mrb[0].mxu0 %v1838
        %v2651 = vpop.f32.mrb[0].mxu0
        %v2652 = vadd.f32 %v2363, %v2651
        %v2653 = vpop.f32.mrb[0].mxu0
        %v2654 = vpop.f32.mrb[0].mxu0
        %v2655 = vadd.f32 %v2366, %v2654
        %v2656 = vpop.f32.mrb[0].mxu0
        %2657 = vmatprep.mubr.bf16.mxu0 %v1843
        %2658 = vmatmul.mubr.bf16.gmra.mrb[0].mxu0 %v1842
        %v2659 = vpop.f32.mrb[0].mxu0
        %v2660 = vadd.f32 %v2371, %v2659
        %v2661 = vpop.f32.mrb[0].mxu0
        %v2662 = vpop.f32.mrb[0].mxu0
        %v2663 = vadd.f32 %v2374, %v2662
        %v2664 = vpop.f32.mrb[0].mxu0
        %2665 = vmatprep.mubr.bf16.mxu0 %v1847
        %2666 = vmatmul.mubr.bf16.gmra.mrb[0].mxu0 %v1846
        %v2667 = vpop.f32.mrb[0].mxu0
        %v2668 = vadd.f32 %v2379, %v2667
        %v2669 = vpop.f32.mrb[0].mxu0
        %v2670 = vpop.f32.mrb[0].mxu0
        %v2671 = vadd.f32 %v2382, %v2670
        %v2672 = vpop.f32.mrb[0].mxu0
        %2673 = vmatprep.mubr.bf16.mxu0 %v1851
        %2674 = vmatmul.mubr.bf16.gmra.mrb[0].mxu0 %v1850
        %v2675 = vpop.f32.mrb[0].mxu0
        %v2676 = vadd.f32 %v2387, %v2675
        %v2677 = vpop.f32.mrb[0].mxu0
        %v2678 = vpop.f32.mrb[0].mxu0
        %v2679 = vadd.f32 %v2390, %v2678
        %v2680 = vpop.f32.mrb[0].mxu0
        %2681 = vmatprep.mubr.bf16.mxu0 %v1855
        %2682 = vmatmul.mubr.bf16.gmra.mrb[0].mxu0 %v1854
        %v2683 = vpop.f32.mrb[0].mxu0
        %v2684 = vadd.f32 %v2395, %v2683
        %v2685 = vpop.f32.mrb[0].mxu0
        %v2686 = vpop.f32.mrb[0].mxu0
        %v2687 = vadd.f32 %v2398, %v2686
        %v2688 = vpop.f32.mrb[0].mxu0
        %2689 = vdwg.mxu0
        %v2690 = vadd.f32 %v1664, %v2436
        %v2691 = vadd.f32 %v1665, %v2439
        %v2692 = vadd.f32 %v1666, %v2444
        %v2693 = vadd.f32 %v1667, %v2447
        %v2694 = vadd.f32 %v1668, %v2452
        %v2695 = vadd.f32 %v1669, %v2455
        %v2696 = vadd.f32 %v1670, %v2460
        %v2697 = vadd.f32 %v1671, %v2463
        %v2698 = vadd.f32 %v1672, %v2468
        %v2699 = vadd.f32 %v1673, %v2471
        %v2700 = vadd.f32 %v1674, %v2476
        %v2701 = vadd.f32 %v1675, %v2479
        %v2702 = vadd.f32 %v1676, %v2484
        %v2703 = vadd.f32 %v1677, %v2487
        %v2704 = vadd.f32 %v1678, %v2492
        %v2705 = vadd.f32 %v1679, %v2495
        %v2706 = vadd.f32 %v1680, %v2500
        %v2707 = vadd.f32 %v1681, %v2503
        %v2708 = vadd.f32 %v1682, %v2508
        %v2709 = vadd.f32 %v1683, %v2511
        %v2710 = vadd.f32 %v1684, %v2516
        %v2711 = vadd.f32 %v1685, %v2519
        %v2712 = vadd.f32 %v1686, %v2524
        %v2713 = vadd.f32 %v1687, %v2527
        %v2714 = vadd.f32 %v1688, %v2532
        %v2715 = vadd.f32 %v1689, %v2535
        %v2716 = vadd.f32 %v1690, %v2540
        %v2717 = vadd.f32 %v1691, %v2543
        %v2718 = vadd.f32 %v1692, %v2548
        %v2719 = vadd.f32 %v1693, %v2551
        %v2720 = vadd.f32 %v1694, %v2556
        %v2721 = vadd.f32 %v1695, %v2559
        %v2722 = vadd.f32 %v1696, %v2564
        %v2723 = vadd.f32 %v1697, %v2567
        %v2724 = vadd.f32 %v1698, %v2572
        %v2725 = vadd.f32 %v1699, %v2575
        %v2726 = vadd.f32 %v1700, %v2580
        %v2727 = vadd.f32 %v1701, %v2583
        %v2728 = vadd.f32 %v1702, %v2588
        %v2729 = vadd.f32 %v1703, %v2591
        %v2730 = vadd.f32 %v1704, %v2596
        %v2731 = vadd.f32 %v1705, %v2599
        %v2732 = vadd.f32 %v1706, %v2604
        %v2733 = vadd.f32 %v1707, %v2607
        %v2734 = vadd.f32 %v1708, %v2612
        %v2735 = vadd.f32 %v1709, %v2615
        %v2736 = vadd.f32 %v1710, %v2620
        %v2737 = vadd.f32 %v1711, %v2623
        %v2738 = vadd.f32 %v1712, %v2628
        %v2739 = vadd.f32 %v1713, %v2631
        %v2740 = vadd.f32 %v1714, %v2636
        %v2741 = vadd.f32 %v1715, %v2639
        %v2742 = vadd.f32 %v1716, %v2644
        %v2743 = vadd.f32 %v1717, %v2647
        %v2744 = vadd.f32 %v1718, %v2652
        %v2745 = vadd.f32 %v1719, %v2655
        %v2746 = vadd.f32 %v1720, %v2660
        %v2747 = vadd.f32 %v1721, %v2663
        %v2748 = vadd.f32 %v1722, %v2668
        %v2749 = vadd.f32 %v1723, %v2671
        %v2750 = vadd.f32 %v1724, %v2676
        %v2751 = vadd.f32 %v1725, %v2679
        %v2752 = vadd.f32 %v1726, %v2684
        %v2753 = vadd.f32 %v1727, %v2687
        %2754 = vst [vmem:[#allocation2] sm:$0xff] %v2690
        %2755 = vst [vmem:[#allocation2 + $0x8] sm:$0xff] %v2691
        %2756 = vst [vmem:[#allocation2 + $0x10] sm:$0xff] %v2692
        %2757 = vst [vmem:[#allocation2 + $0x18] sm:$0xff] %v2693
        %2758 = vst [vmem:[#allocation2 + $0x20] sm:$0xff] %v2694
        %2759 = vst [vmem:[#allocation2 + $0x28] sm:$0xff] %v2695
        %2760 = vst [vmem:[#allocation2 + $0x30] sm:$0xff] %v2696
        %2761 = vst [vmem:[#allocation2 + $0x38] sm:$0xff] %v2697
        %2762 = vst [vmem:[#allocation2 + $0x40] sm:$0xff] %v2698
        %2763 = vst [vmem:[#allocation2 + $0x48] sm:$0xff] %v2699
        %2764 = vst [vmem:[#allocation2 + $0x50] sm:$0xff] %v2700
        %2765 = vst [vmem:[#allocation2 + $0x58] sm:$0xff] %v2701
        %2766 = vst [vmem:[#allocation2 + $0x60] sm:$0xff] %v2702
        %2767 = vst [vmem:[#allocation2 + $0x68] sm:$0xff] %v2703
        %2768 = vst [vmem:[#allocation2 + $0x70] sm:$0xff] %v2704
        %2769 = vst [vmem:[#allocation2 + $0x78] sm:$0xff] %v2705
        %2770 = vst [vmem:[#allocation2 + $0x80] sm:$0xff] %v2706
        %2771 = vst [vmem:[#allocation2 + $0x88] sm:$0xff] %v2707
        %2772 = vst [vmem:[#allocation2 + $0x90] sm:$0xff] %v2708
        %2773 = vst [vmem:[#allocation2 + $0x98] sm:$0xff] %v2709
        %2774 = vst [vmem:[#allocation2 + $0xa0] sm:$0xff] %v2710
        %2775 = vst [vmem:[#allocation2 + $0xa8] sm:$0xff] %v2711
        %2776 = vst [vmem:[#allocation2 + $0xb0] sm:$0xff] %v2712
        %2777 = vst [vmem:[#allocation2 + $0xb8] sm:$0xff] %v2713
        %2778 = vst [vmem:[#allocation2 + $0xc0] sm:$0xff] %v2714
        %2779 = vst [vmem:[#allocation2 + $0xc8] sm:$0xff] %v2715
        %2780 = vst [vmem:[#allocation2 + $0xd0] sm:$0xff] %v2716
        %2781 = vst [vmem:[#allocation2 + $0xd8] sm:$0xff] %v2717
        %2782 = vst [vmem:[#allocation2 + $0xe0] sm:$0xff] %v2718
        %2783 = vst [vmem:[#allocation2 + $0xe8] sm:$0xff] %v2719
        %2784 = vst [vmem:[#allocation2 + $0xf0] sm:$0xff] %v2720
        %2785 = vst [vmem:[#allocation2 + $0xf8] sm:$0xff] %v2721
        %2786 = vst [vmem:[#allocation2 + $0x100] sm:$0xff] %v2722
        %2787 = vst [vmem:[#allocation2 + $0x108] sm:$0xff] %v2723
        %2788 = vst [vmem:[#allocation2 + $0x110] sm:$0xff] %v2724
        %2789 = vst [vmem:[#allocation2 + $0x118] sm:$0xff] %v2725
        %2790 = vst [vmem:[#allocation2 + $0x120] sm:$0xff] %v2726
        %2791 = vst [vmem:[#allocation2 + $0x128] sm:$0xff] %v2727
        %2792 = vst [vmem:[#allocation2 + $0x130] sm:$0xff] %v2728
        %2793 = vst [vmem:[#allocation2 + $0x138] sm:$0xff] %v2729
        %2794 = vst [vmem:[#allocation2 + $0x140] sm:$0xff] %v2730
        %2795 = vst [vmem:[#allocation2 + $0x148] sm:$0xff] %v2731
        %2796 = vst [vmem:[#allocation2 + $0x150] sm:$0xff] %v2732
        %2797 = vst [vmem:[#allocation2 + $0x158] sm:$0xff] %v2733
        %2798 = vst [vmem:[#allocation2 + $0x160] sm:$0xff] %v2734
        %2799 = vst [vmem:[#allocation2 + $0x168] sm:$0xff] %v2735
        %2800 = vst [vmem:[#allocation2 + $0x170] sm:$0xff] %v2736
        %2801 = vst [vmem:[#allocation2 + $0x178] sm:$0xff] %v2737
        %2802 = vst [vmem:[#allocation2 + $0x180] sm:$0xff] %v2738
        %2803 = vst [vmem:[#allocation2 + $0x188] sm:$0xff] %v2739
        %2804 = vst [vmem:[#allocation2 + $0x190] sm:$0xff] %v2740
        %2805 = vst [vmem:[#allocation2 + $0x198] sm:$0xff] %v2741
        %2806 = vst [vmem:[#allocation2 + $0x1a0] sm:$0xff] %v2742
        %2807 = vst [vmem:[#allocation2 + $0x1a8] sm:$0xff] %v2743
        %2808 = vst [vmem:[#allocation2 + $0x1b0] sm:$0xff] %v2744
        %2809 = vst [vmem:[#allocation2 + $0x1b8] sm:$0xff] %v2745
        %2810 = vst [vmem:[#allocation2 + $0x1c0] sm:$0xff] %v2746
        %2811 = vst [vmem:[#allocation2 + $0x1c8] sm:$0xff] %v2747
        %2812 = vst [vmem:[#allocation2 + $0x1d0] sm:$0xff] %v2748
        %2813 = vst [vmem:[#allocation2 + $0x1d8] sm:$0xff] %v2749
        %2814 = vst [vmem:[#allocation2 + $0x1e0] sm:$0xff] %v2750
        %2815 = vst [vmem:[#allocation2 + $0x1e8] sm:$0xff] %v2751
        %2816 = vst [vmem:[#allocation2 + $0x1f0] sm:$0xff] %v2752
        %2817 = vst [vmem:[#allocation2 + $0x1f8] sm:$0xff] %v2753
        // Predicated region
        $region57: #{tpu_custom_call.1} parent=39 // pred_check
          %p2818 = pneg %p324
        $region58: #{tpu_custom_call.1} parent=39 // pred_check_branch
          %2820 = sbr.rel (%p2818) target = $region60
        $region59: #{tpu_custom_call.1} parent=39 // pred_region
          %v2821 = vld [vmem:[#allocation2] sm:$0xff]
          %v2822 = vld [vmem:[#allocation2 + $0x8] sm:$0xff]
          %v2823 = vld [vmem:[#allocation2 + $0x10] sm:$0xff]
          %v2824 = vld [vmem:[#allocation2 + $0x18] sm:$0xff]
          %v2825 = vld [vmem:[#allocation2 + $0x20] sm:$0xff]
          %v2826 = vld [vmem:[#allocation2 + $0x28] sm:$0xff]
          %v2827 = vld [vmem:[#allocation2 + $0x30] sm:$0xff]
          %v2828 = vld [vmem:[#allocation2 + $0x38] sm:$0xff]
          %v2829 = vld [vmem:[#allocation2 + $0x40] sm:$0xff]
          %v2830 = vld [vmem:[#allocation2 + $0x48] sm:$0xff]
          %v2831 = vld [vmem:[#allocation2 + $0x50] sm:$0xff]
          %v2832 = vld [vmem:[#allocation2 + $0x58] sm:$0xff]
          %v2833 = vld [vmem:[#allocation2 + $0x60] sm:$0xff]
          %v2834 = vld [vmem:[#allocation2 + $0x68] sm:$0xff]
          %v2835 = vld [vmem:[#allocation2 + $0x70] sm:$0xff]
          %v2836 = vld [vmem:[#allocation2 + $0x78] sm:$0xff]
          %v2837 = vld [vmem:[#allocation2 + $0x80] sm:$0xff]
          %v2838 = vld [vmem:[#allocation2 + $0x88] sm:$0xff]
          %v2839 = vld [vmem:[#allocation2 + $0x90] sm:$0xff]
          %v2840 = vld [vmem:[#allocation2 + $0x98] sm:$0xff]
          %v2841 = vld [vmem:[#allocation2 + $0xa0] sm:$0xff]
          %v2842 = vld [vmem:[#allocation2 + $0xa8] sm:$0xff]
          %v2843 = vld [vmem:[#allocation2 + $0xb0] sm:$0xff]
          %v2844 = vld [vmem:[#allocation2 + $0xb8] sm:$0xff]
          %v2845 = vld [vmem:[#allocation2 + $0xc0] sm:$0xff]
          %v2846 = vld [vmem:[#allocation2 + $0xc8] sm:$0xff]
          %v2847 = vld [vmem:[#allocation2 + $0xd0] sm:$0xff]
          %v2848 = vld [vmem:[#allocation2 + $0xd8] sm:$0xff]
          %v2849 = vld [vmem:[#allocation2 + $0xe0] sm:$0xff]
          %v2850 = vld [vmem:[#allocation2 + $0xe8] sm:$0xff]
          %v2851 = vld [vmem:[#allocation2 + $0xf0] sm:$0xff]
          %v2852 = vld [vmem:[#allocation2 + $0xf8] sm:$0xff]
          %v2853 = vld [vmem:[#allocation2 + $0x100] sm:$0xff]
          %v2854 = vld [vmem:[#allocation2 + $0x108] sm:$0xff]
          %v2855 = vld [vmem:[#allocation2 + $0x110] sm:$0xff]
          %v2856 = vld [vmem:[#allocation2 + $0x118] sm:$0xff]
          %v2857 = vld [vmem:[#allocation2 + $0x120] sm:$0xff]
          %v2858 = vld [vmem:[#allocation2 + $0x128] sm:$0xff]
          %v2859 = vld [vmem:[#allocation2 + $0x130] sm:$0xff]
          %v2860 = vld [vmem:[#allocation2 + $0x138] sm:$0xff]
          %v2861 = vld [vmem:[#allocation2 + $0x140] sm:$0xff]
          %v2862 = vld [vmem:[#allocation2 + $0x148] sm:$0xff]
          %v2863 = vld [vmem:[#allocation2 + $0x150] sm:$0xff]
          %v2864 = vld [vmem:[#allocation2 + $0x158] sm:$0xff]
          %v2865 = vld [vmem:[#allocation2 + $0x160] sm:$0xff]
          %v2866 = vld [vmem:[#allocation2 + $0x168] sm:$0xff]
          %v2867 = vld [vmem:[#allocation2 + $0x170] sm:$0xff]
          %v2868 = vld [vmem:[#allocation2 + $0x178] sm:$0xff]
          %v2869 = vld [vmem:[#allocation2 + $0x180] sm:$0xff]
          %v2870 = vld [vmem:[#allocation2 + $0x188] sm:$0xff]
          %v2871 = vld [vmem:[#allocation2 + $0x190] sm:$0xff]
          %v2872 = vld [vmem:[#allocation2 + $0x198] sm:$0xff]
          %v2873 = vld [vmem:[#allocation2 + $0x1a0] sm:$0xff]
          %v2874 = vld [vmem:[#allocation2 + $0x1a8] sm:$0xff]
          %v2875 = vld [vmem:[#allocation2 + $0x1b0] sm:$0xff]
          %v2876 = vld [vmem:[#allocation2 + $0x1b8] sm:$0xff]
          %v2877 = vld [vmem:[#allocation2 + $0x1c0] sm:$0xff]
          %v2878 = vld [vmem:[#allocation2 + $0x1c8] sm:$0xff]
          %v2879 = vld [vmem:[#allocation2 + $0x1d0] sm:$0xff]
          %v2880 = vld [vmem:[#allocation2 + $0x1d8] sm:$0xff]
          %v2881 = vld [vmem:[#allocation2 + $0x1e0] sm:$0xff]
          %v2882 = vld [vmem:[#allocation2 + $0x1e8] sm:$0xff]
          %v2883 = vld [vmem:[#allocation2 + $0x1f0] sm:$0xff]
          %v2884 = vld [vmem:[#allocation2 + $0x1f8] sm:$0xff]
          %v2885 = vadd.f32 %v392, %v2821
          %v2886 = vadd.f32 %v393, %v2822
          %v2887 = vadd.f32 %v394, %v2823
          %v2888 = vadd.f32 %v395, %v2824
          %v2889 = vadd.f32 %v396, %v2825
          %v2890 = vadd.f32 %v397, %v2826
          %v2891 = vadd.f32 %v398, %v2827
          %v2892 = vadd.f32 %v399, %v2828
          %v2893 = vadd.f32 %v400, %v2829
          %v2894 = vadd.f32 %v401, %v2830
          %v2895 = vadd.f32 %v402, %v2831
          %v2896 = vadd.f32 %v403, %v2832
          %v2897 = vadd.f32 %v404, %v2833
          %v2898 = vadd.f32 %v405, %v2834
          %v2899 = vadd.f32 %v406, %v2835
          %v2900 = vadd.f32 %v407, %v2836
          %v2901 = vadd.f32 %v408, %v2837
          %v2902 = vadd.f32 %v409, %v2838
          %v2903 = vadd.f32 %v410, %v2839
          %v2904 = vadd.f32 %v411, %v2840
          %v2905 = vadd.f32 %v412, %v2841
          %v2906 = vadd.f32 %v413, %v2842
          %v2907 = vadd.f32 %v414, %v2843
          %v2908 = vadd.f32 %v415, %v2844
          %v2909 = vadd.f32 %v416, %v2845
          %v2910 = vadd.f32 %v417, %v2846
          %v2911 = vadd.f32 %v418, %v2847
          %v2912 = vadd.f32 %v419, %v2848
          %v2913 = vadd.f32 %v420, %v2849
          %v2914 = vadd.f32 %v421, %v2850
          %v2915 = vadd.f32 %v422, %v2851
          %v2916 = vadd.f32 %v423, %v2852
          %v2917 = vadd.f32 %v424, %v2853
          %v2918 = vadd.f32 %v425, %v2854
          %v2919 = vadd.f32 %v426, %v2855
          %v2920 = vadd.f32 %v427, %v2856
          %v2921 = vadd.f32 %v428, %v2857
          %v2922 = vadd.f32 %v429, %v2858
          %v2923 = vadd.f32 %v430, %v2859
          %v2924 = vadd.f32 %v431, %v2860
          %v2925 = vadd.f32 %v432, %v2861
          %v2926 = vadd.f32 %v433, %v2862
          %v2927 = vadd.f32 %v434, %v2863
          %v2928 = vadd.f32 %v435, %v2864
          %v2929 = vadd.f32 %v436, %v2865
          %v2930 = vadd.f32 %v437, %v2866
          %v2931 = vadd.f32 %v438, %v2867
          %v2932 = vadd.f32 %v439, %v2868
          %v2933 = vadd.f32 %v440, %v2869
          %v2934 = vadd.f32 %v441, %v2870
          %v2935 = vadd.f32 %v442, %v2871
          %v2936 = vadd.f32 %v443, %v2872
          %v2937 = vadd.f32 %v444, %v2873
          %v2938 = vadd.f32 %v445, %v2874
          %v2939 = vadd.f32 %v446, %v2875
          %v2940 = vadd.f32 %v447, %v2876
          %v2941 = vadd.f32 %v448, %v2877
          %v2942 = vadd.f32 %v449, %v2878
          %v2943 = vadd.f32 %v450, %v2879
          %v2944 = vadd.f32 %v451, %v2880
          %v2945 = vadd.f32 %v452, %v2881
          %v2946 = vadd.f32 %v453, %v2882
          %v2947 = vadd.f32 %v454, %v2883
          %v2948 = vadd.f32 %v455, %v2884
          %v2949 = vld [vmem:[%s4] sm:$0x1]
          %v2950 = vlaneseq
          %v2951 = vshrl.u32 %v2950, 7
          %v2952 = vsub.s32 0, %v2951
          %v2953 = vrot.slane %v2949, %v2952
          %v2954 = vadd.f32 %v2885, %v2953
          %v2955 = vadd.f32 %v2886, %v2953
          %v2956 = vadd.f32 %v2887, %v2953
          %v2957 = vadd.f32 %v2888, %v2953
          %v2958 = vadd.f32 %v2889, %v2953
          %v2959 = vadd.f32 %v2890, %v2953
          %v2960 = vadd.f32 %v2891, %v2953
          %v2961 = vadd.f32 %v2892, %v2953
          %v2962 = vadd.f32 %v2893, %v2953
          %v2963 = vadd.f32 %v2894, %v2953
          %v2964 = vadd.f32 %v2895, %v2953
          %v2965 = vadd.f32 %v2896, %v2953
          %v2966 = vadd.f32 %v2897, %v2953
          %v2967 = vadd.f32 %v2898, %v2953
          %v2968 = vadd.f32 %v2899, %v2953
          %v2969 = vadd.f32 %v2900, %v2953
          %v2970 = vadd.f32 %v2901, %v2953
          %v2971 = vadd.f32 %v2902, %v2953
          %v2972 = vadd.f32 %v2903, %v2953
          %v2973 = vadd.f32 %v2904, %v2953
          %v2974 = vadd.f32 %v2905, %v2953
          %v2975 = vadd.f32 %v2906, %v2953
          %v2976 = vadd.f32 %v2907, %v2953
          %v2977 = vadd.f32 %v2908, %v2953
          %v2978 = vadd.f32 %v2909, %v2953
          %v2979 = vadd.f32 %v2910, %v2953
          %v2980 = vadd.f32 %v2911, %v2953
          %v2981 = vadd.f32 %v2912, %v2953
          %v2982 = vadd.f32 %v2913, %v2953
          %v2983 = vadd.f32 %v2914, %v2953
          %v2984 = vadd.f32 %v2915, %v2953
          %v2985 = vadd.f32 %v2916, %v2953
          %v2986 = vadd.f32 %v2917, %v2953
          %v2987 = vadd.f32 %v2918, %v2953
          %v2988 = vadd.f32 %v2919, %v2953
          %v2989 = vadd.f32 %v2920, %v2953
          %v2990 = vadd.f32 %v2921, %v2953
          %v2991 = vadd.f32 %v2922, %v2953
          %v2992 = vadd.f32 %v2923, %v2953
          %v2993 = vadd.f32 %v2924, %v2953
          %v2994 = vadd.f32 %v2925, %v2953
          %v2995 = vadd.f32 %v2926, %v2953
          %v2996 = vadd.f32 %v2927, %v2953
          %v2997 = vadd.f32 %v2928, %v2953
          %v2998 = vadd.f32 %v2929, %v2953
          %v2999 = vadd.f32 %v2930, %v2953
          %v3000 = vadd.f32 %v2931, %v2953
          %v3001 = vadd.f32 %v2932, %v2953
          %v3002 = vadd.f32 %v2933, %v2953
          %v3003 = vadd.f32 %v2934, %v2953
          %v3004 = vadd.f32 %v2935, %v2953
          %v3005 = vadd.f32 %v2936, %v2953
          %v3006 = vadd.f32 %v2937, %v2953
          %v3007 = vadd.f32 %v2938, %v2953
          %v3008 = vadd.f32 %v2939, %v2953
          %v3009 = vadd.f32 %v2940, %v2953
          %v3010 = vadd.f32 %v2941, %v2953
          %v3011 = vadd.f32 %v2942, %v2953
          %v3012 = vadd.f32 %v2943, %v2953
          %v3013 = vadd.f32 %v2944, %v2953
          %v3014 = vadd.f32 %v2945, %v2953
          %v3015 = vadd.f32 %v2946, %v2953
          %v3016 = vadd.f32 %v2947, %v2953
          %v3017 = vadd.f32 %v2948, %v2953
          %3018 = vadd.xlane.f32.xlu0 %v2954
          %v3019 = vpop.xlane.xlu0 %3018
          %3020 = vadd.xlane.f32.xlu0 %v2955
          %v3021 = vpop.xlane.xlu0 %3020
          %3022 = vadd.xlane.f32.xlu0 %v2956
          %v3023 = vpop.xlane.xlu0 %3022
          %3024 = vadd.xlane.f32.xlu0 %v2957
          %v3025 = vpop.xlane.xlu0 %3024
          %3026 = vadd.xlane.f32.xlu0 %v2958
          %v3027 = vpop.xlane.xlu0 %3026
          %3028 = vadd.xlane.f32.xlu0 %v2959
          %v3029 = vpop.xlane.xlu0 %3028
          %3030 = vadd.xlane.f32.xlu0 %v2960
          %v3031 = vpop.xlane.xlu0 %3030
          %3032 = vadd.xlane.f32.xlu0 %v2961
          %v3033 = vpop.xlane.xlu0 %3032
          %3034 = vadd.xlane.f32.xlu0 %v2962
          %v3035 = vpop.xlane.xlu0 %3034
          %3036 = vadd.xlane.f32.xlu0 %v2963
          %v3037 = vpop.xlane.xlu0 %3036
          %3038 = vadd.xlane.f32.xlu0 %v2964
          %v3039 = vpop.xlane.xlu0 %3038
          %3040 = vadd.xlane.f32.xlu0 %v2965
          %v3041 = vpop.xlane.xlu0 %3040
          %3042 = vadd.xlane.f32.xlu0 %v2966
          %v3043 = vpop.xlane.xlu0 %3042
          %3044 = vadd.xlane.f32.xlu0 %v2967
          %v3045 = vpop.xlane.xlu0 %3044
          %3046 = vadd.xlane.f32.xlu0 %v2968
          %v3047 = vpop.xlane.xlu0 %3046
          %3048 = vadd.xlane.f32.xlu0 %v2969
          %v3049 = vpop.xlane.xlu0 %3048
          %3050 = vadd.xlane.f32.xlu0 %v2970
          %v3051 = vpop.xlane.xlu0 %3050
          %3052 = vadd.xlane.f32.xlu0 %v2971
          %v3053 = vpop.xlane.xlu0 %3052
          %3054 = vadd.xlane.f32.xlu0 %v2972
          %v3055 = vpop.xlane.xlu0 %3054
          %3056 = vadd.xlane.f32.xlu0 %v2973
          %v3057 = vpop.xlane.xlu0 %3056
          %3058 = vadd.xlane.f32.xlu0 %v2974
          %v3059 = vpop.xlane.xlu0 %3058
          %3060 = vadd.xlane.f32.xlu0 %v2975
          %v3061 = vpop.xlane.xlu0 %3060
          %3062 = vadd.xlane.f32.xlu0 %v2976
          %v3063 = vpop.xlane.xlu0 %3062
          %3064 = vadd.xlane.f32.xlu0 %v2977
          %v3065 = vpop.xlane.xlu0 %3064
          %3066 = vadd.xlane.f32.xlu0 %v2978
          %v3067 = vpop.xlane.xlu0 %3066
          %3068 = vadd.xlane.f32.xlu0 %v2979
          %v3069 = vpop.xlane.xlu0 %3068
          %3070 = vadd.xlane.f32.xlu0 %v2980
          %v3071 = vpop.xlane.xlu0 %3070
          %3072 = vadd.xlane.f32.xlu0 %v2981
          %v3073 = vpop.xlane.xlu0 %3072
          %3074 = vadd.xlane.f32.xlu0 %v2982
          %v3075 = vpop.xlane.xlu0 %3074
          %3076 = vadd.xlane.f32.xlu0 %v2983
          %v3077 = vpop.xlane.xlu0 %3076
          %3078 = vadd.xlane.f32.xlu0 %v2984
          %v3079 = vpop.xlane.xlu0 %3078
          %3080 = vadd.xlane.f32.xlu0 %v2985
          %v3081 = vpop.xlane.xlu0 %3080
          %3082 = vadd.xlane.f32.xlu0 %v2986
          %v3083 = vpop.xlane.xlu0 %3082
          %3084 = vadd.xlane.f32.xlu0 %v2987
          %v3085 = vpop.xlane.xlu0 %3084
          %3086 = vadd.xlane.f32.xlu0 %v2988
          %v3087 = vpop.xlane.xlu0 %3086
          %3088 = vadd.xlane.f32.xlu0 %v2989
          %v3089 = vpop.xlane.xlu0 %3088
          %3090 = vadd.xlane.f32.xlu0 %v2990
          %v3091 = vpop.xlane.xlu0 %3090
          %3092 = vadd.xlane.f32.xlu0 %v2991
          %v3093 = vpop.xlane.xlu0 %3092
          %3094 = vadd.xlane.f32.xlu0 %v2992
          %v3095 = vpop.xlane.xlu0 %3094
          %3096 = vadd.xlane.f32.xlu0 %v2993
          %v3097 = vpop.xlane.xlu0 %3096
          %3098 = vadd.xlane.f32.xlu0 %v2994
          %v3099 = vpop.xlane.xlu0 %3098
          %3100 = vadd.xlane.f32.xlu0 %v2995
          %v3101 = vpop.xlane.xlu0 %3100
          %3102 = vadd.xlane.f32.xlu0 %v2996
          %v3103 = vpop.xlane.xlu0 %3102
          %3104 = vadd.xlane.f32.xlu0 %v2997
          %v3105 = vpop.xlane.xlu0 %3104
          %3106 = vadd.xlane.f32.xlu0 %v2998
          %v3107 = vpop.xlane.xlu0 %3106
          %3108 = vadd.xlane.f32.xlu0 %v2999
          %v3109 = vpop.xlane.xlu0 %3108
          %3110 = vadd.xlane.f32.xlu0 %v3000
          %v3111 = vpop.xlane.xlu0 %3110
          %3112 = vadd.xlane.f32.xlu0 %v3001
          %v3113 = vpop.xlane.xlu0 %3112
          %3114 = vadd.xlane.f32.xlu0 %v3002
          %v3115 = vpop.xlane.xlu0 %3114
          %3116 = vadd.xlane.f32.xlu0 %v3003
          %v3117 = vpop.xlane.xlu0 %3116
          %3118 = vadd.xlane.f32.xlu0 %v3004
          %v3119 = vpop.xlane.xlu0 %3118
          %3120 = vadd.xlane.f32.xlu0 %v3005
          %v3121 = vpop.xlane.xlu0 %3120
          %3122 = vadd.xlane.f32.xlu0 %v3006
          %v3123 = vpop.xlane.xlu0 %3122
          %3124 = vadd.xlane.f32.xlu0 %v3007
          %v3125 = vpop.xlane.xlu0 %3124
          %3126 = vadd.xlane.f32.xlu0 %v3008
          %v3127 = vpop.xlane.xlu0 %3126
          %3128 = vadd.xlane.f32.xlu0 %v3009
          %v3129 = vpop.xlane.xlu0 %3128
          %3130 = vadd.xlane.f32.xlu0 %v3010
          %v3131 = vpop.xlane.xlu0 %3130
          %3132 = vadd.xlane.f32.xlu0 %v3011
          %v3133 = vpop.xlane.xlu0 %3132
          %3134 = vadd.xlane.f32.xlu0 %v3012
          %v3135 = vpop.xlane.xlu0 %3134
          %3136 = vadd.xlane.f32.xlu0 %v3013
          %v3137 = vpop.xlane.xlu0 %3136
          %3138 = vadd.xlane.f32.xlu0 %v3014
          %v3139 = vpop.xlane.xlu0 %3138
          %3140 = vadd.xlane.f32.xlu0 %v3015
          %v3141 = vpop.xlane.xlu0 %3140
          %3142 = vadd.xlane.f32.xlu0 %v3016
          %v3143 = vpop.xlane.xlu0 %3142
          %3144 = vadd.xlane.f32.xlu0 %v3017
          %v3145 = vpop.xlane.xlu0 %3144
          %v3146 = vrcp.pop 128.0
          %v3147 = vmul.f32 %v3019, %v3146
          %v3148 = vmul.f32 %v3021, %v3146
          %v3149 = vmul.f32 %v3023, %v3146
          %v3150 = vmul.f32 %v3025, %v3146
          %v3151 = vmul.f32 %v3027, %v3146
          %v3152 = vmul.f32 %v3029, %v3146
          %v3153 = vmul.f32 %v3031, %v3146
          %v3154 = vmul.f32 %v3033, %v3146
          %v3155 = vmul.f32 %v3035, %v3146
          %v3156 = vmul.f32 %v3037, %v3146
          %v3157 = vmul.f32 %v3039, %v3146
          %v3158 = vmul.f32 %v3041, %v3146
          %v3159 = vmul.f32 %v3043, %v3146
          %v3160 = vmul.f32 %v3045, %v3146
          %v3161 = vmul.f32 %v3047, %v3146
          %v3162 = vmul.f32 %v3049, %v3146
          %v3163 = vmul.f32 %v3051, %v3146
          %v3164 = vmul.f32 %v3053, %v3146
          %v3165 = vmul.f32 %v3055, %v3146
          %v3166 = vmul.f32 %v3057, %v3146
          %v3167 = vmul.f32 %v3059, %v3146
          %v3168 = vmul.f32 %v3061, %v3146
          %v3169 = vmul.f32 %v3063, %v3146
          %v3170 = vmul.f32 %v3065, %v3146
          %v3171 = vmul.f32 %v3067, %v3146
          %v3172 = vmul.f32 %v3069, %v3146
          %v3173 = vmul.f32 %v3071, %v3146
          %v3174 = vmul.f32 %v3073, %v3146
          %v3175 = vmul.f32 %v3075, %v3146
          %v3176 = vmul.f32 %v3077, %v3146
          %v3177 = vmul.f32 %v3079, %v3146
          %v3178 = vmul.f32 %v3081, %v3146
          %v3179 = vmul.f32 %v3083, %v3146
          %v3180 = vmul.f32 %v3085, %v3146
          %v3181 = vmul.f32 %v3087, %v3146
          %v3182 = vmul.f32 %v3089, %v3146
          %v3183 = vmul.f32 %v3091, %v3146
          %v3184 = vmul.f32 %v3093, %v3146
          %v3185 = vmul.f32 %v3095, %v3146
          %v3186 = vmul.f32 %v3097, %v3146
          %v3187 = vmul.f32 %v3099, %v3146
          %v3188 = vmul.f32 %v3101, %v3146
          %v3189 = vmul.f32 %v3103, %v3146
          %v3190 = vmul.f32 %v3105, %v3146
          %v3191 = vmul.f32 %v3107, %v3146
          %v3192 = vmul.f32 %v3109, %v3146
          %v3193 = vmul.f32 %v3111, %v3146
          %v3194 = vmul.f32 %v3113, %v3146
          %v3195 = vmul.f32 %v3115, %v3146
          %v3196 = vmul.f32 %v3117, %v3146
          %v3197 = vmul.f32 %v3119, %v3146
          %v3198 = vmul.f32 %v3121, %v3146
          %v3199 = vmul.f32 %v3123, %v3146
          %v3200 = vmul.f32 %v3125, %v3146
          %v3201 = vmul.f32 %v3127, %v3146
          %v3202 = vmul.f32 %v3129, %v3146
          %v3203 = vmul.f32 %v3131, %v3146
          %v3204 = vmul.f32 %v3133, %v3146
          %v3205 = vmul.f32 %v3135, %v3146
          %v3206 = vmul.f32 %v3137, %v3146
          %v3207 = vmul.f32 %v3139, %v3146
          %v3208 = vmul.f32 %v3141, %v3146
          %v3209 = vmul.f32 %v3143, %v3146
          %v3210 = vmul.f32 %v3145, %v3146
          %v3211 = vsub.f32 %v2954, %v3147
          %v3212 = vsub.f32 %v2955, %v3148
          %v3213 = vsub.f32 %v2956, %v3149
          %v3214 = vsub.f32 %v2957, %v3150
          %v3215 = vsub.f32 %v2958, %v3151
          %v3216 = vsub.f32 %v2959, %v3152
          %v3217 = vsub.f32 %v2960, %v3153
          %v3218 = vsub.f32 %v2961, %v3154
          %v3219 = vsub.f32 %v2962, %v3155
          %v3220 = vsub.f32 %v2963, %v3156
          %v3221 = vsub.f32 %v2964, %v3157
          %v3222 = vsub.f32 %v2965, %v3158
          %v3223 = vsub.f32 %v2966, %v3159
          %v3224 = vsub.f32 %v2967, %v3160
          %v3225 = vsub.f32 %v2968, %v3161
          %v3226 = vsub.f32 %v2969, %v3162
          %v3227 = vsub.f32 %v2970, %v3163
          %v3228 = vsub.f32 %v2971, %v3164
          %v3229 = vsub.f32 %v2972, %v3165
          %v3230 = vsub.f32 %v2973, %v3166
          %v3231 = vsub.f32 %v2974, %v3167
          %v3232 = vsub.f32 %v2975, %v3168
          %v3233 = vsub.f32 %v2976, %v3169
          %v3234 = vsub.f32 %v2977, %v3170
          %v3235 = vsub.f32 %v2978, %v3171
          %v3236 = vsub.f32 %v2979, %v3172
          %v3237 = vsub.f32 %v2980, %v3173
          %v3238 = vsub.f32 %v2981, %v3174
          %v3239 = vsub.f32 %v2982, %v3175
          %v3240 = vsub.f32 %v2983, %v3176
          %v3241 = vsub.f32 %v2984, %v3177
          %v3242 = vsub.f32 %v2985, %v3178
          %v3243 = vsub.f32 %v2986, %v3179
          %v3244 = vsub.f32 %v2987, %v3180
          %v3245 = vsub.f32 %v2988, %v3181
          %v3246 = vsub.f32 %v2989, %v3182
          %v3247 = vsub.f32 %v2990, %v3183
          %v3248 = vsub.f32 %v2991, %v3184
          %v3249 = vsub.f32 %v2992, %v3185
          %v3250 = vsub.f32 %v2993, %v3186
          %v3251 = vsub.f32 %v2994, %v3187
          %v3252 = vsub.f32 %v2995, %v3188
          %v3253 = vsub.f32 %v2996, %v3189
          %v3254 = vsub.f32 %v2997, %v3190
          %v3255 = vsub.f32 %v2998, %v3191
          %v3256 = vsub.f32 %v2999, %v3192
          %v3257 = vsub.f32 %v3000, %v3193
          %v3258 = vsub.f32 %v3001, %v3194
          %v3259 = vsub.f32 %v3002, %v3195
          %v3260 = vsub.f32 %v3003, %v3196
          %v3261 = vsub.f32 %v3004, %v3197
          %v3262 = vsub.f32 %v3005, %v3198
          %v3263 = vsub.f32 %v3006, %v3199
          %v3264 = vsub.f32 %v3007, %v3200
          %v3265 = vsub.f32 %v3008, %v3201
          %v3266 = vsub.f32 %v3009, %v3202
          %v3267 = vsub.f32 %v3010, %v3203
          %v3268 = vsub.f32 %v3011, %v3204
          %v3269 = vsub.f32 %v3012, %v3205
          %v3270 = vsub.f32 %v3013, %v3206
          %v3271 = vsub.f32 %v3014, %v3207
          %v3272 = vsub.f32 %v3015, %v3208
          %v3273 = vsub.f32 %v3016, %v3209
          %v3274 = vsub.f32 %v3017, %v3210
          %v3275 = vmul.f32 %v3211, %v3211
          %v3276 = vmul.f32 %v3212, %v3212
          %v3277 = vmul.f32 %v3213, %v3213
          %v3278 = vmul.f32 %v3214, %v3214
          %v3279 = vmul.f32 %v3215, %v3215
          %v3280 = vmul.f32 %v3216, %v3216
          %v3281 = vmul.f32 %v3217, %v3217
          %v3282 = vmul.f32 %v3218, %v3218
          %v3283 = vmul.f32 %v3219, %v3219
          %v3284 = vmul.f32 %v3220, %v3220
          %v3285 = vmul.f32 %v3221, %v3221
          %v3286 = vmul.f32 %v3222, %v3222
          %v3287 = vmul.f32 %v3223, %v3223
          %v3288 = vmul.f32 %v3224, %v3224
          %v3289 = vmul.f32 %v3225, %v3225
          %v3290 = vmul.f32 %v3226, %v3226
          %v3291 = vmul.f32 %v3227, %v3227
          %v3292 = vmul.f32 %v3228, %v3228
          %v3293 = vmul.f32 %v3229, %v3229
          %v3294 = vmul.f32 %v3230, %v3230
          %v3295 = vmul.f32 %v3231, %v3231
          %v3296 = vmul.f32 %v3232, %v3232
          %v3297 = vmul.f32 %v3233, %v3233
          %v3298 = vmul.f32 %v3234, %v3234
          %v3299 = vmul.f32 %v3235, %v3235
          %v3300 = vmul.f32 %v3236, %v3236
          %v3301 = vmul.f32 %v3237, %v3237
          %v3302 = vmul.f32 %v3238, %v3238
          %v3303 = vmul.f32 %v3239, %v3239
          %v3304 = vmul.f32 %v3240, %v3240
          %v3305 = vmul.f32 %v3241, %v3241
          %v3306 = vmul.f32 %v3242, %v3242
          %v3307 = vmul.f32 %v3243, %v3243
          %v3308 = vmul.f32 %v3244, %v3244
          %v3309 = vmul.f32 %v3245, %v3245
          %v3310 = vmul.f32 %v3246, %v3246
          %v3311 = vmul.f32 %v3247, %v3247
          %v3312 = vmul.f32 %v3248, %v3248
          %v3313 = vmul.f32 %v3249, %v3249
          %v3314 = vmul.f32 %v3250, %v3250
          %v3315 = vmul.f32 %v3251, %v3251
          %v3316 = vmul.f32 %v3252, %v3252
          %v3317 = vmul.f32 %v3253, %v3253
          %v3318 = vmul.f32 %v3254, %v3254
          %v3319 = vmul.f32 %v3255, %v3255
          %v3320 = vmul.f32 %v3256, %v3256
          %v3321 = vmul.f32 %v3257, %v3257
          %v3322 = vmul.f32 %v3258, %v3258
          %v3323 = vmul.f32 %v3259, %v3259
          %v3324 = vmul.f32 %v3260, %v3260
          %v3325 = vmul.f32 %v3261, %v3261
          %v3326 = vmul.f32 %v3262, %v3262
          %v3327 = vmul.f32 %v3263, %v3263
          %v3328 = vmul.f32 %v3264, %v3264
          %v3329 = vmul.f32 %v3265, %v3265
          %v3330 = vmul.f32 %v3266, %v3266
          %v3331 = vmul.f32 %v3267, %v3267
          %v3332 = vmul.f32 %v3268, %v3268
          %v3333 = vmul.f32 %v3269, %v3269
          %v3334 = vmul.f32 %v3270, %v3270
          %v3335 = vmul.f32 %v3271, %v3271
          %v3336 = vmul.f32 %v3272, %v3272
          %v3337 = vmul.f32 %v3273, %v3273
          %v3338 = vmul.f32 %v3274, %v3274
          %3339 = vadd.xlane.f32.xlu0 %v3275
          %v3340 = vpop.xlane.xlu0 %3339
          %3341 = vadd.xlane.f32.xlu0 %v3276
          %v3342 = vpop.xlane.xlu0 %3341
          %3343 = vadd.xlane.f32.xlu0 %v3277
          %v3344 = vpop.xlane.xlu0 %3343
          %3345 = vadd.xlane.f32.xlu0 %v3278
          %v3346 = vpop.xlane.xlu0 %3345
          %3347 = vadd.xlane.f32.xlu0 %v3279
          %v3348 = vpop.xlane.xlu0 %3347
          %3349 = vadd.xlane.f32.xlu0 %v3280
          %v3350 = vpop.xlane.xlu0 %3349
          %3351 = vadd.xlane.f32.xlu0 %v3281
          %v3352 = vpop.xlane.xlu0 %3351
          %3353 = vadd.xlane.f32.xlu0 %v3282
          %v3354 = vpop.xlane.xlu0 %3353
          %3355 = vadd.xlane.f32.xlu0 %v3283
          %v3356 = vpop.xlane.xlu0 %3355
          %3357 = vadd.xlane.f32.xlu0 %v3284
          %v3358 = vpop.xlane.xlu0 %3357
          %3359 = vadd.xlane.f32.xlu0 %v3285
          %v3360 = vpop.xlane.xlu0 %3359
          %3361 = vadd.xlane.f32.xlu0 %v3286
          %v3362 = vpop.xlane.xlu0 %3361
          %3363 = vadd.xlane.f32.xlu0 %v3287
          %v3364 = vpop.xlane.xlu0 %3363
          %3365 = vadd.xlane.f32.xlu0 %v3288
          %v3366 = vpop.xlane.xlu0 %3365
          %3367 = vadd.xlane.f32.xlu0 %v3289
          %v3368 = vpop.xlane.xlu0 %3367
          %3369 = vadd.xlane.f32.xlu0 %v3290
          %v3370 = vpop.xlane.xlu0 %3369
          %3371 = vadd.xlane.f32.xlu0 %v3291
          %v3372 = vpop.xlane.xlu0 %3371
          %3373 = vadd.xlane.f32.xlu0 %v3292
          %v3374 = vpop.xlane.xlu0 %3373
          %3375 = vadd.xlane.f32.xlu0 %v3293
          %v3376 = vpop.xlane.xlu0 %3375
          %3377 = vadd.xlane.f32.xlu0 %v3294
          %v3378 = vpop.xlane.xlu0 %3377
          %3379 = vadd.xlane.f32.xlu0 %v3295
          %v3380 = vpop.xlane.xlu0 %3379
          %3381 = vadd.xlane.f32.xlu0 %v3296
          %v3382 = vpop.xlane.xlu0 %3381
          %3383 = vadd.xlane.f32.xlu0 %v3297
          %v3384 = vpop.xlane.xlu0 %3383
          %3385 = vadd.xlane.f32.xlu0 %v3298
          %v3386 = vpop.xlane.xlu0 %3385
          %3387 = vadd.xlane.f32.xlu0 %v3299
          %v3388 = vpop.xlane.xlu0 %3387
          %3389 = vadd.xlane.f32.xlu0 %v3300
          %v3390 = vpop.xlane.xlu0 %3389
          %3391 = vadd.xlane.f32.xlu0 %v3301
          %v3392 = vpop.xlane.xlu0 %3391
          %3393 = vadd.xlane.f32.xlu0 %v3302
          %v3394 = vpop.xlane.xlu0 %3393
          %3395 = vadd.xlane.f32.xlu0 %v3303
          %v3396 = vpop.xlane.xlu0 %3395
          %3397 = vadd.xlane.f32.xlu0 %v3304
          %v3398 = vpop.xlane.xlu0 %3397
          %3399 = vadd.xlane.f32.xlu0 %v3305
          %v3400 = vpop.xlane.xlu0 %3399
          %3401 = vadd.xlane.f32.xlu0 %v3306
          %v3402 = vpop.xlane.xlu0 %3401
          %3403 = vadd.xlane.f32.xlu0 %v3307
          %v3404 = vpop.xlane.xlu0 %3403
          %3405 = vadd.xlane.f32.xlu0 %v3308
          %v3406 = vpop.xlane.xlu0 %3405
          %3407 = vadd.xlane.f32.xlu0 %v3309
          %v3408 = vpop.xlane.xlu0 %3407
          %3409 = vadd.xlane.f32.xlu0 %v3310
          %v3410 = vpop.xlane.xlu0 %3409
          %3411 = vadd.xlane.f32.xlu0 %v3311
          %v3412 = vpop.xlane.xlu0 %3411
          %3413 = vadd.xlane.f32.xlu0 %v3312
          %v3414 = vpop.xlane.xlu0 %3413
          %3415 = vadd.xlane.f32.xlu0 %v3313
          %v3416 = vpop.xlane.xlu0 %3415
          %3417 = vadd.xlane.f32.xlu0 %v3314
          %v3418 = vpop.xlane.xlu0 %3417
          %3419 = vadd.xlane.f32.xlu0 %v3315
          %v3420 = vpop.xlane.xlu0 %3419
          %3421 = vadd.xlane.f32.xlu0 %v3316
          %v3422 = vpop.xlane.xlu0 %3421
          %3423 = vadd.xlane.f32.xlu0 %v3317
          %v3424 = vpop.xlane.xlu0 %3423
          %3425 = vadd.xlane.f32.xlu0 %v3318
          %v3426 = vpop.xlane.xlu0 %3425
          %3427 = vadd.xlane.f32.xlu0 %v3319
          %v3428 = vpop.xlane.xlu0 %3427
          %3429 = vadd.xlane.f32.xlu0 %v3320
          %v3430 = vpop.xlane.xlu0 %3429
          %3431 = vadd.xlane.f32.xlu0 %v3321
          %v3432 = vpop.xlane.xlu0 %3431
          %3433 = vadd.xlane.f32.xlu0 %v3322
          %v3434 = vpop.xlane.xlu0 %3433
          %3435 = vadd.xlane.f32.xlu0 %v3323
          %v3436 = vpop.xlane.xlu0 %3435
          %3437 = vadd.xlane.f32.xlu0 %v3324
          %v3438 = vpop.xlane.xlu0 %3437
          %3439 = vadd.xlane.f32.xlu0 %v3325
          %v3440 = vpop.xlane.xlu0 %3439
          %3441 = vadd.xlane.f32.xlu0 %v3326
          %v3442 = vpop.xlane.xlu0 %3441
          %3443 = vadd.xlane.f32.xlu0 %v3327
          %v3444 = vpop.xlane.xlu0 %3443
          %3445 = vadd.xlane.f32.xlu0 %v3328
          %v3446 = vpop.xlane.xlu0 %3445
          %3447 = vadd.xlane.f32.xlu0 %v3329
          %v3448 = vpop.xlane.xlu0 %3447
          %3449 = vadd.xlane.f32.xlu0 %v3330
          %v3450 = vpop.xlane.xlu0 %3449
          %3451 = vadd.xlane.f32.xlu0 %v3331
          %v3452 = vpop.xlane.xlu0 %3451
          %3453 = vadd.xlane.f32.xlu0 %v3332
          %v3454 = vpop.xlane.xlu0 %3453
          %3455 = vadd.xlane.f32.xlu0 %v3333
          %v3456 = vpop.xlane.xlu0 %3455
          %3457 = vadd.xlane.f32.xlu0 %v3334
          %v3458 = vpop.xlane.xlu0 %3457
          %3459 = vadd.xlane.f32.xlu0 %v3335
          %v3460 = vpop.xlane.xlu0 %3459
          %3461 = vadd.xlane.f32.xlu0 %v3336
          %v3462 = vpop.xlane.xlu0 %3461
          %3463 = vadd.xlane.f32.xlu0 %v3337
          %v3464 = vpop.xlane.xlu0 %3463
          %3465 = vadd.xlane.f32.xlu0 %v3338
          %v3466 = vpop.xlane.xlu0 %3465
          %v3467 = vmul.f32 %v3340, %v3146
          %v3468 = vmul.f32 %v3342, %v3146
          %v3469 = vmul.f32 %v3344, %v3146
          %v3470 = vmul.f32 %v3346, %v3146
          %v3471 = vmul.f32 %v3348, %v3146
          %v3472 = vmul.f32 %v3350, %v3146
          %v3473 = vmul.f32 %v3352, %v3146
          %v3474 = vmul.f32 %v3354, %v3146
          %v3475 = vmul.f32 %v3356, %v3146
          %v3476 = vmul.f32 %v3358, %v3146
          %v3477 = vmul.f32 %v3360, %v3146
          %v3478 = vmul.f32 %v3362, %v3146
          %v3479 = vmul.f32 %v3364, %v3146
          %v3480 = vmul.f32 %v3366, %v3146
          %v3481 = vmul.f32 %v3368, %v3146
          %v3482 = vmul.f32 %v3370, %v3146
          %v3483 = vmul.f32 %v3372, %v3146
          %v3484 = vmul.f32 %v3374, %v3146
          %v3485 = vmul.f32 %v3376, %v3146
          %v3486 = vmul.f32 %v3378, %v3146
          %v3487 = vmul.f32 %v3380, %v3146
          %v3488 = vmul.f32 %v3382, %v3146
          %v3489 = vmul.f32 %v3384, %v3146
          %v3490 = vmul.f32 %v3386, %v3146
          %v3491 = vmul.f32 %v3388, %v3146
          %v3492 = vmul.f32 %v3390, %v3146
          %v3493 = vmul.f32 %v3392, %v3146
          %v3494 = vmul.f32 %v3394, %v3146
          %v3495 = vmul.f32 %v3396, %v3146
          %v3496 = vmul.f32 %v3398, %v3146
          %v3497 = vmul.f32 %v3400, %v3146
          %v3498 = vmul.f32 %v3402, %v3146
          %v3499 = vmul.f32 %v3404, %v3146
          %v3500 = vmul.f32 %v3406, %v3146
          %v3501 = vmul.f32 %v3408, %v3146
          %v3502 = vmul.f32 %v3410, %v3146
          %v3503 = vmul.f32 %v3412, %v3146
          %v3504 = vmul.f32 %v3414, %v3146
          %v3505 = vmul.f32 %v3416, %v3146
          %v3506 = vmul.f32 %v3418, %v3146
          %v3507 = vmul.f32 %v3420, %v3146
          %v3508 = vmul.f32 %v3422, %v3146
          %v3509 = vmul.f32 %v3424, %v3146
          %v3510 = vmul.f32 %v3426, %v3146
          %v3511 = vmul.f32 %v3428, %v3146
          %v3512 = vmul.f32 %v3430, %v3146
          %v3513 = vmul.f32 %v3432, %v3146
          %v3514 = vmul.f32 %v3434, %v3146
          %v3515 = vmul.f32 %v3436, %v3146
          %v3516 = vmul.f32 %v3438, %v3146
          %v3517 = vmul.f32 %v3440, %v3146
          %v3518 = vmul.f32 %v3442, %v3146
          %v3519 = vmul.f32 %v3444, %v3146
          %v3520 = vmul.f32 %v3446, %v3146
          %v3521 = vmul.f32 %v3448, %v3146
          %v3522 = vmul.f32 %v3450, %v3146
          %v3523 = vmul.f32 %v3452, %v3146
          %v3524 = vmul.f32 %v3454, %v3146
          %v3525 = vmul.f32 %v3456, %v3146
          %v3526 = vmul.f32 %v3458, %v3146
          %v3527 = vmul.f32 %v3460, %v3146
          %v3528 = vmul.f32 %v3462, %v3146
          %v3529 = vmul.f32 %v3464, %v3146
          %v3530 = vmul.f32 %v3466, %v3146
          %v3531 = vadd.f32 %v3467, 1e-05
          %v3532 = vadd.f32 %v3468, 1e-05
          %v3533 = vadd.f32 %v3469, 1e-05
          %v3534 = vadd.f32 %v3470, 1e-05
          %v3535 = vadd.f32 %v3471, 1e-05
          %v3536 = vadd.f32 %v3472, 1e-05
          %v3537 = vadd.f32 %v3473, 1e-05
          %v3538 = vadd.f32 %v3474, 1e-05
          %v3539 = vadd.f32 %v3475, 1e-05
          %v3540 = vadd.f32 %v3476, 1e-05
          %v3541 = vadd.f32 %v3477, 1e-05
          %v3542 = vadd.f32 %v3478, 1e-05
          %v3543 = vadd.f32 %v3479, 1e-05
          %v3544 = vadd.f32 %v3480, 1e-05
          %v3545 = vadd.f32 %v3481, 1e-05
          %v3546 = vadd.f32 %v3482, 1e-05
          %v3547 = vadd.f32 %v3483, 1e-05
          %v3548 = vadd.f32 %v3484, 1e-05
          %v3549 = vadd.f32 %v3485, 1e-05
          %v3550 = vadd.f32 %v3486, 1e-05
          %v3551 = vadd.f32 %v3487, 1e-05
          %v3552 = vadd.f32 %v3488, 1e-05
          %v3553 = vadd.f32 %v3489, 1e-05
          %v3554 = vadd.f32 %v3490, 1e-05
          %v3555 = vadd.f32 %v3491, 1e-05
          %v3556 = vadd.f32 %v3492, 1e-05
          %v3557 = vadd.f32 %v3493, 1e-05
          %v3558 = vadd.f32 %v3494, 1e-05
          %v3559 = vadd.f32 %v3495, 1e-05
          %v3560 = vadd.f32 %v3496, 1e-05
          %v3561 = vadd.f32 %v3497, 1e-05
          %v3562 = vadd.f32 %v3498, 1e-05
          %v3563 = vadd.f32 %v3499, 1e-05
          %v3564 = vadd.f32 %v3500, 1e-05
          %v3565 = vadd.f32 %v3501, 1e-05
          %v3566 = vadd.f32 %v3502, 1e-05
          %v3567 = vadd.f32 %v3503, 1e-05
          %v3568 = vadd.f32 %v3504, 1e-05
          %v3569 = vadd.f32 %v3505, 1e-05
          %v3570 = vadd.f32 %v3506, 1e-05
          %v3571 = vadd.f32 %v3507, 1e-05
          %v3572 = vadd.f32 %v3508, 1e-05
          %v3573 = vadd.f32 %v3509, 1e-05
          %v3574 = vadd.f32 %v3510, 1e-05
          %v3575 = vadd.f32 %v3511, 1e-05
          %v3576 = vadd.f32 %v3512, 1e-05
          %v3577 = vadd.f32 %v3513, 1e-05
          %v3578 = vadd.f32 %v3514, 1e-05
          %v3579 = vadd.f32 %v3515, 1e-05
          %v3580 = vadd.f32 %v3516, 1e-05
          %v3581 = vadd.f32 %v3517, 1e-05
          %v3582 = vadd.f32 %v3518, 1e-05
          %v3583 = vadd.f32 %v3519, 1e-05
          %v3584 = vadd.f32 %v3520, 1e-05
          %v3585 = vadd.f32 %v3521, 1e-05
          %v3586 = vadd.f32 %v3522, 1e-05
          %v3587 = vadd.f32 %v3523, 1e-05
          %v3588 = vadd.f32 %v3524, 1e-05
          %v3589 = vadd.f32 %v3525, 1e-05
          %v3590 = vadd.f32 %v3526, 1e-05
          %v3591 = vadd.f32 %v3527, 1e-05
          %v3592 = vadd.f32 %v3528, 1e-05
          %v3593 = vadd.f32 %v3529, 1e-05
          %v3594 = vadd.f32 %v3530, 1e-05
          %v3595 = vrsqrt.pop %v3531
          %v3596 = vrsqrt.pop %v3532
          %v3597 = vrsqrt.pop %v3533
          %v3598 = vrsqrt.pop %v3534
          %v3599 = vrsqrt.pop %v3535
          %v3600 = vrsqrt.pop %v3536
          %v3601 = vrsqrt.pop %v3537
          %v3602 = vrsqrt.pop %v3538
          %v3603 = vrsqrt.pop %v3539
          %v3604 = vrsqrt.pop %v3540
          %v3605 = vrsqrt.pop %v3541
          %v3606 = vrsqrt.pop %v3542
          %v3607 = vrsqrt.pop %v3543
          %v3608 = vrsqrt.pop %v3544
          %v3609 = vrsqrt.pop %v3545
          %v3610 = vrsqrt.pop %v3546
          %v3611 = vrsqrt.pop %v3547
          %v3612 = vrsqrt.pop %v3548
          %v3613 = vrsqrt.pop %v3549
          %v3614 = vrsqrt.pop %v3550
          %v3615 = vrsqrt.pop %v3551
          %v3616 = vrsqrt.pop %v3552
          %v3617 = vrsqrt.pop %v3553
          %v3618 = vrsqrt.pop %v3554
          %v3619 = vrsqrt.pop %v3555
          %v3620 = vrsqrt.pop %v3556
          %v3621 = vrsqrt.pop %v3557
          %v3622 = vrsqrt.pop %v3558
          %v3623 = vrsqrt.pop %v3559
          %v3624 = vrsqrt.pop %v3560
          %v3625 = vrsqrt.pop %v3561
          %v3626 = vrsqrt.pop %v3562
          %v3627 = vrsqrt.pop %v3563
          %v3628 = vrsqrt.pop %v3564
          %v3629 = vrsqrt.pop %v3565
          %v3630 = vrsqrt.pop %v3566
          %v3631 = vrsqrt.pop %v3567
          %v3632 = vrsqrt.pop %v3568
          %v3633 = vrsqrt.pop %v3569
          %v3634 = vrsqrt.pop %v3570
          %v3635 = vrsqrt.pop %v3571
          %v3636 = vrsqrt.pop %v3572
          %v3637 = vrsqrt.pop %v3573
          %v3638 = vrsqrt.pop %v3574
          %v3639 = vrsqrt.pop %v3575
          %v3640 = vrsqrt.pop %v3576
          %v3641 = vrsqrt.pop %v3577
          %v3642 = vrsqrt.pop %v3578
          %v3643 = vrsqrt.pop %v3579
          %v3644 = vrsqrt.pop %v3580
          %v3645 = vrsqrt.pop %v3581
          %v3646 = vrsqrt.pop %v3582
          %v3647 = vrsqrt.pop %v3583
          %v3648 = vrsqrt.pop %v3584
          %v3649 = vrsqrt.pop %v3585
          %v3650 = vrsqrt.pop %v3586
          %v3651 = vrsqrt.pop %v3587
          %v3652 = vrsqrt.pop %v3588
          %v3653 = vrsqrt.pop %v3589
          %v3654 = vrsqrt.pop %v3590
          %v3655 = vrsqrt.pop %v3591
          %v3656 = vrsqrt.pop %v3592
          %v3657 = vrsqrt.pop %v3593
          %v3658 = vrsqrt.pop %v3594
          %v3659 = vmul.f32 %v3211, %v3595
          %v3660 = vmul.f32 %v3212, %v3596
          %v3661 = vmul.f32 %v3213, %v3597
          %v3662 = vmul.f32 %v3214, %v3598
          %v3663 = vmul.f32 %v3215, %v3599
          %v3664 = vmul.f32 %v3216, %v3600
          %v3665 = vmul.f32 %v3217, %v3601
          %v3666 = vmul.f32 %v3218, %v3602
          %v3667 = vmul.f32 %v3219, %v3603
          %v3668 = vmul.f32 %v3220, %v3604
          %v3669 = vmul.f32 %v3221, %v3605
          %v3670 = vmul.f32 %v3222, %v3606
          %v3671 = vmul.f32 %v3223, %v3607
          %v3672 = vmul.f32 %v3224, %v3608
          %v3673 = vmul.f32 %v3225, %v3609
          %v3674 = vmul.f32 %v3226, %v3610
          %v3675 = vmul.f32 %v3227, %v3611
          %v3676 = vmul.f32 %v3228, %v3612
          %v3677 = vmul.f32 %v3229, %v3613
          %v3678 = vmul.f32 %v3230, %v3614
          %v3679 = vmul.f32 %v3231, %v3615
          %v3680 = vmul.f32 %v3232, %v3616
          %v3681 = vmul.f32 %v3233, %v3617
          %v3682 = vmul.f32 %v3234, %v3618
          %v3683 = vmul.f32 %v3235, %v3619
          %v3684 = vmul.f32 %v3236, %v3620
          %v3685 = vmul.f32 %v3237, %v3621
          %v3686 = vmul.f32 %v3238, %v3622
          %v3687 = vmul.f32 %v3239, %v3623
          %v3688 = vmul.f32 %v3240, %v3624
          %v3689 = vmul.f32 %v3241, %v3625
          %v3690 = vmul.f32 %v3242, %v3626
          %v3691 = vmul.f32 %v3243, %v3627
          %v3692 = vmul.f32 %v3244, %v3628
          %v3693 = vmul.f32 %v3245, %v3629
          %v3694 = vmul.f32 %v3246, %v3630
          %v3695 = vmul.f32 %v3247, %v3631
          %v3696 = vmul.f32 %v3248, %v3632
          %v3697 = vmul.f32 %v3249, %v3633
          %v3698 = vmul.f32 %v3250, %v3634
          %v3699 = vmul.f32 %v3251, %v3635
          %v3700 = vmul.f32 %v3252, %v3636
          %v3701 = vmul.f32 %v3253, %v3637
          %v3702 = vmul.f32 %v3254, %v3638
          %v3703 = vmul.f32 %v3255, %v3639
          %v3704 = vmul.f32 %v3256, %v3640
          %v3705 = vmul.f32 %v3257, %v3641
          %v3706 = vmul.f32 %v3258, %v3642
          %v3707 = vmul.f32 %v3259, %v3643
          %v3708 = vmul.f32 %v3260, %v3644
          %v3709 = vmul.f32 %v3261, %v3645
          %v3710 = vmul.f32 %v3262, %v3646
          %v3711 = vmul.f32 %v3263, %v3647
          %v3712 = vmul.f32 %v3264, %v3648
          %v3713 = vmul.f32 %v3265, %v3649
          %v3714 = vmul.f32 %v3266, %v3650
          %v3715 = vmul.f32 %v3267, %v3651
          %v3716 = vmul.f32 %v3268, %v3652
          %v3717 = vmul.f32 %v3269, %v3653
          %v3718 = vmul.f32 %v3270, %v3654
          %v3719 = vmul.f32 %v3271, %v3655
          %v3720 = vmul.f32 %v3272, %v3656
          %v3721 = vmul.f32 %v3273, %v3657
          %v3722 = vmul.f32 %v3274, %v3658
          %v3723 = vld [vmem:[%s4 + $0x1] sm:$0x1]
          %v3724 = vlaneseq
          %v3725 = vshrl.u32 %v3724, 7
          %v3726 = vsub.s32 0, %v3725
          %v3727 = vrot.slane %v3723, %v3726
          %v3728 = vmul.f32 %v3659, %v3727
          %v3729 = vmul.f32 %v3660, %v3727
          %v3730 = vmul.f32 %v3661, %v3727
          %v3731 = vmul.f32 %v3662, %v3727
          %v3732 = vmul.f32 %v3663, %v3727
          %v3733 = vmul.f32 %v3664, %v3727
          %v3734 = vmul.f32 %v3665, %v3727
          %v3735 = vmul.f32 %v3666, %v3727
          %v3736 = vmul.f32 %v3667, %v3727
          %v3737 = vmul.f32 %v3668, %v3727
          %v3738 = vmul.f32 %v3669, %v3727
          %v3739 = vmul.f32 %v3670, %v3727
          %v3740 = vmul.f32 %v3671, %v3727
          %v3741 = vmul.f32 %v3672, %v3727
          %v3742 = vmul.f32 %v3673, %v3727
          %v3743 = vmul.f32 %v3674, %v3727
          %v3744 = vmul.f32 %v3675, %v3727
          %v3745 = vmul.f32 %v3676, %v3727
          %v3746 = vmul.f32 %v3677, %v3727
          %v3747 = vmul.f32 %v3678, %v3727
          %v3748 = vmul.f32 %v3679, %v3727
          %v3749 = vmul.f32 %v3680, %v3727
          %v3750 = vmul.f32 %v3681, %v3727
          %v3751 = vmul.f32 %v3682, %v3727
          %v3752 = vmul.f32 %v3683, %v3727
          %v3753 = vmul.f32 %v3684, %v3727
          %v3754 = vmul.f32 %v3685, %v3727
          %v3755 = vmul.f32 %v3686, %v3727
          %v3756 = vmul.f32 %v3687, %v3727
          %v3757 = vmul.f32 %v3688, %v3727
          %v3758 = vmul.f32 %v3689, %v3727
          %v3759 = vmul.f32 %v3690, %v3727
          %v3760 = vmul.f32 %v3691, %v3727
          %v3761 = vmul.f32 %v3692, %v3727
          %v3762 = vmul.f32 %v3693, %v3727
          %v3763 = vmul.f32 %v3694, %v3727
          %v3764 = vmul.f32 %v3695, %v3727
          %v3765 = vmul.f32 %v3696, %v3727
          %v3766 = vmul.f32 %v3697, %v3727
          %v3767 = vmul.f32 %v3698, %v3727
          %v3768 = vmul.f32 %v3699, %v3727
          %v3769 = vmul.f32 %v3700, %v3727
          %v3770 = vmul.f32 %v3701, %v3727
          %v3771 = vmul.f32 %v3702, %v3727
          %v3772 = vmul.f32 %v3703, %v3727
          %v3773 = vmul.f32 %v3704, %v3727
          %v3774 = vmul.f32 %v3705, %v3727
          %v3775 = vmul.f32 %v3706, %v3727
          %v3776 = vmul.f32 %v3707, %v3727
          %v3777 = vmul.f32 %v3708, %v3727
          %v3778 = vmul.f32 %v3709, %v3727
          %v3779 = vmul.f32 %v3710, %v3727
          %v3780 = vmul.f32 %v3711, %v3727
          %v3781 = vmul.f32 %v3712, %v3727
          %v3782 = vmul.f32 %v3713, %v3727
          %v3783 = vmul.f32 %v3714, %v3727
          %v3784 = vmul.f32 %v3715, %v3727
          %v3785 = vmul.f32 %v3716, %v3727
          %v3786 = vmul.f32 %v3717, %v3727
          %v3787 = vmul.f32 %v3718, %v3727
          %v3788 = vmul.f32 %v3719, %v3727
          %v3789 = vmul.f32 %v3720, %v3727
          %v3790 = vmul.f32 %v3721, %v3727
          %v3791 = vmul.f32 %v3722, %v3727
          %v3792 = vld [vmem:[%s4 + $0x2] sm:$0x1]
          %v3793 = vlaneseq
          %v3794 = vshrl.u32 %v3793, 7
          %v3795 = vsub.s32 0, %v3794
          %v3796 = vrot.slane %v3792, %v3795
          %v3797 = vadd.f32 %v3728, %v3796
          %v3798 = vadd.f32 %v3729, %v3796
          %v3799 = vadd.f32 %v3730, %v3796
          %v3800 = vadd.f32 %v3731, %v3796
          %v3801 = vadd.f32 %v3732, %v3796
          %v3802 = vadd.f32 %v3733, %v3796
          %v3803 = vadd.f32 %v3734, %v3796
          %v3804 = vadd.f32 %v3735, %v3796
          %v3805 = vadd.f32 %v3736, %v3796
          %v3806 = vadd.f32 %v3737, %v3796
          %v3807 = vadd.f32 %v3738, %v3796
          %v3808 = vadd.f32 %v3739, %v3796
          %v3809 = vadd.f32 %v3740, %v3796
          %v3810 = vadd.f32 %v3741, %v3796
          %v3811 = vadd.f32 %v3742, %v3796
          %v3812 = vadd.f32 %v3743, %v3796
          %v3813 = vadd.f32 %v3744, %v3796
          %v3814 = vadd.f32 %v3745, %v3796
          %v3815 = vadd.f32 %v3746, %v3796
          %v3816 = vadd.f32 %v3747, %v3796
          %v3817 = vadd.f32 %v3748, %v3796
          %v3818 = vadd.f32 %v3749, %v3796
          %v3819 = vadd.f32 %v3750, %v3796
          %v3820 = vadd.f32 %v3751, %v3796
          %v3821 = vadd.f32 %v3752, %v3796
          %v3822 = vadd.f32 %v3753, %v3796
          %v3823 = vadd.f32 %v3754, %v3796
          %v3824 = vadd.f32 %v3755, %v3796
          %v3825 = vadd.f32 %v3756, %v3796
          %v3826 = vadd.f32 %v3757, %v3796
          %v3827 = vadd.f32 %v3758, %v3796
          %v3828 = vadd.f32 %v3759, %v3796
          %v3829 = vadd.f32 %v3760, %v3796
          %v3830 = vadd.f32 %v3761, %v3796
          %v3831 = vadd.f32 %v3762, %v3796
          %v3832 = vadd.f32 %v3763, %v3796
          %v3833 = vadd.f32 %v3764, %v3796
          %v3834 = vadd.f32 %v3765, %v3796
          %v3835 = vadd.f32 %v3766, %v3796
          %v3836 = vadd.f32 %v3767, %v3796
          %v3837 = vadd.f32 %v3768, %v3796
          %v3838 = vadd.f32 %v3769, %v3796
          %v3839 = vadd.f32 %v3770, %v3796
          %v3840 = vadd.f32 %v3771, %v3796
          %v3841 = vadd.f32 %v3772, %v3796
          %v3842 = vadd.f32 %v3773, %v3796
          %v3843 = vadd.f32 %v3774, %v3796
          %v3844 = vadd.f32 %v3775, %v3796
          %v3845 = vadd.f32 %v3776, %v3796
          %v3846 = vadd.f32 %v3777, %v3796
          %v3847 = vadd.f32 %v3778, %v3796
          %v3848 = vadd.f32 %v3779, %v3796
          %v3849 = vadd.f32 %v3780, %v3796
          %v3850 = vadd.f32 %v3781, %v3796
          %v3851 = vadd.f32 %v3782, %v3796
          %v3852 = vadd.f32 %v3783, %v3796
          %v3853 = vadd.f32 %v3784, %v3796
          %v3854 = vadd.f32 %v3785, %v3796
          %v3855 = vadd.f32 %v3786, %v3796
          %v3856 = vadd.f32 %v3787, %v3796
          %v3857 = vadd.f32 %v3788, %v3796
          %v3858 = vadd.f32 %v3789, %v3796
          %v3859 = vadd.f32 %v3790, %v3796
          %v3860 = vadd.f32 %v3791, %v3796
          %3861 = vst [vmem:[%s313] sm:$0xff] %v3797
          %3862 = vst [vmem:[%s313 + $0x8] sm:$0xff] %v3798
          %3863 = vst [vmem:[%s313 + $0x10] sm:$0xff] %v3799
          %3864 = vst [vmem:[%s313 + $0x18] sm:$0xff] %v3800
          %3865 = vst [vmem:[%s313 + $0x20] sm:$0xff] %v3801
          %3866 = vst [vmem:[%s313 + $0x28] sm:$0xff] %v3802
          %3867 = vst [vmem:[%s313 + $0x30] sm:$0xff] %v3803
          %3868 = vst [vmem:[%s313 + $0x38] sm:$0xff] %v3804
          %3869 = vst [vmem:[%s313 + $0x40] sm:$0xff] %v3805
          %3870 = vst [vmem:[%s313 + $0x48] sm:$0xff] %v3806
          %3871 = vst [vmem:[%s313 + $0x50] sm:$0xff] %v3807
          %3872 = vst [vmem:[%s313 + $0x58] sm:$0xff] %v3808
          %3873 = vst [vmem:[%s313 + $0x60] sm:$0xff] %v3809
          %3874 = vst [vmem:[%s313 + $0x68] sm:$0xff] %v3810
          %3875 = vst [vmem:[%s313 + $0x70] sm:$0xff] %v3811
          %3876 = vst [vmem:[%s313 + $0x78] sm:$0xff] %v3812
          %3877 = vst [vmem:[%s313 + $0x80] sm:$0xff] %v3813
          %3878 = vst [vmem:[%s313 + $0x88] sm:$0xff] %v3814
          %3879 = vst [vmem:[%s313 + $0x90] sm:$0xff] %v3815
          %3880 = vst [vmem:[%s313 + $0x98] sm:$0xff] %v3816
          %3881 = vst [vmem:[%s313 + $0xa0] sm:$0xff] %v3817
          %3882 = vst [vmem:[%s313 + $0xa8] sm:$0xff] %v3818
          %3883 = vst [vmem:[%s313 + $0xb0] sm:$0xff] %v3819
          %3884 = vst [vmem:[%s313 + $0xb8] sm:$0xff] %v3820
          %3885 = vst [vmem:[%s313 + $0xc0] sm:$0xff] %v3821
          %3886 = vst [vmem:[%s313 + $0xc8] sm:$0xff] %v3822
          %3887 = vst [vmem:[%s313 + $0xd0] sm:$0xff] %v3823
          %3888 = vst [vmem:[%s313 + $0xd8] sm:$0xff] %v3824
          %3889 = vst [vmem:[%s313 + $0xe0] sm:$0xff] %v3825
          %3890 = vst [vmem:[%s313 + $0xe8] sm:$0xff] %v3826
          %3891 = vst [vmem:[%s313 + $0xf0] sm:$0xff] %v3827
          %3892 = vst [vmem:[%s313 + $0xf8] sm:$0xff] %v3828
          %3893 = vst [vmem:[%s313 + $0x100] sm:$0xff] %v3829
          %3894 = vst [vmem:[%s313 + $0x108] sm:$0xff] %v3830
          %3895 = vst [vmem:[%s313 + $0x110] sm:$0xff] %v3831
          %3896 = vst [vmem:[%s313 + $0x118] sm:$0xff] %v3832
          %3897 = vst [vmem:[%s313 + $0x120] sm:$0xff] %v3833
          %3898 = vst [vmem:[%s313 + $0x128] sm:$0xff] %v3834
          %3899 = vst [vmem:[%s313 + $0x130] sm:$0xff] %v3835
          %3900 = vst [vmem:[%s313 + $0x138] sm:$0xff] %v3836
          %3901 = vst [vmem:[%s313 + $0x140] sm:$0xff] %v3837
          %3902 = vst [vmem:[%s313 + $0x148] sm:$0xff] %v3838
          %3903 = vst [vmem:[%s313 + $0x150] sm:$0xff] %v3839
          %3904 = vst [vmem:[%s313 + $0x158] sm:$0xff] %v3840
          %3905 = vst [vmem:[%s313 + $0x160] sm:$0xff] %v3841
          %3906 = vst [vmem:[%s313 + $0x168] sm:$0xff] %v3842
          %3907 = vst [vmem:[%s313 + $0x170] sm:$0xff] %v3843
          %3908 = vst [vmem:[%s313 + $0x178] sm:$0xff] %v3844
          %3909 = vst [vmem:[%s313 + $0x180] sm:$0xff] %v3845
          %3910 = vst [vmem:[%s313 + $0x188] sm:$0xff] %v3846
          %3911 = vst [vmem:[%s313 + $0x190] sm:$0xff] %v3847
          %3912 = vst [vmem:[%s313 + $0x198] sm:$0xff] %v3848
          %3913 = vst [vmem:[%s313 + $0x1a0] sm:$0xff] %v3849
          %3914 = vst [vmem:[%s313 + $0x1a8] sm:$0xff] %v3850
          %3915 = vst [vmem:[%s313 + $0x1b0] sm:$0xff] %v3851
          %3916 = vst [vmem:[%s313 + $0x1b8] sm:$0xff] %v3852
          %3917 = vst [vmem:[%s313 + $0x1c0] sm:$0xff] %v3853
          %3918 = vst [vmem:[%s313 + $0x1c8] sm:$0xff] %v3854
          %3919 = vst [vmem:[%s313 + $0x1d0] sm:$0xff] %v3855
          %3920 = vst [vmem:[%s313 + $0x1d8] sm:$0xff] %v3856
          %3921 = vst [vmem:[%s313 + $0x1e0] sm:$0xff] %v3857
          %3922 = vst [vmem:[%s313 + $0x1e8] sm:$0xff] %v3858
          %3923 = vst [vmem:[%s313 + $0x1f0] sm:$0xff] %v3859
          %3924 = vst [vmem:[%s313 + $0x1f8] sm:$0xff] %v3860
        $region60: #{tpu_custom_call.1} parent=39 // pred_fallthru
          _
        %s3925 = sand.u32 %s168, 1
        %s3926 = scalar_lea.sflag [#allocation5], %s3925
        %s3927 = sand.u32 %s168, 1
        %s3928 = smul.addr %s3927, 512
        %s3929 = scalar_lea.vmem [#allocation9], %s3928
        // Predicated region
        $region61: #{tpu_custom_call.1} parent=39 // pred_check
          %p3930 = pneg %p178
        $region62: #{tpu_custom_call.1} parent=39 // pred_check_branch
          %3932 = sbr.rel (%p3930) target = $region64
        $region63: #{tpu_custom_call.1} parent=39 // pred_region
          %s3933 = smul.u32 64, %s27
          %s3935 = ssub.s32 8192, 8192
          %3936 = vsyncadd %s3926, %s3935
          %s3937 = smul.addr %s3933, 128
          %s3938 = scalar_lea.hbm %s5, %s3937
          %s3939 = sshll.u32 %s3929, 4
          %s3940 = int_to_ptr.vmem [resolvable:$true] %s3939
          %3945 = dma.vmem_to_hbm [thread:$0]  %s3940, 8192, %s3938, %s3926, 128, 128, 8
        $region64: #{tpu_custom_call.1} parent=39 // pred_fallthru
          _
      $region40: #{tpu_custom_call.1} parent=5 // pred_fallthru
        _
      %p3946 = scmp.le.s32.totalorder 2, %s18
      // Predicated region
      $region65: #{tpu_custom_call.1} parent=5 // pred_check
        %p3947 = pneg %p3946
      $region66: #{tpu_custom_call.1} parent=5 // pred_check_branch
        %3949 = sbr.rel (%p3947) target = $region68
      $region67: #{tpu_custom_call.1} parent=5 // pred_region
        %s3950 = ssub.s32 %s18, 2
        // Predicated region
        $region69: #{tpu_custom_call.1} parent=67 // pred_check
          %p3951 = pneg %p184
        $region70: #{tpu_custom_call.1} parent=67 // pred_check_branch
          %3953 = sbr.rel (%p3951) target = $region72
        $region71: #{tpu_custom_call.1} parent=67 // pred_region
          %s3954 = sand.u32 %s169, 1
          %s3955 = scalar_lea.sflag [#allocation5], %s3954
          %s3956 = sand.u32 %s169, 1
          %s3957 = smul.addr %s3956, 512
          %s3958 = scalar_lea.vmem [#allocation9], %s3957
          %3959 = dma.done %s3955, 8192
        $region72: #{tpu_custom_call.1} parent=67 // pred_fallthru
          _
      $region68: #{tpu_custom_call.1} parent=5 // pred_fallthru
        _
    $region6: #{tpu_custom_call.1} parent=1 // loop_footer
      %s22 = sadd.s32 1, %s18
    $region7: #{tpu_custom_call.1} parent=1 // loop_footer_branch
      %17 = sbr.rel target = $region3
    $region8: #{tpu_custom_call.1} parent=1 // loop_exit
      _
    %3960 = vsyncpa [#allocation4], 1
    %s3961 = scalar_lea.sflag [#allocation4], 1
    %3962 = vsyncpa %s3961, 1
    %3963 = vsyncpa [#allocation7], 1
    %3964 = vsyncpa [#allocation5], 1
    %s3965 = scalar_lea.sflag [#allocation5], 1
    %3966 = vsyncpa %s3965, 1

</llo_original>
